<compile_context>
chip_gen: v7x
topology: tpu7x:2x2x1
jax: 0.10.0
libtpu: 0.0.40
codegen_flags: <defaults>
</compile_context>

<pallas_src>
import functools
import math

import jax
import jax.numpy as jnp
from jax.experimental import pallas as pl
from jax.experimental.pallas import tpu as pltpu


# ------------------------------ kernel helpers -------------------------------


def _layer_norm(x, gamma, beta, eps=1e-6):
    """LayerNorm over the last dim, f32, eps=1e-6 as in the reference module."""
    mu = jnp.mean(x, axis=-1, keepdims=True)
    xc = x - mu
    var = jnp.mean(xc * xc, axis=-1, keepdims=True)
    return xc * jax.lax.rsqrt(var + eps) * gamma + beta


def _mha(q_all, k_all, v_all, wo_ref, bo_ref, bt, seq, num_heads, cdt):
    """Multi-head attention on already-projected q/k/v of shape (bt*seq, H*dk).

    The 1/sqrt(dk) scale is already folded into the Q projection weights.
    Heads are taken as static lane slices (dk lane-aligned); the score / PV
    contractions are batched per (b, h); softmax normalization is deferred to
    the (…, dk) context; per-head contexts are re-joined with a lane-aligned
    concatenate and projected with ONE full-width (K = H*dk) matmul.
    """
    rows, hd = q_all.shape
    dk = hd // num_heads

    q_all = q_all.astype(cdt)
    k_all = k_all.astype(cdt)
    v_all = v_all.astype(cdt)

    ctx_heads = []
    for h in range(num_heads):                       # small static unroll
        lo = h * dk
        q = q_all[:, lo:lo + dk].reshape(bt, seq, dk)
        k = k_all[:, lo:lo + dk].reshape(bt, seq, dk)
        v = v_all[:, lo:lo + dk].reshape(bt, seq, dk)

        s = jnp.einsum("bqd,bkd->bqk", q, k,
                       preferred_element_type=jnp.float32)       # (bt,S,S) f32
        m = jnp.max(s, axis=-1, keepdims=True)
        p = jnp.exp(s - m)
        denom = jnp.sum(p, axis=-1, keepdims=True)

        ctx = jnp.einsum("bqk,bkd->bqd", p.astype(cdt), v,
                         preferred_element_type=jnp.float32)     # (bt,S,dk)
        # deferred normalization: S*dk muls instead of S*S, reciprocal on EUP
        ctx = ctx * pl.reciprocal(denom, approx=True)
        ctx_heads.append(ctx.reshape(rows, dk))

    ctx = ctx_heads[0] if num_heads == 1 else jnp.concatenate(ctx_heads, axis=-1)
    return jnp.dot(ctx.astype(cdt), wo_ref[...],
                   preferred_element_type=jnp.float32) + bo_ref[...]


# --------------------------------- kernel -------------------------------------


def decoder_layer_kernel(
    tgt_ref, mem_ref,
    # attention_1 (self-attention on tgt)
    wqkv1_ref, bqkv1_ref, wo1_ref, bo1_ref, ln1g_ref, ln1b_ref,
    # attention_2 (q,k from memory; v from attention_1 output)
    wqk2_ref, bqk2_ref, wv2_ref, bv2_ref, wo2_ref, bo2_ref, ln2g_ref, ln2b_ref,
    # feed-forward
    wff1_ref, bff1_ref, wff2_ref, bff2_ref, ln3g_ref, ln3b_ref,
    o_ref,
    *,
    num_heads: int,
):
    bt, seq, d = tgt_ref.shape
    rows = bt * seq
    cdt = wqkv1_ref.dtype            # matmul operand dtype (bf16)

    # fold batch into the matmul M dimension (leading-dim collapse is free)
    tgt = tgt_ref[...].astype(jnp.float32).reshape(rows, d)
    mem = mem_ref[...].astype(jnp.float32).reshape(rows, d)

    # ---- attention_1: self-attention, fused QKV projection (D, 3D) ----------
    qkv1 = jnp.dot(tgt.astype(cdt), wqkv1_ref[...],
                   preferred_element_type=jnp.float32) + bqkv1_ref[...]
    attn1 = _mha(qkv1[:, :d], qkv1[:, d:2 * d], qkv1[:, 2 * d:],
                 wo1_ref, bo1_ref, bt, seq, num_heads, cdt)
    x1 = _layer_norm(tgt + attn1, ln1g_ref[...], ln1b_ref[...])

    # ---- attention_2: q,k from `memory` (fused (D, 2D)), v from x1 ----------
    qk2 = jnp.dot(mem.astype(cdt), wqk2_ref[...],
                  preferred_element_type=jnp.float32) + bqk2_ref[...]
    v2 = jnp.dot(x1.astype(cdt), wv2_ref[...],
                 preferred_element_type=jnp.float32) + bv2_ref[...]
    attn2 = _mha(qk2[:, :d], qk2[:, d:], v2,
                 wo2_ref, bo2_ref, bt, seq, num_heads, cdt)
    x2 = _layer_norm(x1 + attn2, ln2g_ref[...], ln2b_ref[...])

    # ---- feed-forward: Linear -> ReLU -> Linear ------------------------------
    hid = jnp.dot(x2.astype(cdt), wff1_ref[...],
                  preferred_element_type=jnp.float32) + bff1_ref[...]
    hid = jnp.maximum(hid, 0.0)
    ff = jnp.dot(hid.astype(cdt), wff2_ref[...],
                 preferred_element_type=jnp.float32) + bff2_ref[...]
    out = _layer_norm(x2 + ff, ln3g_ref[...], ln3b_ref[...])

    o_ref[...] = out.reshape(bt, seq, d).astype(o_ref.dtype)


# --------------------------------- wrapper -------------------------------------


def _rep_spec(shape, single_buffer):
    """BlockSpec covering the whole grid-invariant parameter array."""
    nd = len(shape)
    index_map = lambda b: (0,) * nd
    if single_buffer:
        # constant index_map across the grid -> no need to double-buffer
        return pl.BlockSpec(shape, index_map, pipeline_mode=pl.Buffered(1))
    return pl.BlockSpec(shape, index_map)


def prepare_decoder_params(params, dim_model, num_heads,
                           matmul_dtype=jnp.bfloat16):
    """One-time weight prep (hoisted off the forward path).

    Folds the 1/sqrt(dk) attention scale into the Q columns of the fused
    QKV / QK weights and biases (in f32, before the bf16 cast), and casts the
    matmul weights to the MXU operand dtype.
    """
    D = dim_model
    dk = D // num_heads
    scale = 1.0 / math.sqrt(dk)

    w_qkv1 = params["w_qkv1"].astype(jnp.float32).at[:, :D].multiply(scale)
    b_qkv1 = params["b_qkv1"].astype(jnp.float32).at[:, :D].multiply(scale)
    w_qk2 = params["w_qk2"].astype(jnp.float32).at[:, :D].multiply(scale)
    b_qk2 = params["b_qk2"].astype(jnp.float32).at[:, :D].multiply(scale)

    def mm(w):  # matmul weights -> low precision for the MXU
        return w.astype(matmul_dtype)

    return (
        mm(w_qkv1), b_qkv1, mm(params["w_o1"]), params["b_o1"],
        params["ln1_g"], params["ln1_b"],
        mm(w_qk2), b_qk2, mm(params["w_v2"]), params["b_v2"],
        mm(params["w_o2"]), params["b_o2"],
        params["ln2_g"], params["ln2_b"],
        mm(params["w_ff1"]), params["b_ff1"],
        mm(params["w_ff2"]), params["b_ff2"],
        params["ln3_g"], params["ln3_b"],
    )


def transformer_decoder_layer(tgt, memory, weights, num_heads, *, block_b=None):
    """Forward of one TransformerDecoderLayer: out = layer(tgt, memory).

    `weights` must come from prepare_decoder_params (casts/scale already done).
    """
    B, S, D = tgt.shape
    assert memory.shape == tgt.shape, "reference bmm requires matching shapes"
    assert D % num_heads == 0, "dim_model must be divisible by num_heads"

    # choose a batch tile so each grid step feeds >= ~256 rows to the MXU
    if block_b is None:
        block_b = min(B, max(1, -(-256 // S)))
    while B % block_b:
        block_b -= 1
    grid = (B // block_b,)

    act_spec = pl.BlockSpec((block_b, S, D), lambda b: (b, 0, 0))

    # ---- VMEM budget + cost estimate -----------------------------------------
    rows = block_b * S
    dim_ff = weights[14].shape[-1]            # w_ff1: (D, dim_ff)
    weight_bytes = sum(int(w.size) * w.dtype.itemsize for w in weights)
    act_block_bytes = rows * D * tgt.dtype.itemsize
    scratch_bytes = (rows * (3 * D + dim_ff + 8 * D) * 4
                     + 2 * block_b * S * S * 4)
    vmem_est = weight_bytes + 3 * 2 * act_block_bytes + scratch_bytes
    vmem_limit = int(min(max(2 * vmem_est, 32 * 1024 * 1024),
                         100 * 1024 * 1024))

    rows_total = B * S
    mm_flops = 2 * rows_total * D * (8 * D + 2 * dim_ff)
    attn_flops = 8 * B * S * S * D            # 2 attn blocks x (QK^T + PV)
    cost = pl.CostEstimate(
        flops=int(mm_flops + attn_flops),
        transcendentals=int(2 * B * num_heads * S * S + 8 * rows_total),
        bytes_accessed=int(weight_bytes
                           + 3 * rows_total * D * tgt.dtype.itemsize),
    )

    kernel = functools.partial(decoder_layer_kernel, num_heads=num_heads)

    def run(single_buffer_weights):
        in_specs = [act_spec, act_spec] + [
            _rep_spec(w.shape, single_buffer_weights) for w in weights]
        return pl.pallas_call(
            kernel,
            out_shape=jax.ShapeDtypeStruct((B, S, D), tgt.dtype),
            grid=grid,
            in_specs=in_specs,
            out_specs=pl.BlockSpec((block_b, S, D), lambda b: (b, 0, 0)),
            compiler_params=pltpu.CompilerParams(
                dimension_semantics=("parallel",),
                vmem_limit_bytes=vmem_limit),
            cost_estimate=cost,
        )(tgt, memory, *weights)

    try:
        return run(True)
    except Exception:   # fallback if Buffered(1) pipeline_mode is unsupported
        return run(False)


# ------------------------------ parameter init ---------------------------------


def init_decoder_params(key, dim_model, num_heads, dim_ff):
    """Synthetic weights in 'math layout' (in_features, out_features)."""
    assert dim_model % num_heads == 0
    D, F = dim_model, dim_ff
    keys = jax.random.split(key, 10)

    def nrm(k, shape, scale=0.02):
        return (scale * jax.random.normal(k, shape)).astype(jnp.float32)

    return {
        # attention_1: fused per-head Q,K,V projections, concatenated -> (D, 3D)
        "w_qkv1": nrm(keys[0], (D, 3 * D)),
        "b_qkv1": jnp.zeros((1, 3 * D), jnp.float32),
        "w_o1": nrm(keys[1], (D, D)),
        "b_o1": nrm(keys[2], (1, D)),
        "ln1_g": jnp.ones((1, D), jnp.float32),
        "ln1_b": jnp.zeros((1, D), jnp.float32),
        # attention_2: fused Q,K of `memory` -> (D, 2D); V of x1 -> (D, D)
        "w_qk2": nrm(keys[3], (D, 2 * D)),
        "b_qk2": jnp.zeros((1, 2 * D), jnp.float32),
        "w_v2": nrm(keys[4], (D, D)),
        "b_v2": jnp.zeros((1, D), jnp.float32),
        "w_o2": nrm(keys[5], (D, D)),
        "b_o2": nrm(keys[6], (1, D)),
        "ln2_g": jnp.ones((1, D), jnp.float32),
        "ln2_b": jnp.zeros((1, D), jnp.float32),
        # feed-forward
        "w_ff1": nrm(keys[7], (D, F)),
        "b_ff1": nrm(keys[8], (1, F)),
        "w_ff2": nrm(keys[9], (F, D)),
        "b_ff2": jnp.zeros((1, D), jnp.float32),
        "ln3_g": jnp.ones((1, D), jnp.float32),
        "ln3_b": jnp.zeros((1, D), jnp.float32),
    }


# ------------------------------ pure-JAX reference -----------------------------


def reference_decoder_layer(tgt, memory, params, num_heads):
    """f32 reference matching the PyTorch module semantics."""
    D = tgt.shape[-1]
    dk = D // num_heads
    scale = 1.0 / math.sqrt(dk)

    def ln(x, g, b):
        mu = jnp.mean(x, -1, keepdims=True)
        var = jnp.mean((x - mu) ** 2, -1, keepdims=True)
        return (x - mu) / jnp.sqrt(var + 1e-6) * g + b

    def heads(x):
        B, S, _ = x.shape
        return x.reshape(B, S, num_heads, dk).transpose(0, 2, 1, 3)

    def mha(q, k, v, wo, bo):
        qh, kh, vh = heads(q), heads(k), heads(v)
        s = jnp.einsum("bhqd,bhkd->bhqk", qh, kh) * scale
        p = jax.nn.softmax(s, axis=-1)
        ctx = jnp.einsum("bhqk,bhkd->bhqd", p, vh)
        B, H, S, _ = ctx.shape
        return ctx.transpose(0, 2, 1, 3).reshape(B, S, D) @ wo + bo

    qkv1 = tgt @ params["w_qkv1"] + params["b_qkv1"]
    a1 = mha(qkv1[..., :D], qkv1[..., D:2 * D], qkv1[..., 2 * D:],
             params["w_o1"], params["b_o1"])
    x1 = ln(tgt + a1, params["ln1_g"], params["ln1_b"])

    qk2 = memory @ params["w_qk2"] + params["b_qk2"]
    v2 = x1 @ params["w_v2"] + params["b_v2"]
    a2 = mha(qk2[..., :D], qk2[..., D:], v2, params["w_o2"], params["b_o2"])
    x2 = ln(x1 + a2, params["ln2_g"], params["ln2_b"])

    ff = jnp.maximum(x2 @ params["w_ff1"] + params["b_ff1"], 0.0)
    ff = ff @ params["w_ff2"] + params["b_ff2"]
    return ln(x2 + ff, params["ln3_g"], params["ln3_b"])


# ----------------------------------- main ---------------------------------------


if __name__ == "__main__":
    # Small but lane-dense config: D and FF multiples of 128, dk = D/H = 128,
    # S multiple of 8 (no masked partial stores / wasted vreg lanes).
    B, S = 2, 16
    DIM_MODEL = 256
    NUM_HEADS = 2
    DIM_FF = 512

    key = jax.random.PRNGKey(0)
    k_tgt, k_mem, k_par = jax.random.split(key, 3)
    tgt = jax.random.normal(k_tgt, (B, S, DIM_MODEL), dtype=jnp.float32)
    memory = jax.random.normal(k_mem, (B, S, DIM_MODEL), dtype=jnp.float32)
    params = init_decoder_params(k_par, DIM_MODEL, NUM_HEADS, DIM_FF)

    # one-time weight prep (bf16 cast + 1/sqrt(dk) fold), hoisted off the call
    weights = prepare_decoder_params(params, DIM_MODEL, NUM_HEADS)

    out = transformer_decoder_layer(tgt, memory, weights, NUM_HEADS)
    out = jax.block_until_ready(out)

    assert out.shape == (B, S, DIM_MODEL) and out.dtype == jnp.float32
    assert bool(jnp.all(jnp.isfinite(out)))

    ref = reference_decoder_layer(tgt, memory, params, NUM_HEADS)
    max_err = float(jnp.max(jnp.abs(out - ref)))
    assert max_err < 0.1, f"kernel vs reference mismatch: max_err={max_err}"

    print("KERNEL_OK")
</pallas_src>

<mosaic_0001>
module attributes {stable_mosaic.version = 11 : i64} {
  func.func @decoder_layer_kernel(%arg0: i32, %arg1: memref<2x16x256xf32, #tpu.memory_space<vmem>>, %arg2: memref<2x16x256xf32, #tpu.memory_space<vmem>>, %arg3: memref<256x768xbf16, #tpu.memory_space<vmem>>, %arg4: memref<1x768xf32, #tpu.memory_space<vmem>>, %arg5: memref<256x256xbf16, #tpu.memory_space<vmem>>, %arg6: memref<1x256xf32, #tpu.memory_space<vmem>>, %arg7: memref<1x256xf32, #tpu.memory_space<vmem>>, %arg8: memref<1x256xf32, #tpu.memory_space<vmem>>, %arg9: memref<256x512xbf16, #tpu.memory_space<vmem>>, %arg10: memref<1x512xf32, #tpu.memory_space<vmem>>, %arg11: memref<256x256xbf16, #tpu.memory_space<vmem>>, %arg12: memref<1x256xf32, #tpu.memory_space<vmem>>, %arg13: memref<256x256xbf16, #tpu.memory_space<vmem>>, %arg14: memref<1x256xf32, #tpu.memory_space<vmem>>, %arg15: memref<1x256xf32, #tpu.memory_space<vmem>>, %arg16: memref<1x256xf32, #tpu.memory_space<vmem>>, %arg17: memref<256x512xbf16, #tpu.memory_space<vmem>>, %arg18: memref<1x512xf32, #tpu.memory_space<vmem>>, %arg19: memref<512x256xbf16, #tpu.memory_space<vmem>>, %arg20: memref<1x256xf32, #tpu.memory_space<vmem>>, %arg21: memref<1x256xf32, #tpu.memory_space<vmem>>, %arg22: memref<1x256xf32, #tpu.memory_space<vmem>>, %arg23: memref<2x16x256xf32, #tpu.memory_space<vmem>>) attributes {dimension_semantics = [#tpu.dimension_semantics<parallel>], iteration_bounds = array<i64: 1>, scalar_prefetch = 0 : i64, scratch_operands = 0 : i64, tpu.core_type = #tpu.core_type<tc>, window_params = [{transform_indices = @transform_0, window_bounds = array<i64: 2, 16, 256>}, {transform_indices = @transform_1, window_bounds = array<i64: 2, 16, 256>}, {pipeline_mode = #tpu.pipeline_mode<synchronous>, transform_indices = @transform_2, window_bounds = array<i64: 256, 768>}, {pipeline_mode = #tpu.pipeline_mode<synchronous>, transform_indices = @transform_3, window_bounds = array<i64: 1, 768>}, {pipeline_mode = #tpu.pipeline_mode<synchronous>, transform_indices = @transform_4, window_bounds = array<i64: 256, 256>}, {pipeline_mode = #tpu.pipeline_mode<synchronous>, transform_indices = @transform_5, window_bounds = array<i64: 1, 256>}, {pipeline_mode = #tpu.pipeline_mode<synchronous>, transform_indices = @transform_6, window_bounds = array<i64: 1, 256>}, {pipeline_mode = #tpu.pipeline_mode<synchronous>, transform_indices = @transform_7, window_bounds = array<i64: 1, 256>}, {pipeline_mode = #tpu.pipeline_mode<synchronous>, transform_indices = @transform_8, window_bounds = array<i64: 256, 512>}, {pipeline_mode = #tpu.pipeline_mode<synchronous>, transform_indices = @transform_9, window_bounds = array<i64: 1, 512>}, {pipeline_mode = #tpu.pipeline_mode<synchronous>, transform_indices = @transform_10, window_bounds = array<i64: 256, 256>}, {pipeline_mode = #tpu.pipeline_mode<synchronous>, transform_indices = @transform_11, window_bounds = array<i64: 1, 256>}, {pipeline_mode = #tpu.pipeline_mode<synchronous>, transform_indices = @transform_12, window_bounds = array<i64: 256, 256>}, {pipeline_mode = #tpu.pipeline_mode<synchronous>, transform_indices = @transform_13, window_bounds = array<i64: 1, 256>}, {pipeline_mode = #tpu.pipeline_mode<synchronous>, transform_indices = @transform_14, window_bounds = array<i64: 1, 256>}, {pipeline_mode = #tpu.pipeline_mode<synchronous>, transform_indices = @transform_15, window_bounds = array<i64: 1, 256>}, {pipeline_mode = #tpu.pipeline_mode<synchronous>, transform_indices = @transform_16, window_bounds = array<i64: 256, 512>}, {pipeline_mode = #tpu.pipeline_mode<synchronous>, transform_indices = @transform_17, window_bounds = array<i64: 1, 512>}, {pipeline_mode = #tpu.pipeline_mode<synchronous>, transform_indices = @transform_18, window_bounds = array<i64: 512, 256>}, {pipeline_mode = #tpu.pipeline_mode<synchronous>, transform_indices = @transform_19, window_bounds = array<i64: 1, 256>}, {pipeline_mode = #tpu.pipeline_mode<synchronous>, transform_indices = @transform_20, window_bounds = array<i64: 1, 256>}, {pipeline_mode = #tpu.pipeline_mode<synchronous>, transform_indices = @transform_21, window_bounds = array<i64: 1, 256>}, {transform_indices = @transform_22, window_bounds = array<i64: 2, 16, 256>}]} {
    %c0 = arith.constant 0 : index
    %c0_0 = arith.constant 0 : index
    %c0_1 = arith.constant 0 : index
    %0 = vector.load %arg1[%c0, %c0_0, %c0_1] : memref<2x16x256xf32, #tpu.memory_space<vmem>>, vector<2x16x256xf32>
    %1 = vector.shape_cast %0 : vector<2x16x256xf32> to vector<32x256xf32>
    %c0_2 = arith.constant 0 : index
    %c0_3 = arith.constant 0 : index
    %c0_4 = arith.constant 0 : index
    %2 = vector.load %arg2[%c0_2, %c0_3, %c0_4] : memref<2x16x256xf32, #tpu.memory_space<vmem>>, vector<2x16x256xf32>
    %3 = vector.shape_cast %2 : vector<2x16x256xf32> to vector<32x256xf32>
    %4 = arith.truncf %1 : vector<32x256xf32> to vector<32x256xbf16>
    %c0_5 = arith.constant 0 : index
    %c0_6 = arith.constant 0 : index
    %5 = vector.load %arg3[%c0_5, %c0_6] : memref<256x768xbf16, #tpu.memory_space<vmem>>, vector<256x768xbf16>
    %cst = arith.constant dense<0.000000e+00> : vector<32x768xf32>
    %6 = tpu.matmul %4, %5, %cst {dimension_numbers = #tpu.dot_dimension_numbers<[1], [0], [0], [1], [0, 0, 1, 1], [], []>} : vector<32x256xbf16>, vector<256x768xbf16>, vector<32x768xf32> -> vector<32x768xf32>
    %c0_7 = arith.constant 0 : index
    %c0_8 = arith.constant 0 : index
    %7 = vector.load %arg4[%c0_7, %c0_8] : memref<1x768xf32, #tpu.memory_space<vmem>>, vector<1x768xf32>
    %8 = vector.broadcast %7 : vector<1x768xf32> to vector<32x768xf32>
    %9 = arith.addf %6, %8 : vector<32x768xf32>
    %10 = vector.extract_strided_slice %9 {offsets = [0, 0], sizes = [32, 256], strides = [1, 1]} : vector<32x768xf32> to vector<32x256xf32>
    %11 = vector.extract_strided_slice %9 {offsets = [0, 256], sizes = [32, 256], strides = [1, 1]} : vector<32x768xf32> to vector<32x256xf32>
    %12 = vector.extract_strided_slice %9 {offsets = [0, 512], sizes = [32, 256], strides = [1, 1]} : vector<32x768xf32> to vector<32x256xf32>
    %13 = arith.truncf %10 : vector<32x256xf32> to vector<32x256xbf16>
    %14 = arith.truncf %11 : vector<32x256xf32> to vector<32x256xbf16>
    %15 = arith.truncf %12 : vector<32x256xf32> to vector<32x256xbf16>
    %16 = vector.extract_strided_slice %13 {offsets = [0, 0], sizes = [32, 128], strides = [1, 1]} : vector<32x256xbf16> to vector<32x128xbf16>
    %17 = vector.shape_cast %16 : vector<32x128xbf16> to vector<2x16x128xbf16>
    %18 = vector.extract_strided_slice %14 {offsets = [0, 0], sizes = [32, 128], strides = [1, 1]} : vector<32x256xbf16> to vector<32x128xbf16>
    %19 = vector.shape_cast %18 : vector<32x128xbf16> to vector<2x16x128xbf16>
    %20 = vector.extract_strided_slice %15 {offsets = [0, 0], sizes = [32, 128], strides = [1, 1]} : vector<32x256xbf16> to vector<32x128xbf16>
    %21 = vector.shape_cast %20 : vector<32x128xbf16> to vector<2x16x128xbf16>
    "tpu.trace_start"() <{level = 10 : i32, message = "bqd,bkd->bqk"}> : () -> ()
    %cst_9 = arith.constant dense<0.000000e+00> : vector<2x16x16xf32>
    %22 = tpu.matmul %17, %19, %cst_9 {dimension_numbers = #tpu.dot_dimension_numbers<[2], [2], [1], [1], [0, 0, 0, 1, 1, 1], [0], [0]>} : vector<2x16x128xbf16>, vector<2x16x128xbf16>, vector<2x16x16xf32> -> vector<2x16x16xf32>
    "tpu.trace_stop"() : () -> ()
    %cst_10 = arith.constant dense<0xFF800000> : vector<2x16xf32>
    %23 = vector.multi_reduction <maximumf>, %22, %cst_10 [2] : vector<2x16x16xf32> to vector<2x16xf32>
    %24 = vector.shape_cast %23 : vector<2x16xf32> to vector<2x16x1xf32>
    %25 = vector.broadcast %24 : vector<2x16x1xf32> to vector<2x16x16xf32>
    %26 = arith.subf %22, %25 : vector<2x16x16xf32>
    %27 = math.exp %26 : vector<2x16x16xf32>
    %cst_11 = arith.constant dense<0.000000e+00> : vector<2x16xf32>
    %28 = vector.multi_reduction <add>, %27, %cst_11 [2] : vector<2x16x16xf32> to vector<2x16xf32>
    %29 = vector.shape_cast %28 : vector<2x16xf32> to vector<2x16x1xf32>
    %30 = arith.truncf %27 : vector<2x16x16xf32> to vector<2x16x16xbf16>
    "tpu.trace_start"() <{level = 10 : i32, message = "bqk,bkd->bqd"}> : () -> ()
    %cst_12 = arith.constant dense<0.000000e+00> : vector<2x16x128xf32>
    %31 = tpu.matmul %30, %21, %cst_12 {dimension_numbers = #tpu.dot_dimension_numbers<[2], [1], [1], [2], [0, 0, 0, 1, 1, 2], [0], [0]>} : vector<2x16x16xbf16>, vector<2x16x128xbf16>, vector<2x16x128xf32> -> vector<2x16x128xf32>
    "tpu.trace_stop"() : () -> ()
    %32 = tpu.reciprocal %29 {approx = true} : vector<2x16x1xf32> -> vector<2x16x1xf32>
    %33 = vector.broadcast %32 : vector<2x16x1xf32> to vector<2x16x128xf32>
    %34 = arith.mulf %31, %33 : vector<2x16x128xf32>
    %35 = vector.shape_cast %34 : vector<2x16x128xf32> to vector<32x128xf32>
    %36 = vector.extract_strided_slice %13 {offsets = [0, 128], sizes = [32, 128], strides = [1, 1]} : vector<32x256xbf16> to vector<32x128xbf16>
    %37 = vector.shape_cast %36 : vector<32x128xbf16> to vector<2x16x128xbf16>
    %38 = vector.extract_strided_slice %14 {offsets = [0, 128], sizes = [32, 128], strides = [1, 1]} : vector<32x256xbf16> to vector<32x128xbf16>
    %39 = vector.shape_cast %38 : vector<32x128xbf16> to vector<2x16x128xbf16>
    %40 = vector.extract_strided_slice %15 {offsets = [0, 128], sizes = [32, 128], strides = [1, 1]} : vector<32x256xbf16> to vector<32x128xbf16>
    %41 = vector.shape_cast %40 : vector<32x128xbf16> to vector<2x16x128xbf16>
    "tpu.trace_start"() <{level = 10 : i32, message = "bqd,bkd->bqk"}> : () -> ()
    %cst_13 = arith.constant dense<0.000000e+00> : vector<2x16x16xf32>
    %42 = tpu.matmul %37, %39, %cst_13 {dimension_numbers = #tpu.dot_dimension_numbers<[2], [2], [1], [1], [0, 0, 0, 1, 1, 1], [0], [0]>} : vector<2x16x128xbf16>, vector<2x16x128xbf16>, vector<2x16x16xf32> -> vector<2x16x16xf32>
    "tpu.trace_stop"() : () -> ()
    %cst_14 = arith.constant dense<0xFF800000> : vector<2x16xf32>
    %43 = vector.multi_reduction <maximumf>, %42, %cst_14 [2] : vector<2x16x16xf32> to vector<2x16xf32>
    %44 = vector.shape_cast %43 : vector<2x16xf32> to vector<2x16x1xf32>
    %45 = vector.broadcast %44 : vector<2x16x1xf32> to vector<2x16x16xf32>
    %46 = arith.subf %42, %45 : vector<2x16x16xf32>
    %47 = math.exp %46 : vector<2x16x16xf32>
    %cst_15 = arith.constant dense<0.000000e+00> : vector<2x16xf32>
    %48 = vector.multi_reduction <add>, %47, %cst_15 [2] : vector<2x16x16xf32> to vector<2x16xf32>
    %49 = vector.shape_cast %48 : vector<2x16xf32> to vector<2x16x1xf32>
    %50 = arith.truncf %47 : vector<2x16x16xf32> to vector<2x16x16xbf16>
    "tpu.trace_start"() <{level = 10 : i32, message = "bqk,bkd->bqd"}> : () -> ()
    %cst_16 = arith.constant dense<0.000000e+00> : vector<2x16x128xf32>
    %51 = tpu.matmul %50, %41, %cst_16 {dimension_numbers = #tpu.dot_dimension_numbers<[2], [1], [1], [2], [0, 0, 0, 1, 1, 2], [0], [0]>} : vector<2x16x16xbf16>, vector<2x16x128xbf16>, vector<2x16x128xf32> -> vector<2x16x128xf32>
    "tpu.trace_stop"() : () -> ()
    %52 = tpu.reciprocal %49 {approx = true} : vector<2x16x1xf32> -> vector<2x16x1xf32>
    %53 = vector.broadcast %52 : vector<2x16x1xf32> to vector<2x16x128xf32>
    %54 = arith.mulf %51, %53 : vector<2x16x128xf32>
    %55 = vector.shape_cast %54 : vector<2x16x128xf32> to vector<32x128xf32>
    %56 = tpu.concatenate %35, %55 in 1 : vector<32x128xf32>, vector<32x128xf32> -> vector<32x256xf32>
    %57 = arith.truncf %56 : vector<32x256xf32> to vector<32x256xbf16>
    %c0_17 = arith.constant 0 : index
    %c0_18 = arith.constant 0 : index
    %58 = vector.load %arg5[%c0_17, %c0_18] : memref<256x256xbf16, #tpu.memory_space<vmem>>, vector<256x256xbf16>
    %cst_19 = arith.constant dense<0.000000e+00> : vector<32x256xf32>
    %59 = tpu.matmul %57, %58, %cst_19 {dimension_numbers = #tpu.dot_dimension_numbers<[1], [0], [0], [1], [0, 0, 1, 1], [], []>} : vector<32x256xbf16>, vector<256x256xbf16>, vector<32x256xf32> -> vector<32x256xf32>
    %c0_20 = arith.constant 0 : index
    %c0_21 = arith.constant 0 : index
    %60 = vector.load %arg6[%c0_20, %c0_21] : memref<1x256xf32, #tpu.memory_space<vmem>>, vector<1x256xf32>
    %61 = vector.broadcast %60 : vector<1x256xf32> to vector<32x256xf32>
    %62 = arith.addf %59, %61 : vector<32x256xf32>
    %63 = arith.addf %1, %62 : vector<32x256xf32>
    %c0_22 = arith.constant 0 : index
    %c0_23 = arith.constant 0 : index
    %64 = vector.load %arg7[%c0_22, %c0_23] : memref<1x256xf32, #tpu.memory_space<vmem>>, vector<1x256xf32>
    %c0_24 = arith.constant 0 : index
    %c0_25 = arith.constant 0 : index
    %65 = vector.load %arg8[%c0_24, %c0_25] : memref<1x256xf32, #tpu.memory_space<vmem>>, vector<1x256xf32>
    %cst_26 = arith.constant dense<0.000000e+00> : vector<32xf32>
    %66 = vector.multi_reduction <add>, %63, %cst_26 [1] : vector<32x256xf32> to vector<32xf32>
    %67 = vector.shape_cast %66 : vector<32xf32> to vector<32x1xf32>
    %cst_27 = arith.constant 2.560000e+02 : f32
    %68 = vector.broadcast %cst_27 : f32 to vector<32x1xf32>
    %69 = arith.divf %67, %68 : vector<32x1xf32>
    %70 = vector.broadcast %69 : vector<32x1xf32> to vector<32x256xf32>
    %71 = arith.subf %63, %70 : vector<32x256xf32>
    %72 = arith.mulf %71, %71 : vector<32x256xf32>
    %cst_28 = arith.constant dense<0.000000e+00> : vector<32xf32>
    %73 = vector.multi_reduction <add>, %72, %cst_28 [1] : vector<32x256xf32> to vector<32xf32>
    %74 = vector.shape_cast %73 : vector<32xf32> to vector<32x1xf32>
    %cst_29 = arith.constant 2.560000e+02 : f32
    %75 = vector.broadcast %cst_29 : f32 to vector<32x1xf32>
    %76 = arith.divf %74, %75 : vector<32x1xf32>
    %cst_30 = arith.constant 9.99999997E-7 : f32
    %77 = vector.broadcast %cst_30 : f32 to vector<32x1xf32>
    %78 = arith.addf %76, %77 : vector<32x1xf32>
    %79 = math.rsqrt %78 : vector<32x1xf32>
    %80 = vector.broadcast %79 : vector<32x1xf32> to vector<32x256xf32>
    %81 = arith.mulf %71, %80 : vector<32x256xf32>
    %82 = vector.broadcast %64 : vector<1x256xf32> to vector<32x256xf32>
    %83 = arith.mulf %81, %82 : vector<32x256xf32>
    %84 = vector.broadcast %65 : vector<1x256xf32> to vector<32x256xf32>
    %85 = arith.addf %83, %84 : vector<32x256xf32>
    %86 = arith.truncf %3 : vector<32x256xf32> to vector<32x256xbf16>
    %c0_31 = arith.constant 0 : index
    %c0_32 = arith.constant 0 : index
    %87 = vector.load %arg9[%c0_31, %c0_32] : memref<256x512xbf16, #tpu.memory_space<vmem>>, vector<256x512xbf16>
    %cst_33 = arith.constant dense<0.000000e+00> : vector<32x512xf32>
    %88 = tpu.matmul %86, %87, %cst_33 {dimension_numbers = #tpu.dot_dimension_numbers<[1], [0], [0], [1], [0, 0, 1, 1], [], []>} : vector<32x256xbf16>, vector<256x512xbf16>, vector<32x512xf32> -> vector<32x512xf32>
    %c0_34 = arith.constant 0 : index
    %c0_35 = arith.constant 0 : index
    %89 = vector.load %arg10[%c0_34, %c0_35] : memref<1x512xf32, #tpu.memory_space<vmem>>, vector<1x512xf32>
    %90 = vector.broadcast %89 : vector<1x512xf32> to vector<32x512xf32>
    %91 = arith.addf %88, %90 : vector<32x512xf32>
    %92 = arith.truncf %85 : vector<32x256xf32> to vector<32x256xbf16>
    %c0_36 = arith.constant 0 : index
    %c0_37 = arith.constant 0 : index
    %93 = vector.load %arg11[%c0_36, %c0_37] : memref<256x256xbf16, #tpu.memory_space<vmem>>, vector<256x256xbf16>
    %cst_38 = arith.constant dense<0.000000e+00> : vector<32x256xf32>
    %94 = tpu.matmul %92, %93, %cst_38 {dimension_numbers = #tpu.dot_dimension_numbers<[1], [0], [0], [1], [0, 0, 1, 1], [], []>} : vector<32x256xbf16>, vector<256x256xbf16>, vector<32x256xf32> -> vector<32x256xf32>
    %c0_39 = arith.constant 0 : index
    %c0_40 = arith.constant 0 : index
    %95 = vector.load %arg12[%c0_39, %c0_40] : memref<1x256xf32, #tpu.memory_space<vmem>>, vector<1x256xf32>
    %96 = vector.broadcast %95 : vector<1x256xf32> to vector<32x256xf32>
    %97 = arith.addf %94, %96 : vector<32x256xf32>
    %98 = vector.extract_strided_slice %91 {offsets = [0, 0], sizes = [32, 256], strides = [1, 1]} : vector<32x512xf32> to vector<32x256xf32>
    %99 = vector.extract_strided_slice %91 {offsets = [0, 256], sizes = [32, 256], strides = [1, 1]} : vector<32x512xf32> to vector<32x256xf32>
    %100 = arith.truncf %98 : vector<32x256xf32> to vector<32x256xbf16>
    %101 = arith.truncf %99 : vector<32x256xf32> to vector<32x256xbf16>
    %102 = arith.truncf %97 : vector<32x256xf32> to vector<32x256xbf16>
    %103 = vector.extract_strided_slice %100 {offsets = [0, 0], sizes = [32, 128], strides = [1, 1]} : vector<32x256xbf16> to vector<32x128xbf16>
    %104 = vector.shape_cast %103 : vector<32x128xbf16> to vector<2x16x128xbf16>
    %105 = vector.extract_strided_slice %101 {offsets = [0, 0], sizes = [32, 128], strides = [1, 1]} : vector<32x256xbf16> to vector<32x128xbf16>
    %106 = vector.shape_cast %105 : vector<32x128xbf16> to vector<2x16x128xbf16>
    %107 = vector.extract_strided_slice %102 {offsets = [0, 0], sizes = [32, 128], strides = [1, 1]} : vector<32x256xbf16> to vector<32x128xbf16>
    %108 = vector.shape_cast %107 : vector<32x128xbf16> to vector<2x16x128xbf16>
    "tpu.trace_start"() <{level = 10 : i32, message = "bqd,bkd->bqk"}> : () -> ()
    %cst_41 = arith.constant dense<0.000000e+00> : vector<2x16x16xf32>
    %109 = tpu.matmul %104, %106, %cst_41 {dimension_numbers = #tpu.dot_dimension_numbers<[2], [2], [1], [1], [0, 0, 0, 1, 1, 1], [0], [0]>} : vector<2x16x128xbf16>, vector<2x16x128xbf16>, vector<2x16x16xf32> -> vector<2x16x16xf32>
    "tpu.trace_stop"() : () -> ()
    %cst_42 = arith.constant dense<0xFF800000> : vector<2x16xf32>
    %110 = vector.multi_reduction <maximumf>, %109, %cst_42 [2] : vector<2x16x16xf32> to vector<2x16xf32>
    %111 = vector.shape_cast %110 : vector<2x16xf32> to vector<2x16x1xf32>
    %112 = vector.broadcast %111 : vector<2x16x1xf32> to vector<2x16x16xf32>
    %113 = arith.subf %109, %112 : vector<2x16x16xf32>
    %114 = math.exp %113 : vector<2x16x16xf32>
    %cst_43 = arith.constant dense<0.000000e+00> : vector<2x16xf32>
    %115 = vector.multi_reduction <add>, %114, %cst_43 [2] : vector<2x16x16xf32> to vector<2x16xf32>
    %116 = vector.shape_cast %115 : vector<2x16xf32> to vector<2x16x1xf32>
    %117 = arith.truncf %114 : vector<2x16x16xf32> to vector<2x16x16xbf16>
    "tpu.trace_start"() <{level = 10 : i32, message = "bqk,bkd->bqd"}> : () -> ()
    %cst_44 = arith.constant dense<0.000000e+00> : vector<2x16x128xf32>
    %118 = tpu.matmul %117, %108, %cst_44 {dimension_numbers = #tpu.dot_dimension_numbers<[2], [1], [1], [2], [0, 0, 0, 1, 1, 2], [0], [0]>} : vector<2x16x16xbf16>, vector<2x16x128xbf16>, vector<2x16x128xf32> -> vector<2x16x128xf32>
    "tpu.trace_stop"() : () -> ()
    %119 = tpu.reciprocal %116 {approx = true} : vector<2x16x1xf32> -> vector<2x16x1xf32>
    %120 = vector.broadcast %119 : vector<2x16x1xf32> to vector<2x16x128xf32>
    %121 = arith.mulf %118, %120 : vector<2x16x128xf32>
    %122 = vector.shape_cast %121 : vector<2x16x128xf32> to vector<32x128xf32>
    %123 = vector.extract_strided_slice %100 {offsets = [0, 128], sizes = [32, 128], strides = [1, 1]} : vector<32x256xbf16> to vector<32x128xbf16>
    %124 = vector.shape_cast %123 : vector<32x128xbf16> to vector<2x16x128xbf16>
    %125 = vector.extract_strided_slice %101 {offsets = [0, 128], sizes = [32, 128], strides = [1, 1]} : vector<32x256xbf16> to vector<32x128xbf16>
    %126 = vector.shape_cast %125 : vector<32x128xbf16> to vector<2x16x128xbf16>
    %127 = vector.extract_strided_slice %102 {offsets = [0, 128], sizes = [32, 128], strides = [1, 1]} : vector<32x256xbf16> to vector<32x128xbf16>
    %128 = vector.shape_cast %127 : vector<32x128xbf16> to vector<2x16x128xbf16>
    "tpu.trace_start"() <{level = 10 : i32, message = "bqd,bkd->bqk"}> : () -> ()
    %cst_45 = arith.constant dense<0.000000e+00> : vector<2x16x16xf32>
    %129 = tpu.matmul %124, %126, %cst_45 {dimension_numbers = #tpu.dot_dimension_numbers<[2], [2], [1], [1], [0, 0, 0, 1, 1, 1], [0], [0]>} : vector<2x16x128xbf16>, vector<2x16x128xbf16>, vector<2x16x16xf32> -> vector<2x16x16xf32>
    "tpu.trace_stop"() : () -> ()
    %cst_46 = arith.constant dense<0xFF800000> : vector<2x16xf32>
    %130 = vector.multi_reduction <maximumf>, %129, %cst_46 [2] : vector<2x16x16xf32> to vector<2x16xf32>
    %131 = vector.shape_cast %130 : vector<2x16xf32> to vector<2x16x1xf32>
    %132 = vector.broadcast %131 : vector<2x16x1xf32> to vector<2x16x16xf32>
    %133 = arith.subf %129, %132 : vector<2x16x16xf32>
    %134 = math.exp %133 : vector<2x16x16xf32>
    %cst_47 = arith.constant dense<0.000000e+00> : vector<2x16xf32>
    %135 = vector.multi_reduction <add>, %134, %cst_47 [2] : vector<2x16x16xf32> to vector<2x16xf32>
    %136 = vector.shape_cast %135 : vector<2x16xf32> to vector<2x16x1xf32>
    %137 = arith.truncf %134 : vector<2x16x16xf32> to vector<2x16x16xbf16>
    "tpu.trace_start"() <{level = 10 : i32, message = "bqk,bkd->bqd"}> : () -> ()
    %cst_48 = arith.constant dense<0.000000e+00> : vector<2x16x128xf32>
    %138 = tpu.matmul %137, %128, %cst_48 {dimension_numbers = #tpu.dot_dimension_numbers<[2], [1], [1], [2], [0, 0, 0, 1, 1, 2], [0], [0]>} : vector<2x16x16xbf16>, vector<2x16x128xbf16>, vector<2x16x128xf32> -> vector<2x16x128xf32>
    "tpu.trace_stop"() : () -> ()
    %139 = tpu.reciprocal %136 {approx = true} : vector<2x16x1xf32> -> vector<2x16x1xf32>
    %140 = vector.broadcast %139 : vector<2x16x1xf32> to vector<2x16x128xf32>
    %141 = arith.mulf %138, %140 : vector<2x16x128xf32>
    %142 = vector.shape_cast %141 : vector<2x16x128xf32> to vector<32x128xf32>
    %143 = tpu.concatenate %122, %142 in 1 : vector<32x128xf32>, vector<32x128xf32> -> vector<32x256xf32>
    %144 = arith.truncf %143 : vector<32x256xf32> to vector<32x256xbf16>
    %c0_49 = arith.constant 0 : index
    %c0_50 = arith.constant 0 : index
    %145 = vector.load %arg13[%c0_49, %c0_50] : memref<256x256xbf16, #tpu.memory_space<vmem>>, vector<256x256xbf16>
    %cst_51 = arith.constant dense<0.000000e+00> : vector<32x256xf32>
    %146 = tpu.matmul %144, %145, %cst_51 {dimension_numbers = #tpu.dot_dimension_numbers<[1], [0], [0], [1], [0, 0, 1, 1], [], []>} : vector<32x256xbf16>, vector<256x256xbf16>, vector<32x256xf32> -> vector<32x256xf32>
    %c0_52 = arith.constant 0 : index
    %c0_53 = arith.constant 0 : index
    %147 = vector.load %arg14[%c0_52, %c0_53] : memref<1x256xf32, #tpu.memory_space<vmem>>, vector<1x256xf32>
    %148 = vector.broadcast %147 : vector<1x256xf32> to vector<32x256xf32>
    %149 = arith.addf %146, %148 : vector<32x256xf32>
    %150 = arith.addf %85, %149 : vector<32x256xf32>
    %c0_54 = arith.constant 0 : index
    %c0_55 = arith.constant 0 : index
    %151 = vector.load %arg15[%c0_54, %c0_55] : memref<1x256xf32, #tpu.memory_space<vmem>>, vector<1x256xf32>
    %c0_56 = arith.constant 0 : index
    %c0_57 = arith.constant 0 : index
    %152 = vector.load %arg16[%c0_56, %c0_57] : memref<1x256xf32, #tpu.memory_space<vmem>>, vector<1x256xf32>
    %cst_58 = arith.constant dense<0.000000e+00> : vector<32xf32>
    %153 = vector.multi_reduction <add>, %150, %cst_58 [1] : vector<32x256xf32> to vector<32xf32>
    %154 = vector.shape_cast %153 : vector<32xf32> to vector<32x1xf32>
    %cst_59 = arith.constant 2.560000e+02 : f32
    %155 = vector.broadcast %cst_59 : f32 to vector<32x1xf32>
    %156 = arith.divf %154, %155 : vector<32x1xf32>
    %157 = vector.broadcast %156 : vector<32x1xf32> to vector<32x256xf32>
    %158 = arith.subf %150, %157 : vector<32x256xf32>
    %159 = arith.mulf %158, %158 : vector<32x256xf32>
    %cst_60 = arith.constant dense<0.000000e+00> : vector<32xf32>
    %160 = vector.multi_reduction <add>, %159, %cst_60 [1] : vector<32x256xf32> to vector<32xf32>
    %161 = vector.shape_cast %160 : vector<32xf32> to vector<32x1xf32>
    %cst_61 = arith.constant 2.560000e+02 : f32
    %162 = vector.broadcast %cst_61 : f32 to vector<32x1xf32>
    %163 = arith.divf %161, %162 : vector<32x1xf32>
    %cst_62 = arith.constant 9.99999997E-7 : f32
    %164 = vector.broadcast %cst_62 : f32 to vector<32x1xf32>
    %165 = arith.addf %163, %164 : vector<32x1xf32>
    %166 = math.rsqrt %165 : vector<32x1xf32>
    %167 = vector.broadcast %166 : vector<32x1xf32> to vector<32x256xf32>
    %168 = arith.mulf %158, %167 : vector<32x256xf32>
    %169 = vector.broadcast %151 : vector<1x256xf32> to vector<32x256xf32>
    %170 = arith.mulf %168, %169 : vector<32x256xf32>
    %171 = vector.broadcast %152 : vector<1x256xf32> to vector<32x256xf32>
    %172 = arith.addf %170, %171 : vector<32x256xf32>
    %173 = arith.truncf %172 : vector<32x256xf32> to vector<32x256xbf16>
    %c0_63 = arith.constant 0 : index
    %c0_64 = arith.constant 0 : index
    %174 = vector.load %arg17[%c0_63, %c0_64] : memref<256x512xbf16, #tpu.memory_space<vmem>>, vector<256x512xbf16>
    %cst_65 = arith.constant dense<0.000000e+00> : vector<32x512xf32>
    %175 = tpu.matmul %173, %174, %cst_65 {dimension_numbers = #tpu.dot_dimension_numbers<[1], [0], [0], [1], [0, 0, 1, 1], [], []>} : vector<32x256xbf16>, vector<256x512xbf16>, vector<32x512xf32> -> vector<32x512xf32>
    %c0_66 = arith.constant 0 : index
    %c0_67 = arith.constant 0 : index
    %176 = vector.load %arg18[%c0_66, %c0_67] : memref<1x512xf32, #tpu.memory_space<vmem>>, vector<1x512xf32>
    %177 = vector.broadcast %176 : vector<1x512xf32> to vector<32x512xf32>
    %178 = arith.addf %175, %177 : vector<32x512xf32>
    %cst_68 = arith.constant 0.000000e+00 : f32
    %179 = vector.broadcast %cst_68 : f32 to vector<32x512xf32>
    %180 = arith.maximumf %178, %179 : vector<32x512xf32>
    %181 = arith.truncf %180 : vector<32x512xf32> to vector<32x512xbf16>
    %c0_69 = arith.constant 0 : index
    %c0_70 = arith.constant 0 : index
    %182 = vector.load %arg19[%c0_69, %c0_70] : memref<512x256xbf16, #tpu.memory_space<vmem>>, vector<512x256xbf16>
    %cst_71 = arith.constant dense<0.000000e+00> : vector<32x256xf32>
    %183 = tpu.matmul %181, %182, %cst_71 {dimension_numbers = #tpu.dot_dimension_numbers<[1], [0], [0], [1], [0, 0, 1, 1], [], []>} : vector<32x512xbf16>, vector<512x256xbf16>, vector<32x256xf32> -> vector<32x256xf32>
    %c0_72 = arith.constant 0 : index
    %c0_73 = arith.constant 0 : index
    %184 = vector.load %arg20[%c0_72, %c0_73] : memref<1x256xf32, #tpu.memory_space<vmem>>, vector<1x256xf32>
    %185 = vector.broadcast %184 : vector<1x256xf32> to vector<32x256xf32>
    %186 = arith.addf %183, %185 : vector<32x256xf32>
    %187 = arith.addf %172, %186 : vector<32x256xf32>
    %c0_74 = arith.constant 0 : index
    %c0_75 = arith.constant 0 : index
    %188 = vector.load %arg21[%c0_74, %c0_75] : memref<1x256xf32, #tpu.memory_space<vmem>>, vector<1x256xf32>
    %c0_76 = arith.constant 0 : index
    %c0_77 = arith.constant 0 : index
    %189 = vector.load %arg22[%c0_76, %c0_77] : memref<1x256xf32, #tpu.memory_space<vmem>>, vector<1x256xf32>
    %cst_78 = arith.constant dense<0.000000e+00> : vector<32xf32>
    %190 = vector.multi_reduction <add>, %187, %cst_78 [1] : vector<32x256xf32> to vector<32xf32>
    %191 = vector.shape_cast %190 : vector<32xf32> to vector<32x1xf32>
    %cst_79 = arith.constant 2.560000e+02 : f32
    %192 = vector.broadcast %cst_79 : f32 to vector<32x1xf32>
    %193 = arith.divf %191, %192 : vector<32x1xf32>
    %194 = vector.broadcast %193 : vector<32x1xf32> to vector<32x256xf32>
    %195 = arith.subf %187, %194 : vector<32x256xf32>
    %196 = arith.mulf %195, %195 : vector<32x256xf32>
    %cst_80 = arith.constant dense<0.000000e+00> : vector<32xf32>
    %197 = vector.multi_reduction <add>, %196, %cst_80 [1] : vector<32x256xf32> to vector<32xf32>
    %198 = vector.shape_cast %197 : vector<32xf32> to vector<32x1xf32>
    %cst_81 = arith.constant 2.560000e+02 : f32
    %199 = vector.broadcast %cst_81 : f32 to vector<32x1xf32>
    %200 = arith.divf %198, %199 : vector<32x1xf32>
    %cst_82 = arith.constant 9.99999997E-7 : f32
    %201 = vector.broadcast %cst_82 : f32 to vector<32x1xf32>
    %202 = arith.addf %200, %201 : vector<32x1xf32>
    %203 = math.rsqrt %202 : vector<32x1xf32>
    %204 = vector.broadcast %203 : vector<32x1xf32> to vector<32x256xf32>
    %205 = arith.mulf %195, %204 : vector<32x256xf32>
    %206 = vector.broadcast %188 : vector<1x256xf32> to vector<32x256xf32>
    %207 = arith.mulf %205, %206 : vector<32x256xf32>
    %208 = vector.broadcast %189 : vector<1x256xf32> to vector<32x256xf32>
    %209 = arith.addf %207, %208 : vector<32x256xf32>
    %210 = vector.shape_cast %209 : vector<32x256xf32> to vector<2x16x256xf32>
    %c0_83 = arith.constant 0 : index
    %c0_84 = arith.constant 0 : index
    %c0_85 = arith.constant 0 : index
    %211 = vector.load %arg23[%c0_83, %c0_84, %c0_85] : memref<2x16x256xf32, #tpu.memory_space<vmem>>, vector<2x16x256xf32>
    tpu.vector_store %arg23[%c0_83, %c0_84, %c0_85], %210 {strides = array<i32>} : memref<2x16x256xf32, #tpu.memory_space<vmem>>, vector<2x16x256xf32>,
    return
  }
  func.func @transform_0(%arg0: i32) -> (i32, i32, i32) {
    %c0_i32 = arith.constant 0 : i32
    %c0_i32_0 = arith.constant 0 : i32
    %c0_i32_1 = arith.constant 0 : i32
    return %arg0, %c0_i32, %c0_i32_0 : i32, i32, i32
  }
  func.func @transform_1(%arg0: i32) -> (i32, i32, i32) {
    %c0_i32 = arith.constant 0 : i32
    %c0_i32_0 = arith.constant 0 : i32
    %c0_i32_1 = arith.constant 0 : i32
    return %arg0, %c0_i32, %c0_i32_0 : i32, i32, i32
  }
  func.func @transform_2(%arg0: i32) -> (i32, i32) {
    %c0_i32 = arith.constant 0 : i32
    %c0_i32_0 = arith.constant 0 : i32
    %c0_i32_1 = arith.constant 0 : i32
    return %c0_i32, %c0_i32_0 : i32, i32
  }
  func.func @transform_3(%arg0: i32) -> (i32, i32) {
    %c0_i32 = arith.constant 0 : i32
    %c0_i32_0 = arith.constant 0 : i32
    %c0_i32_1 = arith.constant 0 : i32
    return %c0_i32, %c0_i32_0 : i32, i32
  }
  func.func @transform_4(%arg0: i32) -> (i32, i32) {
    %c0_i32 = arith.constant 0 : i32
    %c0_i32_0 = arith.constant 0 : i32
    %c0_i32_1 = arith.constant 0 : i32
    return %c0_i32, %c0_i32_0 : i32, i32
  }
  func.func @transform_5(%arg0: i32) -> (i32, i32) {
    %c0_i32 = arith.constant 0 : i32
    %c0_i32_0 = arith.constant 0 : i32
    %c0_i32_1 = arith.constant 0 : i32
    return %c0_i32, %c0_i32_0 : i32, i32
  }
  func.func @transform_6(%arg0: i32) -> (i32, i32) {
    %c0_i32 = arith.constant 0 : i32
    %c0_i32_0 = arith.constant 0 : i32
    %c0_i32_1 = arith.constant 0 : i32
    return %c0_i32, %c0_i32_0 : i32, i32
  }
  func.func @transform_7(%arg0: i32) -> (i32, i32) {
    %c0_i32 = arith.constant 0 : i32
    %c0_i32_0 = arith.constant 0 : i32
    %c0_i32_1 = arith.constant 0 : i32
    return %c0_i32, %c0_i32_0 : i32, i32
  }
  func.func @transform_8(%arg0: i32) -> (i32, i32) {
    %c0_i32 = arith.constant 0 : i32
    %c0_i32_0 = arith.constant 0 : i32
    %c0_i32_1 = arith.constant 0 : i32
    return %c0_i32, %c0_i32_0 : i32, i32
  }
  func.func @transform_9(%arg0: i32) -> (i32, i32) {
    %c0_i32 = arith.constant 0 : i32
    %c0_i32_0 = arith.constant 0 : i32
    %c0_i32_1 = arith.constant 0 : i32
    return %c0_i32, %c0_i32_0 : i32, i32
  }
  func.func @transform_10(%arg0: i32) -> (i32, i32) {
    %c0_i32 = arith.constant 0 : i32
    %c0_i32_0 = arith.constant 0 : i32
    %c0_i32_1 = arith.constant 0 : i32
    return %c0_i32, %c0_i32_0 : i32, i32
  }
  func.func @transform_11(%arg0: i32) -> (i32, i32) {
    %c0_i32 = arith.constant 0 : i32
    %c0_i32_0 = arith.constant 0 : i32
    %c0_i32_1 = arith.constant 0 : i32
    return %c0_i32, %c0_i32_0 : i32, i32
  }
  func.func @transform_12(%arg0: i32) -> (i32, i32) {
    %c0_i32 = arith.constant 0 : i32
    %c0_i32_0 = arith.constant 0 : i32
    %c0_i32_1 = arith.constant 0 : i32
    return %c0_i32, %c0_i32_0 : i32, i32
  }
  func.func @transform_13(%arg0: i32) -> (i32, i32) {
    %c0_i32 = arith.constant 0 : i32
    %c0_i32_0 = arith.constant 0 : i32
    %c0_i32_1 = arith.constant 0 : i32
    return %c0_i32, %c0_i32_0 : i32, i32
  }
  func.func @transform_14(%arg0: i32) -> (i32, i32) {
    %c0_i32 = arith.constant 0 : i32
    %c0_i32_0 = arith.constant 0 : i32
    %c0_i32_1 = arith.constant 0 : i32
    return %c0_i32, %c0_i32_0 : i32, i32
  }
  func.func @transform_15(%arg0: i32) -> (i32, i32) {
    %c0_i32 = arith.constant 0 : i32
    %c0_i32_0 = arith.constant 0 : i32
    %c0_i32_1 = arith.constant 0 : i32
    return %c0_i32, %c0_i32_0 : i32, i32
  }
  func.func @transform_16(%arg0: i32) -> (i32, i32) {
    %c0_i32 = arith.constant 0 : i32
    %c0_i32_0 = arith.constant 0 : i32
    %c0_i32_1 = arith.constant 0 : i32
    return %c0_i32, %c0_i32_0 : i32, i32
  }
  func.func @transform_17(%arg0: i32) -> (i32, i32) {
    %c0_i32 = arith.constant 0 : i32
    %c0_i32_0 = arith.constant 0 : i32
    %c0_i32_1 = arith.constant 0 : i32
    return %c0_i32, %c0_i32_0 : i32, i32
  }
  func.func @transform_18(%arg0: i32) -> (i32, i32) {
    %c0_i32 = arith.constant 0 : i32
    %c0_i32_0 = arith.constant 0 : i32
    %c0_i32_1 = arith.constant 0 : i32
    return %c0_i32, %c0_i32_0 : i32, i32
  }
  func.func @transform_19(%arg0: i32) -> (i32, i32) {
    %c0_i32 = arith.constant 0 : i32
    %c0_i32_0 = arith.constant 0 : i32
    %c0_i32_1 = arith.constant 0 : i32
    return %c0_i32, %c0_i32_0 : i32, i32
  }
  func.func @transform_20(%arg0: i32) -> (i32, i32) {
    %c0_i32 = arith.constant 0 : i32
    %c0_i32_0 = arith.constant 0 : i32
    %c0_i32_1 = arith.constant 0 : i32
    return %c0_i32, %c0_i32_0 : i32, i32
  }
  func.func @transform_21(%arg0: i32) -> (i32, i32) {
    %c0_i32 = arith.constant 0 : i32
    %c0_i32_0 = arith.constant 0 : i32
    %c0_i32_1 = arith.constant 0 : i32
    return %c0_i32, %c0_i32_0 : i32, i32
  }
  func.func @transform_22(%arg0: i32) -> (i32, i32, i32) {
    %c0_i32 = arith.constant 0 : i32
    %c0_i32_0 = arith.constant 0 : i32
    %c0_i32_1 = arith.constant 0 : i32
    return %arg0, %c0_i32, %c0_i32_0 : i32, i32, i32
  }
}

module attributes {stable_mosaic.version = 11 : i64} {
  func.func @decoder_layer_kernel(%arg0: i32, %arg1: memref<2x16x256xf32, #tpu.memory_space<vmem>>, %arg2: memref<2x16x256xf32, #tpu.memory_space<vmem>>, %arg3: memref<256x768xbf16, #tpu.memory_space<vmem>>, %arg4: memref<1x768xf32, #tpu.memory_space<vmem>>, %arg5: memref<256x256xbf16, #tpu.memory_space<vmem>>, %arg6: memref<1x256xf32, #tpu.memory_space<vmem>>, %arg7: memref<1x256xf32, #tpu.memory_space<vmem>>, %arg8: memref<1x256xf32, #tpu.memory_space<vmem>>, %arg9: memref<256x512xbf16, #tpu.memory_space<vmem>>, %arg10: memref<1x512xf32, #tpu.memory_space<vmem>>, %arg11: memref<256x256xbf16, #tpu.memory_space<vmem>>, %arg12: memref<1x256xf32, #tpu.memory_space<vmem>>, %arg13: memref<256x256xbf16, #tpu.memory_space<vmem>>, %arg14: memref<1x256xf32, #tpu.memory_space<vmem>>, %arg15: memref<1x256xf32, #tpu.memory_space<vmem>>, %arg16: memref<1x256xf32, #tpu.memory_space<vmem>>, %arg17: memref<256x512xbf16, #tpu.memory_space<vmem>>, %arg18: memref<1x512xf32, #tpu.memory_space<vmem>>, %arg19: memref<512x256xbf16, #tpu.memory_space<vmem>>, %arg20: memref<1x256xf32, #tpu.memory_space<vmem>>, %arg21: memref<1x256xf32, #tpu.memory_space<vmem>>, %arg22: memref<1x256xf32, #tpu.memory_space<vmem>>, %arg23: memref<2x16x256xf32, #tpu.memory_space<vmem>>) attributes {dimension_semantics = [#tpu.dimension_semantics<parallel>], iteration_bounds = array<i64: 1>, scalar_prefetch = 0 : i64, scratch_operands = 0 : i64, tpu.core_type = #tpu.core_type<tc>, window_params = [{transform_indices = @transform_0, window_bounds = array<i64: 2, 16, 256>}, {transform_indices = @transform_1, window_bounds = array<i64: 2, 16, 256>}, {pipeline_mode = #tpu.pipeline_mode<synchronous>, transform_indices = @transform_2, window_bounds = array<i64: 256, 768>}, {pipeline_mode = #tpu.pipeline_mode<synchronous>, transform_indices = @transform_3, window_bounds = array<i64: 1, 768>}, {pipeline_mode = #tpu.pipeline_mode<synchronous>, transform_indices = @transform_4, window_bounds = array<i64: 256, 256>}, {pipeline_mode = #tpu.pipeline_mode<synchronous>, transform_indices = @transform_5, window_bounds = array<i64: 1, 256>}, {pipeline_mode = #tpu.pipeline_mode<synchronous>, transform_indices = @transform_6, window_bounds = array<i64: 1, 256>}, {pipeline_mode = #tpu.pipeline_mode<synchronous>, transform_indices = @transform_7, window_bounds = array<i64: 1, 256>}, {pipeline_mode = #tpu.pipeline_mode<synchronous>, transform_indices = @transform_8, window_bounds = array<i64: 256, 512>}, {pipeline_mode = #tpu.pipeline_mode<synchronous>, transform_indices = @transform_9, window_bounds = array<i64: 1, 512>}, {pipeline_mode = #tpu.pipeline_mode<synchronous>, transform_indices = @transform_10, window_bounds = array<i64: 256, 256>}, {pipeline_mode = #tpu.pipeline_mode<synchronous>, transform_indices = @transform_11, window_bounds = array<i64: 1, 256>}, {pipeline_mode = #tpu.pipeline_mode<synchronous>, transform_indices = @transform_12, window_bounds = array<i64: 256, 256>}, {pipeline_mode = #tpu.pipeline_mode<synchronous>, transform_indices = @transform_13, window_bounds = array<i64: 1, 256>}, {pipeline_mode = #tpu.pipeline_mode<synchronous>, transform_indices = @transform_14, window_bounds = array<i64: 1, 256>}, {pipeline_mode = #tpu.pipeline_mode<synchronous>, transform_indices = @transform_15, window_bounds = array<i64: 1, 256>}, {pipeline_mode = #tpu.pipeline_mode<synchronous>, transform_indices = @transform_16, window_bounds = array<i64: 256, 512>}, {pipeline_mode = #tpu.pipeline_mode<synchronous>, transform_indices = @transform_17, window_bounds = array<i64: 1, 512>}, {pipeline_mode = #tpu.pipeline_mode<synchronous>, transform_indices = @transform_18, window_bounds = array<i64: 512, 256>}, {pipeline_mode = #tpu.pipeline_mode<synchronous>, transform_indices = @transform_19, window_bounds = array<i64: 1, 256>}, {pipeline_mode = #tpu.pipeline_mode<synchronous>, transform_indices = @transform_20, window_bounds = array<i64: 1, 256>}, {pipeline_mode = #tpu.pipeline_mode<synchronous>, transform_indices = @transform_21, window_bounds = array<i64: 1, 256>}, {transform_indices = @transform_22, window_bounds = array<i64: 2, 16, 256>}]} {
    %c0 = arith.constant 0 : index
    %c0_0 = arith.constant 0 : index
    %c0_1 = arith.constant 0 : index
    %0 = vector.load %arg1[%c0, %c0_0, %c0_1] : memref<2x16x256xf32, #tpu.memory_space<vmem>>, vector<2x16x256xf32>
    %1 = vector.shape_cast %0 : vector<2x16x256xf32> to vector<32x256xf32>
    %c0_2 = arith.constant 0 : index
    %c0_3 = arith.constant 0 : index
    %c0_4 = arith.constant 0 : index
    %2 = vector.load %arg2[%c0_2, %c0_3, %c0_4] : memref<2x16x256xf32, #tpu.memory_space<vmem>>, vector<2x16x256xf32>
    %3 = vector.shape_cast %2 : vector<2x16x256xf32> to vector<32x256xf32>
    %4 = arith.truncf %1 : vector<32x256xf32> to vector<32x256xbf16>
    %c0_5 = arith.constant 0 : index
    %c0_6 = arith.constant 0 : index
    %5 = vector.load %arg3[%c0_5, %c0_6] : memref<256x768xbf16, #tpu.memory_space<vmem>>, vector<256x768xbf16>
    %cst = arith.constant dense<0.000000e+00> : vector<32x768xf32>
    %6 = tpu.matmul %4, %5, %cst {dimension_numbers = #tpu.dot_dimension_numbers<[1], [0], [0], [1], [0, 0, 1, 1], [], []>} : vector<32x256xbf16>, vector<256x768xbf16>, vector<32x768xf32> -> vector<32x768xf32>
    %c0_7 = arith.constant 0 : index
    %c0_8 = arith.constant 0 : index
    %7 = vector.load %arg4[%c0_7, %c0_8] : memref<1x768xf32, #tpu.memory_space<vmem>>, vector<1x768xf32>
    %8 = vector.broadcast %7 : vector<1x768xf32> to vector<32x768xf32>
    %9 = arith.addf %6, %8 : vector<32x768xf32>
    %10 = vector.extract_strided_slice %9 {offsets = [0, 0], sizes = [32, 256], strides = [1, 1]} : vector<32x768xf32> to vector<32x256xf32>
    %11 = vector.extract_strided_slice %9 {offsets = [0, 256], sizes = [32, 256], strides = [1, 1]} : vector<32x768xf32> to vector<32x256xf32>
    %12 = vector.extract_strided_slice %9 {offsets = [0, 512], sizes = [32, 256], strides = [1, 1]} : vector<32x768xf32> to vector<32x256xf32>
    %13 = arith.truncf %10 : vector<32x256xf32> to vector<32x256xbf16>
    %14 = arith.truncf %11 : vector<32x256xf32> to vector<32x256xbf16>
    %15 = arith.truncf %12 : vector<32x256xf32> to vector<32x256xbf16>
    %16 = vector.extract_strided_slice %13 {offsets = [0, 0], sizes = [32, 128], strides = [1, 1]} : vector<32x256xbf16> to vector<32x128xbf16>
    %17 = vector.shape_cast %16 : vector<32x128xbf16> to vector<2x16x128xbf16>
    %18 = vector.extract_strided_slice %14 {offsets = [0, 0], sizes = [32, 128], strides = [1, 1]} : vector<32x256xbf16> to vector<32x128xbf16>
    %19 = vector.shape_cast %18 : vector<32x128xbf16> to vector<2x16x128xbf16>
    %20 = vector.extract_strided_slice %15 {offsets = [0, 0], sizes = [32, 128], strides = [1, 1]} : vector<32x256xbf16> to vector<32x128xbf16>
    %21 = vector.shape_cast %20 : vector<32x128xbf16> to vector<2x16x128xbf16>
    "tpu.trace_start"() <{level = 10 : i32, message = "bqd,bkd->bqk"}> : () -> ()
    %cst_9 = arith.constant dense<0.000000e+00> : vector<2x16x16xf32>
    %22 = tpu.matmul %17, %19, %cst_9 {dimension_numbers = #tpu.dot_dimension_numbers<[2], [2], [1], [1], [0, 0, 0, 1, 1, 1], [0], [0]>} : vector<2x16x128xbf16>, vector<2x16x128xbf16>, vector<2x16x16xf32> -> vector<2x16x16xf32>
    "tpu.trace_stop"() : () -> ()
    %cst_10 = arith.constant dense<0xFF800000> : vector<2x16xf32>
    %23 = vector.multi_reduction <maximumf>, %22, %cst_10 [2] : vector<2x16x16xf32> to vector<2x16xf32>
    %24 = vector.shape_cast %23 : vector<2x16xf32> to vector<2x16x1xf32>
    %25 = vector.broadcast %24 : vector<2x16x1xf32> to vector<2x16x16xf32>
    %26 = arith.subf %22, %25 : vector<2x16x16xf32>
    %27 = math.exp %26 : vector<2x16x16xf32>
    %cst_11 = arith.constant dense<0.000000e+00> : vector<2x16xf32>
    %28 = vector.multi_reduction <add>, %27, %cst_11 [2] : vector<2x16x16xf32> to vector<2x16xf32>
    %29 = vector.shape_cast %28 : vector<2x16xf32> to vector<2x16x1xf32>
    %30 = arith.truncf %27 : vector<2x16x16xf32> to vector<2x16x16xbf16>
    "tpu.trace_start"() <{level = 10 : i32, message = "bqk,bkd->bqd"}> : () -> ()
    %cst_12 = arith.constant dense<0.000000e+00> : vector<2x16x128xf32>
    %31 = tpu.matmul %30, %21, %cst_12 {dimension_numbers = #tpu.dot_dimension_numbers<[2], [1], [1], [2], [0, 0, 0, 1, 1, 2], [0], [0]>} : vector<2x16x16xbf16>, vector<2x16x128xbf16>, vector<2x16x128xf32> -> vector<2x16x128xf32>
    "tpu.trace_stop"() : () -> ()
    %32 = tpu.reciprocal %29 {approx = true} : vector<2x16x1xf32> -> vector<2x16x1xf32>
    %33 = vector.broadcast %32 : vector<2x16x1xf32> to vector<2x16x128xf32>
    %34 = arith.mulf %31, %33 : vector<2x16x128xf32>
    %35 = vector.shape_cast %34 : vector<2x16x128xf32> to vector<32x128xf32>
    %36 = vector.extract_strided_slice %13 {offsets = [0, 128], sizes = [32, 128], strides = [1, 1]} : vector<32x256xbf16> to vector<32x128xbf16>
    %37 = vector.shape_cast %36 : vector<32x128xbf16> to vector<2x16x128xbf16>
    %38 = vector.extract_strided_slice %14 {offsets = [0, 128], sizes = [32, 128], strides = [1, 1]} : vector<32x256xbf16> to vector<32x128xbf16>
    %39 = vector.shape_cast %38 : vector<32x128xbf16> to vector<2x16x128xbf16>
    %40 = vector.extract_strided_slice %15 {offsets = [0, 128], sizes = [32, 128], strides = [1, 1]} : vector<32x256xbf16> to vector<32x128xbf16>
    %41 = vector.shape_cast %40 : vector<32x128xbf16> to vector<2x16x128xbf16>
    "tpu.trace_start"() <{level = 10 : i32, message = "bqd,bkd->bqk"}> : () -> ()
    %cst_13 = arith.constant dense<0.000000e+00> : vector<2x16x16xf32>
    %42 = tpu.matmul %37, %39, %cst_13 {dimension_numbers = #tpu.dot_dimension_numbers<[2], [2], [1], [1], [0, 0, 0, 1, 1, 1], [0], [0]>} : vector<2x16x128xbf16>, vector<2x16x128xbf16>, vector<2x16x16xf32> -> vector<2x16x16xf32>
    "tpu.trace_stop"() : () -> ()
    %cst_14 = arith.constant dense<0xFF800000> : vector<2x16xf32>
    %43 = vector.multi_reduction <maximumf>, %42, %cst_14 [2] : vector<2x16x16xf32> to vector<2x16xf32>
    %44 = vector.shape_cast %43 : vector<2x16xf32> to vector<2x16x1xf32>
    %45 = vector.broadcast %44 : vector<2x16x1xf32> to vector<2x16x16xf32>
    %46 = arith.subf %42, %45 : vector<2x16x16xf32>
    %47 = math.exp %46 : vector<2x16x16xf32>
    %cst_15 = arith.constant dense<0.000000e+00> : vector<2x16xf32>
    %48 = vector.multi_reduction <add>, %47, %cst_15 [2] : vector<2x16x16xf32> to vector<2x16xf32>
    %49 = vector.shape_cast %48 : vector<2x16xf32> to vector<2x16x1xf32>
    %50 = arith.truncf %47 : vector<2x16x16xf32> to vector<2x16x16xbf16>
    "tpu.trace_start"() <{level = 10 : i32, message = "bqk,bkd->bqd"}> : () -> ()
    %cst_16 = arith.constant dense<0.000000e+00> : vector<2x16x128xf32>
    %51 = tpu.matmul %50, %41, %cst_16 {dimension_numbers = #tpu.dot_dimension_numbers<[2], [1], [1], [2], [0, 0, 0, 1, 1, 2], [0], [0]>} : vector<2x16x16xbf16>, vector<2x16x128xbf16>, vector<2x16x128xf32> -> vector<2x16x128xf32>
    "tpu.trace_stop"() : () -> ()
    %52 = tpu.reciprocal %49 {approx = true} : vector<2x16x1xf32> -> vector<2x16x1xf32>
    %53 = vector.broadcast %52 : vector<2x16x1xf32> to vector<2x16x128xf32>
    %54 = arith.mulf %51, %53 : vector<2x16x128xf32>
    %55 = vector.shape_cast %54 : vector<2x16x128xf32> to vector<32x128xf32>
    %56 = tpu.concatenate %35, %55 in 1 : vector<32x128xf32>, vector<32x128xf32> -> vector<32x256xf32>
    %57 = arith.truncf %56 : vector<32x256xf32> to vector<32x256xbf16>
    %c0_17 = arith.constant 0 : index
    %c0_18 = arith.constant 0 : index
    %58 = vector.load %arg5[%c0_17, %c0_18] : memref<256x256xbf16, #tpu.memory_space<vmem>>, vector<256x256xbf16>
    %cst_19 = arith.constant dense<0.000000e+00> : vector<32x256xf32>
    %59 = tpu.matmul %57, %58, %cst_19 {dimension_numbers = #tpu.dot_dimension_numbers<[1], [0], [0], [1], [0, 0, 1, 1], [], []>} : vector<32x256xbf16>, vector<256x256xbf16>, vector<32x256xf32> -> vector<32x256xf32>
    %c0_20 = arith.constant 0 : index
    %c0_21 = arith.constant 0 : index
    %60 = vector.load %arg6[%c0_20, %c0_21] : memref<1x256xf32, #tpu.memory_space<vmem>>, vector<1x256xf32>
    %61 = vector.broadcast %60 : vector<1x256xf32> to vector<32x256xf32>
    %62 = arith.addf %59, %61 : vector<32x256xf32>
    %63 = arith.addf %1, %62 : vector<32x256xf32>
    %c0_22 = arith.constant 0 : index
    %c0_23 = arith.constant 0 : index
    %64 = vector.load %arg7[%c0_22, %c0_23] : memref<1x256xf32, #tpu.memory_space<vmem>>, vector<1x256xf32>
    %c0_24 = arith.constant 0 : index
    %c0_25 = arith.constant 0 : index
    %65 = vector.load %arg8[%c0_24, %c0_25] : memref<1x256xf32, #tpu.memory_space<vmem>>, vector<1x256xf32>
    %cst_26 = arith.constant dense<0.000000e+00> : vector<32xf32>
    %66 = vector.multi_reduction <add>, %63, %cst_26 [1] : vector<32x256xf32> to vector<32xf32>
    %67 = vector.shape_cast %66 : vector<32xf32> to vector<32x1xf32>
    %cst_27 = arith.constant 2.560000e+02 : f32
    %68 = vector.broadcast %cst_27 : f32 to vector<32x1xf32>
    %69 = arith.divf %67, %68 : vector<32x1xf32>
    %70 = vector.broadcast %69 : vector<32x1xf32> to vector<32x256xf32>
    %71 = arith.subf %63, %70 : vector<32x256xf32>
    %72 = arith.mulf %71, %71 : vector<32x256xf32>
    %cst_28 = arith.constant dense<0.000000e+00> : vector<32xf32>
    %73 = vector.multi_reduction <add>, %72, %cst_28 [1] : vector<32x256xf32> to vector<32xf32>
    %74 = vector.shape_cast %73 : vector<32xf32> to vector<32x1xf32>
    %cst_29 = arith.constant 2.560000e+02 : f32
    %75 = vector.broadcast %cst_29 : f32 to vector<32x1xf32>
    %76 = arith.divf %74, %75 : vector<32x1xf32>
    %cst_30 = arith.constant 9.99999997E-7 : f32
    %77 = vector.broadcast %cst_30 : f32 to vector<32x1xf32>
    %78 = arith.addf %76, %77 : vector<32x1xf32>
    %79 = math.rsqrt %78 : vector<32x1xf32>
    %80 = vector.broadcast %79 : vector<32x1xf32> to vector<32x256xf32>
    %81 = arith.mulf %71, %80 : vector<32x256xf32>
    %82 = vector.broadcast %64 : vector<1x256xf32> to vector<32x256xf32>
    %83 = arith.mulf %81, %82 : vector<32x256xf32>
    %84 = vector.broadcast %65 : vector<1x256xf32> to vector<32x256xf32>
    %85 = arith.addf %83, %84 : vector<32x256xf32>
    %86 = arith.truncf %3 : vector<32x256xf32> to vector<32x256xbf16>
    %c0_31 = arith.constant 0 : index
    %c0_32 = arith.constant 0 : index
    %87 = vector.load %arg9[%c0_31, %c0_32] : memref<256x512xbf16, #tpu.memory_space<vmem>>, vector<256x512xbf16>
    %cst_33 = arith.constant dense<0.000000e+00> : vector<32x512xf32>
    %88 = tpu.matmul %86, %87, %cst_33 {dimension_numbers = #tpu.dot_dimension_numbers<[1], [0], [0], [1], [0, 0, 1, 1], [], []>} : vector<32x256xbf16>, vector<256x512xbf16>, vector<32x512xf32> -> vector<32x512xf32>
    %c0_34 = arith.constant 0 : index
    %c0_35 = arith.constant 0 : index
    %89 = vector.load %arg10[%c0_34, %c0_35] : memref<1x512xf32, #tpu.memory_space<vmem>>, vector<1x512xf32>
    %90 = vector.broadcast %89 : vector<1x512xf32> to vector<32x512xf32>
    %91 = arith.addf %88, %90 : vector<32x512xf32>
    %92 = arith.truncf %85 : vector<32x256xf32> to vector<32x256xbf16>
    %c0_36 = arith.constant 0 : index
    %c0_37 = arith.constant 0 : index
    %93 = vector.load %arg11[%c0_36, %c0_37] : memref<256x256xbf16, #tpu.memory_space<vmem>>, vector<256x256xbf16>
    %cst_38 = arith.constant dense<0.000000e+00> : vector<32x256xf32>
    %94 = tpu.matmul %92, %93, %cst_38 {dimension_numbers = #tpu.dot_dimension_numbers<[1], [0], [0], [1], [0, 0, 1, 1], [], []>} : vector<32x256xbf16>, vector<256x256xbf16>, vector<32x256xf32> -> vector<32x256xf32>
    %c0_39 = arith.constant 0 : index
    %c0_40 = arith.constant 0 : index
    %95 = vector.load %arg12[%c0_39, %c0_40] : memref<1x256xf32, #tpu.memory_space<vmem>>, vector<1x256xf32>
    %96 = vector.broadcast %95 : vector<1x256xf32> to vector<32x256xf32>
    %97 = arith.addf %94, %96 : vector<32x256xf32>
    %98 = vector.extract_strided_slice %91 {offsets = [0, 0], sizes = [32, 256], strides = [1, 1]} : vector<32x512xf32> to vector<32x256xf32>
    %99 = vector.extract_strided_slice %91 {offsets = [0, 256], sizes = [32, 256], strides = [1, 1]} : vector<32x512xf32> to vector<32x256xf32>
    %100 = arith.truncf %98 : vector<32x256xf32> to vector<32x256xbf16>
    %101 = arith.truncf %99 : vector<32x256xf32> to vector<32x256xbf16>
    %102 = arith.truncf %97 : vector<32x256xf32> to vector<32x256xbf16>
    %103 = vector.extract_strided_slice %100 {offsets = [0, 0], sizes = [32, 128], strides = [1, 1]} : vector<32x256xbf16> to vector<32x128xbf16>
    %104 = vector.shape_cast %103 : vector<32x128xbf16> to vector<2x16x128xbf16>
    %105 = vector.extract_strided_slice %101 {offsets = [0, 0], sizes = [32, 128], strides = [1, 1]} : vector<32x256xbf16> to vector<32x128xbf16>
    %106 = vector.shape_cast %105 : vector<32x128xbf16> to vector<2x16x128xbf16>
    %107 = vector.extract_strided_slice %102 {offsets = [0, 0], sizes = [32, 128], strides = [1, 1]} : vector<32x256xbf16> to vector<32x128xbf16>
    %108 = vector.shape_cast %107 : vector<32x128xbf16> to vector<2x16x128xbf16>
    "tpu.trace_start"() <{level = 10 : i32, message = "bqd,bkd->bqk"}> : () -> ()
    %cst_41 = arith.constant dense<0.000000e+00> : vector<2x16x16xf32>
    %109 = tpu.matmul %104, %106, %cst_41 {dimension_numbers = #tpu.dot_dimension_numbers<[2], [2], [1], [1], [0, 0, 0, 1, 1, 1], [0], [0]>} : vector<2x16x128xbf16>, vector<2x16x128xbf16>, vector<2x16x16xf32> -> vector<2x16x16xf32>
    "tpu.trace_stop"() : () -> ()
    %cst_42 = arith.constant dense<0xFF800000> : vector<2x16xf32>
    %110 = vector.multi_reduction <maximumf>, %109, %cst_42 [2] : vector<2x16x16xf32> to vector<2x16xf32>
    %111 = vector.shape_cast %110 : vector<2x16xf32> to vector<2x16x1xf32>
    %112 = vector.broadcast %111 : vector<2x16x1xf32> to vector<2x16x16xf32>
    %113 = arith.subf %109, %112 : vector<2x16x16xf32>
    %114 = math.exp %113 : vector<2x16x16xf32>
    %cst_43 = arith.constant dense<0.000000e+00> : vector<2x16xf32>
    %115 = vector.multi_reduction <add>, %114, %cst_43 [2] : vector<2x16x16xf32> to vector<2x16xf32>
    %116 = vector.shape_cast %115 : vector<2x16xf32> to vector<2x16x1xf32>
    %117 = arith.truncf %114 : vector<2x16x16xf32> to vector<2x16x16xbf16>
    "tpu.trace_start"() <{level = 10 : i32, message = "bqk,bkd->bqd"}> : () -> ()
    %cst_44 = arith.constant dense<0.000000e+00> : vector<2x16x128xf32>
    %118 = tpu.matmul %117, %108, %cst_44 {dimension_numbers = #tpu.dot_dimension_numbers<[2], [1], [1], [2], [0, 0, 0, 1, 1, 2], [0], [0]>} : vector<2x16x16xbf16>, vector<2x16x128xbf16>, vector<2x16x128xf32> -> vector<2x16x128xf32>
    "tpu.trace_stop"() : () -> ()
    %119 = tpu.reciprocal %116 {approx = true} : vector<2x16x1xf32> -> vector<2x16x1xf32>
    %120 = vector.broadcast %119 : vector<2x16x1xf32> to vector<2x16x128xf32>
    %121 = arith.mulf %118, %120 : vector<2x16x128xf32>
    %122 = vector.shape_cast %121 : vector<2x16x128xf32> to vector<32x128xf32>
    %123 = vector.extract_strided_slice %100 {offsets = [0, 128], sizes = [32, 128], strides = [1, 1]} : vector<32x256xbf16> to vector<32x128xbf16>
    %124 = vector.shape_cast %123 : vector<32x128xbf16> to vector<2x16x128xbf16>
    %125 = vector.extract_strided_slice %101 {offsets = [0, 128], sizes = [32, 128], strides = [1, 1]} : vector<32x256xbf16> to vector<32x128xbf16>
    %126 = vector.shape_cast %125 : vector<32x128xbf16> to vector<2x16x128xbf16>
    %127 = vector.extract_strided_slice %102 {offsets = [0, 128], sizes = [32, 128], strides = [1, 1]} : vector<32x256xbf16> to vector<32x128xbf16>
    %128 = vector.shape_cast %127 : vector<32x128xbf16> to vector<2x16x128xbf16>
    "tpu.trace_start"() <{level = 10 : i32, message = "bqd,bkd->bqk"}> : () -> ()
    %cst_45 = arith.constant dense<0.000000e+00> : vector<2x16x16xf32>
    %129 = tpu.matmul %124, %126, %cst_45 {dimension_numbers = #tpu.dot_dimension_numbers<[2], [2], [1], [1], [0, 0, 0, 1, 1, 1], [0], [0]>} : vector<2x16x128xbf16>, vector<2x16x128xbf16>, vector<2x16x16xf32> -> vector<2x16x16xf32>
    "tpu.trace_stop"() : () -> ()
    %cst_46 = arith.constant dense<0xFF800000> : vector<2x16xf32>
    %130 = vector.multi_reduction <maximumf>, %129, %cst_46 [2] : vector<2x16x16xf32> to vector<2x16xf32>
    %131 = vector.shape_cast %130 : vector<2x16xf32> to vector<2x16x1xf32>
    %132 = vector.broadcast %131 : vector<2x16x1xf32> to vector<2x16x16xf32>
    %133 = arith.subf %129, %132 : vector<2x16x16xf32>
    %134 = math.exp %133 : vector<2x16x16xf32>
    %cst_47 = arith.constant dense<0.000000e+00> : vector<2x16xf32>
    %135 = vector.multi_reduction <add>, %134, %cst_47 [2] : vector<2x16x16xf32> to vector<2x16xf32>
    %136 = vector.shape_cast %135 : vector<2x16xf32> to vector<2x16x1xf32>
    %137 = arith.truncf %134 : vector<2x16x16xf32> to vector<2x16x16xbf16>
    "tpu.trace_start"() <{level = 10 : i32, message = "bqk,bkd->bqd"}> : () -> ()
    %cst_48 = arith.constant dense<0.000000e+00> : vector<2x16x128xf32>
    %138 = tpu.matmul %137, %128, %cst_48 {dimension_numbers = #tpu.dot_dimension_numbers<[2], [1], [1], [2], [0, 0, 0, 1, 1, 2], [0], [0]>} : vector<2x16x16xbf16>, vector<2x16x128xbf16>, vector<2x16x128xf32> -> vector<2x16x128xf32>
    "tpu.trace_stop"() : () -> ()
    %139 = tpu.reciprocal %136 {approx = true} : vector<2x16x1xf32> -> vector<2x16x1xf32>
    %140 = vector.broadcast %139 : vector<2x16x1xf32> to vector<2x16x128xf32>
    %141 = arith.mulf %138, %140 : vector<2x16x128xf32>
    %142 = vector.shape_cast %141 : vector<2x16x128xf32> to vector<32x128xf32>
    %143 = tpu.concatenate %122, %142 in 1 : vector<32x128xf32>, vector<32x128xf32> -> vector<32x256xf32>
    %144 = arith.truncf %143 : vector<32x256xf32> to vector<32x256xbf16>
    %c0_49 = arith.constant 0 : index
    %c0_50 = arith.constant 0 : index
    %145 = vector.load %arg13[%c0_49, %c0_50] : memref<256x256xbf16, #tpu.memory_space<vmem>>, vector<256x256xbf16>
    %cst_51 = arith.constant dense<0.000000e+00> : vector<32x256xf32>
    %146 = tpu.matmul %144, %145, %cst_51 {dimension_numbers = #tpu.dot_dimension_numbers<[1], [0], [0], [1], [0, 0, 1, 1], [], []>} : vector<32x256xbf16>, vector<256x256xbf16>, vector<32x256xf32> -> vector<32x256xf32>
    %c0_52 = arith.constant 0 : index
    %c0_53 = arith.constant 0 : index
    %147 = vector.load %arg14[%c0_52, %c0_53] : memref<1x256xf32, #tpu.memory_space<vmem>>, vector<1x256xf32>
    %148 = vector.broadcast %147 : vector<1x256xf32> to vector<32x256xf32>
    %149 = arith.addf %146, %148 : vector<32x256xf32>
    %150 = arith.addf %85, %149 : vector<32x256xf32>
    %c0_54 = arith.constant 0 : index
    %c0_55 = arith.constant 0 : index
    %151 = vector.load %arg15[%c0_54, %c0_55] : memref<1x256xf32, #tpu.memory_space<vmem>>, vector<1x256xf32>
    %c0_56 = arith.constant 0 : index
    %c0_57 = arith.constant 0 : index
    %152 = vector.load %arg16[%c0_56, %c0_57] : memref<1x256xf32, #tpu.memory_space<vmem>>, vector<1x256xf32>
    %cst_58 = arith.constant dense<0.000000e+00> : vector<32xf32>
    %153 = vector.multi_reduction <add>, %150, %cst_58 [1] : vector<32x256xf32> to vector<32xf32>
    %154 = vector.shape_cast %153 : vector<32xf32> to vector<32x1xf32>
    %cst_59 = arith.constant 2.560000e+02 : f32
    %155 = vector.broadcast %cst_59 : f32 to vector<32x1xf32>
    %156 = arith.divf %154, %155 : vector<32x1xf32>
    %157 = vector.broadcast %156 : vector<32x1xf32> to vector<32x256xf32>
    %158 = arith.subf %150, %157 : vector<32x256xf32>
    %159 = arith.mulf %158, %158 : vector<32x256xf32>
    %cst_60 = arith.constant dense<0.000000e+00> : vector<32xf32>
    %160 = vector.multi_reduction <add>, %159, %cst_60 [1] : vector<32x256xf32> to vector<32xf32>
    %161 = vector.shape_cast %160 : vector<32xf32> to vector<32x1xf32>
    %cst_61 = arith.constant 2.560000e+02 : f32
    %162 = vector.broadcast %cst_61 : f32 to vector<32x1xf32>
    %163 = arith.divf %161, %162 : vector<32x1xf32>
    %cst_62 = arith.constant 9.99999997E-7 : f32
    %164 = vector.broadcast %cst_62 : f32 to vector<32x1xf32>
    %165 = arith.addf %163, %164 : vector<32x1xf32>
    %166 = math.rsqrt %165 : vector<32x1xf32>
    %167 = vector.broadcast %166 : vector<32x1xf32> to vector<32x256xf32>
    %168 = arith.mulf %158, %167 : vector<32x256xf32>
    %169 = vector.broadcast %151 : vector<1x256xf32> to vector<32x256xf32>
    %170 = arith.mulf %168, %169 : vector<32x256xf32>
    %171 = vector.broadcast %152 : vector<1x256xf32> to vector<32x256xf32>
    %172 = arith.addf %170, %171 : vector<32x256xf32>
    %173 = arith.truncf %172 : vector<32x256xf32> to vector<32x256xbf16>
    %c0_63 = arith.constant 0 : index
    %c0_64 = arith.constant 0 : index
    %174 = vector.load %arg17[%c0_63, %c0_64] : memref<256x512xbf16, #tpu.memory_space<vmem>>, vector<256x512xbf16>
    %cst_65 = arith.constant dense<0.000000e+00> : vector<32x512xf32>
    %175 = tpu.matmul %173, %174, %cst_65 {dimension_numbers = #tpu.dot_dimension_numbers<[1], [0], [0], [1], [0, 0, 1, 1], [], []>} : vector<32x256xbf16>, vector<256x512xbf16>, vector<32x512xf32> -> vector<32x512xf32>
    %c0_66 = arith.constant 0 : index
    %c0_67 = arith.constant 0 : index
    %176 = vector.load %arg18[%c0_66, %c0_67] : memref<1x512xf32, #tpu.memory_space<vmem>>, vector<1x512xf32>
    %177 = vector.broadcast %176 : vector<1x512xf32> to vector<32x512xf32>
    %178 = arith.addf %175, %177 : vector<32x512xf32>
    %cst_68 = arith.constant 0.000000e+00 : f32
    %179 = vector.broadcast %cst_68 : f32 to vector<32x512xf32>
    %180 = arith.maximumf %178, %179 : vector<32x512xf32>
    %181 = arith.truncf %180 : vector<32x512xf32> to vector<32x512xbf16>
    %c0_69 = arith.constant 0 : index
    %c0_70 = arith.constant 0 : index
    %182 = vector.load %arg19[%c0_69, %c0_70] : memref<512x256xbf16, #tpu.memory_space<vmem>>, vector<512x256xbf16>
    %cst_71 = arith.constant dense<0.000000e+00> : vector<32x256xf32>
    %183 = tpu.matmul %181, %182, %cst_71 {dimension_numbers = #tpu.dot_dimension_numbers<[1], [0], [0], [1], [0, 0, 1, 1], [], []>} : vector<32x512xbf16>, vector<512x256xbf16>, vector<32x256xf32> -> vector<32x256xf32>
    %c0_72 = arith.constant 0 : index
    %c0_73 = arith.constant 0 : index
    %184 = vector.load %arg20[%c0_72, %c0_73] : memref<1x256xf32, #tpu.memory_space<vmem>>, vector<1x256xf32>
    %185 = vector.broadcast %184 : vector<1x256xf32> to vector<32x256xf32>
    %186 = arith.addf %183, %185 : vector<32x256xf32>
    %187 = arith.addf %172, %186 : vector<32x256xf32>
    %c0_74 = arith.constant 0 : index
    %c0_75 = arith.constant 0 : index
    %188 = vector.load %arg21[%c0_74, %c0_75] : memref<1x256xf32, #tpu.memory_space<vmem>>, vector<1x256xf32>
    %c0_76 = arith.constant 0 : index
    %c0_77 = arith.constant 0 : index
    %189 = vector.load %arg22[%c0_76, %c0_77] : memref<1x256xf32, #tpu.memory_space<vmem>>, vector<1x256xf32>
    %cst_78 = arith.constant dense<0.000000e+00> : vector<32xf32>
    %190 = vector.multi_reduction <add>, %187, %cst_78 [1] : vector<32x256xf32> to vector<32xf32>
    %191 = vector.shape_cast %190 : vector<32xf32> to vector<32x1xf32>
    %cst_79 = arith.constant 2.560000e+02 : f32
    %192 = vector.broadcast %cst_79 : f32 to vector<32x1xf32>
    %193 = arith.divf %191, %192 : vector<32x1xf32>
    %194 = vector.broadcast %193 : vector<32x1xf32> to vector<32x256xf32>
    %195 = arith.subf %187, %194 : vector<32x256xf32>
    %196 = arith.mulf %195, %195 : vector<32x256xf32>
    %cst_80 = arith.constant dense<0.000000e+00> : vector<32xf32>
    %197 = vector.multi_reduction <add>, %196, %cst_80 [1] : vector<32x256xf32> to vector<32xf32>
    %198 = vector.shape_cast %197 : vector<32xf32> to vector<32x1xf32>
    %cst_81 = arith.constant 2.560000e+02 : f32
    %199 = vector.broadcast %cst_81 : f32 to vector<32x1xf32>
    %200 = arith.divf %198, %199 : vector<32x1xf32>
    %cst_82 = arith.constant 9.99999997E-7 : f32
    %201 = vector.broadcast %cst_82 : f32 to vector<32x1xf32>
    %202 = arith.addf %200, %201 : vector<32x1xf32>
    %203 = math.rsqrt %202 : vector<32x1xf32>
    %204 = vector.broadcast %203 : vector<32x1xf32> to vector<32x256xf32>
    %205 = arith.mulf %195, %204 : vector<32x256xf32>
    %206 = vector.broadcast %188 : vector<1x256xf32> to vector<32x256xf32>
    %207 = arith.mulf %205, %206 : vector<32x256xf32>
    %208 = vector.broadcast %189 : vector<1x256xf32> to vector<32x256xf32>
    %209 = arith.addf %207, %208 : vector<32x256xf32>
    %210 = vector.shape_cast %209 : vector<32x256xf32> to vector<2x16x256xf32>
    %c0_83 = arith.constant 0 : index
    %c0_84 = arith.constant 0 : index
    %c0_85 = arith.constant 0 : index
    %211 = vector.load %arg23[%c0_83, %c0_84, %c0_85] : memref<2x16x256xf32, #tpu.memory_space<vmem>>, vector<2x16x256xf32>
    tpu.vector_store %arg23[%c0_83, %c0_84, %c0_85], %210 {strides = array<i32>} : memref<2x16x256xf32, #tpu.memory_space<vmem>>, vector<2x16x256xf32>,
    return
  }
  func.func @transform_0(%arg0: i32) -> (i32, i32, i32) {
    %c0_i32 = arith.constant 0 : i32
    %c0_i32_0 = arith.constant 0 : i32
    %c0_i32_1 = arith.constant 0 : i32
    return %arg0, %c0_i32, %c0_i32_0 : i32, i32, i32
  }
  func.func @transform_1(%arg0: i32) -> (i32, i32, i32) {
    %c0_i32 = arith.constant 0 : i32
    %c0_i32_0 = arith.constant 0 : i32
    %c0_i32_1 = arith.constant 0 : i32
    return %arg0, %c0_i32, %c0_i32_0 : i32, i32, i32
  }
  func.func @transform_2(%arg0: i32) -> (i32, i32) {
    %c0_i32 = arith.constant 0 : i32
    %c0_i32_0 = arith.constant 0 : i32
    %c0_i32_1 = arith.constant 0 : i32
    return %c0_i32, %c0_i32_0 : i32, i32
  }
  func.func @transform_3(%arg0: i32) -> (i32, i32) {
    %c0_i32 = arith.constant 0 : i32
    %c0_i32_0 = arith.constant 0 : i32
    %c0_i32_1 = arith.constant 0 : i32
    return %c0_i32, %c0_i32_0 : i32, i32
  }
  func.func @transform_4(%arg0: i32) -> (i32, i32) {
    %c0_i32 = arith.constant 0 : i32
    %c0_i32_0 = arith.constant 0 : i32
    %c0_i32_1 = arith.constant 0 : i32
    return %c0_i32, %c0_i32_0 : i32, i32
  }
  func.func @transform_5(%arg0: i32) -> (i32, i32) {
    %c0_i32 = arith.constant 0 : i32
    %c0_i32_0 = arith.constant 0 : i32
    %c0_i32_1 = arith.constant 0 : i32
    return %c0_i32, %c0_i32_0 : i32, i32
  }
  func.func @transform_6(%arg0: i32) -> (i32, i32) {
    %c0_i32 = arith.constant 0 : i32
    %c0_i32_0 = arith.constant 0 : i32
    %c0_i32_1 = arith.constant 0 : i32
    return %c0_i32, %c0_i32_0 : i32, i32
  }
  func.func @transform_7(%arg0: i32) -> (i32, i32) {
    %c0_i32 = arith.constant 0 : i32
    %c0_i32_0 = arith.constant 0 : i32
    %c0_i32_1 = arith.constant 0 : i32
    return %c0_i32, %c0_i32_0 : i32, i32
  }
  func.func @transform_8(%arg0: i32) -> (i32, i32) {
    %c0_i32 = arith.constant 0 : i32
    %c0_i32_0 = arith.constant 0 : i32
    %c0_i32_1 = arith.constant 0 : i32
    return %c0_i32, %c0_i32_0 : i32, i32
  }
  func.func @transform_9(%arg0: i32) -> (i32, i32) {
    %c0_i32 = arith.constant 0 : i32
    %c0_i32_0 = arith.constant 0 : i32
    %c0_i32_1 = arith.constant 0 : i32
    return %c0_i32, %c0_i32_0 : i32, i32
  }
  func.func @transform_10(%arg0: i32) -> (i32, i32) {
    %c0_i32 = arith.constant 0 : i32
    %c0_i32_0 = arith.constant 0 : i32
    %c0_i32_1 = arith.constant 0 : i32
    return %c0_i32, %c0_i32_0 : i32, i32
  }
  func.func @transform_11(%arg0: i32) -> (i32, i32) {
    %c0_i32 = arith.constant 0 : i32
    %c0_i32_0 = arith.constant 0 : i32
    %c0_i32_1 = arith.constant 0 : i32
    return %c0_i32, %c0_i32_0 : i32, i32
  }
  func.func @transform_12(%arg0: i32) -> (i32, i32) {
    %c0_i32 = arith.constant 0 : i32
    %c0_i32_0 = arith.constant 0 : i32
    %c0_i32_1 = arith.constant 0 : i32
    return %c0_i32, %c0_i32_0 : i32, i32
  }
  func.func @transform_13(%arg0: i32) -> (i32, i32) {
    %c0_i32 = arith.constant 0 : i32
    %c0_i32_0 = arith.constant 0 : i32
    %c0_i32_1 = arith.constant 0 : i32
    return %c0_i32, %c0_i32_0 : i32, i32
  }
  func.func @transform_14(%arg0: i32) -> (i32, i32) {
    %c0_i32 = arith.constant 0 : i32
    %c0_i32_0 = arith.constant 0 : i32
    %c0_i32_1 = arith.constant 0 : i32
    return %c0_i32, %c0_i32_0 : i32, i32
  }
  func.func @transform_15(%arg0: i32) -> (i32, i32) {
    %c0_i32 = arith.constant 0 : i32
    %c0_i32_0 = arith.constant 0 : i32
    %c0_i32_1 = arith.constant 0 : i32
    return %c0_i32, %c0_i32_0 : i32, i32
  }
  func.func @transform_16(%arg0: i32) -> (i32, i32) {
    %c0_i32 = arith.constant 0 : i32
    %c0_i32_0 = arith.constant 0 : i32
    %c0_i32_1 = arith.constant 0 : i32
    return %c0_i32, %c0_i32_0 : i32, i32
  }
  func.func @transform_17(%arg0: i32) -> (i32, i32) {
    %c0_i32 = arith.constant 0 : i32
    %c0_i32_0 = arith.constant 0 : i32
    %c0_i32_1 = arith.constant 0 : i32
    return %c0_i32, %c0_i32_0 : i32, i32
  }
  func.func @transform_18(%arg0: i32) -> (i32, i32) {
    %c0_i32 = arith.constant 0 : i32
    %c0_i32_0 = arith.constant 0 : i32
    %c0_i32_1 = arith.constant 0 : i32
    return %c0_i32, %c0_i32_0 : i32, i32
  }
  func.func @transform_19(%arg0: i32) -> (i32, i32) {
    %c0_i32 = arith.constant 0 : i32
    %c0_i32_0 = arith.constant 0 : i32
    %c0_i32_1 = arith.constant 0 : i32
    return %c0_i32, %c0_i32_0 : i32, i32
  }
  func.func @transform_20(%arg0: i32) -> (i32, i32) {
    %c0_i32 = arith.constant 0 : i32
    %c0_i32_0 = arith.constant 0 : i32
    %c0_i32_1 = arith.constant 0 : i32
    return %c0_i32, %c0_i32_0 : i32, i32
  }
  func.func @transform_21(%arg0: i32) -> (i32, i32) {
    %c0_i32 = arith.constant 0 : i32
    %c0_i32_0 = arith.constant 0 : i32
    %c0_i32_1 = arith.constant 0 : i32
    return %c0_i32, %c0_i32_0 : i32, i32
  }
  func.func @transform_22(%arg0: i32) -> (i32, i32, i32) {
    %c0_i32 = arith.constant 0 : i32
    %c0_i32_0 = arith.constant 0 : i32
    %c0_i32_1 = arith.constant 0 : i32
    return %arg0, %c0_i32, %c0_i32_0 : i32, i32, i32
  }
}

</mosaic_0001>

<llo_original>
// kernel: tpu_custom_call.1
$region0: #{tpu_custom_call.1}
  #allocation0 [shape = 'u32[]', space=smem, size = 0x4, offset = 0x4, fixed_abs, tag = 'smem constant byte address 0x4 - core index']
  #allocation1 [shape = 'u32[144,128]{1,0:T(1,128)}', space=vmem, size = 0x12000, scoped, tag = 'internal scratch']
  %s0 = inlined_call_operand.hbm [shape: f32[2,16,256], index: 0, kind: input, shape index: {}]
  %s1 = inlined_call_operand.hbm [shape: f32[2,16,256], index: 1, kind: input, shape index: {}]
  %s2 = inlined_call_operand.hbm [shape: bf16[256,768], index: 2, kind: input, shape index: {}]
  %s3 = inlined_call_operand.vmem [shape: f32[1,768], index: 3, kind: input, shape index: {}]
  %s4 = inlined_call_operand.hbm [shape: bf16[256,256], index: 4, kind: input, shape index: {}]
  %s5 = inlined_call_operand.vmem [shape: f32[1,256], index: 5, kind: input, shape index: {}]
  %s6 = inlined_call_operand.vmem [shape: f32[1,256], index: 6, kind: input, shape index: {}]
  %s7 = inlined_call_operand.vmem [shape: f32[1,256], index: 7, kind: input, shape index: {}]
  %s8 = inlined_call_operand.hbm [shape: bf16[256,512], index: 8, kind: input, shape index: {}]
  %s9 = inlined_call_operand.vmem [shape: f32[1,512], index: 9, kind: input, shape index: {}]
  %s10 = inlined_call_operand.hbm [shape: bf16[256,256], index: 10, kind: input, shape index: {}]
  %s11 = inlined_call_operand.vmem [shape: f32[1,256], index: 11, kind: input, shape index: {}]
  %s12 = inlined_call_operand.hbm [shape: bf16[256,256], index: 12, kind: input, shape index: {}]
  %s13 = inlined_call_operand.vmem [shape: f32[1,256], index: 13, kind: input, shape index: {}]
  %s14 = inlined_call_operand.vmem [shape: f32[1,256], index: 14, kind: input, shape index: {}]
  %s15 = inlined_call_operand.vmem [shape: f32[1,256], index: 15, kind: input, shape index: {}]
  %s16 = inlined_call_operand.hbm [shape: bf16[256,512], index: 16, kind: input, shape index: {}]
  %s17 = inlined_call_operand.vmem [shape: f32[1,512], index: 17, kind: input, shape index: {}]
  %s18 = inlined_call_operand.hbm [shape: bf16[512,256], index: 18, kind: input, shape index: {}]
  %s19 = inlined_call_operand.vmem [shape: f32[1,256], index: 19, kind: input, shape index: {}]
  %s20 = inlined_call_operand.vmem [shape: f32[1,256], index: 20, kind: input, shape index: {}]
  %s21 = inlined_call_operand.vmem [shape: f32[1,256], index: 21, kind: input, shape index: {}]
  %s22 = inlined_call_operand.hbm [shape: f32[2,16,256], index: 22, kind: output, shape index: {}]
  %s23 = sld [smem:[#allocation0]]
  $region134: #{tpu_custom_call.1} parent=0
    _
  %s25 = ssub.s32 1, %s23
  %s26 = scalar_select 0, %s25, %s23
  $region1: #{tpu_custom_call.1} parent=0
    #allocation2 [shape = 'u8[32768]{0}', space=vmem, size = 0x8000, scoped, tag = 'input window, operand 0, single buffered']
    #allocation3 [shape = 's32[1]{0}', space=sflag, size = 0x4, scoped, tag = 'scoped memory for tpu_custom_call.1']
    #allocation4 [shape = 's32[1]{0}', space=sflag, size = 0x4, scoped, tag = 'scoped memory for tpu_custom_call.1']
    #allocation5 [shape = 'u8[32768]{0}', space=vmem, size = 0x8000, scoped, tag = 'input window, operand 1, single buffered']
    #allocation6 [shape = 's32[1]{0}', space=sflag, size = 0x4, scoped, tag = 'scoped memory for tpu_custom_call.1']
    #allocation7 [shape = 'u8[393216]{0}', space=vmem, size = 0x60000, scoped, tag = 'input window, operand 2, single buffered']
    #allocation8 [shape = 'u8[131072]{0}', space=vmem, size = 0x20000, scoped, tag = 'input window, operand 4, single buffered']
    #allocation9 [shape = 's32[1]{0}', space=sflag, size = 0x4, scoped, tag = 'scoped memory for tpu_custom_call.1']
    #allocation10 [shape = 'u8[262144]{0}', space=vmem, size = 0x40000, scoped, tag = 'input window, operand 8, single buffered']
    #allocation11 [shape = 'u8[131072]{0}', space=vmem, size = 0x20000, scoped, tag = 'input window, operand 10, single buffered']
    #allocation12 [shape = 's32[1]{0}', space=sflag, size = 0x4, scoped, tag = 'scoped memory for tpu_custom_call.1']
    #allocation13 [shape = 'u8[131072]{0}', space=vmem, size = 0x20000, scoped, tag = 'input window, operand 12, single buffered']
    #allocation14 [shape = 'u8[262144]{0}', space=vmem, size = 0x40000, scoped, tag = 'input window, operand 16, single buffered']
    #allocation15 [shape = 's32[1]{0}', space=sflag, size = 0x4, scoped, tag = 'scoped memory for tpu_custom_call.1']
    #allocation16 [shape = 'u8[262144]{0}', space=vmem, size = 0x40000, scoped, tag = 'input window, operand 18, single buffered']
    #allocation17 [shape = 'u8[32768]{0}', space=vmem, size = 0x8000, scoped, tag = 'output window, operand 0, single buffered']
    %27 = vsyncpa [#allocation3], 0
    %28 = vsyncpa [#allocation6], 0
    %29 = vsyncpa [#allocation9], 0
    %30 = vsyncpa [#allocation12], 0
    %31 = vsyncpa [#allocation15], 0
    %32 = vsyncpa [#allocation4], 0
    // Predicated region
    $region2: #{tpu_custom_call.1} parent=1 // pred_check
      _
    $region3: #{tpu_custom_call.1} parent=1 // pred_check_branch
      %34 = sbr.rel (0) target = $region5
    $region4: #{tpu_custom_call.1} parent=1 // pred_region
      %s36 = ssub.s32 1024, 1024
      %37 = vsyncadd [#allocation3], %s36
      %s38 = sshll.u32 [#allocation2], 4
      %s39 = int_to_ptr.vmem [resolvable:$true] %s38
      %44 = dma.hbm_to_vmem [thread:$0]  %s0, 1024, %s39, [#allocation3], 256, 256, 16
    $region5: #{tpu_custom_call.1} parent=1 // pred_fallthru
      _
    // Predicated region
    $region6: #{tpu_custom_call.1} parent=1 // pred_check
      _
    $region7: #{tpu_custom_call.1} parent=1 // pred_check_branch
      %46 = sbr.rel (0) target = $region9
    $region8: #{tpu_custom_call.1} parent=1 // pred_region
      %s48 = ssub.s32 1024, 1024
      %49 = vsyncadd [#allocation6], %s48
      %s50 = sshll.u32 [#allocation5], 4
      %s51 = int_to_ptr.vmem [resolvable:$true] %s50
      %56 = dma.hbm_to_vmem [thread:$0]  %s1, 1024, %s51, [#allocation6], 256, 256, 16
    $region9: #{tpu_custom_call.1} parent=1 // pred_fallthru
      _
    // Predicated region
    $region10: #{tpu_custom_call.1} parent=1 // pred_check
      _
    $region11: #{tpu_custom_call.1} parent=1 // pred_check_branch
      %58 = sbr.rel (0) target = $region13
    $region12: #{tpu_custom_call.1} parent=1 // pred_region
      %s60 = ssub.s32 12288, 12288
      %61 = vsyncadd [#allocation6], %s60
      %s62 = sshll.u32 [#allocation7], 4
      %s63 = int_to_ptr.vmem [resolvable:$true] %s62
      %68 = dma.hbm_to_vmem [thread:$0]  %s2, 12288, %s63, [#allocation6], 384, 384, 24
    $region13: #{tpu_custom_call.1} parent=1 // pred_fallthru
      _
    // Predicated region
    $region14: #{tpu_custom_call.1} parent=1 // pred_check
      _
    $region15: #{tpu_custom_call.1} parent=1 // pred_check_branch
      %70 = sbr.rel (0) target = $region17
    $region16: #{tpu_custom_call.1} parent=1 // pred_region
      _
    $region17: #{tpu_custom_call.1} parent=1 // pred_fallthru
      _
    // Predicated region
    $region18: #{tpu_custom_call.1} parent=1 // pred_check
      _
    $region19: #{tpu_custom_call.1} parent=1 // pred_check_branch
      %72 = sbr.rel (0) target = $region21
    $region20: #{tpu_custom_call.1} parent=1 // pred_region
      %s74 = ssub.s32 4096, 4096
      %75 = vsyncadd [#allocation9], %s74
      %s76 = sshll.u32 [#allocation8], 4
      %s77 = int_to_ptr.vmem [resolvable:$true] %s76
      %82 = dma.hbm_to_vmem [thread:$0]  %s4, 4096, %s77, [#allocation9], 128, 128, 8
    $region21: #{tpu_custom_call.1} parent=1 // pred_fallthru
      _
    // Predicated region
    $region22: #{tpu_custom_call.1} parent=1 // pred_check
      _
    $region23: #{tpu_custom_call.1} parent=1 // pred_check_branch
      %84 = sbr.rel (0) target = $region25
    $region24: #{tpu_custom_call.1} parent=1 // pred_region
      _
    $region25: #{tpu_custom_call.1} parent=1 // pred_fallthru
      _
    // Predicated region
    $region26: #{tpu_custom_call.1} parent=1 // pred_check
      _
    $region27: #{tpu_custom_call.1} parent=1 // pred_check_branch
      %86 = sbr.rel (0) target = $region29
    $region28: #{tpu_custom_call.1} parent=1 // pred_region
      _
    $region29: #{tpu_custom_call.1} parent=1 // pred_fallthru
      _
    // Predicated region
    $region30: #{tpu_custom_call.1} parent=1 // pred_check
      _
    $region31: #{tpu_custom_call.1} parent=1 // pred_check_branch
      %88 = sbr.rel (0) target = $region33
    $region32: #{tpu_custom_call.1} parent=1 // pred_region
      _
    $region33: #{tpu_custom_call.1} parent=1 // pred_fallthru
      _
    // Predicated region
    $region34: #{tpu_custom_call.1} parent=1 // pred_check
      _
    $region35: #{tpu_custom_call.1} parent=1 // pred_check_branch
      %90 = sbr.rel (0) target = $region37
    $region36: #{tpu_custom_call.1} parent=1 // pred_region
      %s92 = ssub.s32 8192, 8192
      %93 = vsyncadd [#allocation9], %s92
      %s94 = sshll.u32 [#allocation10], 4
      %s95 = int_to_ptr.vmem [resolvable:$true] %s94
      %100 = dma.hbm_to_vmem [thread:$0]  %s8, 8192, %s95, [#allocation9], 256, 256, 16
    $region37: #{tpu_custom_call.1} parent=1 // pred_fallthru
      _
    // Predicated region
    $region38: #{tpu_custom_call.1} parent=1 // pred_check
      _
    $region39: #{tpu_custom_call.1} parent=1 // pred_check_branch
      %102 = sbr.rel (0) target = $region41
    $region40: #{tpu_custom_call.1} parent=1 // pred_region
      _
    $region41: #{tpu_custom_call.1} parent=1 // pred_fallthru
      _
    // Predicated region
    $region42: #{tpu_custom_call.1} parent=1 // pred_check
      _
    $region43: #{tpu_custom_call.1} parent=1 // pred_check_branch
      %104 = sbr.rel (0) target = $region45
    $region44: #{tpu_custom_call.1} parent=1 // pred_region
      %s106 = ssub.s32 4096, 4096
      %107 = vsyncadd [#allocation12], %s106
      %s108 = sshll.u32 [#allocation11], 4
      %s109 = int_to_ptr.vmem [resolvable:$true] %s108
      %114 = dma.hbm_to_vmem [thread:$0]  %s10, 4096, %s109, [#allocation12], 128, 128, 8
    $region45: #{tpu_custom_call.1} parent=1 // pred_fallthru
      _
    // Predicated region
    $region46: #{tpu_custom_call.1} parent=1 // pred_check
      _
    $region47: #{tpu_custom_call.1} parent=1 // pred_check_branch
      %116 = sbr.rel (0) target = $region49
    $region48: #{tpu_custom_call.1} parent=1 // pred_region
      _
    $region49: #{tpu_custom_call.1} parent=1 // pred_fallthru
      _
    // Predicated region
    $region50: #{tpu_custom_call.1} parent=1 // pred_check
      _
    $region51: #{tpu_custom_call.1} parent=1 // pred_check_branch
      %118 = sbr.rel (0) target = $region53
    $region52: #{tpu_custom_call.1} parent=1 // pred_region
      %s120 = ssub.s32 4096, 4096
      %121 = vsyncadd [#allocation12], %s120
      %s122 = sshll.u32 [#allocation13], 4
      %s123 = int_to_ptr.vmem [resolvable:$true] %s122
      %128 = dma.hbm_to_vmem [thread:$0]  %s12, 4096, %s123, [#allocation12], 128, 128, 8
    $region53: #{tpu_custom_call.1} parent=1 // pred_fallthru
      _
    // Predicated region
    $region54: #{tpu_custom_call.1} parent=1 // pred_check
      _
    $region55: #{tpu_custom_call.1} parent=1 // pred_check_branch
      %130 = sbr.rel (0) target = $region57
    $region56: #{tpu_custom_call.1} parent=1 // pred_region
      _
    $region57: #{tpu_custom_call.1} parent=1 // pred_fallthru
      _
    // Predicated region
    $region58: #{tpu_custom_call.1} parent=1 // pred_check
      _
    $region59: #{tpu_custom_call.1} parent=1 // pred_check_branch
      %132 = sbr.rel (0) target = $region61
    $region60: #{tpu_custom_call.1} parent=1 // pred_region
      _
    $region61: #{tpu_custom_call.1} parent=1 // pred_fallthru
      _
    // Predicated region
    $region62: #{tpu_custom_call.1} parent=1 // pred_check
      _
    $region63: #{tpu_custom_call.1} parent=1 // pred_check_branch
      %134 = sbr.rel (0) target = $region65
    $region64: #{tpu_custom_call.1} parent=1 // pred_region
      _
    $region65: #{tpu_custom_call.1} parent=1 // pred_fallthru
      _
    // Predicated region
    $region66: #{tpu_custom_call.1} parent=1 // pred_check
      _
    $region67: #{tpu_custom_call.1} parent=1 // pred_check_branch
      %136 = sbr.rel (0) target = $region69
    $region68: #{tpu_custom_call.1} parent=1 // pred_region
      %s138 = ssub.s32 8192, 8192
      %139 = vsyncadd [#allocation15], %s138
      %s140 = sshll.u32 [#allocation14], 4
      %s141 = int_to_ptr.vmem [resolvable:$true] %s140
      %146 = dma.hbm_to_vmem [thread:$0]  %s16, 8192, %s141, [#allocation15], 256, 256, 16
    $region69: #{tpu_custom_call.1} parent=1 // pred_fallthru
      _
    // Predicated region
    $region70: #{tpu_custom_call.1} parent=1 // pred_check
      _
    $region71: #{tpu_custom_call.1} parent=1 // pred_check_branch
      %148 = sbr.rel (0) target = $region73
    $region72: #{tpu_custom_call.1} parent=1 // pred_region
      _
    $region73: #{tpu_custom_call.1} parent=1 // pred_fallthru
      _
    // Predicated region
    $region74: #{tpu_custom_call.1} parent=1 // pred_check
      _
    $region75: #{tpu_custom_call.1} parent=1 // pred_check_branch
      %150 = sbr.rel (0) target = $region77
    $region76: #{tpu_custom_call.1} parent=1 // pred_region
      %s152 = ssub.s32 8192, 8192
      %153 = vsyncadd [#allocation15], %s152
      %s154 = sshll.u32 [#allocation16], 4
      %s155 = int_to_ptr.vmem [resolvable:$true] %s154
      %160 = dma.hbm_to_vmem [thread:$0]  %s18, 8192, %s155, [#allocation15], 128, 128, 8
    $region77: #{tpu_custom_call.1} parent=1 // pred_fallthru
      _
    // Predicated region
    $region78: #{tpu_custom_call.1} parent=1 // pred_check
      _
    $region79: #{tpu_custom_call.1} parent=1 // pred_check_branch
      %162 = sbr.rel (0) target = $region81
    $region80: #{tpu_custom_call.1} parent=1 // pred_region
      _
    $region81: #{tpu_custom_call.1} parent=1 // pred_fallthru
      _
    // Predicated region
    $region82: #{tpu_custom_call.1} parent=1 // pred_check
      _
    $region83: #{tpu_custom_call.1} parent=1 // pred_check_branch
      %164 = sbr.rel (0) target = $region85
    $region84: #{tpu_custom_call.1} parent=1 // pred_region
      _
    $region85: #{tpu_custom_call.1} parent=1 // pred_fallthru
      _
    // Predicated region
    $region86: #{tpu_custom_call.1} parent=1 // pred_check
      _
    $region87: #{tpu_custom_call.1} parent=1 // pred_check_branch
      %166 = sbr.rel (0) target = $region89
    $region88: #{tpu_custom_call.1} parent=1 // pred_region
      _
    $region89: #{tpu_custom_call.1} parent=1 // pred_fallthru
      _
    // Predicated region
    $region90: #{tpu_custom_call.1} parent=1 // pred_check
      _
    $region91: #{tpu_custom_call.1} parent=1 // pred_check_branch
      %168 = sbr.rel (0) target = $region93
    $region92: #{tpu_custom_call.1} parent=1 // pred_region
      %169 = dma.done [#allocation3], 1024
    $region93: #{tpu_custom_call.1} parent=1 // pred_fallthru
      _
    // Predicated region
    $region94: #{tpu_custom_call.1} parent=1 // pred_check
      _
    $region95: #{tpu_custom_call.1} parent=1 // pred_check_branch
      %171 = sbr.rel (0) target = $region97
    $region96: #{tpu_custom_call.1} parent=1 // pred_region
      %172 = dma.done [#allocation6], 1024
    $region97: #{tpu_custom_call.1} parent=1 // pred_fallthru
      _
    // Predicated region
    $region98: #{tpu_custom_call.1} parent=1 // pred_check
      _
    $region99: #{tpu_custom_call.1} parent=1 // pred_check_branch
      %174 = sbr.rel (0) target = $region101
    $region100: #{tpu_custom_call.1} parent=1 // pred_region
      %175 = dma.done [#allocation6], 12288
    $region101: #{tpu_custom_call.1} parent=1 // pred_fallthru
      _
    // Predicated region
    $region102: #{tpu_custom_call.1} parent=1 // pred_check
      _
    $region103: #{tpu_custom_call.1} parent=1 // pred_check_branch
      %177 = sbr.rel (0) target = $region105
    $region104: #{tpu_custom_call.1} parent=1 // pred_region
      %178 = dma.done [#allocation9], 4096
    $region105: #{tpu_custom_call.1} parent=1 // pred_fallthru
      _
    // Predicated region
    $region106: #{tpu_custom_call.1} parent=1 // pred_check
      _
    $region107: #{tpu_custom_call.1} parent=1 // pred_check_branch
      %180 = sbr.rel (0) target = $region109
    $region108: #{tpu_custom_call.1} parent=1 // pred_region
      %181 = dma.done [#allocation9], 8192
    $region109: #{tpu_custom_call.1} parent=1 // pred_fallthru
      _
    // Predicated region
    $region110: #{tpu_custom_call.1} parent=1 // pred_check
      _
    $region111: #{tpu_custom_call.1} parent=1 // pred_check_branch
      %183 = sbr.rel (0) target = $region113
    $region112: #{tpu_custom_call.1} parent=1 // pred_region
      %184 = dma.done [#allocation12], 4096
    $region113: #{tpu_custom_call.1} parent=1 // pred_fallthru
      _
    // Predicated region
    $region114: #{tpu_custom_call.1} parent=1 // pred_check
      _
    $region115: #{tpu_custom_call.1} parent=1 // pred_check_branch
      %186 = sbr.rel (0) target = $region117
    $region116: #{tpu_custom_call.1} parent=1 // pred_region
      %187 = dma.done [#allocation12], 4096
    $region117: #{tpu_custom_call.1} parent=1 // pred_fallthru
      _
    // Predicated region
    $region118: #{tpu_custom_call.1} parent=1 // pred_check
      _
    $region119: #{tpu_custom_call.1} parent=1 // pred_check_branch
      %189 = sbr.rel (0) target = $region121
    $region120: #{tpu_custom_call.1} parent=1 // pred_region
      %190 = dma.done [#allocation15], 8192
    $region121: #{tpu_custom_call.1} parent=1 // pred_fallthru
      _
    // Predicated region
    $region122: #{tpu_custom_call.1} parent=1 // pred_check
      _
    $region123: #{tpu_custom_call.1} parent=1 // pred_check_branch
      %192 = sbr.rel (0) target = $region125
    $region124: #{tpu_custom_call.1} parent=1 // pred_region
      %193 = dma.done [#allocation15], 8192
    $region125: #{tpu_custom_call.1} parent=1 // pred_fallthru
      _
    %v195 = vld [vmem:[#allocation2] sm:$0xff]
    %v196 = vld [vmem:[#allocation2 + $0x8] sm:$0xff]
    %v197 = vld [vmem:[#allocation2 + $0x10] sm:$0xff]
    %v198 = vld [vmem:[#allocation2 + $0x18] sm:$0xff]
    %v199 = vld [vmem:[#allocation2 + $0x20] sm:$0xff]
    %v200 = vld [vmem:[#allocation2 + $0x28] sm:$0xff]
    %v201 = vld [vmem:[#allocation2 + $0x30] sm:$0xff]
    %v202 = vld [vmem:[#allocation2 + $0x38] sm:$0xff]
    %v203 = vld [vmem:[#allocation5] sm:$0xff]
    %v204 = vld [vmem:[#allocation5 + $0x8] sm:$0xff]
    %v205 = vld [vmem:[#allocation5 + $0x10] sm:$0xff]
    %v206 = vld [vmem:[#allocation5 + $0x18] sm:$0xff]
    %v207 = vld [vmem:[#allocation5 + $0x20] sm:$0xff]
    %v208 = vld [vmem:[#allocation5 + $0x28] sm:$0xff]
    %v209 = vld [vmem:[#allocation5 + $0x30] sm:$0xff]
    %v210 = vld [vmem:[#allocation5 + $0x38] sm:$0xff]
    %v211 = vpack.c.bf16 %v197, %v195
    %v212 = vpack.c.bf16 %v198, %v196
    %v213 = vpack.c.bf16 %v201, %v199
    %v214 = vpack.c.bf16 %v202, %v200
    %v215 = vld [vmem:[#allocation7] sm:$0xff]
    %v216 = vld [vmem:[#allocation7 + $0x8] sm:$0xff]
    %v217 = vld [vmem:[#allocation7 + $0x10] sm:$0xff]
    %v218 = vld [vmem:[#allocation7 + $0x18] sm:$0xff]
    %v219 = vld [vmem:[#allocation7 + $0x20] sm:$0xff]
    %v220 = vld [vmem:[#allocation7 + $0x28] sm:$0xff]
    %v221 = vld [vmem:[#allocation7 + $0x30] sm:$0xff]
    %v222 = vld [vmem:[#allocation7 + $0x38] sm:$0xff]
    %v223 = vld [vmem:[#allocation7 + $0x40] sm:$0xff]
    %v224 = vld [vmem:[#allocation7 + $0x48] sm:$0xff]
    %v225 = vld [vmem:[#allocation7 + $0x50] sm:$0xff]
    %v226 = vld [vmem:[#allocation7 + $0x58] sm:$0xff]
    %v227 = vld [vmem:[#allocation7 + $0x60] sm:$0xff]
    %v228 = vld [vmem:[#allocation7 + $0x68] sm:$0xff]
    %v229 = vld [vmem:[#allocation7 + $0x70] sm:$0xff]
    %v230 = vld [vmem:[#allocation7 + $0x78] sm:$0xff]
    %v231 = vld [vmem:[#allocation7 + $0x80] sm:$0xff]
    %v232 = vld [vmem:[#allocation7 + $0x88] sm:$0xff]
    %v233 = vld [vmem:[#allocation7 + $0x90] sm:$0xff]
    %v234 = vld [vmem:[#allocation7 + $0x98] sm:$0xff]
    %v235 = vld [vmem:[#allocation7 + $0xa0] sm:$0xff]
    %v236 = vld [vmem:[#allocation7 + $0xa8] sm:$0xff]
    %v237 = vld [vmem:[#allocation7 + $0xb0] sm:$0xff]
    %v238 = vld [vmem:[#allocation7 + $0xb8] sm:$0xff]
    %v239 = vld [vmem:[#allocation7 + $0xc0] sm:$0xff]
    %v240 = vld [vmem:[#allocation7 + $0xc8] sm:$0xff]
    %v241 = vld [vmem:[#allocation7 + $0xd0] sm:$0xff]
    %v242 = vld [vmem:[#allocation7 + $0xd8] sm:$0xff]
    %v243 = vld [vmem:[#allocation7 + $0xe0] sm:$0xff]
    %v244 = vld [vmem:[#allocation7 + $0xe8] sm:$0xff]
    %v245 = vld [vmem:[#allocation7 + $0xf0] sm:$0xff]
    %v246 = vld [vmem:[#allocation7 + $0xf8] sm:$0xff]
    %v247 = vld [vmem:[#allocation7 + $0x100] sm:$0xff]
    %v248 = vld [vmem:[#allocation7 + $0x108] sm:$0xff]
    %v249 = vld [vmem:[#allocation7 + $0x110] sm:$0xff]
    %v250 = vld [vmem:[#allocation7 + $0x118] sm:$0xff]
    %v251 = vld [vmem:[#allocation7 + $0x120] sm:$0xff]
    %v252 = vld [vmem:[#allocation7 + $0x128] sm:$0xff]
    %v253 = vld [vmem:[#allocation7 + $0x130] sm:$0xff]
    %v254 = vld [vmem:[#allocation7 + $0x138] sm:$0xff]
    %v255 = vld [vmem:[#allocation7 + $0x140] sm:$0xff]
    %v256 = vld [vmem:[#allocation7 + $0x148] sm:$0xff]
    %v257 = vld [vmem:[#allocation7 + $0x150] sm:$0xff]
    %v258 = vld [vmem:[#allocation7 + $0x158] sm:$0xff]
    %v259 = vld [vmem:[#allocation7 + $0x160] sm:$0xff]
    %v260 = vld [vmem:[#allocation7 + $0x168] sm:$0xff]
    %v261 = vld [vmem:[#allocation7 + $0x170] sm:$0xff]
    %v262 = vld [vmem:[#allocation7 + $0x178] sm:$0xff]
    %v263 = vld [vmem:[#allocation7 + $0x180] sm:$0xff]
    %v264 = vld [vmem:[#allocation7 + $0x188] sm:$0xff]
    %v265 = vld [vmem:[#allocation7 + $0x190] sm:$0xff]
    %v266 = vld [vmem:[#allocation7 + $0x198] sm:$0xff]
    %v267 = vld [vmem:[#allocation7 + $0x1a0] sm:$0xff]
    %v268 = vld [vmem:[#allocation7 + $0x1a8] sm:$0xff]
    %v269 = vld [vmem:[#allocation7 + $0x1b0] sm:$0xff]
    %v270 = vld [vmem:[#allocation7 + $0x1b8] sm:$0xff]
    %v271 = vld [vmem:[#allocation7 + $0x1c0] sm:$0xff]
    %v272 = vld [vmem:[#allocation7 + $0x1c8] sm:$0xff]
    %v273 = vld [vmem:[#allocation7 + $0x1d0] sm:$0xff]
    %v274 = vld [vmem:[#allocation7 + $0x1d8] sm:$0xff]
    %v275 = vld [vmem:[#allocation7 + $0x1e0] sm:$0xff]
    %v276 = vld [vmem:[#allocation7 + $0x1e8] sm:$0xff]
    %v277 = vld [vmem:[#allocation7 + $0x1f0] sm:$0xff]
    %v278 = vld [vmem:[#allocation7 + $0x1f8] sm:$0xff]
    %v279 = vld [vmem:[#allocation7 + $0x200] sm:$0xff]
    %v280 = vld [vmem:[#allocation7 + $0x208] sm:$0xff]
    %v281 = vld [vmem:[#allocation7 + $0x210] sm:$0xff]
    %v282 = vld [vmem:[#allocation7 + $0x218] sm:$0xff]
    %v283 = vld [vmem:[#allocation7 + $0x220] sm:$0xff]
    %v284 = vld [vmem:[#allocation7 + $0x228] sm:$0xff]
    %v285 = vld [vmem:[#allocation7 + $0x230] sm:$0xff]
    %v286 = vld [vmem:[#allocation7 + $0x238] sm:$0xff]
    %v287 = vld [vmem:[#allocation7 + $0x240] sm:$0xff]
    %v288 = vld [vmem:[#allocation7 + $0x248] sm:$0xff]
    %v289 = vld [vmem:[#allocation7 + $0x250] sm:$0xff]
    %v290 = vld [vmem:[#allocation7 + $0x258] sm:$0xff]
    %v291 = vld [vmem:[#allocation7 + $0x260] sm:$0xff]
    %v292 = vld [vmem:[#allocation7 + $0x268] sm:$0xff]
    %v293 = vld [vmem:[#allocation7 + $0x270] sm:$0xff]
    %v294 = vld [vmem:[#allocation7 + $0x278] sm:$0xff]
    %v295 = vld [vmem:[#allocation7 + $0x280] sm:$0xff]
    %v296 = vld [vmem:[#allocation7 + $0x288] sm:$0xff]
    %v297 = vld [vmem:[#allocation7 + $0x290] sm:$0xff]
    %v298 = vld [vmem:[#allocation7 + $0x298] sm:$0xff]
    %v299 = vld [vmem:[#allocation7 + $0x2a0] sm:$0xff]
    %v300 = vld [vmem:[#allocation7 + $0x2a8] sm:$0xff]
    %v301 = vld [vmem:[#allocation7 + $0x2b0] sm:$0xff]
    %v302 = vld [vmem:[#allocation7 + $0x2b8] sm:$0xff]
    %v303 = vld [vmem:[#allocation7 + $0x2c0] sm:$0xff]
    %v304 = vld [vmem:[#allocation7 + $0x2c8] sm:$0xff]
    %v305 = vld [vmem:[#allocation7 + $0x2d0] sm:$0xff]
    %v306 = vld [vmem:[#allocation7 + $0x2d8] sm:$0xff]
    %v307 = vld [vmem:[#allocation7 + $0x2e0] sm:$0xff]
    %v308 = vld [vmem:[#allocation7 + $0x2e8] sm:$0xff]
    %v309 = vld [vmem:[#allocation7 + $0x2f0] sm:$0xff]
    %v310 = vld [vmem:[#allocation7 + $0x2f8] sm:$0xff]
    %v311 = vld [vmem:[%s3] sm:$0x3f]
    %v313 = vlaneseq
    %v314 = vshrl.u32 %v313, 7
    %v315 = vsub.s32 0, %v314
    %v316 = vrot.slane %v311, %v315
    %v317 = vlaneseq
    %v318 = vshrl.u32 %v317, 7
    %v319 = vsub.s32 1, %v318
    %v320 = vrot.slane %v311, %v319
    %v321 = vlaneseq
    %v322 = vshrl.u32 %v321, 7
    %v323 = vsub.s32 2, %v322
    %v324 = vrot.slane %v311, %v323
    %v325 = vlaneseq
    %v326 = vshrl.u32 %v325, 7
    %v327 = vsub.s32 3, %v326
    %v328 = vrot.slane %v311, %v327
    %v329 = vlaneseq
    %v330 = vshrl.u32 %v329, 7
    %v331 = vsub.s32 4, %v330
    %v332 = vrot.slane %v311, %v331
    %v333 = vlaneseq
    %v334 = vshrl.u32 %v333, 7
    %v335 = vsub.s32 5, %v334
    %v336 = vrot.slane %v311, %v335
    %v439 = vunpack.c.l.b16 %v215
    %v440 = vunpack.c.h.b16 %v215
    %v441 = vunpack.c.l.b16 %v216
    %v442 = vunpack.c.h.b16 %v216
    %v443 = vunpack.c.l.b16 %v217
    %v444 = vunpack.c.h.b16 %v217
    %v445 = vunpack.c.l.b16 %v218
    %v446 = vunpack.c.h.b16 %v218
    %v447 = vunpack.c.l.b16 %v219
    %v448 = vunpack.c.h.b16 %v219
    %v449 = vunpack.c.l.b16 %v220
    %v450 = vunpack.c.h.b16 %v220
    %v451 = vunpack.c.l.b16 %v221
    %v452 = vunpack.c.h.b16 %v221
    %v453 = vunpack.c.l.b16 %v222
    %v454 = vunpack.c.h.b16 %v222
    %v455 = vunpack.c.l.b16 %v223
    %v456 = vunpack.c.h.b16 %v223
    %v457 = vunpack.c.l.b16 %v224
    %v458 = vunpack.c.h.b16 %v224
    %v459 = vunpack.c.l.b16 %v225
    %v460 = vunpack.c.h.b16 %v225
    %v461 = vunpack.c.l.b16 %v226
    %v462 = vunpack.c.h.b16 %v226
    %v463 = vunpack.c.l.b16 %v227
    %v464 = vunpack.c.h.b16 %v227
    %v465 = vunpack.c.l.b16 %v228
    %v466 = vunpack.c.h.b16 %v228
    %v467 = vunpack.c.l.b16 %v229
    %v468 = vunpack.c.h.b16 %v229
    %v469 = vunpack.c.l.b16 %v230
    %v470 = vunpack.c.h.b16 %v230
    %v471 = vunpack.c.l.b16 %v231
    %v472 = vunpack.c.h.b16 %v231
    %v473 = vunpack.c.l.b16 %v232
    %v474 = vunpack.c.h.b16 %v232
    %v475 = vunpack.c.l.b16 %v233
    %v476 = vunpack.c.h.b16 %v233
    %v477 = vunpack.c.l.b16 %v234
    %v478 = vunpack.c.h.b16 %v234
    %v479 = vunpack.c.l.b16 %v235
    %v480 = vunpack.c.h.b16 %v235
    %v481 = vunpack.c.l.b16 %v236
    %v482 = vunpack.c.h.b16 %v236
    %v483 = vunpack.c.l.b16 %v237
    %v484 = vunpack.c.h.b16 %v237
    %v485 = vunpack.c.l.b16 %v238
    %v486 = vunpack.c.h.b16 %v238
    %v487 = vunpack.c.l.b16 %v239
    %v488 = vunpack.c.h.b16 %v239
    %v489 = vunpack.c.l.b16 %v240
    %v490 = vunpack.c.h.b16 %v240
    %v491 = vunpack.c.l.b16 %v241
    %v492 = vunpack.c.h.b16 %v241
    %v493 = vunpack.c.l.b16 %v242
    %v494 = vunpack.c.h.b16 %v242
    %v495 = vunpack.c.l.b16 %v243
    %v496 = vunpack.c.h.b16 %v243
    %v497 = vunpack.c.l.b16 %v244
    %v498 = vunpack.c.h.b16 %v244
    %v499 = vunpack.c.l.b16 %v245
    %v500 = vunpack.c.h.b16 %v245
    %v501 = vunpack.c.l.b16 %v246
    %v502 = vunpack.c.h.b16 %v246
    %v503 = vunpack.c.l.b16 %v247
    %v504 = vunpack.c.h.b16 %v247
    %v505 = vunpack.c.l.b16 %v248
    %v506 = vunpack.c.h.b16 %v248
    %v507 = vunpack.c.l.b16 %v249
    %v508 = vunpack.c.h.b16 %v249
    %v509 = vunpack.c.l.b16 %v250
    %v510 = vunpack.c.h.b16 %v250
    %v511 = vunpack.c.l.b16 %v251
    %v512 = vunpack.c.h.b16 %v251
    %v513 = vunpack.c.l.b16 %v252
    %v514 = vunpack.c.h.b16 %v252
    %v515 = vunpack.c.l.b16 %v253
    %v516 = vunpack.c.h.b16 %v253
    %v517 = vunpack.c.l.b16 %v254
    %v518 = vunpack.c.h.b16 %v254
    %v519 = vunpack.c.l.b16 %v255
    %v520 = vunpack.c.h.b16 %v255
    %v521 = vunpack.c.l.b16 %v256
    %v522 = vunpack.c.h.b16 %v256
    %v523 = vunpack.c.l.b16 %v257
    %v524 = vunpack.c.h.b16 %v257
    %v525 = vunpack.c.l.b16 %v258
    %v526 = vunpack.c.h.b16 %v258
    %v527 = vunpack.c.l.b16 %v259
    %v528 = vunpack.c.h.b16 %v259
    %v529 = vunpack.c.l.b16 %v260
    %v530 = vunpack.c.h.b16 %v260
    %v531 = vunpack.c.l.b16 %v261
    %v532 = vunpack.c.h.b16 %v261
    %v533 = vunpack.c.l.b16 %v262
    %v534 = vunpack.c.h.b16 %v262
    %v535 = vunpack.c.l.b16 %v263
    %v536 = vunpack.c.h.b16 %v263
    %v537 = vunpack.c.l.b16 %v264
    %v538 = vunpack.c.h.b16 %v264
    %v539 = vunpack.c.l.b16 %v265
    %v540 = vunpack.c.h.b16 %v265
    %v541 = vunpack.c.l.b16 %v266
    %v542 = vunpack.c.h.b16 %v266
    %v543 = vunpack.c.l.b16 %v267
    %v544 = vunpack.c.h.b16 %v267
    %v545 = vunpack.c.l.b16 %v268
    %v546 = vunpack.c.h.b16 %v268
    %v547 = vunpack.c.l.b16 %v269
    %v548 = vunpack.c.h.b16 %v269
    %v549 = vunpack.c.l.b16 %v270
    %v550 = vunpack.c.h.b16 %v270
    %v551 = vunpack.c.l.b16 %v271
    %v552 = vunpack.c.h.b16 %v271
    %v553 = vunpack.c.l.b16 %v272
    %v554 = vunpack.c.h.b16 %v272
    %v555 = vunpack.c.l.b16 %v273
    %v556 = vunpack.c.h.b16 %v273
    %v557 = vunpack.c.l.b16 %v274
    %v558 = vunpack.c.h.b16 %v274
    %v559 = vunpack.c.l.b16 %v275
    %v560 = vunpack.c.h.b16 %v275
    %v561 = vunpack.c.l.b16 %v276
    %v562 = vunpack.c.h.b16 %v276
    %v563 = vunpack.c.l.b16 %v277
    %v564 = vunpack.c.h.b16 %v277
    %v565 = vunpack.c.l.b16 %v278
    %v566 = vunpack.c.h.b16 %v278
    %v567 = vunpack.c.l.b16 %v279
    %v568 = vunpack.c.h.b16 %v279
    %v569 = vunpack.c.l.b16 %v280
    %v570 = vunpack.c.h.b16 %v280
    %v571 = vunpack.c.l.b16 %v281
    %v572 = vunpack.c.h.b16 %v281
    %v573 = vunpack.c.l.b16 %v282
    %v574 = vunpack.c.h.b16 %v282
    %v575 = vunpack.c.l.b16 %v283
    %v576 = vunpack.c.h.b16 %v283
    %v577 = vunpack.c.l.b16 %v284
    %v578 = vunpack.c.h.b16 %v284
    %v579 = vunpack.c.l.b16 %v285
    %v580 = vunpack.c.h.b16 %v285
    %v581 = vunpack.c.l.b16 %v286
    %v582 = vunpack.c.h.b16 %v286
    %v583 = vunpack.c.l.b16 %v287
    %v584 = vunpack.c.h.b16 %v287
    %v585 = vunpack.c.l.b16 %v288
    %v586 = vunpack.c.h.b16 %v288
    %v587 = vunpack.c.l.b16 %v289
    %v588 = vunpack.c.h.b16 %v289
    %v589 = vunpack.c.l.b16 %v290
    %v590 = vunpack.c.h.b16 %v290
    %v591 = vunpack.c.l.b16 %v291
    %v592 = vunpack.c.h.b16 %v291
    %v593 = vunpack.c.l.b16 %v292
    %v594 = vunpack.c.h.b16 %v292
    %v595 = vunpack.c.l.b16 %v293
    %v596 = vunpack.c.h.b16 %v293
    %v597 = vunpack.c.l.b16 %v294
    %v598 = vunpack.c.h.b16 %v294
    %v599 = vunpack.c.l.b16 %v295
    %v600 = vunpack.c.h.b16 %v295
    %v601 = vunpack.c.l.b16 %v296
    %v602 = vunpack.c.h.b16 %v296
    %v603 = vunpack.c.l.b16 %v297
    %v604 = vunpack.c.h.b16 %v297
    %v605 = vunpack.c.l.b16 %v298
    %v606 = vunpack.c.h.b16 %v298
    %v607 = vunpack.c.l.b16 %v299
    %v608 = vunpack.c.h.b16 %v299
    %v609 = vunpack.c.l.b16 %v300
    %v610 = vunpack.c.h.b16 %v300
    %v611 = vunpack.c.l.b16 %v301
    %v612 = vunpack.c.h.b16 %v301
    %v613 = vunpack.c.l.b16 %v302
    %v614 = vunpack.c.h.b16 %v302
    %v615 = vunpack.c.l.b16 %v303
    %v616 = vunpack.c.h.b16 %v303
    %v617 = vunpack.c.l.b16 %v304
    %v618 = vunpack.c.h.b16 %v304
    %v619 = vunpack.c.l.b16 %v305
    %v620 = vunpack.c.h.b16 %v305
    %v621 = vunpack.c.l.b16 %v306
    %v622 = vunpack.c.h.b16 %v306
    %v623 = vunpack.c.l.b16 %v307
    %v624 = vunpack.c.h.b16 %v307
    %v625 = vunpack.c.l.b16 %v308
    %v626 = vunpack.c.h.b16 %v308
    %v627 = vunpack.c.l.b16 %v309
    %v628 = vunpack.c.h.b16 %v309
    %v629 = vunpack.c.l.b16 %v310
    %v630 = vunpack.c.h.b16 %v310
    %v631 = vpack.c.b16 %v445, %v439
    %v632 = vpack.c.b16 %v446, %v440
    %v633 = vpack.c.b16 %v447, %v441
    %v634 = vpack.c.b16 %v448, %v442
    %v635 = vpack.c.b16 %v449, %v443
    %v636 = vpack.c.b16 %v450, %v444
    %v637 = vpack.c.b16 %v457, %v451
    %v638 = vpack.c.b16 %v458, %v452
    %v639 = vpack.c.b16 %v459, %v453
    %v640 = vpack.c.b16 %v460, %v454
    %v641 = vpack.c.b16 %v461, %v455
    %v642 = vpack.c.b16 %v462, %v456
    %v643 = vpack.c.b16 %v469, %v463
    %v644 = vpack.c.b16 %v470, %v464
    %v645 = vpack.c.b16 %v471, %v465
    %v646 = vpack.c.b16 %v472, %v466
    %v647 = vpack.c.b16 %v473, %v467
    %v648 = vpack.c.b16 %v474, %v468
    %v649 = vpack.c.b16 %v481, %v475
    %v650 = vpack.c.b16 %v482, %v476
    %v651 = vpack.c.b16 %v483, %v477
    %v652 = vpack.c.b16 %v484, %v478
    %v653 = vpack.c.b16 %v485, %v479
    %v654 = vpack.c.b16 %v486, %v480
    %v655 = vpack.c.b16 %v493, %v487
    %v656 = vpack.c.b16 %v494, %v488
    %v657 = vpack.c.b16 %v495, %v489
    %v658 = vpack.c.b16 %v496, %v490
    %v659 = vpack.c.b16 %v497, %v491
    %v660 = vpack.c.b16 %v498, %v492
    %v661 = vpack.c.b16 %v505, %v499
    %v662 = vpack.c.b16 %v506, %v500
    %v663 = vpack.c.b16 %v507, %v501
    %v664 = vpack.c.b16 %v508, %v502
    %v665 = vpack.c.b16 %v509, %v503
    %v666 = vpack.c.b16 %v510, %v504
    %v667 = vpack.c.b16 %v517, %v511
    %v668 = vpack.c.b16 %v518, %v512
    %v669 = vpack.c.b16 %v519, %v513
    %v670 = vpack.c.b16 %v520, %v514
    %v671 = vpack.c.b16 %v521, %v515
    %v672 = vpack.c.b16 %v522, %v516
    %v673 = vpack.c.b16 %v529, %v523
    %v674 = vpack.c.b16 %v530, %v524
    %v675 = vpack.c.b16 %v531, %v525
    %v676 = vpack.c.b16 %v532, %v526
    %v677 = vpack.c.b16 %v533, %v527
    %v678 = vpack.c.b16 %v534, %v528
    %v679 = vpack.c.b16 %v541, %v535
    %v680 = vpack.c.b16 %v542, %v536
    %v681 = vpack.c.b16 %v543, %v537
    %v682 = vpack.c.b16 %v544, %v538
    %v683 = vpack.c.b16 %v545, %v539
    %v684 = vpack.c.b16 %v546, %v540
    %v685 = vpack.c.b16 %v553, %v547
    %v686 = vpack.c.b16 %v554, %v548
    %v687 = vpack.c.b16 %v555, %v549
    %v688 = vpack.c.b16 %v556, %v550
    %v689 = vpack.c.b16 %v557, %v551
    %v690 = vpack.c.b16 %v558, %v552
    %v691 = vpack.c.b16 %v565, %v559
    %v692 = vpack.c.b16 %v566, %v560
    %v693 = vpack.c.b16 %v567, %v561
    %v694 = vpack.c.b16 %v568, %v562
    %v695 = vpack.c.b16 %v569, %v563
    %v696 = vpack.c.b16 %v570, %v564
    %v697 = vpack.c.b16 %v577, %v571
    %v698 = vpack.c.b16 %v578, %v572
    %v699 = vpack.c.b16 %v579, %v573
    %v700 = vpack.c.b16 %v580, %v574
    %v701 = vpack.c.b16 %v581, %v575
    %v702 = vpack.c.b16 %v582, %v576
    %v703 = vpack.c.b16 %v589, %v583
    %v704 = vpack.c.b16 %v590, %v584
    %v705 = vpack.c.b16 %v591, %v585
    %v706 = vpack.c.b16 %v592, %v586
    %v707 = vpack.c.b16 %v593, %v587
    %v708 = vpack.c.b16 %v594, %v588
    %v709 = vpack.c.b16 %v601, %v595
    %v710 = vpack.c.b16 %v602, %v596
    %v711 = vpack.c.b16 %v603, %v597
    %v712 = vpack.c.b16 %v604, %v598
    %v713 = vpack.c.b16 %v605, %v599
    %v714 = vpack.c.b16 %v606, %v600
    %v715 = vpack.c.b16 %v613, %v607
    %v716 = vpack.c.b16 %v614, %v608
    %v717 = vpack.c.b16 %v615, %v609
    %v718 = vpack.c.b16 %v616, %v610
    %v719 = vpack.c.b16 %v617, %v611
    %v720 = vpack.c.b16 %v618, %v612
    %v721 = vpack.c.b16 %v625, %v619
    %v722 = vpack.c.b16 %v626, %v620
    %v723 = vpack.c.b16 %v627, %v621
    %v724 = vpack.c.b16 %v628, %v622
    %v725 = vpack.c.b16 %v629, %v623
    %v726 = vpack.c.b16 %v630, %v624
    %823 = vmatprep.subr.bf16.mxu0 %v632
    %824 = vmatpush1.bf16.msra.mxu0 %v631
    %825 = vmatprep.subr.bf16.mxu0 %v638
    %826 = vmatpush1.bf16.msra.mxu0 %v637
    %827 = vmatprep.subr.bf16.mxu0 %v644
    %828 = vmatpush1.bf16.msra.mxu0 %v643
    %829 = vmatprep.subr.bf16.mxu0 %v650
    %830 = vmatpush1.bf16.msra.mxu0 %v649
    %831 = vmatprep.subr.bf16.mxu0 %v656
    %832 = vmatpush1.bf16.msra.mxu0 %v655
    %833 = vmatprep.subr.bf16.mxu0 %v662
    %834 = vmatpush1.bf16.msra.mxu0 %v661
    %835 = vmatprep.subr.bf16.mxu0 %v668
    %836 = vmatpush1.bf16.msra.mxu0 %v667
    %837 = vmatprep.subr.bf16.mxu0 %v674
    %838 = vmatpush1.bf16.msra.mxu0 %v673
    %839 = vmatprep.subr.bf16.mxu0 %v680
    %840 = vmatpush1.bf16.msra.mxu0 %v679
    %841 = vmatprep.subr.bf16.mxu0 %v686
    %842 = vmatpush1.bf16.msra.mxu0 %v685
    %843 = vmatprep.subr.bf16.mxu0 %v692
    %844 = vmatpush1.bf16.msra.mxu0 %v691
    %845 = vmatprep.subr.bf16.mxu0 %v698
    %846 = vmatpush1.bf16.msra.mxu0 %v697
    %847 = vmatprep.subr.bf16.mxu0 %v704
    %848 = vmatpush1.bf16.msra.mxu0 %v703
    %849 = vmatprep.subr.bf16.mxu0 %v710
    %850 = vmatpush1.bf16.msra.mxu0 %v709
    %851 = vmatprep.subr.bf16.mxu0 %v716
    %852 = vmatpush1.bf16.msra.mxu0 %v715
    %853 = vmatprep.subr.bf16.mxu0 %v722
    %854 = vmatpush1.bf16.msra.mxu0 %v721
    %855 = vmatprep.mubr.bf16.mxu0 %v212
    %856 = vmatmul.mubr.bf16.gmra.mrb[0].mxu0 %v211
    %v857 = vpop.f32.mrb[0].mxu0
    %v858 = vadd.f32 %v316, %v857
    %v859 = vpop.f32.mrb[0].mxu0
    %v860 = vadd.f32 %v320, %v859
    %v861 = vpop.f32.mrb[0].mxu0
    %v862 = vadd.f32 %v316, %v861
    %v863 = vpop.f32.mrb[0].mxu0
    %v864 = vadd.f32 %v320, %v863
    %865 = vmatprep.mubr.bf16.mxu0 %v214
    %866 = vmatmul.mubr.bf16.gmra.mrb[0].mxu0 %v213
    %v867 = vpop.f32.mrb[0].mxu0
    %v868 = vadd.f32 %v316, %v867
    %v869 = vpop.f32.mrb[0].mxu0
    %v870 = vadd.f32 %v320, %v869
    %v871 = vpop.f32.mrb[0].mxu0
    %v872 = vadd.f32 %v316, %v871
    %v873 = vpop.f32.mrb[0].mxu0
    %v874 = vadd.f32 %v320, %v873
    %875 = vdwg.mxu0
    %876 = vmatprep.subr.bf16.mxu0 %v634
    %877 = vmatpush1.bf16.msra.mxu0 %v633
    %878 = vmatprep.subr.bf16.mxu0 %v640
    %879 = vmatpush1.bf16.msra.mxu0 %v639
    %880 = vmatprep.subr.bf16.mxu0 %v646
    %881 = vmatpush1.bf16.msra.mxu0 %v645
    %882 = vmatprep.subr.bf16.mxu0 %v652
    %883 = vmatpush1.bf16.msra.mxu0 %v651
    %884 = vmatprep.subr.bf16.mxu0 %v658
    %885 = vmatpush1.bf16.msra.mxu0 %v657
    %886 = vmatprep.subr.bf16.mxu0 %v664
    %887 = vmatpush1.bf16.msra.mxu0 %v663
    %888 = vmatprep.subr.bf16.mxu0 %v670
    %889 = vmatpush1.bf16.msra.mxu0 %v669
    %890 = vmatprep.subr.bf16.mxu0 %v676
    %891 = vmatpush1.bf16.msra.mxu0 %v675
    %892 = vmatprep.subr.bf16.mxu0 %v682
    %893 = vmatpush1.bf16.msra.mxu0 %v681
    %894 = vmatprep.subr.bf16.mxu0 %v688
    %895 = vmatpush1.bf16.msra.mxu0 %v687
    %896 = vmatprep.subr.bf16.mxu0 %v694
    %897 = vmatpush1.bf16.msra.mxu0 %v693
    %898 = vmatprep.subr.bf16.mxu0 %v700
    %899 = vmatpush1.bf16.msra.mxu0 %v699
    %900 = vmatprep.subr.bf16.mxu0 %v706
    %901 = vmatpush1.bf16.msra.mxu0 %v705
    %902 = vmatprep.subr.bf16.mxu0 %v712
    %903 = vmatpush1.bf16.msra.mxu0 %v711
    %904 = vmatprep.subr.bf16.mxu0 %v718
    %905 = vmatpush1.bf16.msra.mxu0 %v717
    %906 = vmatprep.subr.bf16.mxu0 %v724
    %907 = vmatpush1.bf16.msra.mxu0 %v723
    %908 = vmatprep.mubr.bf16.mxu0 %v212
    %909 = vmatmul.mubr.bf16.gmra.mrb[0].mxu0 %v211
    %v910 = vpop.f32.mrb[0].mxu0
    %v911 = vadd.f32 %v324, %v910
    %v912 = vpop.f32.mrb[0].mxu0
    %v913 = vadd.f32 %v328, %v912
    %v914 = vpop.f32.mrb[0].mxu0
    %v915 = vadd.f32 %v324, %v914
    %v916 = vpop.f32.mrb[0].mxu0
    %v917 = vadd.f32 %v328, %v916
    %918 = vmatprep.mubr.bf16.mxu0 %v214
    %919 = vmatmul.mubr.bf16.gmra.mrb[0].mxu0 %v213
    %v920 = vpop.f32.mrb[0].mxu0
    %v921 = vadd.f32 %v324, %v920
    %v922 = vpop.f32.mrb[0].mxu0
    %v923 = vadd.f32 %v328, %v922
    %v924 = vpop.f32.mrb[0].mxu0
    %v925 = vadd.f32 %v324, %v924
    %v926 = vpop.f32.mrb[0].mxu0
    %v927 = vadd.f32 %v328, %v926
    %928 = vdwg.mxu0
    %929 = vmatprep.subr.bf16.mxu0 %v636
    %930 = vmatpush1.bf16.msra.mxu0 %v635
    %931 = vmatprep.subr.bf16.mxu0 %v642
    %932 = vmatpush1.bf16.msra.mxu0 %v641
    %933 = vmatprep.subr.bf16.mxu0 %v648
    %934 = vmatpush1.bf16.msra.mxu0 %v647
    %935 = vmatprep.subr.bf16.mxu0 %v654
    %936 = vmatpush1.bf16.msra.mxu0 %v653
    %937 = vmatprep.subr.bf16.mxu0 %v660
    %938 = vmatpush1.bf16.msra.mxu0 %v659
    %939 = vmatprep.subr.bf16.mxu0 %v666
    %940 = vmatpush1.bf16.msra.mxu0 %v665
    %941 = vmatprep.subr.bf16.mxu0 %v672
    %942 = vmatpush1.bf16.msra.mxu0 %v671
    %943 = vmatprep.subr.bf16.mxu0 %v678
    %944 = vmatpush1.bf16.msra.mxu0 %v677
    %945 = vmatprep.subr.bf16.mxu0 %v684
    %946 = vmatpush1.bf16.msra.mxu0 %v683
    %947 = vmatprep.subr.bf16.mxu0 %v690
    %948 = vmatpush1.bf16.msra.mxu0 %v689
    %949 = vmatprep.subr.bf16.mxu0 %v696
    %950 = vmatpush1.bf16.msra.mxu0 %v695
    %951 = vmatprep.subr.bf16.mxu0 %v702
    %952 = vmatpush1.bf16.msra.mxu0 %v701
    %953 = vmatprep.subr.bf16.mxu0 %v708
    %954 = vmatpush1.bf16.msra.mxu0 %v707
    %955 = vmatprep.subr.bf16.mxu0 %v714
    %956 = vmatpush1.bf16.msra.mxu0 %v713
    %957 = vmatprep.subr.bf16.mxu0 %v720
    %958 = vmatpush1.bf16.msra.mxu0 %v719
    %959 = vmatprep.subr.bf16.mxu0 %v726
    %960 = vmatpush1.bf16.msra.mxu0 %v725
    %961 = vmatprep.mubr.bf16.mxu0 %v212
    %962 = vmatmul.mubr.bf16.gmra.mrb[0].mxu0 %v211
    %v963 = vpop.f32.mrb[0].mxu0
    %v964 = vadd.f32 %v332, %v963
    %v965 = vpop.f32.mrb[0].mxu0
    %v966 = vadd.f32 %v336, %v965
    %v967 = vpop.f32.mrb[0].mxu0
    %v968 = vadd.f32 %v332, %v967
    %v969 = vpop.f32.mrb[0].mxu0
    %v970 = vadd.f32 %v336, %v969
    %971 = vmatprep.mubr.bf16.mxu0 %v214
    %972 = vmatmul.mubr.bf16.gmra.mrb[0].mxu0 %v213
    %v973 = vpop.f32.mrb[0].mxu0
    %v974 = vadd.f32 %v332, %v973
    %v975 = vpop.f32.mrb[0].mxu0
    %v976 = vadd.f32 %v336, %v975
    %v977 = vpop.f32.mrb[0].mxu0
    %v978 = vadd.f32 %v332, %v977
    %v979 = vpop.f32.mrb[0].mxu0
    %v980 = vadd.f32 %v336, %v979
    %981 = vdwg.mxu0
    %v982 = vpack.c.bf16 %v862, %v858
    %v983 = vpack.c.bf16 %v864, %v860
    %v984 = vpack.c.bf16 %v872, %v868
    %v985 = vpack.c.bf16 %v874, %v870
    %v986 = vpack.c.bf16 %v915, %v911
    %v987 = vpack.c.bf16 %v917, %v913
    %v988 = vpack.c.bf16 %v925, %v921
    %v989 = vpack.c.bf16 %v927, %v923
    %v990 = vpack.c.bf16 %v968, %v964
    %v991 = vpack.c.bf16 %v970, %v966
    %v992 = vpack.c.bf16 %v978, %v974
    %v993 = vpack.c.bf16 %v980, %v976
    %994 = vmatprep.subr.bf16.mxu0 0
    %995 = vmatpush1.bf16.xpose.msra.mxu0 %v986
    %996 = vmatprep.subr.bf16.mxu0 0
    %997 = vmatpush1.bf16.xpose.msra.mxu0 0
    %998 = vmatprep.subr.bf16.mxu0 0
    %999 = vmatpush1.bf16.xpose.msra.mxu0 0
    %1000 = vmatprep.subr.bf16.mxu0 0
    %1001 = vmatpush1.bf16.xpose.msra.mxu0 0
    %1002 = vmatprep.subr.bf16.mxu0 0
    %1003 = vmatpush1.bf16.xpose.msra.mxu0 0
    %1004 = vmatprep.subr.bf16.mxu0 0
    %1005 = vmatpush1.bf16.xpose.msra.mxu0 0
    %1006 = vmatprep.subr.bf16.mxu0 0
    %1007 = vmatpush1.bf16.xpose.msra.mxu0 0
    %1008 = vmatprep.subr.bf16.mxu0 0
    %1009 = vmatpush1.bf16.xpose.msra.mxu0 0
    %1010 = vmatprep.subr.bf16.mxu0 0
    %1011 = vmatpush1.bf16.xpose.msra.mxu0 0
    %1012 = vmatprep.subr.bf16.mxu0 0
    %1013 = vmatpush1.bf16.xpose.msra.mxu0 0
    %1014 = vmatprep.subr.bf16.mxu0 0
    %1015 = vmatpush1.bf16.xpose.msra.mxu0 0
    %1016 = vmatprep.subr.bf16.mxu0 0
    %1017 = vmatpush1.bf16.xpose.msra.mxu0 0
    %1018 = vmatprep.subr.bf16.mxu0 0
    %1019 = vmatpush1.bf16.xpose.msra.mxu0 0
    %1020 = vmatprep.subr.bf16.mxu0 0
    %1021 = vmatpush1.bf16.xpose.msra.mxu0 0
    %1022 = vmatprep.subr.bf16.mxu0 0
    %1023 = vmatpush1.bf16.xpose.msra.mxu0 0
    %1024 = vmatprep.subr.bf16.mxu0 0
    %1025 = vmatpush1.bf16.xpose.msra.mxu0 0
    %1026 = vmatprep.mubr.bf16.mxu0 0
    %1027 = vmatmul.mubr.bf16.gmra.mrb[0].mxu0 %v982
    %v1028 = vpop.f32.mrb[0].mxu0
    %v1029 = vadd.f32 0.0, %v1028
    %v1030 = vpop.f32.mrb[0].mxu0
    %v1031 = vpop.f32.mrb[0].mxu0
    %v1032 = vadd.f32 0.0, %v1031
    %v1033 = vpop.f32.mrb[0].mxu0
    %1034 = vdwg.mxu0
    %1035 = vmatprep.subr.bf16.mxu0 0
    %1036 = vmatpush1.bf16.xpose.msra.mxu0 %v988
    %1037 = vmatprep.subr.bf16.mxu0 0
    %1038 = vmatpush1.bf16.xpose.msra.mxu0 0
    %1039 = vmatprep.subr.bf16.mxu0 0
    %1040 = vmatpush1.bf16.xpose.msra.mxu0 0
    %1041 = vmatprep.subr.bf16.mxu0 0
    %1042 = vmatpush1.bf16.xpose.msra.mxu0 0
    %1043 = vmatprep.subr.bf16.mxu0 0
    %1044 = vmatpush1.bf16.xpose.msra.mxu0 0
    %1045 = vmatprep.subr.bf16.mxu0 0
    %1046 = vmatpush1.bf16.xpose.msra.mxu0 0
    %1047 = vmatprep.subr.bf16.mxu0 0
    %1048 = vmatpush1.bf16.xpose.msra.mxu0 0
    %1049 = vmatprep.subr.bf16.mxu0 0
    %1050 = vmatpush1.bf16.xpose.msra.mxu0 0
    %1051 = vmatprep.subr.bf16.mxu0 0
    %1052 = vmatpush1.bf16.xpose.msra.mxu0 0
    %1053 = vmatprep.subr.bf16.mxu0 0
    %1054 = vmatpush1.bf16.xpose.msra.mxu0 0
    %1055 = vmatprep.subr.bf16.mxu0 0
    %1056 = vmatpush1.bf16.xpose.msra.mxu0 0
    %1057 = vmatprep.subr.bf16.mxu0 0
    %1058 = vmatpush1.bf16.xpose.msra.mxu0 0
    %1059 = vmatprep.subr.bf16.mxu0 0
    %1060 = vmatpush1.bf16.xpose.msra.mxu0 0
    %1061 = vmatprep.subr.bf16.mxu0 0
    %1062 = vmatpush1.bf16.xpose.msra.mxu0 0
    %1063 = vmatprep.subr.bf16.mxu0 0
    %1064 = vmatpush1.bf16.xpose.msra.mxu0 0
    %1065 = vmatprep.subr.bf16.mxu0 0
    %1066 = vmatpush1.bf16.xpose.msra.mxu0 0
    %1067 = vmatprep.mubr.bf16.mxu0 0
    %1068 = vmatmul.mubr.bf16.gmra.mrb[0].mxu0 %v984
    %v1069 = vpop.f32.mrb[0].mxu0
    %v1070 = vadd.f32 0.0, %v1069
    %v1071 = vpop.f32.mrb[0].mxu0
    %v1072 = vpop.f32.mrb[0].mxu0
    %v1073 = vadd.f32 0.0, %v1072
    %v1074 = vpop.f32.mrb[0].mxu0
    %1075 = vdwg.mxu0
    %vm1076 = vcmask 130048
    %v1077 = vsel %vm1076, %v1029, -inf
    %1078 = vmax.xlane.f32.xlu0 %v1077
    %v1079 = vpop.xlane.xlu0 %1078
    %v1080 = vsel %vm1076, %v1032, -inf
    %1081 = vmax.xlane.f32.xlu0 %v1080
    %v1082 = vpop.xlane.xlu0 %1081
    %v1083 = vsel %vm1076, %v1070, -inf
    %1084 = vmax.xlane.f32.xlu0 %v1083
    %v1085 = vpop.xlane.xlu0 %1084
    %v1086 = vsel %vm1076, %v1073, -inf
    %1087 = vmax.xlane.f32.xlu0 %v1086
    %v1088 = vpop.xlane.xlu0 %1087
    %v1089 = vsub.f32 %v1029, %v1079
    %v1090 = vsub.f32 %v1032, %v1082
    %v1091 = vsub.f32 %v1070, %v1085
    %v1092 = vsub.f32 %v1073, %v1088
    %v1093 = vmul.f32 %v1089, 1.442695
    %v1094 = vpow.pop %v1093
    %v1095 = vmul.f32 %v1090, 1.442695
    %v1096 = vpow.pop %v1095
    %v1097 = vmul.f32 %v1091, 1.442695
    %v1098 = vpow.pop %v1097
    %v1099 = vmul.f32 %v1092, 1.442695
    %v1100 = vpow.pop %v1099
    %v1101 = vsel %vm1076, %v1094, 0.0
    %1102 = vadd.xlane.f32.xlu0 %v1101
    %v1103 = vpop.xlane.xlu0 %1102
    %v1104 = vsel %vm1076, %v1096, 0.0
    %1105 = vadd.xlane.f32.xlu0 %v1104
    %v1106 = vpop.xlane.xlu0 %1105
    %v1107 = vsel %vm1076, %v1098, 0.0
    %1108 = vadd.xlane.f32.xlu0 %v1107
    %v1109 = vpop.xlane.xlu0 %1108
    %v1110 = vsel %vm1076, %v1100, 0.0
    %1111 = vadd.xlane.f32.xlu0 %v1110
    %v1112 = vpop.xlane.xlu0 %1111
    %v1113 = vpack.c.bf16 %v1096, %v1094
    %v1114 = vpack.c.bf16 %v1100, %v1098
    %v1116 = vsel %vm1076, %v1113, 0
    %1118 = vmatprep.subr.bf16.mxu0 0
    %1119 = vmatpush1.bf16.msra.mxu0 %v990
    %1120 = vmatprep.subr.bf16.mxu0 0
    %1121 = vmatpush1.bf16.msra.mxu0 0
    %1122 = vmatprep.subr.bf16.mxu0 0
    %1123 = vmatpush1.bf16.msra.mxu0 0
    %1124 = vmatprep.subr.bf16.mxu0 0
    %1125 = vmatpush1.bf16.msra.mxu0 0
    %1126 = vmatprep.subr.bf16.mxu0 0
    %1127 = vmatpush1.bf16.msra.mxu0 0
    %1128 = vmatprep.subr.bf16.mxu0 0
    %1129 = vmatpush1.bf16.msra.mxu0 0
    %1130 = vmatprep.subr.bf16.mxu0 0
    %1131 = vmatpush1.bf16.msra.mxu0 0
    %1132 = vmatprep.subr.bf16.mxu0 0
    %1133 = vmatpush1.bf16.msra.mxu0 0
    %1134 = vmatprep.subr.bf16.mxu0 0
    %1135 = vmatpush1.bf16.msra.mxu0 0
    %1136 = vmatprep.subr.bf16.mxu0 0
    %1137 = vmatpush1.bf16.msra.mxu0 0
    %1138 = vmatprep.subr.bf16.mxu0 0
    %1139 = vmatpush1.bf16.msra.mxu0 0
    %1140 = vmatprep.subr.bf16.mxu0 0
    %1141 = vmatpush1.bf16.msra.mxu0 0
    %1142 = vmatprep.subr.bf16.mxu0 0
    %1143 = vmatpush1.bf16.msra.mxu0 0
    %1144 = vmatprep.subr.bf16.mxu0 0
    %1145 = vmatpush1.bf16.msra.mxu0 0
    %1146 = vmatprep.subr.bf16.mxu0 0
    %1147 = vmatpush1.bf16.msra.mxu0 0
    %1148 = vmatprep.subr.bf16.mxu0 0
    %1149 = vmatpush1.bf16.msra.mxu0 0
    %1150 = vmatprep.mubr.bf16.mxu0 0
    %1151 = vmatmul.mubr.bf16.gmra.mrb[0].mxu0 %v1116
    %v1152 = vpop.f32.mrb[0].mxu0
    %v1153 = vadd.f32 0.0, %v1152
    %v1154 = vpop.f32.mrb[0].mxu0
    %v1155 = vpop.f32.mrb[0].mxu0
    %v1156 = vadd.f32 0.0, %v1155
    %v1157 = vpop.f32.mrb[0].mxu0
    %1158 = vdwg.mxu0
    %v1160 = vsel %vm1076, %v1114, 0
    %1162 = vmatprep.subr.bf16.mxu0 0
    %1163 = vmatpush1.bf16.msra.mxu0 %v992
    %1164 = vmatprep.subr.bf16.mxu0 0
    %1165 = vmatpush1.bf16.msra.mxu0 0
    %1166 = vmatprep.subr.bf16.mxu0 0
    %1167 = vmatpush1.bf16.msra.mxu0 0
    %1168 = vmatprep.subr.bf16.mxu0 0
    %1169 = vmatpush1.bf16.msra.mxu0 0
    %1170 = vmatprep.subr.bf16.mxu0 0
    %1171 = vmatpush1.bf16.msra.mxu0 0
    %1172 = vmatprep.subr.bf16.mxu0 0
    %1173 = vmatpush1.bf16.msra.mxu0 0
    %1174 = vmatprep.subr.bf16.mxu0 0
    %1175 = vmatpush1.bf16.msra.mxu0 0
    %1176 = vmatprep.subr.bf16.mxu0 0
    %1177 = vmatpush1.bf16.msra.mxu0 0
    %1178 = vmatprep.subr.bf16.mxu0 0
    %1179 = vmatpush1.bf16.msra.mxu0 0
    %1180 = vmatprep.subr.bf16.mxu0 0
    %1181 = vmatpush1.bf16.msra.mxu0 0
    %1182 = vmatprep.subr.bf16.mxu0 0
    %1183 = vmatpush1.bf16.msra.mxu0 0
    %1184 = vmatprep.subr.bf16.mxu0 0
    %1185 = vmatpush1.bf16.msra.mxu0 0
    %1186 = vmatprep.subr.bf16.mxu0 0
    %1187 = vmatpush1.bf16.msra.mxu0 0
    %1188 = vmatprep.subr.bf16.mxu0 0
    %1189 = vmatpush1.bf16.msra.mxu0 0
    %1190 = vmatprep.subr.bf16.mxu0 0
    %1191 = vmatpush1.bf16.msra.mxu0 0
    %1192 = vmatprep.subr.bf16.mxu0 0
    %1193 = vmatpush1.bf16.msra.mxu0 0
    %1194 = vmatprep.mubr.bf16.mxu0 0
    %1195 = vmatmul.mubr.bf16.gmra.mrb[0].mxu0 %v1160
    %v1196 = vpop.f32.mrb[0].mxu0
    %v1197 = vadd.f32 0.0, %v1196
    %v1198 = vpop.f32.mrb[0].mxu0
    %v1199 = vpop.f32.mrb[0].mxu0
    %v1200 = vadd.f32 0.0, %v1199
    %v1201 = vpop.f32.mrb[0].mxu0
    %1202 = vdwg.mxu0
    %v1203 = vrcp.pop %v1103
    %v1204 = vrcp.pop %v1106
    %v1205 = vrcp.pop %v1109
    %v1206 = vrcp.pop %v1112
    %v1207 = vmul.f32 %v1153, %v1203
    %v1208 = vmul.f32 %v1156, %v1204
    %v1209 = vmul.f32 %v1197, %v1205
    %v1210 = vmul.f32 %v1200, %v1206
    %1211 = vmatprep.subr.bf16.mxu0 0
    %1212 = vmatpush1.bf16.xpose.msra.mxu0 %v987
    %1213 = vmatprep.subr.bf16.mxu0 0
    %1214 = vmatpush1.bf16.xpose.msra.mxu0 0
    %1215 = vmatprep.subr.bf16.mxu0 0
    %1216 = vmatpush1.bf16.xpose.msra.mxu0 0
    %1217 = vmatprep.subr.bf16.mxu0 0
    %1218 = vmatpush1.bf16.xpose.msra.mxu0 0
    %1219 = vmatprep.subr.bf16.mxu0 0
    %1220 = vmatpush1.bf16.xpose.msra.mxu0 0
    %1221 = vmatprep.subr.bf16.mxu0 0
    %1222 = vmatpush1.bf16.xpose.msra.mxu0 0
    %1223 = vmatprep.subr.bf16.mxu0 0
    %1224 = vmatpush1.bf16.xpose.msra.mxu0 0
    %1225 = vmatprep.subr.bf16.mxu0 0
    %1226 = vmatpush1.bf16.xpose.msra.mxu0 0
    %1227 = vmatprep.subr.bf16.mxu0 0
    %1228 = vmatpush1.bf16.xpose.msra.mxu0 0
    %1229 = vmatprep.subr.bf16.mxu0 0
    %1230 = vmatpush1.bf16.xpose.msra.mxu0 0
    %1231 = vmatprep.subr.bf16.mxu0 0
    %1232 = vmatpush1.bf16.xpose.msra.mxu0 0
    %1233 = vmatprep.subr.bf16.mxu0 0
    %1234 = vmatpush1.bf16.xpose.msra.mxu0 0
    %1235 = vmatprep.subr.bf16.mxu0 0
    %1236 = vmatpush1.bf16.xpose.msra.mxu0 0
    %1237 = vmatprep.subr.bf16.mxu0 0
    %1238 = vmatpush1.bf16.xpose.msra.mxu0 0
    %1239 = vmatprep.subr.bf16.mxu0 0
    %1240 = vmatpush1.bf16.xpose.msra.mxu0 0
    %1241 = vmatprep.subr.bf16.mxu0 0
    %1242 = vmatpush1.bf16.xpose.msra.mxu0 0
    %1243 = vmatprep.mubr.bf16.mxu0 0
    %1244 = vmatmul.mubr.bf16.gmra.mrb[0].mxu0 %v983
    %v1245 = vpop.f32.mrb[0].mxu0
    %v1246 = vadd.f32 0.0, %v1245
    %v1247 = vpop.f32.mrb[0].mxu0
    %v1248 = vpop.f32.mrb[0].mxu0
    %v1249 = vadd.f32 0.0, %v1248
    %v1250 = vpop.f32.mrb[0].mxu0
    %1251 = vdwg.mxu0
    %1252 = vmatprep.subr.bf16.mxu0 0
    %1253 = vmatpush1.bf16.xpose.msra.mxu0 %v989
    %1254 = vmatprep.subr.bf16.mxu0 0
    %1255 = vmatpush1.bf16.xpose.msra.mxu0 0
    %1256 = vmatprep.subr.bf16.mxu0 0
    %1257 = vmatpush1.bf16.xpose.msra.mxu0 0
    %1258 = vmatprep.subr.bf16.mxu0 0
    %1259 = vmatpush1.bf16.xpose.msra.mxu0 0
    %1260 = vmatprep.subr.bf16.mxu0 0
    %1261 = vmatpush1.bf16.xpose.msra.mxu0 0
    %1262 = vmatprep.subr.bf16.mxu0 0
    %1263 = vmatpush1.bf16.xpose.msra.mxu0 0
    %1264 = vmatprep.subr.bf16.mxu0 0
    %1265 = vmatpush1.bf16.xpose.msra.mxu0 0
    %1266 = vmatprep.subr.bf16.mxu0 0
    %1267 = vmatpush1.bf16.xpose.msra.mxu0 0
    %1268 = vmatprep.subr.bf16.mxu0 0
    %1269 = vmatpush1.bf16.xpose.msra.mxu0 0
    %1270 = vmatprep.subr.bf16.mxu0 0
    %1271 = vmatpush1.bf16.xpose.msra.mxu0 0
    %1272 = vmatprep.subr.bf16.mxu0 0
    %1273 = vmatpush1.bf16.xpose.msra.mxu0 0
    %1274 = vmatprep.subr.bf16.mxu0 0
    %1275 = vmatpush1.bf16.xpose.msra.mxu0 0
    %1276 = vmatprep.subr.bf16.mxu0 0
    %1277 = vmatpush1.bf16.xpose.msra.mxu0 0
    %1278 = vmatprep.subr.bf16.mxu0 0
    %1279 = vmatpush1.bf16.xpose.msra.mxu0 0
    %1280 = vmatprep.subr.bf16.mxu0 0
    %1281 = vmatpush1.bf16.xpose.msra.mxu0 0
    %1282 = vmatprep.subr.bf16.mxu0 0
    %1283 = vmatpush1.bf16.xpose.msra.mxu0 0
    %1284 = vmatprep.mubr.bf16.mxu0 0
    %1285 = vmatmul.mubr.bf16.gmra.mrb[0].mxu0 %v985
    %v1286 = vpop.f32.mrb[0].mxu0
    %v1287 = vadd.f32 0.0, %v1286
    %v1288 = vpop.f32.mrb[0].mxu0
    %v1289 = vpop.f32.mrb[0].mxu0
    %v1290 = vadd.f32 0.0, %v1289
    %v1291 = vpop.f32.mrb[0].mxu0
    %1292 = vdwg.mxu0
    %v1293 = vsel %vm1076, %v1246, -inf
    %1294 = vmax.xlane.f32.xlu0 %v1293
    %v1295 = vpop.xlane.xlu0 %1294
    %v1296 = vsel %vm1076, %v1249, -inf
    %1297 = vmax.xlane.f32.xlu0 %v1296
    %v1298 = vpop.xlane.xlu0 %1297
    %v1299 = vsel %vm1076, %v1287, -inf
    %1300 = vmax.xlane.f32.xlu0 %v1299
    %v1301 = vpop.xlane.xlu0 %1300
    %v1302 = vsel %vm1076, %v1290, -inf
    %1303 = vmax.xlane.f32.xlu0 %v1302
    %v1304 = vpop.xlane.xlu0 %1303
    %v1305 = vsub.f32 %v1246, %v1295
    %v1306 = vsub.f32 %v1249, %v1298
    %v1307 = vsub.f32 %v1287, %v1301
    %v1308 = vsub.f32 %v1290, %v1304
    %v1309 = vmul.f32 %v1305, 1.442695
    %v1310 = vpow.pop %v1309
    %v1311 = vmul.f32 %v1306, 1.442695
    %v1312 = vpow.pop %v1311
    %v1313 = vmul.f32 %v1307, 1.442695
    %v1314 = vpow.pop %v1313
    %v1315 = vmul.f32 %v1308, 1.442695
    %v1316 = vpow.pop %v1315
    %v1317 = vsel %vm1076, %v1310, 0.0
    %1318 = vadd.xlane.f32.xlu0 %v1317
    %v1319 = vpop.xlane.xlu0 %1318
    %v1320 = vsel %vm1076, %v1312, 0.0
    %1321 = vadd.xlane.f32.xlu0 %v1320
    %v1322 = vpop.xlane.xlu0 %1321
    %v1323 = vsel %vm1076, %v1314, 0.0
    %1324 = vadd.xlane.f32.xlu0 %v1323
    %v1325 = vpop.xlane.xlu0 %1324
    %v1326 = vsel %vm1076, %v1316, 0.0
    %1327 = vadd.xlane.f32.xlu0 %v1326
    %v1328 = vpop.xlane.xlu0 %1327
    %v1329 = vpack.c.bf16 %v1312, %v1310
    %v1330 = vpack.c.bf16 %v1316, %v1314
    %v1332 = vsel %vm1076, %v1329, 0
    %1334 = vmatprep.subr.bf16.mxu0 0
    %1335 = vmatpush1.bf16.msra.mxu0 %v991
    %1336 = vmatprep.subr.bf16.mxu0 0
    %1337 = vmatpush1.bf16.msra.mxu0 0
    %1338 = vmatprep.subr.bf16.mxu0 0
    %1339 = vmatpush1.bf16.msra.mxu0 0
    %1340 = vmatprep.subr.bf16.mxu0 0
    %1341 = vmatpush1.bf16.msra.mxu0 0
    %1342 = vmatprep.subr.bf16.mxu0 0
    %1343 = vmatpush1.bf16.msra.mxu0 0
    %1344 = vmatprep.subr.bf16.mxu0 0
    %1345 = vmatpush1.bf16.msra.mxu0 0
    %1346 = vmatprep.subr.bf16.mxu0 0
    %1347 = vmatpush1.bf16.msra.mxu0 0
    %1348 = vmatprep.subr.bf16.mxu0 0
    %1349 = vmatpush1.bf16.msra.mxu0 0
    %1350 = vmatprep.subr.bf16.mxu0 0
    %1351 = vmatpush1.bf16.msra.mxu0 0
    %1352 = vmatprep.subr.bf16.mxu0 0
    %1353 = vmatpush1.bf16.msra.mxu0 0
    %1354 = vmatprep.subr.bf16.mxu0 0
    %1355 = vmatpush1.bf16.msra.mxu0 0
    %1356 = vmatprep.subr.bf16.mxu0 0
    %1357 = vmatpush1.bf16.msra.mxu0 0
    %1358 = vmatprep.subr.bf16.mxu0 0
    %1359 = vmatpush1.bf16.msra.mxu0 0
    %1360 = vmatprep.subr.bf16.mxu0 0
    %1361 = vmatpush1.bf16.msra.mxu0 0
    %1362 = vmatprep.subr.bf16.mxu0 0
    %1363 = vmatpush1.bf16.msra.mxu0 0
    %1364 = vmatprep.subr.bf16.mxu0 0
    %1365 = vmatpush1.bf16.msra.mxu0 0
    %1366 = vmatprep.mubr.bf16.mxu0 0
    %1367 = vmatmul.mubr.bf16.gmra.mrb[0].mxu0 %v1332
    %v1368 = vpop.f32.mrb[0].mxu0
    %v1369 = vadd.f32 0.0, %v1368
    %v1370 = vpop.f32.mrb[0].mxu0
    %v1371 = vpop.f32.mrb[0].mxu0
    %v1372 = vadd.f32 0.0, %v1371
    %v1373 = vpop.f32.mrb[0].mxu0
    %1374 = vdwg.mxu0
    %v1376 = vsel %vm1076, %v1330, 0
    %1378 = vmatprep.subr.bf16.mxu0 0
    %1379 = vmatpush1.bf16.msra.mxu0 %v993
    %1380 = vmatprep.subr.bf16.mxu0 0
    %1381 = vmatpush1.bf16.msra.mxu0 0
    %1382 = vmatprep.subr.bf16.mxu0 0
    %1383 = vmatpush1.bf16.msra.mxu0 0
    %1384 = vmatprep.subr.bf16.mxu0 0
    %1385 = vmatpush1.bf16.msra.mxu0 0
    %1386 = vmatprep.subr.bf16.mxu0 0
    %1387 = vmatpush1.bf16.msra.mxu0 0
    %1388 = vmatprep.subr.bf16.mxu0 0
    %1389 = vmatpush1.bf16.msra.mxu0 0
    %1390 = vmatprep.subr.bf16.mxu0 0
    %1391 = vmatpush1.bf16.msra.mxu0 0
    %1392 = vmatprep.subr.bf16.mxu0 0
    %1393 = vmatpush1.bf16.msra.mxu0 0
    %1394 = vmatprep.subr.bf16.mxu0 0
    %1395 = vmatpush1.bf16.msra.mxu0 0
    %1396 = vmatprep.subr.bf16.mxu0 0
    %1397 = vmatpush1.bf16.msra.mxu0 0
    %1398 = vmatprep.subr.bf16.mxu0 0
    %1399 = vmatpush1.bf16.msra.mxu0 0
    %1400 = vmatprep.subr.bf16.mxu0 0
    %1401 = vmatpush1.bf16.msra.mxu0 0
    %1402 = vmatprep.subr.bf16.mxu0 0
    %1403 = vmatpush1.bf16.msra.mxu0 0
    %1404 = vmatprep.subr.bf16.mxu0 0
    %1405 = vmatpush1.bf16.msra.mxu0 0
    %1406 = vmatprep.subr.bf16.mxu0 0
    %1407 = vmatpush1.bf16.msra.mxu0 0
    %1408 = vmatprep.subr.bf16.mxu0 0
    %1409 = vmatpush1.bf16.msra.mxu0 0
    %1410 = vmatprep.mubr.bf16.mxu0 0
    %1411 = vmatmul.mubr.bf16.gmra.mrb[0].mxu0 %v1376
    %v1412 = vpop.f32.mrb[0].mxu0
    %v1413 = vadd.f32 0.0, %v1412
    %v1414 = vpop.f32.mrb[0].mxu0
    %v1415 = vpop.f32.mrb[0].mxu0
    %v1416 = vadd.f32 0.0, %v1415
    %v1417 = vpop.f32.mrb[0].mxu0
    %1418 = vdwg.mxu0
    %v1419 = vrcp.pop %v1319
    %v1420 = vrcp.pop %v1322
    %v1421 = vrcp.pop %v1325
    %v1422 = vrcp.pop %v1328
    %v1423 = vmul.f32 %v1369, %v1419
    %v1424 = vmul.f32 %v1372, %v1420
    %v1425 = vmul.f32 %v1413, %v1421
    %v1426 = vmul.f32 %v1416, %v1422
    %v1427 = vpack.c.bf16 %v1208, %v1207
    %v1428 = vpack.c.bf16 %v1424, %v1423
    %v1429 = vpack.c.bf16 %v1210, %v1209
    %v1430 = vpack.c.bf16 %v1426, %v1425
    %v1431 = vld [vmem:[#allocation8] sm:$0xff]
    %v1432 = vld [vmem:[#allocation8 + $0x8] sm:$0xff]
    %v1433 = vld [vmem:[#allocation8 + $0x10] sm:$0xff]
    %v1434 = vld [vmem:[#allocation8 + $0x18] sm:$0xff]
    %v1435 = vld [vmem:[#allocation8 + $0x20] sm:$0xff]
    %v1436 = vld [vmem:[#allocation8 + $0x28] sm:$0xff]
    %v1437 = vld [vmem:[#allocation8 + $0x30] sm:$0xff]
    %v1438 = vld [vmem:[#allocation8 + $0x38] sm:$0xff]
    %v1439 = vld [vmem:[#allocation8 + $0x40] sm:$0xff]
    %v1440 = vld [vmem:[#allocation8 + $0x48] sm:$0xff]
    %v1441 = vld [vmem:[#allocation8 + $0x50] sm:$0xff]
    %v1442 = vld [vmem:[#allocation8 + $0x58] sm:$0xff]
    %v1443 = vld [vmem:[#allocation8 + $0x60] sm:$0xff]
    %v1444 = vld [vmem:[#allocation8 + $0x68] sm:$0xff]
    %v1445 = vld [vmem:[#allocation8 + $0x70] sm:$0xff]
    %v1446 = vld [vmem:[#allocation8 + $0x78] sm:$0xff]
    %v1447 = vld [vmem:[#allocation8 + $0x80] sm:$0xff]
    %v1448 = vld [vmem:[#allocation8 + $0x88] sm:$0xff]
    %v1449 = vld [vmem:[#allocation8 + $0x90] sm:$0xff]
    %v1450 = vld [vmem:[#allocation8 + $0x98] sm:$0xff]
    %v1451 = vld [vmem:[#allocation8 + $0xa0] sm:$0xff]
    %v1452 = vld [vmem:[#allocation8 + $0xa8] sm:$0xff]
    %v1453 = vld [vmem:[#allocation8 + $0xb0] sm:$0xff]
    %v1454 = vld [vmem:[#allocation8 + $0xb8] sm:$0xff]
    %v1455 = vld [vmem:[#allocation8 + $0xc0] sm:$0xff]
    %v1456 = vld [vmem:[#allocation8 + $0xc8] sm:$0xff]
    %v1457 = vld [vmem:[#allocation8 + $0xd0] sm:$0xff]
    %v1458 = vld [vmem:[#allocation8 + $0xd8] sm:$0xff]
    %v1459 = vld [vmem:[#allocation8 + $0xe0] sm:$0xff]
    %v1460 = vld [vmem:[#allocation8 + $0xe8] sm:$0xff]
    %v1461 = vld [vmem:[#allocation8 + $0xf0] sm:$0xff]
    %v1462 = vld [vmem:[#allocation8 + $0xf8] sm:$0xff]
    %v1463 = vld [vmem:[%s5] sm:$0x3]
    %v1465 = vlaneseq
    %v1466 = vshrl.u32 %v1465, 7
    %v1467 = vsub.s32 0, %v1466
    %v1468 = vrot.slane %v1463, %v1467
    %v1469 = vlaneseq
    %v1470 = vshrl.u32 %v1469, 7
    %v1471 = vsub.s32 1, %v1470
    %v1472 = vrot.slane %v1463, %v1471
    %v1507 = vunpack.c.l.b16 %v1431
    %v1508 = vunpack.c.h.b16 %v1431
    %v1509 = vunpack.c.l.b16 %v1432
    %v1510 = vunpack.c.h.b16 %v1432
    %v1511 = vunpack.c.l.b16 %v1433
    %v1512 = vunpack.c.h.b16 %v1433
    %v1513 = vunpack.c.l.b16 %v1434
    %v1514 = vunpack.c.h.b16 %v1434
    %v1515 = vunpack.c.l.b16 %v1435
    %v1516 = vunpack.c.h.b16 %v1435
    %v1517 = vunpack.c.l.b16 %v1436
    %v1518 = vunpack.c.h.b16 %v1436
    %v1519 = vunpack.c.l.b16 %v1437
    %v1520 = vunpack.c.h.b16 %v1437
    %v1521 = vunpack.c.l.b16 %v1438
    %v1522 = vunpack.c.h.b16 %v1438
    %v1523 = vunpack.c.l.b16 %v1439
    %v1524 = vunpack.c.h.b16 %v1439
    %v1525 = vunpack.c.l.b16 %v1440
    %v1526 = vunpack.c.h.b16 %v1440
    %v1527 = vunpack.c.l.b16 %v1441
    %v1528 = vunpack.c.h.b16 %v1441
    %v1529 = vunpack.c.l.b16 %v1442
    %v1530 = vunpack.c.h.b16 %v1442
    %v1531 = vunpack.c.l.b16 %v1443
    %v1532 = vunpack.c.h.b16 %v1443
    %v1533 = vunpack.c.l.b16 %v1444
    %v1534 = vunpack.c.h.b16 %v1444
    %v1535 = vunpack.c.l.b16 %v1445
    %v1536 = vunpack.c.h.b16 %v1445
    %v1537 = vunpack.c.l.b16 %v1446
    %v1538 = vunpack.c.h.b16 %v1446
    %v1539 = vunpack.c.l.b16 %v1447
    %v1540 = vunpack.c.h.b16 %v1447
    %v1541 = vunpack.c.l.b16 %v1448
    %v1542 = vunpack.c.h.b16 %v1448
    %v1543 = vunpack.c.l.b16 %v1449
    %v1544 = vunpack.c.h.b16 %v1449
    %v1545 = vunpack.c.l.b16 %v1450
    %v1546 = vunpack.c.h.b16 %v1450
    %v1547 = vunpack.c.l.b16 %v1451
    %v1548 = vunpack.c.h.b16 %v1451
    %v1549 = vunpack.c.l.b16 %v1452
    %v1550 = vunpack.c.h.b16 %v1452
    %v1551 = vunpack.c.l.b16 %v1453
    %v1552 = vunpack.c.h.b16 %v1453
    %v1553 = vunpack.c.l.b16 %v1454
    %v1554 = vunpack.c.h.b16 %v1454
    %v1555 = vunpack.c.l.b16 %v1455
    %v1556 = vunpack.c.h.b16 %v1455
    %v1557 = vunpack.c.l.b16 %v1456
    %v1558 = vunpack.c.h.b16 %v1456
    %v1559 = vunpack.c.l.b16 %v1457
    %v1560 = vunpack.c.h.b16 %v1457
    %v1561 = vunpack.c.l.b16 %v1458
    %v1562 = vunpack.c.h.b16 %v1458
    %v1563 = vunpack.c.l.b16 %v1459
    %v1564 = vunpack.c.h.b16 %v1459
    %v1565 = vunpack.c.l.b16 %v1460
    %v1566 = vunpack.c.h.b16 %v1460
    %v1567 = vunpack.c.l.b16 %v1461
    %v1568 = vunpack.c.h.b16 %v1461
    %v1569 = vunpack.c.l.b16 %v1462
    %v1570 = vunpack.c.h.b16 %v1462
    %v1571 = vpack.c.b16 %v1509, %v1507
    %v1572 = vpack.c.b16 %v1510, %v1508
    %v1573 = vpack.c.b16 %v1513, %v1511
    %v1574 = vpack.c.b16 %v1514, %v1512
    %v1575 = vpack.c.b16 %v1517, %v1515
    %v1576 = vpack.c.b16 %v1518, %v1516
    %v1577 = vpack.c.b16 %v1521, %v1519
    %v1578 = vpack.c.b16 %v1522, %v1520
    %v1579 = vpack.c.b16 %v1525, %v1523
    %v1580 = vpack.c.b16 %v1526, %v1524
    %v1581 = vpack.c.b16 %v1529, %v1527
    %v1582 = vpack.c.b16 %v1530, %v1528
    %v1583 = vpack.c.b16 %v1533, %v1531
    %v1584 = vpack.c.b16 %v1534, %v1532
    %v1585 = vpack.c.b16 %v1537, %v1535
    %v1586 = vpack.c.b16 %v1538, %v1536
    %v1587 = vpack.c.b16 %v1541, %v1539
    %v1588 = vpack.c.b16 %v1542, %v1540
    %v1589 = vpack.c.b16 %v1545, %v1543
    %v1590 = vpack.c.b16 %v1546, %v1544
    %v1591 = vpack.c.b16 %v1549, %v1547
    %v1592 = vpack.c.b16 %v1550, %v1548
    %v1593 = vpack.c.b16 %v1553, %v1551
    %v1594 = vpack.c.b16 %v1554, %v1552
    %v1595 = vpack.c.b16 %v1557, %v1555
    %v1596 = vpack.c.b16 %v1558, %v1556
    %v1597 = vpack.c.b16 %v1561, %v1559
    %v1598 = vpack.c.b16 %v1562, %v1560
    %v1599 = vpack.c.b16 %v1565, %v1563
    %v1600 = vpack.c.b16 %v1566, %v1564
    %v1601 = vpack.c.b16 %v1569, %v1567
    %v1602 = vpack.c.b16 %v1570, %v1568
    %1635 = vmatprep.subr.bf16.mxu0 %v1572
    %1636 = vmatpush1.bf16.msra.mxu0 %v1571
    %1637 = vmatprep.subr.bf16.mxu0 %v1574
    %1638 = vmatpush1.bf16.msra.mxu0 %v1573
    %1639 = vmatprep.subr.bf16.mxu0 %v1576
    %1640 = vmatpush1.bf16.msra.mxu0 %v1575
    %1641 = vmatprep.subr.bf16.mxu0 %v1578
    %1642 = vmatpush1.bf16.msra.mxu0 %v1577
    %1643 = vmatprep.subr.bf16.mxu0 %v1580
    %1644 = vmatpush1.bf16.msra.mxu0 %v1579
    %1645 = vmatprep.subr.bf16.mxu0 %v1582
    %1646 = vmatpush1.bf16.msra.mxu0 %v1581
    %1647 = vmatprep.subr.bf16.mxu0 %v1584
    %1648 = vmatpush1.bf16.msra.mxu0 %v1583
    %1649 = vmatprep.subr.bf16.mxu0 %v1586
    %1650 = vmatpush1.bf16.msra.mxu0 %v1585
    %1651 = vmatprep.subr.bf16.mxu0 %v1588
    %1652 = vmatpush1.bf16.msra.mxu0 %v1587
    %1653 = vmatprep.subr.bf16.mxu0 %v1590
    %1654 = vmatpush1.bf16.msra.mxu0 %v1589
    %1655 = vmatprep.subr.bf16.mxu0 %v1592
    %1656 = vmatpush1.bf16.msra.mxu0 %v1591
    %1657 = vmatprep.subr.bf16.mxu0 %v1594
    %1658 = vmatpush1.bf16.msra.mxu0 %v1593
    %1659 = vmatprep.subr.bf16.mxu0 %v1596
    %1660 = vmatpush1.bf16.msra.mxu0 %v1595
    %1661 = vmatprep.subr.bf16.mxu0 %v1598
    %1662 = vmatpush1.bf16.msra.mxu0 %v1597
    %1663 = vmatprep.subr.bf16.mxu0 %v1600
    %1664 = vmatpush1.bf16.msra.mxu0 %v1599
    %1665 = vmatprep.subr.bf16.mxu0 %v1602
    %1666 = vmatpush1.bf16.msra.mxu0 %v1601
    %1667 = vmatprep.mubr.bf16.mxu0 %v1428
    %1668 = vmatmul.mubr.bf16.gmra.mrb[0].mxu0 %v1427
    %v1669 = vpop.f32.mrb[0].mxu0
    %v1670 = vadd.f32 %v1468, %v1669
    %v1671 = vpop.f32.mrb[0].mxu0
    %v1672 = vadd.f32 %v1472, %v1671
    %v1673 = vpop.f32.mrb[0].mxu0
    %v1674 = vadd.f32 %v1468, %v1673
    %v1675 = vpop.f32.mrb[0].mxu0
    %v1676 = vadd.f32 %v1472, %v1675
    %1677 = vmatprep.mubr.bf16.mxu0 %v1430
    %1678 = vmatmul.mubr.bf16.gmra.mrb[0].mxu0 %v1429
    %v1679 = vpop.f32.mrb[0].mxu0
    %v1680 = vadd.f32 %v1468, %v1679
    %v1681 = vpop.f32.mrb[0].mxu0
    %v1682 = vadd.f32 %v1472, %v1681
    %v1683 = vpop.f32.mrb[0].mxu0
    %v1684 = vadd.f32 %v1468, %v1683
    %v1685 = vpop.f32.mrb[0].mxu0
    %v1686 = vadd.f32 %v1472, %v1685
    %1687 = vdwg.mxu0
    %v1688 = vadd.f32 %v195, %v1670
    %v1689 = vadd.f32 %v196, %v1672
    %v1690 = vadd.f32 %v197, %v1674
    %v1691 = vadd.f32 %v198, %v1676
    %v1692 = vadd.f32 %v199, %v1680
    %v1693 = vadd.f32 %v200, %v1682
    %v1694 = vadd.f32 %v201, %v1684
    %v1695 = vadd.f32 %v202, %v1686
    %v1696 = vld [vmem:[%s6] sm:$0x3]
    %v1697 = vld [vmem:[%s7] sm:$0x3]
    %v1698 = vadd.f32 %v1688, %v1689
    %1699 = vadd.xlane.f32.xlu0 %v1698
    %v1700 = vpop.xlane.xlu0 %1699
    %v1701 = vadd.f32 %v1690, %v1691
    %1702 = vadd.xlane.f32.xlu0 %v1701
    %v1703 = vpop.xlane.xlu0 %1702
    %v1704 = vadd.f32 %v1692, %v1693
    %1705 = vadd.xlane.f32.xlu0 %v1704
    %v1706 = vpop.xlane.xlu0 %1705
    %v1707 = vadd.f32 %v1694, %v1695
    %1708 = vadd.xlane.f32.xlu0 %v1707
    %v1709 = vpop.xlane.xlu0 %1708
    %v1710 = vrcp.pop 256.0
    %v1711 = vmul.f32 %v1700, %v1710
    %v1712 = vmul.f32 %v1703, %v1710
    %v1713 = vmul.f32 %v1706, %v1710
    %v1714 = vmul.f32 %v1709, %v1710
    %v1715 = vsub.f32 %v1688, %v1711
    %v1716 = vsub.f32 %v1689, %v1711
    %v1717 = vsub.f32 %v1690, %v1712
    %v1718 = vsub.f32 %v1691, %v1712
    %v1719 = vsub.f32 %v1692, %v1713
    %v1720 = vsub.f32 %v1693, %v1713
    %v1721 = vsub.f32 %v1694, %v1714
    %v1722 = vsub.f32 %v1695, %v1714
    %v1723 = vmul.f32 %v1715, %v1715
    %v1724 = vmul.f32 %v1716, %v1716
    %v1725 = vmul.f32 %v1717, %v1717
    %v1726 = vmul.f32 %v1718, %v1718
    %v1727 = vmul.f32 %v1719, %v1719
    %v1728 = vmul.f32 %v1720, %v1720
    %v1729 = vmul.f32 %v1721, %v1721
    %v1730 = vmul.f32 %v1722, %v1722
    %v1731 = vadd.f32 %v1723, %v1724
    %1732 = vadd.xlane.f32.xlu0 %v1731
    %v1733 = vpop.xlane.xlu0 %1732
    %v1734 = vadd.f32 %v1725, %v1726
    %1735 = vadd.xlane.f32.xlu0 %v1734
    %v1736 = vpop.xlane.xlu0 %1735
    %v1737 = vadd.f32 %v1727, %v1728
    %1738 = vadd.xlane.f32.xlu0 %v1737
    %v1739 = vpop.xlane.xlu0 %1738
    %v1740 = vadd.f32 %v1729, %v1730
    %1741 = vadd.xlane.f32.xlu0 %v1740
    %v1742 = vpop.xlane.xlu0 %1741
    %v1743 = vmul.f32 %v1733, %v1710
    %v1744 = vmul.f32 %v1736, %v1710
    %v1745 = vmul.f32 %v1739, %v1710
    %v1746 = vmul.f32 %v1742, %v1710
    %v1747 = vadd.f32 %v1743, 1e-06
    %v1748 = vadd.f32 %v1744, 1e-06
    %v1749 = vadd.f32 %v1745, 1e-06
    %v1750 = vadd.f32 %v1746, 1e-06
    %v1751 = vrsqrt.pop %v1747
    %v1752 = vrsqrt.pop %v1748
    %v1753 = vrsqrt.pop %v1749
    %v1754 = vrsqrt.pop %v1750
    %v1755 = vmul.f32 %v1715, %v1751
    %v1756 = vmul.f32 %v1716, %v1751
    %v1757 = vmul.f32 %v1717, %v1752
    %v1758 = vmul.f32 %v1718, %v1752
    %v1759 = vmul.f32 %v1719, %v1753
    %v1760 = vmul.f32 %v1720, %v1753
    %v1761 = vmul.f32 %v1721, %v1754
    %v1762 = vmul.f32 %v1722, %v1754
    %v1764 = vlaneseq
    %v1765 = vshrl.u32 %v1764, 7
    %v1766 = vsub.s32 0, %v1765
    %v1767 = vrot.slane %v1696, %v1766
    %v1768 = vlaneseq
    %v1769 = vshrl.u32 %v1768, 7
    %v1770 = vsub.s32 1, %v1769
    %v1771 = vrot.slane %v1696, %v1770
    %v1774 = vmul.f32 %v1755, %v1767
    %v1775 = vmul.f32 %v1756, %v1771
    %v1776 = vmul.f32 %v1757, %v1767
    %v1777 = vmul.f32 %v1758, %v1771
    %v1778 = vmul.f32 %v1759, %v1767
    %v1779 = vmul.f32 %v1760, %v1771
    %v1780 = vmul.f32 %v1761, %v1767
    %v1781 = vmul.f32 %v1762, %v1771
    %v1783 = vlaneseq
    %v1784 = vshrl.u32 %v1783, 7
    %v1785 = vsub.s32 0, %v1784
    %v1786 = vrot.slane %v1697, %v1785
    %v1787 = vlaneseq
    %v1788 = vshrl.u32 %v1787, 7
    %v1789 = vsub.s32 1, %v1788
    %v1790 = vrot.slane %v1697, %v1789
    %v1793 = vadd.f32 %v1774, %v1786
    %v1794 = vadd.f32 %v1775, %v1790
    %v1795 = vadd.f32 %v1776, %v1786
    %v1796 = vadd.f32 %v1777, %v1790
    %v1797 = vadd.f32 %v1778, %v1786
    %v1798 = vadd.f32 %v1779, %v1790
    %v1799 = vadd.f32 %v1780, %v1786
    %v1800 = vadd.f32 %v1781, %v1790
    %v1801 = vpack.c.bf16 %v205, %v203
    %v1802 = vpack.c.bf16 %v206, %v204
    %v1803 = vpack.c.bf16 %v209, %v207
    %v1804 = vpack.c.bf16 %v210, %v208
    %v1805 = vld [vmem:[#allocation10] sm:$0xff]
    %v1806 = vld [vmem:[#allocation10 + $0x8] sm:$0xff]
    %v1807 = vld [vmem:[#allocation10 + $0x10] sm:$0xff]
    %v1808 = vld [vmem:[#allocation10 + $0x18] sm:$0xff]
    %v1809 = vld [vmem:[#allocation10 + $0x20] sm:$0xff]
    %v1810 = vld [vmem:[#allocation10 + $0x28] sm:$0xff]
    %v1811 = vld [vmem:[#allocation10 + $0x30] sm:$0xff]
    %v1812 = vld [vmem:[#allocation10 + $0x38] sm:$0xff]
    %v1813 = vld [vmem:[#allocation10 + $0x40] sm:$0xff]
    %v1814 = vld [vmem:[#allocation10 + $0x48] sm:$0xff]
    %v1815 = vld [vmem:[#allocation10 + $0x50] sm:$0xff]
    %v1816 = vld [vmem:[#allocation10 + $0x58] sm:$0xff]
    %v1817 = vld [vmem:[#allocation10 + $0x60] sm:$0xff]
    %v1818 = vld [vmem:[#allocation10 + $0x68] sm:$0xff]
    %v1819 = vld [vmem:[#allocation10 + $0x70] sm:$0xff]
    %v1820 = vld [vmem:[#allocation10 + $0x78] sm:$0xff]
    %v1821 = vld [vmem:[#allocation10 + $0x80] sm:$0xff]
    %v1822 = vld [vmem:[#allocation10 + $0x88] sm:$0xff]
    %v1823 = vld [vmem:[#allocation10 + $0x90] sm:$0xff]
    %v1824 = vld [vmem:[#allocation10 + $0x98] sm:$0xff]
    %v1825 = vld [vmem:[#allocation10 + $0xa0] sm:$0xff]
    %v1826 = vld [vmem:[#allocation10 + $0xa8] sm:$0xff]
    %v1827 = vld [vmem:[#allocation10 + $0xb0] sm:$0xff]
    %v1828 = vld [vmem:[#allocation10 + $0xb8] sm:$0xff]
    %v1829 = vld [vmem:[#allocation10 + $0xc0] sm:$0xff]
    %v1830 = vld [vmem:[#allocation10 + $0xc8] sm:$0xff]
    %v1831 = vld [vmem:[#allocation10 + $0xd0] sm:$0xff]
    %v1832 = vld [vmem:[#allocation10 + $0xd8] sm:$0xff]
    %v1833 = vld [vmem:[#allocation10 + $0xe0] sm:$0xff]
    %v1834 = vld [vmem:[#allocation10 + $0xe8] sm:$0xff]
    %v1835 = vld [vmem:[#allocation10 + $0xf0] sm:$0xff]
    %v1836 = vld [vmem:[#allocation10 + $0xf8] sm:$0xff]
    %v1837 = vld [vmem:[#allocation10 + $0x100] sm:$0xff]
    %v1838 = vld [vmem:[#allocation10 + $0x108] sm:$0xff]
    %v1839 = vld [vmem:[#allocation10 + $0x110] sm:$0xff]
    %v1840 = vld [vmem:[#allocation10 + $0x118] sm:$0xff]
    %v1841 = vld [vmem:[#allocation10 + $0x120] sm:$0xff]
    %v1842 = vld [vmem:[#allocation10 + $0x128] sm:$0xff]
    %v1843 = vld [vmem:[#allocation10 + $0x130] sm:$0xff]
    %v1844 = vld [vmem:[#allocation10 + $0x138] sm:$0xff]
    %v1845 = vld [vmem:[#allocation10 + $0x140] sm:$0xff]
    %v1846 = vld [vmem:[#allocation10 + $0x148] sm:$0xff]
    %v1847 = vld [vmem:[#allocation10 + $0x150] sm:$0xff]
    %v1848 = vld [vmem:[#allocation10 + $0x158] sm:$0xff]
    %v1849 = vld [vmem:[#allocation10 + $0x160] sm:$0xff]
    %v1850 = vld [vmem:[#allocation10 + $0x168] sm:$0xff]
    %v1851 = vld [vmem:[#allocation10 + $0x170] sm:$0xff]
    %v1852 = vld [vmem:[#allocation10 + $0x178] sm:$0xff]
    %v1853 = vld [vmem:[#allocation10 + $0x180] sm:$0xff]
    %v1854 = vld [vmem:[#allocation10 + $0x188] sm:$0xff]
    %v1855 = vld [vmem:[#allocation10 + $0x190] sm:$0xff]
    %v1856 = vld [vmem:[#allocation10 + $0x198] sm:$0xff]
    %v1857 = vld [vmem:[#allocation10 + $0x1a0] sm:$0xff]
    %v1858 = vld [vmem:[#allocation10 + $0x1a8] sm:$0xff]
    %v1859 = vld [vmem:[#allocation10 + $0x1b0] sm:$0xff]
    %v1860 = vld [vmem:[#allocation10 + $0x1b8] sm:$0xff]
    %v1861 = vld [vmem:[#allocation10 + $0x1c0] sm:$0xff]
    %v1862 = vld [vmem:[#allocation10 + $0x1c8] sm:$0xff]
    %v1863 = vld [vmem:[#allocation10 + $0x1d0] sm:$0xff]
    %v1864 = vld [vmem:[#allocation10 + $0x1d8] sm:$0xff]
    %v1865 = vld [vmem:[#allocation10 + $0x1e0] sm:$0xff]
    %v1866 = vld [vmem:[#allocation10 + $0x1e8] sm:$0xff]
    %v1867 = vld [vmem:[#allocation10 + $0x1f0] sm:$0xff]
    %v1868 = vld [vmem:[#allocation10 + $0x1f8] sm:$0xff]
    %v1869 = vld [vmem:[%s9] sm:$0xf]
    %v1871 = vlaneseq
    %v1872 = vshrl.u32 %v1871, 7
    %v1873 = vsub.s32 0, %v1872
    %v1874 = vrot.slane %v1869, %v1873
    %v1875 = vlaneseq
    %v1876 = vshrl.u32 %v1875, 7
    %v1877 = vsub.s32 1, %v1876
    %v1878 = vrot.slane %v1869, %v1877
    %v1879 = vlaneseq
    %v1880 = vshrl.u32 %v1879, 7
    %v1881 = vsub.s32 2, %v1880
    %v1882 = vrot.slane %v1869, %v1881
    %v1883 = vlaneseq
    %v1884 = vshrl.u32 %v1883, 7
    %v1885 = vsub.s32 3, %v1884
    %v1886 = vrot.slane %v1869, %v1885
    %v1955 = vunpack.c.l.b16 %v1805
    %v1956 = vunpack.c.h.b16 %v1805
    %v1957 = vunpack.c.l.b16 %v1806
    %v1958 = vunpack.c.h.b16 %v1806
    %v1959 = vunpack.c.l.b16 %v1807
    %v1960 = vunpack.c.h.b16 %v1807
    %v1961 = vunpack.c.l.b16 %v1808
    %v1962 = vunpack.c.h.b16 %v1808
    %v1963 = vunpack.c.l.b16 %v1809
    %v1964 = vunpack.c.h.b16 %v1809
    %v1965 = vunpack.c.l.b16 %v1810
    %v1966 = vunpack.c.h.b16 %v1810
    %v1967 = vunpack.c.l.b16 %v1811
    %v1968 = vunpack.c.h.b16 %v1811
    %v1969 = vunpack.c.l.b16 %v1812
    %v1970 = vunpack.c.h.b16 %v1812
    %v1971 = vunpack.c.l.b16 %v1813
    %v1972 = vunpack.c.h.b16 %v1813
    %v1973 = vunpack.c.l.b16 %v1814
    %v1974 = vunpack.c.h.b16 %v1814
    %v1975 = vunpack.c.l.b16 %v1815
    %v1976 = vunpack.c.h.b16 %v1815
    %v1977 = vunpack.c.l.b16 %v1816
    %v1978 = vunpack.c.h.b16 %v1816
    %v1979 = vunpack.c.l.b16 %v1817
    %v1980 = vunpack.c.h.b16 %v1817
    %v1981 = vunpack.c.l.b16 %v1818
    %v1982 = vunpack.c.h.b16 %v1818
    %v1983 = vunpack.c.l.b16 %v1819
    %v1984 = vunpack.c.h.b16 %v1819
    %v1985 = vunpack.c.l.b16 %v1820
    %v1986 = vunpack.c.h.b16 %v1820
    %v1987 = vunpack.c.l.b16 %v1821
    %v1988 = vunpack.c.h.b16 %v1821
    %v1989 = vunpack.c.l.b16 %v1822
    %v1990 = vunpack.c.h.b16 %v1822
    %v1991 = vunpack.c.l.b16 %v1823
    %v1992 = vunpack.c.h.b16 %v1823
    %v1993 = vunpack.c.l.b16 %v1824
    %v1994 = vunpack.c.h.b16 %v1824
    %v1995 = vunpack.c.l.b16 %v1825
    %v1996 = vunpack.c.h.b16 %v1825
    %v1997 = vunpack.c.l.b16 %v1826
    %v1998 = vunpack.c.h.b16 %v1826
    %v1999 = vunpack.c.l.b16 %v1827
    %v2000 = vunpack.c.h.b16 %v1827
    %v2001 = vunpack.c.l.b16 %v1828
    %v2002 = vunpack.c.h.b16 %v1828
    %v2003 = vunpack.c.l.b16 %v1829
    %v2004 = vunpack.c.h.b16 %v1829
    %v2005 = vunpack.c.l.b16 %v1830
    %v2006 = vunpack.c.h.b16 %v1830
    %v2007 = vunpack.c.l.b16 %v1831
    %v2008 = vunpack.c.h.b16 %v1831
    %v2009 = vunpack.c.l.b16 %v1832
    %v2010 = vunpack.c.h.b16 %v1832
    %v2011 = vunpack.c.l.b16 %v1833
    %v2012 = vunpack.c.h.b16 %v1833
    %v2013 = vunpack.c.l.b16 %v1834
    %v2014 = vunpack.c.h.b16 %v1834
    %v2015 = vunpack.c.l.b16 %v1835
    %v2016 = vunpack.c.h.b16 %v1835
    %v2017 = vunpack.c.l.b16 %v1836
    %v2018 = vunpack.c.h.b16 %v1836
    %v2019 = vunpack.c.l.b16 %v1837
    %v2020 = vunpack.c.h.b16 %v1837
    %v2021 = vunpack.c.l.b16 %v1838
    %v2022 = vunpack.c.h.b16 %v1838
    %v2023 = vunpack.c.l.b16 %v1839
    %v2024 = vunpack.c.h.b16 %v1839
    %v2025 = vunpack.c.l.b16 %v1840
    %v2026 = vunpack.c.h.b16 %v1840
    %v2027 = vunpack.c.l.b16 %v1841
    %v2028 = vunpack.c.h.b16 %v1841
    %v2029 = vunpack.c.l.b16 %v1842
    %v2030 = vunpack.c.h.b16 %v1842
    %v2031 = vunpack.c.l.b16 %v1843
    %v2032 = vunpack.c.h.b16 %v1843
    %v2033 = vunpack.c.l.b16 %v1844
    %v2034 = vunpack.c.h.b16 %v1844
    %v2035 = vunpack.c.l.b16 %v1845
    %v2036 = vunpack.c.h.b16 %v1845
    %v2037 = vunpack.c.l.b16 %v1846
    %v2038 = vunpack.c.h.b16 %v1846
    %v2039 = vunpack.c.l.b16 %v1847
    %v2040 = vunpack.c.h.b16 %v1847
    %v2041 = vunpack.c.l.b16 %v1848
    %v2042 = vunpack.c.h.b16 %v1848
    %v2043 = vunpack.c.l.b16 %v1849
    %v2044 = vunpack.c.h.b16 %v1849
    %v2045 = vunpack.c.l.b16 %v1850
    %v2046 = vunpack.c.h.b16 %v1850
    %v2047 = vunpack.c.l.b16 %v1851
    %v2048 = vunpack.c.h.b16 %v1851
    %v2049 = vunpack.c.l.b16 %v1852
    %v2050 = vunpack.c.h.b16 %v1852
    %v2051 = vunpack.c.l.b16 %v1853
    %v2052 = vunpack.c.h.b16 %v1853
    %v2053 = vunpack.c.l.b16 %v1854
    %v2054 = vunpack.c.h.b16 %v1854
    %v2055 = vunpack.c.l.b16 %v1855
    %v2056 = vunpack.c.h.b16 %v1855
    %v2057 = vunpack.c.l.b16 %v1856
    %v2058 = vunpack.c.h.b16 %v1856
    %v2059 = vunpack.c.l.b16 %v1857
    %v2060 = vunpack.c.h.b16 %v1857
    %v2061 = vunpack.c.l.b16 %v1858
    %v2062 = vunpack.c.h.b16 %v1858
    %v2063 = vunpack.c.l.b16 %v1859
    %v2064 = vunpack.c.h.b16 %v1859
    %v2065 = vunpack.c.l.b16 %v1860
    %v2066 = vunpack.c.h.b16 %v1860
    %v2067 = vunpack.c.l.b16 %v1861
    %v2068 = vunpack.c.h.b16 %v1861
    %v2069 = vunpack.c.l.b16 %v1862
    %v2070 = vunpack.c.h.b16 %v1862
    %v2071 = vunpack.c.l.b16 %v1863
    %v2072 = vunpack.c.h.b16 %v1863
    %v2073 = vunpack.c.l.b16 %v1864
    %v2074 = vunpack.c.h.b16 %v1864
    %v2075 = vunpack.c.l.b16 %v1865
    %v2076 = vunpack.c.h.b16 %v1865
    %v2077 = vunpack.c.l.b16 %v1866
    %v2078 = vunpack.c.h.b16 %v1866
    %v2079 = vunpack.c.l.b16 %v1867
    %v2080 = vunpack.c.h.b16 %v1867
    %v2081 = vunpack.c.l.b16 %v1868
    %v2082 = vunpack.c.h.b16 %v1868
    %v2083 = vpack.c.b16 %v1959, %v1955
    %v2084 = vpack.c.b16 %v1960, %v1956
    %v2085 = vpack.c.b16 %v1961, %v1957
    %v2086 = vpack.c.b16 %v1962, %v1958
    %v2087 = vpack.c.b16 %v1967, %v1963
    %v2088 = vpack.c.b16 %v1968, %v1964
    %v2089 = vpack.c.b16 %v1969, %v1965
    %v2090 = vpack.c.b16 %v1970, %v1966
    %v2091 = vpack.c.b16 %v1975, %v1971
    %v2092 = vpack.c.b16 %v1976, %v1972
    %v2093 = vpack.c.b16 %v1977, %v1973
    %v2094 = vpack.c.b16 %v1978, %v1974
    %v2095 = vpack.c.b16 %v1983, %v1979
    %v2096 = vpack.c.b16 %v1984, %v1980
    %v2097 = vpack.c.b16 %v1985, %v1981
    %v2098 = vpack.c.b16 %v1986, %v1982
    %v2099 = vpack.c.b16 %v1991, %v1987
    %v2100 = vpack.c.b16 %v1992, %v1988
    %v2101 = vpack.c.b16 %v1993, %v1989
    %v2102 = vpack.c.b16 %v1994, %v1990
    %v2103 = vpack.c.b16 %v1999, %v1995
    %v2104 = vpack.c.b16 %v2000, %v1996
    %v2105 = vpack.c.b16 %v2001, %v1997
    %v2106 = vpack.c.b16 %v2002, %v1998
    %v2107 = vpack.c.b16 %v2007, %v2003
    %v2108 = vpack.c.b16 %v2008, %v2004
    %v2109 = vpack.c.b16 %v2009, %v2005
    %v2110 = vpack.c.b16 %v2010, %v2006
    %v2111 = vpack.c.b16 %v2015, %v2011
    %v2112 = vpack.c.b16 %v2016, %v2012
    %v2113 = vpack.c.b16 %v2017, %v2013
    %v2114 = vpack.c.b16 %v2018, %v2014
    %v2115 = vpack.c.b16 %v2023, %v2019
    %v2116 = vpack.c.b16 %v2024, %v2020
    %v2117 = vpack.c.b16 %v2025, %v2021
    %v2118 = vpack.c.b16 %v2026, %v2022
    %v2119 = vpack.c.b16 %v2031, %v2027
    %v2120 = vpack.c.b16 %v2032, %v2028
    %v2121 = vpack.c.b16 %v2033, %v2029
    %v2122 = vpack.c.b16 %v2034, %v2030
    %v2123 = vpack.c.b16 %v2039, %v2035
    %v2124 = vpack.c.b16 %v2040, %v2036
    %v2125 = vpack.c.b16 %v2041, %v2037
    %v2126 = vpack.c.b16 %v2042, %v2038
    %v2127 = vpack.c.b16 %v2047, %v2043
    %v2128 = vpack.c.b16 %v2048, %v2044
    %v2129 = vpack.c.b16 %v2049, %v2045
    %v2130 = vpack.c.b16 %v2050, %v2046
    %v2131 = vpack.c.b16 %v2055, %v2051
    %v2132 = vpack.c.b16 %v2056, %v2052
    %v2133 = vpack.c.b16 %v2057, %v2053
    %v2134 = vpack.c.b16 %v2058, %v2054
    %v2135 = vpack.c.b16 %v2063, %v2059
    %v2136 = vpack.c.b16 %v2064, %v2060
    %v2137 = vpack.c.b16 %v2065, %v2061
    %v2138 = vpack.c.b16 %v2066, %v2062
    %v2139 = vpack.c.b16 %v2071, %v2067
    %v2140 = vpack.c.b16 %v2072, %v2068
    %v2141 = vpack.c.b16 %v2073, %v2069
    %v2142 = vpack.c.b16 %v2074, %v2070
    %v2143 = vpack.c.b16 %v2079, %v2075
    %v2144 = vpack.c.b16 %v2080, %v2076
    %v2145 = vpack.c.b16 %v2081, %v2077
    %v2146 = vpack.c.b16 %v2082, %v2078
    %2211 = vmatprep.subr.bf16.mxu0 %v2084
    %2212 = vmatpush1.bf16.msra.mxu0 %v2083
    %2213 = vmatprep.subr.bf16.mxu0 %v2088
    %2214 = vmatpush1.bf16.msra.mxu0 %v2087
    %2215 = vmatprep.subr.bf16.mxu0 %v2092
    %2216 = vmatpush1.bf16.msra.mxu0 %v2091
    %2217 = vmatprep.subr.bf16.mxu0 %v2096
    %2218 = vmatpush1.bf16.msra.mxu0 %v2095
    %2219 = vmatprep.subr.bf16.mxu0 %v2100
    %2220 = vmatpush1.bf16.msra.mxu0 %v2099
    %2221 = vmatprep.subr.bf16.mxu0 %v2104
    %2222 = vmatpush1.bf16.msra.mxu0 %v2103
    %2223 = vmatprep.subr.bf16.mxu0 %v2108
    %2224 = vmatpush1.bf16.msra.mxu0 %v2107
    %2225 = vmatprep.subr.bf16.mxu0 %v2112
    %2226 = vmatpush1.bf16.msra.mxu0 %v2111
    %2227 = vmatprep.subr.bf16.mxu0 %v2116
    %2228 = vmatpush1.bf16.msra.mxu0 %v2115
    %2229 = vmatprep.subr.bf16.mxu0 %v2120
    %2230 = vmatpush1.bf16.msra.mxu0 %v2119
    %2231 = vmatprep.subr.bf16.mxu0 %v2124
    %2232 = vmatpush1.bf16.msra.mxu0 %v2123
    %2233 = vmatprep.subr.bf16.mxu0 %v2128
    %2234 = vmatpush1.bf16.msra.mxu0 %v2127
    %2235 = vmatprep.subr.bf16.mxu0 %v2132
    %2236 = vmatpush1.bf16.msra.mxu0 %v2131
    %2237 = vmatprep.subr.bf16.mxu0 %v2136
    %2238 = vmatpush1.bf16.msra.mxu0 %v2135
    %2239 = vmatprep.subr.bf16.mxu0 %v2140
    %2240 = vmatpush1.bf16.msra.mxu0 %v2139
    %2241 = vmatprep.subr.bf16.mxu0 %v2144
    %2242 = vmatpush1.bf16.msra.mxu0 %v2143
    %2243 = vmatprep.mubr.bf16.mxu0 %v1802
    %2244 = vmatmul.mubr.bf16.gmra.mrb[0].mxu0 %v1801
    %v2245 = vpop.f32.mrb[0].mxu0
    %v2246 = vadd.f32 %v1874, %v2245
    %v2247 = vpop.f32.mrb[0].mxu0
    %v2248 = vadd.f32 %v1878, %v2247
    %v2249 = vpop.f32.mrb[0].mxu0
    %v2250 = vadd.f32 %v1874, %v2249
    %v2251 = vpop.f32.mrb[0].mxu0
    %v2252 = vadd.f32 %v1878, %v2251
    %2253 = vmatprep.mubr.bf16.mxu0 %v1804
    %2254 = vmatmul.mubr.bf16.gmra.mrb[0].mxu0 %v1803
    %v2255 = vpop.f32.mrb[0].mxu0
    %v2256 = vadd.f32 %v1874, %v2255
    %v2257 = vpop.f32.mrb[0].mxu0
    %v2258 = vadd.f32 %v1878, %v2257
    %v2259 = vpop.f32.mrb[0].mxu0
    %v2260 = vadd.f32 %v1874, %v2259
    %v2261 = vpop.f32.mrb[0].mxu0
    %v2262 = vadd.f32 %v1878, %v2261
    %2263 = vdwg.mxu0
    %2264 = vmatprep.subr.bf16.mxu0 %v2086
    %2265 = vmatpush1.bf16.msra.mxu0 %v2085
    %2266 = vmatprep.subr.bf16.mxu0 %v2090
    %2267 = vmatpush1.bf16.msra.mxu0 %v2089
    %2268 = vmatprep.subr.bf16.mxu0 %v2094
    %2269 = vmatpush1.bf16.msra.mxu0 %v2093
    %2270 = vmatprep.subr.bf16.mxu0 %v2098
    %2271 = vmatpush1.bf16.msra.mxu0 %v2097
    %2272 = vmatprep.subr.bf16.mxu0 %v2102
    %2273 = vmatpush1.bf16.msra.mxu0 %v2101
    %2274 = vmatprep.subr.bf16.mxu0 %v2106
    %2275 = vmatpush1.bf16.msra.mxu0 %v2105
    %2276 = vmatprep.subr.bf16.mxu0 %v2110
    %2277 = vmatpush1.bf16.msra.mxu0 %v2109
    %2278 = vmatprep.subr.bf16.mxu0 %v2114
    %2279 = vmatpush1.bf16.msra.mxu0 %v2113
    %2280 = vmatprep.subr.bf16.mxu0 %v2118
    %2281 = vmatpush1.bf16.msra.mxu0 %v2117
    %2282 = vmatprep.subr.bf16.mxu0 %v2122
    %2283 = vmatpush1.bf16.msra.mxu0 %v2121
    %2284 = vmatprep.subr.bf16.mxu0 %v2126
    %2285 = vmatpush1.bf16.msra.mxu0 %v2125
    %2286 = vmatprep.subr.bf16.mxu0 %v2130
    %2287 = vmatpush1.bf16.msra.mxu0 %v2129
    %2288 = vmatprep.subr.bf16.mxu0 %v2134
    %2289 = vmatpush1.bf16.msra.mxu0 %v2133
    %2290 = vmatprep.subr.bf16.mxu0 %v2138
    %2291 = vmatpush1.bf16.msra.mxu0 %v2137
    %2292 = vmatprep.subr.bf16.mxu0 %v2142
    %2293 = vmatpush1.bf16.msra.mxu0 %v2141
    %2294 = vmatprep.subr.bf16.mxu0 %v2146
    %2295 = vmatpush1.bf16.msra.mxu0 %v2145
    %2296 = vmatprep.mubr.bf16.mxu0 %v1802
    %2297 = vmatmul.mubr.bf16.gmra.mrb[0].mxu0 %v1801
    %v2298 = vpop.f32.mrb[0].mxu0
    %v2299 = vadd.f32 %v1882, %v2298
    %v2300 = vpop.f32.mrb[0].mxu0
    %v2301 = vadd.f32 %v1886, %v2300
    %v2302 = vpop.f32.mrb[0].mxu0
    %v2303 = vadd.f32 %v1882, %v2302
    %v2304 = vpop.f32.mrb[0].mxu0
    %v2305 = vadd.f32 %v1886, %v2304
    %2306 = vmatprep.mubr.bf16.mxu0 %v1804
    %2307 = vmatmul.mubr.bf16.gmra.mrb[0].mxu0 %v1803
    %v2308 = vpop.f32.mrb[0].mxu0
    %v2309 = vadd.f32 %v1882, %v2308
    %v2310 = vpop.f32.mrb[0].mxu0
    %v2311 = vadd.f32 %v1886, %v2310
    %v2312 = vpop.f32.mrb[0].mxu0
    %v2313 = vadd.f32 %v1882, %v2312
    %v2314 = vpop.f32.mrb[0].mxu0
    %v2315 = vadd.f32 %v1886, %v2314
    %2316 = vdwg.mxu0
    %v2317 = vpack.c.bf16 %v1795, %v1793
    %v2318 = vpack.c.bf16 %v1796, %v1794
    %v2319 = vpack.c.bf16 %v1799, %v1797
    %v2320 = vpack.c.bf16 %v1800, %v1798
    %v2321 = vld [vmem:[#allocation11] sm:$0xff]
    %v2322 = vld [vmem:[#allocation11 + $0x8] sm:$0xff]
    %v2323 = vld [vmem:[#allocation11 + $0x10] sm:$0xff]
    %v2324 = vld [vmem:[#allocation11 + $0x18] sm:$0xff]
    %v2325 = vld [vmem:[#allocation11 + $0x20] sm:$0xff]
    %v2326 = vld [vmem:[#allocation11 + $0x28] sm:$0xff]
    %v2327 = vld [vmem:[#allocation11 + $0x30] sm:$0xff]
    %v2328 = vld [vmem:[#allocation11 + $0x38] sm:$0xff]
    %v2329 = vld [vmem:[#allocation11 + $0x40] sm:$0xff]
    %v2330 = vld [vmem:[#allocation11 + $0x48] sm:$0xff]
    %v2331 = vld [vmem:[#allocation11 + $0x50] sm:$0xff]
    %v2332 = vld [vmem:[#allocation11 + $0x58] sm:$0xff]
    %v2333 = vld [vmem:[#allocation11 + $0x60] sm:$0xff]
    %v2334 = vld [vmem:[#allocation11 + $0x68] sm:$0xff]
    %v2335 = vld [vmem:[#allocation11 + $0x70] sm:$0xff]
    %v2336 = vld [vmem:[#allocation11 + $0x78] sm:$0xff]
    %v2337 = vld [vmem:[#allocation11 + $0x80] sm:$0xff]
    %v2338 = vld [vmem:[#allocation11 + $0x88] sm:$0xff]
    %v2339 = vld [vmem:[#allocation11 + $0x90] sm:$0xff]
    %v2340 = vld [vmem:[#allocation11 + $0x98] sm:$0xff]
    %v2341 = vld [vmem:[#allocation11 + $0xa0] sm:$0xff]
    %v2342 = vld [vmem:[#allocation11 + $0xa8] sm:$0xff]
    %v2343 = vld [vmem:[#allocation11 + $0xb0] sm:$0xff]
    %v2344 = vld [vmem:[#allocation11 + $0xb8] sm:$0xff]
    %v2345 = vld [vmem:[#allocation11 + $0xc0] sm:$0xff]
    %v2346 = vld [vmem:[#allocation11 + $0xc8] sm:$0xff]
    %v2347 = vld [vmem:[#allocation11 + $0xd0] sm:$0xff]
    %v2348 = vld [vmem:[#allocation11 + $0xd8] sm:$0xff]
    %v2349 = vld [vmem:[#allocation11 + $0xe0] sm:$0xff]
    %v2350 = vld [vmem:[#allocation11 + $0xe8] sm:$0xff]
    %v2351 = vld [vmem:[#allocation11 + $0xf0] sm:$0xff]
    %v2352 = vld [vmem:[#allocation11 + $0xf8] sm:$0xff]
    %v2353 = vld [vmem:[%s11] sm:$0x3]
    %v2355 = vlaneseq
    %v2356 = vshrl.u32 %v2355, 7
    %v2357 = vsub.s32 0, %v2356
    %v2358 = vrot.slane %v2353, %v2357
    %v2359 = vlaneseq
    %v2360 = vshrl.u32 %v2359, 7
    %v2361 = vsub.s32 1, %v2360
    %v2362 = vrot.slane %v2353, %v2361
    %v2397 = vunpack.c.l.b16 %v2321
    %v2398 = vunpack.c.h.b16 %v2321
    %v2399 = vunpack.c.l.b16 %v2322
    %v2400 = vunpack.c.h.b16 %v2322
    %v2401 = vunpack.c.l.b16 %v2323
    %v2402 = vunpack.c.h.b16 %v2323
    %v2403 = vunpack.c.l.b16 %v2324
    %v2404 = vunpack.c.h.b16 %v2324
    %v2405 = vunpack.c.l.b16 %v2325
    %v2406 = vunpack.c.h.b16 %v2325
    %v2407 = vunpack.c.l.b16 %v2326
    %v2408 = vunpack.c.h.b16 %v2326
    %v2409 = vunpack.c.l.b16 %v2327
    %v2410 = vunpack.c.h.b16 %v2327
    %v2411 = vunpack.c.l.b16 %v2328
    %v2412 = vunpack.c.h.b16 %v2328
    %v2413 = vunpack.c.l.b16 %v2329
    %v2414 = vunpack.c.h.b16 %v2329
    %v2415 = vunpack.c.l.b16 %v2330
    %v2416 = vunpack.c.h.b16 %v2330
    %v2417 = vunpack.c.l.b16 %v2331
    %v2418 = vunpack.c.h.b16 %v2331
    %v2419 = vunpack.c.l.b16 %v2332
    %v2420 = vunpack.c.h.b16 %v2332
    %v2421 = vunpack.c.l.b16 %v2333
    %v2422 = vunpack.c.h.b16 %v2333
    %v2423 = vunpack.c.l.b16 %v2334
    %v2424 = vunpack.c.h.b16 %v2334
    %v2425 = vunpack.c.l.b16 %v2335
    %v2426 = vunpack.c.h.b16 %v2335
    %v2427 = vunpack.c.l.b16 %v2336
    %v2428 = vunpack.c.h.b16 %v2336
    %v2429 = vunpack.c.l.b16 %v2337
    %v2430 = vunpack.c.h.b16 %v2337
    %v2431 = vunpack.c.l.b16 %v2338
    %v2432 = vunpack.c.h.b16 %v2338
    %v2433 = vunpack.c.l.b16 %v2339
    %v2434 = vunpack.c.h.b16 %v2339
    %v2435 = vunpack.c.l.b16 %v2340
    %v2436 = vunpack.c.h.b16 %v2340
    %v2437 = vunpack.c.l.b16 %v2341
    %v2438 = vunpack.c.h.b16 %v2341
    %v2439 = vunpack.c.l.b16 %v2342
    %v2440 = vunpack.c.h.b16 %v2342
    %v2441 = vunpack.c.l.b16 %v2343
    %v2442 = vunpack.c.h.b16 %v2343
    %v2443 = vunpack.c.l.b16 %v2344
    %v2444 = vunpack.c.h.b16 %v2344
    %v2445 = vunpack.c.l.b16 %v2345
    %v2446 = vunpack.c.h.b16 %v2345
    %v2447 = vunpack.c.l.b16 %v2346
    %v2448 = vunpack.c.h.b16 %v2346
    %v2449 = vunpack.c.l.b16 %v2347
    %v2450 = vunpack.c.h.b16 %v2347
    %v2451 = vunpack.c.l.b16 %v2348
    %v2452 = vunpack.c.h.b16 %v2348
    %v2453 = vunpack.c.l.b16 %v2349
    %v2454 = vunpack.c.h.b16 %v2349
    %v2455 = vunpack.c.l.b16 %v2350
    %v2456 = vunpack.c.h.b16 %v2350
    %v2457 = vunpack.c.l.b16 %v2351
    %v2458 = vunpack.c.h.b16 %v2351
    %v2459 = vunpack.c.l.b16 %v2352
    %v2460 = vunpack.c.h.b16 %v2352
    %v2461 = vpack.c.b16 %v2399, %v2397
    %v2462 = vpack.c.b16 %v2400, %v2398
    %v2463 = vpack.c.b16 %v2403, %v2401
    %v2464 = vpack.c.b16 %v2404, %v2402
    %v2465 = vpack.c.b16 %v2407, %v2405
    %v2466 = vpack.c.b16 %v2408, %v2406
    %v2467 = vpack.c.b16 %v2411, %v2409
    %v2468 = vpack.c.b16 %v2412, %v2410
    %v2469 = vpack.c.b16 %v2415, %v2413
    %v2470 = vpack.c.b16 %v2416, %v2414
    %v2471 = vpack.c.b16 %v2419, %v2417
    %v2472 = vpack.c.b16 %v2420, %v2418
    %v2473 = vpack.c.b16 %v2423, %v2421
    %v2474 = vpack.c.b16 %v2424, %v2422
    %v2475 = vpack.c.b16 %v2427, %v2425
    %v2476 = vpack.c.b16 %v2428, %v2426
    %v2477 = vpack.c.b16 %v2431, %v2429
    %v2478 = vpack.c.b16 %v2432, %v2430
    %v2479 = vpack.c.b16 %v2435, %v2433
    %v2480 = vpack.c.b16 %v2436, %v2434
    %v2481 = vpack.c.b16 %v2439, %v2437
    %v2482 = vpack.c.b16 %v2440, %v2438
    %v2483 = vpack.c.b16 %v2443, %v2441
    %v2484 = vpack.c.b16 %v2444, %v2442
    %v2485 = vpack.c.b16 %v2447, %v2445
    %v2486 = vpack.c.b16 %v2448, %v2446
    %v2487 = vpack.c.b16 %v2451, %v2449
    %v2488 = vpack.c.b16 %v2452, %v2450
    %v2489 = vpack.c.b16 %v2455, %v2453
    %v2490 = vpack.c.b16 %v2456, %v2454
    %v2491 = vpack.c.b16 %v2459, %v2457
    %v2492 = vpack.c.b16 %v2460, %v2458
    %2525 = vmatprep.subr.bf16.mxu0 %v2462
    %2526 = vmatpush1.bf16.msra.mxu0 %v2461
    %2527 = vmatprep.subr.bf16.mxu0 %v2464
    %2528 = vmatpush1.bf16.msra.mxu0 %v2463
    %2529 = vmatprep.subr.bf16.mxu0 %v2466
    %2530 = vmatpush1.bf16.msra.mxu0 %v2465
    %2531 = vmatprep.subr.bf16.mxu0 %v2468
    %2532 = vmatpush1.bf16.msra.mxu0 %v2467
    %2533 = vmatprep.subr.bf16.mxu0 %v2470
    %2534 = vmatpush1.bf16.msra.mxu0 %v2469
    %2535 = vmatprep.subr.bf16.mxu0 %v2472
    %2536 = vmatpush1.bf16.msra.mxu0 %v2471
    %2537 = vmatprep.subr.bf16.mxu0 %v2474
    %2538 = vmatpush1.bf16.msra.mxu0 %v2473
    %2539 = vmatprep.subr.bf16.mxu0 %v2476
    %2540 = vmatpush1.bf16.msra.mxu0 %v2475
    %2541 = vmatprep.subr.bf16.mxu0 %v2478
    %2542 = vmatpush1.bf16.msra.mxu0 %v2477
    %2543 = vmatprep.subr.bf16.mxu0 %v2480
    %2544 = vmatpush1.bf16.msra.mxu0 %v2479
    %2545 = vmatprep.subr.bf16.mxu0 %v2482
    %2546 = vmatpush1.bf16.msra.mxu0 %v2481
    %2547 = vmatprep.subr.bf16.mxu0 %v2484
    %2548 = vmatpush1.bf16.msra.mxu0 %v2483
    %2549 = vmatprep.subr.bf16.mxu0 %v2486
    %2550 = vmatpush1.bf16.msra.mxu0 %v2485
    %2551 = vmatprep.subr.bf16.mxu0 %v2488
    %2552 = vmatpush1.bf16.msra.mxu0 %v2487
    %2553 = vmatprep.subr.bf16.mxu0 %v2490
    %2554 = vmatpush1.bf16.msra.mxu0 %v2489
    %2555 = vmatprep.subr.bf16.mxu0 %v2492
    %2556 = vmatpush1.bf16.msra.mxu0 %v2491
    %2557 = vmatprep.mubr.bf16.mxu0 %v2318
    %2558 = vmatmul.mubr.bf16.gmra.mrb[0].mxu0 %v2317
    %v2559 = vpop.f32.mrb[0].mxu0
    %v2560 = vadd.f32 %v2358, %v2559
    %v2561 = vpop.f32.mrb[0].mxu0
    %v2562 = vadd.f32 %v2362, %v2561
    %v2563 = vpop.f32.mrb[0].mxu0
    %v2564 = vadd.f32 %v2358, %v2563
    %v2565 = vpop.f32.mrb[0].mxu0
    %v2566 = vadd.f32 %v2362, %v2565
    %2567 = vmatprep.mubr.bf16.mxu0 %v2320
    %2568 = vmatmul.mubr.bf16.gmra.mrb[0].mxu0 %v2319
    %v2569 = vpop.f32.mrb[0].mxu0
    %v2570 = vadd.f32 %v2358, %v2569
    %v2571 = vpop.f32.mrb[0].mxu0
    %v2572 = vadd.f32 %v2362, %v2571
    %v2573 = vpop.f32.mrb[0].mxu0
    %v2574 = vadd.f32 %v2358, %v2573
    %v2575 = vpop.f32.mrb[0].mxu0
    %v2576 = vadd.f32 %v2362, %v2575
    %2577 = vdwg.mxu0
    %v2578 = vpack.c.bf16 %v2250, %v2246
    %v2579 = vpack.c.bf16 %v2252, %v2248
    %v2580 = vpack.c.bf16 %v2260, %v2256
    %v2581 = vpack.c.bf16 %v2262, %v2258
    %v2582 = vpack.c.bf16 %v2303, %v2299
    %v2583 = vpack.c.bf16 %v2305, %v2301
    %v2584 = vpack.c.bf16 %v2313, %v2309
    %v2585 = vpack.c.bf16 %v2315, %v2311
    %v2586 = vpack.c.bf16 %v2564, %v2560
    %v2587 = vpack.c.bf16 %v2566, %v2562
    %v2588 = vpack.c.bf16 %v2574, %v2570
    %v2589 = vpack.c.bf16 %v2576, %v2572
    %2590 = vmatprep.subr.bf16.mxu0 0
    %2591 = vmatpush1.bf16.xpose.msra.mxu0 %v2582
    %2592 = vmatprep.subr.bf16.mxu0 0
    %2593 = vmatpush1.bf16.xpose.msra.mxu0 0
    %2594 = vmatprep.subr.bf16.mxu0 0
    %2595 = vmatpush1.bf16.xpose.msra.mxu0 0
    %2596 = vmatprep.subr.bf16.mxu0 0
    %2597 = vmatpush1.bf16.xpose.msra.mxu0 0
    %2598 = vmatprep.subr.bf16.mxu0 0
    %2599 = vmatpush1.bf16.xpose.msra.mxu0 0
    %2600 = vmatprep.subr.bf16.mxu0 0
    %2601 = vmatpush1.bf16.xpose.msra.mxu0 0
    %2602 = vmatprep.subr.bf16.mxu0 0
    %2603 = vmatpush1.bf16.xpose.msra.mxu0 0
    %2604 = vmatprep.subr.bf16.mxu0 0
    %2605 = vmatpush1.bf16.xpose.msra.mxu0 0
    %2606 = vmatprep.subr.bf16.mxu0 0
    %2607 = vmatpush1.bf16.xpose.msra.mxu0 0
    %2608 = vmatprep.subr.bf16.mxu0 0
    %2609 = vmatpush1.bf16.xpose.msra.mxu0 0
    %2610 = vmatprep.subr.bf16.mxu0 0
    %2611 = vmatpush1.bf16.xpose.msra.mxu0 0
    %2612 = vmatprep.subr.bf16.mxu0 0
    %2613 = vmatpush1.bf16.xpose.msra.mxu0 0
    %2614 = vmatprep.subr.bf16.mxu0 0
    %2615 = vmatpush1.bf16.xpose.msra.mxu0 0
    %2616 = vmatprep.subr.bf16.mxu0 0
    %2617 = vmatpush1.bf16.xpose.msra.mxu0 0
    %2618 = vmatprep.subr.bf16.mxu0 0
    %2619 = vmatpush1.bf16.xpose.msra.mxu0 0
    %2620 = vmatprep.subr.bf16.mxu0 0
    %2621 = vmatpush1.bf16.xpose.msra.mxu0 0
    %2622 = vmatprep.mubr.bf16.mxu0 0
    %2623 = vmatmul.mubr.bf16.gmra.mrb[0].mxu0 %v2578
    %v2624 = vpop.f32.mrb[0].mxu0
    %v2625 = vadd.f32 0.0, %v2624
    %v2626 = vpop.f32.mrb[0].mxu0
    %v2627 = vpop.f32.mrb[0].mxu0
    %v2628 = vadd.f32 0.0, %v2627
    %v2629 = vpop.f32.mrb[0].mxu0
    %2630 = vdwg.mxu0
    %2631 = vmatprep.subr.bf16.mxu0 0
    %2632 = vmatpush1.bf16.xpose.msra.mxu0 %v2584
    %2633 = vmatprep.subr.bf16.mxu0 0
    %2634 = vmatpush1.bf16.xpose.msra.mxu0 0
    %2635 = vmatprep.subr.bf16.mxu0 0
    %2636 = vmatpush1.bf16.xpose.msra.mxu0 0
    %2637 = vmatprep.subr.bf16.mxu0 0
    %2638 = vmatpush1.bf16.xpose.msra.mxu0 0
    %2639 = vmatprep.subr.bf16.mxu0 0
    %2640 = vmatpush1.bf16.xpose.msra.mxu0 0
    %2641 = vmatprep.subr.bf16.mxu0 0
    %2642 = vmatpush1.bf16.xpose.msra.mxu0 0
    %2643 = vmatprep.subr.bf16.mxu0 0
    %2644 = vmatpush1.bf16.xpose.msra.mxu0 0
    %2645 = vmatprep.subr.bf16.mxu0 0
    %2646 = vmatpush1.bf16.xpose.msra.mxu0 0
    %2647 = vmatprep.subr.bf16.mxu0 0
    %2648 = vmatpush1.bf16.xpose.msra.mxu0 0
    %2649 = vmatprep.subr.bf16.mxu0 0
    %2650 = vmatpush1.bf16.xpose.msra.mxu0 0
    %2651 = vmatprep.subr.bf16.mxu0 0
    %2652 = vmatpush1.bf16.xpose.msra.mxu0 0
    %2653 = vmatprep.subr.bf16.mxu0 0
    %2654 = vmatpush1.bf16.xpose.msra.mxu0 0
    %2655 = vmatprep.subr.bf16.mxu0 0
    %2656 = vmatpush1.bf16.xpose.msra.mxu0 0
    %2657 = vmatprep.subr.bf16.mxu0 0
    %2658 = vmatpush1.bf16.xpose.msra.mxu0 0
    %2659 = vmatprep.subr.bf16.mxu0 0
    %2660 = vmatpush1.bf16.xpose.msra.mxu0 0
    %2661 = vmatprep.subr.bf16.mxu0 0
    %2662 = vmatpush1.bf16.xpose.msra.mxu0 0
    %2663 = vmatprep.mubr.bf16.mxu0 0
    %2664 = vmatmul.mubr.bf16.gmra.mrb[0].mxu0 %v2580
    %v2665 = vpop.f32.mrb[0].mxu0
    %v2666 = vadd.f32 0.0, %v2665
    %v2667 = vpop.f32.mrb[0].mxu0
    %v2668 = vpop.f32.mrb[0].mxu0
    %v2669 = vadd.f32 0.0, %v2668
    %v2670 = vpop.f32.mrb[0].mxu0
    %2671 = vdwg.mxu0
    %v2672 = vsel %vm1076, %v2625, -inf
    %2673 = vmax.xlane.f32.xlu0 %v2672
    %v2674 = vpop.xlane.xlu0 %2673
    %v2675 = vsel %vm1076, %v2628, -inf
    %2676 = vmax.xlane.f32.xlu0 %v2675
    %v2677 = vpop.xlane.xlu0 %2676
    %v2678 = vsel %vm1076, %v2666, -inf
    %2679 = vmax.xlane.f32.xlu0 %v2678
    %v2680 = vpop.xlane.xlu0 %2679
    %v2681 = vsel %vm1076, %v2669, -inf
    %2682 = vmax.xlane.f32.xlu0 %v2681
    %v2683 = vpop.xlane.xlu0 %2682
    %v2684 = vsub.f32 %v2625, %v2674
    %v2685 = vsub.f32 %v2628, %v2677
    %v2686 = vsub.f32 %v2666, %v2680
    %v2687 = vsub.f32 %v2669, %v2683
    %v2688 = vmul.f32 %v2684, 1.442695
    %v2689 = vpow.pop %v2688
    %v2690 = vmul.f32 %v2685, 1.442695
    %v2691 = vpow.pop %v2690
    %v2692 = vmul.f32 %v2686, 1.442695
    %v2693 = vpow.pop %v2692
    %v2694 = vmul.f32 %v2687, 1.442695
    %v2695 = vpow.pop %v2694
    %v2696 = vsel %vm1076, %v2689, 0.0
    %2697 = vadd.xlane.f32.xlu0 %v2696
    %v2698 = vpop.xlane.xlu0 %2697
    %v2699 = vsel %vm1076, %v2691, 0.0
    %2700 = vadd.xlane.f32.xlu0 %v2699
    %v2701 = vpop.xlane.xlu0 %2700
    %v2702 = vsel %vm1076, %v2693, 0.0
    %2703 = vadd.xlane.f32.xlu0 %v2702
    %v2704 = vpop.xlane.xlu0 %2703
    %v2705 = vsel %vm1076, %v2695, 0.0
    %2706 = vadd.xlane.f32.xlu0 %v2705
    %v2707 = vpop.xlane.xlu0 %2706
    %v2708 = vpack.c.bf16 %v2691, %v2689
    %v2709 = vpack.c.bf16 %v2695, %v2693
    %v2711 = vsel %vm1076, %v2708, 0
    %2713 = vmatprep.subr.bf16.mxu0 0
    %2714 = vmatpush1.bf16.msra.mxu0 %v2586
    %2715 = vmatprep.subr.bf16.mxu0 0
    %2716 = vmatpush1.bf16.msra.mxu0 0
    %2717 = vmatprep.subr.bf16.mxu0 0
    %2718 = vmatpush1.bf16.msra.mxu0 0
    %2719 = vmatprep.subr.bf16.mxu0 0
    %2720 = vmatpush1.bf16.msra.mxu0 0
    %2721 = vmatprep.subr.bf16.mxu0 0
    %2722 = vmatpush1.bf16.msra.mxu0 0
    %2723 = vmatprep.subr.bf16.mxu0 0
    %2724 = vmatpush1.bf16.msra.mxu0 0
    %2725 = vmatprep.subr.bf16.mxu0 0
    %2726 = vmatpush1.bf16.msra.mxu0 0
    %2727 = vmatprep.subr.bf16.mxu0 0
    %2728 = vmatpush1.bf16.msra.mxu0 0
    %2729 = vmatprep.subr.bf16.mxu0 0
    %2730 = vmatpush1.bf16.msra.mxu0 0
    %2731 = vmatprep.subr.bf16.mxu0 0
    %2732 = vmatpush1.bf16.msra.mxu0 0
    %2733 = vmatprep.subr.bf16.mxu0 0
    %2734 = vmatpush1.bf16.msra.mxu0 0
    %2735 = vmatprep.subr.bf16.mxu0 0
    %2736 = vmatpush1.bf16.msra.mxu0 0
    %2737 = vmatprep.subr.bf16.mxu0 0
    %2738 = vmatpush1.bf16.msra.mxu0 0
    %2739 = vmatprep.subr.bf16.mxu0 0
    %2740 = vmatpush1.bf16.msra.mxu0 0
    %2741 = vmatprep.subr.bf16.mxu0 0
    %2742 = vmatpush1.bf16.msra.mxu0 0
    %2743 = vmatprep.subr.bf16.mxu0 0
    %2744 = vmatpush1.bf16.msra.mxu0 0
    %2745 = vmatprep.mubr.bf16.mxu0 0
    %2746 = vmatmul.mubr.bf16.gmra.mrb[0].mxu0 %v2711
    %v2747 = vpop.f32.mrb[0].mxu0
    %v2748 = vadd.f32 0.0, %v2747
    %v2749 = vpop.f32.mrb[0].mxu0
    %v2750 = vpop.f32.mrb[0].mxu0
    %v2751 = vadd.f32 0.0, %v2750
    %v2752 = vpop.f32.mrb[0].mxu0
    %2753 = vdwg.mxu0
    %v2755 = vsel %vm1076, %v2709, 0
    %2757 = vmatprep.subr.bf16.mxu0 0
    %2758 = vmatpush1.bf16.msra.mxu0 %v2588
    %2759 = vmatprep.subr.bf16.mxu0 0
    %2760 = vmatpush1.bf16.msra.mxu0 0
    %2761 = vmatprep.subr.bf16.mxu0 0
    %2762 = vmatpush1.bf16.msra.mxu0 0
    %2763 = vmatprep.subr.bf16.mxu0 0
    %2764 = vmatpush1.bf16.msra.mxu0 0
    %2765 = vmatprep.subr.bf16.mxu0 0
    %2766 = vmatpush1.bf16.msra.mxu0 0
    %2767 = vmatprep.subr.bf16.mxu0 0
    %2768 = vmatpush1.bf16.msra.mxu0 0
    %2769 = vmatprep.subr.bf16.mxu0 0
    %2770 = vmatpush1.bf16.msra.mxu0 0
    %2771 = vmatprep.subr.bf16.mxu0 0
    %2772 = vmatpush1.bf16.msra.mxu0 0
    %2773 = vmatprep.subr.bf16.mxu0 0
    %2774 = vmatpush1.bf16.msra.mxu0 0
    %2775 = vmatprep.subr.bf16.mxu0 0
    %2776 = vmatpush1.bf16.msra.mxu0 0
    %2777 = vmatprep.subr.bf16.mxu0 0
    %2778 = vmatpush1.bf16.msra.mxu0 0
    %2779 = vmatprep.subr.bf16.mxu0 0
    %2780 = vmatpush1.bf16.msra.mxu0 0
    %2781 = vmatprep.subr.bf16.mxu0 0
    %2782 = vmatpush1.bf16.msra.mxu0 0
    %2783 = vmatprep.subr.bf16.mxu0 0
    %2784 = vmatpush1.bf16.msra.mxu0 0
    %2785 = vmatprep.subr.bf16.mxu0 0
    %2786 = vmatpush1.bf16.msra.mxu0 0
    %2787 = vmatprep.subr.bf16.mxu0 0
    %2788 = vmatpush1.bf16.msra.mxu0 0
    %2789 = vmatprep.mubr.bf16.mxu0 0
    %2790 = vmatmul.mubr.bf16.gmra.mrb[0].mxu0 %v2755
    %v2791 = vpop.f32.mrb[0].mxu0
    %v2792 = vadd.f32 0.0, %v2791
    %v2793 = vpop.f32.mrb[0].mxu0
    %v2794 = vpop.f32.mrb[0].mxu0
    %v2795 = vadd.f32 0.0, %v2794
    %v2796 = vpop.f32.mrb[0].mxu0
    %2797 = vdwg.mxu0
    %v2798 = vrcp.pop %v2698
    %v2799 = vrcp.pop %v2701
    %v2800 = vrcp.pop %v2704
    %v2801 = vrcp.pop %v2707
    %v2802 = vmul.f32 %v2748, %v2798
    %v2803 = vmul.f32 %v2751, %v2799
    %v2804 = vmul.f32 %v2792, %v2800
    %v2805 = vmul.f32 %v2795, %v2801
    %2806 = vmatprep.subr.bf16.mxu0 0
    %2807 = vmatpush1.bf16.xpose.msra.mxu0 %v2583
    %2808 = vmatprep.subr.bf16.mxu0 0
    %2809 = vmatpush1.bf16.xpose.msra.mxu0 0
    %2810 = vmatprep.subr.bf16.mxu0 0
    %2811 = vmatpush1.bf16.xpose.msra.mxu0 0
    %2812 = vmatprep.subr.bf16.mxu0 0
    %2813 = vmatpush1.bf16.xpose.msra.mxu0 0
    %2814 = vmatprep.subr.bf16.mxu0 0
    %2815 = vmatpush1.bf16.xpose.msra.mxu0 0
    %2816 = vmatprep.subr.bf16.mxu0 0
    %2817 = vmatpush1.bf16.xpose.msra.mxu0 0
    %2818 = vmatprep.subr.bf16.mxu0 0
    %2819 = vmatpush1.bf16.xpose.msra.mxu0 0
    %2820 = vmatprep.subr.bf16.mxu0 0
    %2821 = vmatpush1.bf16.xpose.msra.mxu0 0
    %2822 = vmatprep.subr.bf16.mxu0 0
    %2823 = vmatpush1.bf16.xpose.msra.mxu0 0
    %2824 = vmatprep.subr.bf16.mxu0 0
    %2825 = vmatpush1.bf16.xpose.msra.mxu0 0
    %2826 = vmatprep.subr.bf16.mxu0 0
    %2827 = vmatpush1.bf16.xpose.msra.mxu0 0
    %2828 = vmatprep.subr.bf16.mxu0 0
    %2829 = vmatpush1.bf16.xpose.msra.mxu0 0
    %2830 = vmatprep.subr.bf16.mxu0 0
    %2831 = vmatpush1.bf16.xpose.msra.mxu0 0
    %2832 = vmatprep.subr.bf16.mxu0 0
    %2833 = vmatpush1.bf16.xpose.msra.mxu0 0
    %2834 = vmatprep.subr.bf16.mxu0 0
    %2835 = vmatpush1.bf16.xpose.msra.mxu0 0
    %2836 = vmatprep.subr.bf16.mxu0 0
    %2837 = vmatpush1.bf16.xpose.msra.mxu0 0
    %2838 = vmatprep.mubr.bf16.mxu0 0
    %2839 = vmatmul.mubr.bf16.gmra.mrb[0].mxu0 %v2579
    %v2840 = vpop.f32.mrb[0].mxu0
    %v2841 = vadd.f32 0.0, %v2840
    %v2842 = vpop.f32.mrb[0].mxu0
    %v2843 = vpop.f32.mrb[0].mxu0
    %v2844 = vadd.f32 0.0, %v2843
    %v2845 = vpop.f32.mrb[0].mxu0
    %2846 = vdwg.mxu0
    %2847 = vmatprep.subr.bf16.mxu0 0
    %2848 = vmatpush1.bf16.xpose.msra.mxu0 %v2585
    %2849 = vmatprep.subr.bf16.mxu0 0
    %2850 = vmatpush1.bf16.xpose.msra.mxu0 0
    %2851 = vmatprep.subr.bf16.mxu0 0
    %2852 = vmatpush1.bf16.xpose.msra.mxu0 0
    %2853 = vmatprep.subr.bf16.mxu0 0
    %2854 = vmatpush1.bf16.xpose.msra.mxu0 0
    %2855 = vmatprep.subr.bf16.mxu0 0
    %2856 = vmatpush1.bf16.xpose.msra.mxu0 0
    %2857 = vmatprep.subr.bf16.mxu0 0
    %2858 = vmatpush1.bf16.xpose.msra.mxu0 0
    %2859 = vmatprep.subr.bf16.mxu0 0
    %2860 = vmatpush1.bf16.xpose.msra.mxu0 0
    %2861 = vmatprep.subr.bf16.mxu0 0
    %2862 = vmatpush1.bf16.xpose.msra.mxu0 0
    %2863 = vmatprep.subr.bf16.mxu0 0
    %2864 = vmatpush1.bf16.xpose.msra.mxu0 0
    %2865 = vmatprep.subr.bf16.mxu0 0
    %2866 = vmatpush1.bf16.xpose.msra.mxu0 0
    %2867 = vmatprep.subr.bf16.mxu0 0
    %2868 = vmatpush1.bf16.xpose.msra.mxu0 0
    %2869 = vmatprep.subr.bf16.mxu0 0
    %2870 = vmatpush1.bf16.xpose.msra.mxu0 0
    %2871 = vmatprep.subr.bf16.mxu0 0
    %2872 = vmatpush1.bf16.xpose.msra.mxu0 0
    %2873 = vmatprep.subr.bf16.mxu0 0
    %2874 = vmatpush1.bf16.xpose.msra.mxu0 0
    %2875 = vmatprep.subr.bf16.mxu0 0
    %2876 = vmatpush1.bf16.xpose.msra.mxu0 0
    %2877 = vmatprep.subr.bf16.mxu0 0
    %2878 = vmatpush1.bf16.xpose.msra.mxu0 0
    %2879 = vmatprep.mubr.bf16.mxu0 0
    %2880 = vmatmul.mubr.bf16.gmra.mrb[0].mxu0 %v2581
    %v2881 = vpop.f32.mrb[0].mxu0
    %v2882 = vadd.f32 0.0, %v2881
    %v2883 = vpop.f32.mrb[0].mxu0
    %v2884 = vpop.f32.mrb[0].mxu0
    %v2885 = vadd.f32 0.0, %v2884
    %v2886 = vpop.f32.mrb[0].mxu0
    %2887 = vdwg.mxu0
    %v2888 = vsel %vm1076, %v2841, -inf
    %2889 = vmax.xlane.f32.xlu0 %v2888
    %v2890 = vpop.xlane.xlu0 %2889
    %v2891 = vsel %vm1076, %v2844, -inf
    %2892 = vmax.xlane.f32.xlu0 %v2891
    %v2893 = vpop.xlane.xlu0 %2892
    %v2894 = vsel %vm1076, %v2882, -inf
    %2895 = vmax.xlane.f32.xlu0 %v2894
    %v2896 = vpop.xlane.xlu0 %2895
    %v2897 = vsel %vm1076, %v2885, -inf
    %2898 = vmax.xlane.f32.xlu0 %v2897
    %v2899 = vpop.xlane.xlu0 %2898
    %v2900 = vsub.f32 %v2841, %v2890
    %v2901 = vsub.f32 %v2844, %v2893
    %v2902 = vsub.f32 %v2882, %v2896
    %v2903 = vsub.f32 %v2885, %v2899
    %v2904 = vmul.f32 %v2900, 1.442695
    %v2905 = vpow.pop %v2904
    %v2906 = vmul.f32 %v2901, 1.442695
    %v2907 = vpow.pop %v2906
    %v2908 = vmul.f32 %v2902, 1.442695
    %v2909 = vpow.pop %v2908
    %v2910 = vmul.f32 %v2903, 1.442695
    %v2911 = vpow.pop %v2910
    %v2912 = vsel %vm1076, %v2905, 0.0
    %2913 = vadd.xlane.f32.xlu0 %v2912
    %v2914 = vpop.xlane.xlu0 %2913
    %v2915 = vsel %vm1076, %v2907, 0.0
    %2916 = vadd.xlane.f32.xlu0 %v2915
    %v2917 = vpop.xlane.xlu0 %2916
    %v2918 = vsel %vm1076, %v2909, 0.0
    %2919 = vadd.xlane.f32.xlu0 %v2918
    %v2920 = vpop.xlane.xlu0 %2919
    %v2921 = vsel %vm1076, %v2911, 0.0
    %2922 = vadd.xlane.f32.xlu0 %v2921
    %v2923 = vpop.xlane.xlu0 %2922
    %v2924 = vpack.c.bf16 %v2907, %v2905
    %v2925 = vpack.c.bf16 %v2911, %v2909
    %v2927 = vsel %vm1076, %v2924, 0
    %2929 = vmatprep.subr.bf16.mxu0 0
    %2930 = vmatpush1.bf16.msra.mxu0 %v2587
    %2931 = vmatprep.subr.bf16.mxu0 0
    %2932 = vmatpush1.bf16.msra.mxu0 0
    %2933 = vmatprep.subr.bf16.mxu0 0
    %2934 = vmatpush1.bf16.msra.mxu0 0
    %2935 = vmatprep.subr.bf16.mxu0 0
    %2936 = vmatpush1.bf16.msra.mxu0 0
    %2937 = vmatprep.subr.bf16.mxu0 0
    %2938 = vmatpush1.bf16.msra.mxu0 0
    %2939 = vmatprep.subr.bf16.mxu0 0
    %2940 = vmatpush1.bf16.msra.mxu0 0
    %2941 = vmatprep.subr.bf16.mxu0 0
    %2942 = vmatpush1.bf16.msra.mxu0 0
    %2943 = vmatprep.subr.bf16.mxu0 0
    %2944 = vmatpush1.bf16.msra.mxu0 0
    %2945 = vmatprep.subr.bf16.mxu0 0
    %2946 = vmatpush1.bf16.msra.mxu0 0
    %2947 = vmatprep.subr.bf16.mxu0 0
    %2948 = vmatpush1.bf16.msra.mxu0 0
    %2949 = vmatprep.subr.bf16.mxu0 0
    %2950 = vmatpush1.bf16.msra.mxu0 0
    %2951 = vmatprep.subr.bf16.mxu0 0
    %2952 = vmatpush1.bf16.msra.mxu0 0
    %2953 = vmatprep.subr.bf16.mxu0 0
    %2954 = vmatpush1.bf16.msra.mxu0 0
    %2955 = vmatprep.subr.bf16.mxu0 0
    %2956 = vmatpush1.bf16.msra.mxu0 0
    %2957 = vmatprep.subr.bf16.mxu0 0
    %2958 = vmatpush1.bf16.msra.mxu0 0
    %2959 = vmatprep.subr.bf16.mxu0 0
    %2960 = vmatpush1.bf16.msra.mxu0 0
    %2961 = vmatprep.mubr.bf16.mxu0 0
    %2962 = vmatmul.mubr.bf16.gmra.mrb[0].mxu0 %v2927
    %v2963 = vpop.f32.mrb[0].mxu0
    %v2964 = vadd.f32 0.0, %v2963
    %v2965 = vpop.f32.mrb[0].mxu0
    %v2966 = vpop.f32.mrb[0].mxu0
    %v2967 = vadd.f32 0.0, %v2966
    %v2968 = vpop.f32.mrb[0].mxu0
    %2969 = vdwg.mxu0
    %v2971 = vsel %vm1076, %v2925, 0
    %2973 = vmatprep.subr.bf16.mxu0 0
    %2974 = vmatpush1.bf16.msra.mxu0 %v2589
    %2975 = vmatprep.subr.bf16.mxu0 0
    %2976 = vmatpush1.bf16.msra.mxu0 0
    %2977 = vmatprep.subr.bf16.mxu0 0
    %2978 = vmatpush1.bf16.msra.mxu0 0
    %2979 = vmatprep.subr.bf16.mxu0 0
    %2980 = vmatpush1.bf16.msra.mxu0 0
    %2981 = vmatprep.subr.bf16.mxu0 0
    %2982 = vmatpush1.bf16.msra.mxu0 0
    %2983 = vmatprep.subr.bf16.mxu0 0
    %2984 = vmatpush1.bf16.msra.mxu0 0
    %2985 = vmatprep.subr.bf16.mxu0 0
    %2986 = vmatpush1.bf16.msra.mxu0 0
    %2987 = vmatprep.subr.bf16.mxu0 0
    %2988 = vmatpush1.bf16.msra.mxu0 0
    %2989 = vmatprep.subr.bf16.mxu0 0
    %2990 = vmatpush1.bf16.msra.mxu0 0
    %2991 = vmatprep.subr.bf16.mxu0 0
    %2992 = vmatpush1.bf16.msra.mxu0 0
    %2993 = vmatprep.subr.bf16.mxu0 0
    %2994 = vmatpush1.bf16.msra.mxu0 0
    %2995 = vmatprep.subr.bf16.mxu0 0
    %2996 = vmatpush1.bf16.msra.mxu0 0
    %2997 = vmatprep.subr.bf16.mxu0 0
    %2998 = vmatpush1.bf16.msra.mxu0 0
    %2999 = vmatprep.subr.bf16.mxu0 0
    %3000 = vmatpush1.bf16.msra.mxu0 0
    %3001 = vmatprep.subr.bf16.mxu0 0
    %3002 = vmatpush1.bf16.msra.mxu0 0
    %3003 = vmatprep.subr.bf16.mxu0 0
    %3004 = vmatpush1.bf16.msra.mxu0 0
    %3005 = vmatprep.mubr.bf16.mxu0 0
    %3006 = vmatmul.mubr.bf16.gmra.mrb[0].mxu0 %v2971
    %v3007 = vpop.f32.mrb[0].mxu0
    %v3008 = vadd.f32 0.0, %v3007
    %v3009 = vpop.f32.mrb[0].mxu0
    %v3010 = vpop.f32.mrb[0].mxu0
    %v3011 = vadd.f32 0.0, %v3010
    %v3012 = vpop.f32.mrb[0].mxu0
    %3013 = vdwg.mxu0
    %v3014 = vrcp.pop %v2914
    %v3015 = vrcp.pop %v2917
    %v3016 = vrcp.pop %v2920
    %v3017 = vrcp.pop %v2923
    %v3018 = vmul.f32 %v2964, %v3014
    %v3019 = vmul.f32 %v2967, %v3015
    %v3020 = vmul.f32 %v3008, %v3016
    %v3021 = vmul.f32 %v3011, %v3017
    %v3022 = vpack.c.bf16 %v2803, %v2802
    %v3023 = vpack.c.bf16 %v3019, %v3018
    %v3024 = vpack.c.bf16 %v2805, %v2804
    %v3025 = vpack.c.bf16 %v3021, %v3020
    %v3026 = vld [vmem:[#allocation13] sm:$0xff]
    %v3027 = vld [vmem:[#allocation13 + $0x8] sm:$0xff]
    %v3028 = vld [vmem:[#allocation13 + $0x10] sm:$0xff]
    %v3029 = vld [vmem:[#allocation13 + $0x18] sm:$0xff]
    %v3030 = vld [vmem:[#allocation13 + $0x20] sm:$0xff]
    %v3031 = vld [vmem:[#allocation13 + $0x28] sm:$0xff]
    %v3032 = vld [vmem:[#allocation13 + $0x30] sm:$0xff]
    %v3033 = vld [vmem:[#allocation13 + $0x38] sm:$0xff]
    %v3034 = vld [vmem:[#allocation13 + $0x40] sm:$0xff]
    %v3035 = vld [vmem:[#allocation13 + $0x48] sm:$0xff]
    %v3036 = vld [vmem:[#allocation13 + $0x50] sm:$0xff]
    %v3037 = vld [vmem:[#allocation13 + $0x58] sm:$0xff]
    %v3038 = vld [vmem:[#allocation13 + $0x60] sm:$0xff]
    %v3039 = vld [vmem:[#allocation13 + $0x68] sm:$0xff]
    %v3040 = vld [vmem:[#allocation13 + $0x70] sm:$0xff]
    %v3041 = vld [vmem:[#allocation13 + $0x78] sm:$0xff]
    %v3042 = vld [vmem:[#allocation13 + $0x80] sm:$0xff]
    %v3043 = vld [vmem:[#allocation13 + $0x88] sm:$0xff]
    %v3044 = vld [vmem:[#allocation13 + $0x90] sm:$0xff]
    %v3045 = vld [vmem:[#allocation13 + $0x98] sm:$0xff]
    %v3046 = vld [vmem:[#allocation13 + $0xa0] sm:$0xff]
    %v3047 = vld [vmem:[#allocation13 + $0xa8] sm:$0xff]
    %v3048 = vld [vmem:[#allocation13 + $0xb0] sm:$0xff]
    %v3049 = vld [vmem:[#allocation13 + $0xb8] sm:$0xff]
    %v3050 = vld [vmem:[#allocation13 + $0xc0] sm:$0xff]
    %v3051 = vld [vmem:[#allocation13 + $0xc8] sm:$0xff]
    %v3052 = vld [vmem:[#allocation13 + $0xd0] sm:$0xff]
    %v3053 = vld [vmem:[#allocation13 + $0xd8] sm:$0xff]
    %v3054 = vld [vmem:[#allocation13 + $0xe0] sm:$0xff]
    %v3055 = vld [vmem:[#allocation13 + $0xe8] sm:$0xff]
    %v3056 = vld [vmem:[#allocation13 + $0xf0] sm:$0xff]
    %v3057 = vld [vmem:[#allocation13 + $0xf8] sm:$0xff]
    %v3058 = vld [vmem:[%s13] sm:$0x3]
    %v3060 = vlaneseq
    %v3061 = vshrl.u32 %v3060, 7
    %v3062 = vsub.s32 0, %v3061
    %v3063 = vrot.slane %v3058, %v3062
    %v3064 = vlaneseq
    %v3065 = vshrl.u32 %v3064, 7
    %v3066 = vsub.s32 1, %v3065
    %v3067 = vrot.slane %v3058, %v3066
    %v3102 = vunpack.c.l.b16 %v3026
    %v3103 = vunpack.c.h.b16 %v3026
    %v3104 = vunpack.c.l.b16 %v3027
    %v3105 = vunpack.c.h.b16 %v3027
    %v3106 = vunpack.c.l.b16 %v3028
    %v3107 = vunpack.c.h.b16 %v3028
    %v3108 = vunpack.c.l.b16 %v3029
    %v3109 = vunpack.c.h.b16 %v3029
    %v3110 = vunpack.c.l.b16 %v3030
    %v3111 = vunpack.c.h.b16 %v3030
    %v3112 = vunpack.c.l.b16 %v3031
    %v3113 = vunpack.c.h.b16 %v3031
    %v3114 = vunpack.c.l.b16 %v3032
    %v3115 = vunpack.c.h.b16 %v3032
    %v3116 = vunpack.c.l.b16 %v3033
    %v3117 = vunpack.c.h.b16 %v3033
    %v3118 = vunpack.c.l.b16 %v3034
    %v3119 = vunpack.c.h.b16 %v3034
    %v3120 = vunpack.c.l.b16 %v3035
    %v3121 = vunpack.c.h.b16 %v3035
    %v3122 = vunpack.c.l.b16 %v3036
    %v3123 = vunpack.c.h.b16 %v3036
    %v3124 = vunpack.c.l.b16 %v3037
    %v3125 = vunpack.c.h.b16 %v3037
    %v3126 = vunpack.c.l.b16 %v3038
    %v3127 = vunpack.c.h.b16 %v3038
    %v3128 = vunpack.c.l.b16 %v3039
    %v3129 = vunpack.c.h.b16 %v3039
    %v3130 = vunpack.c.l.b16 %v3040
    %v3131 = vunpack.c.h.b16 %v3040
    %v3132 = vunpack.c.l.b16 %v3041
    %v3133 = vunpack.c.h.b16 %v3041
    %v3134 = vunpack.c.l.b16 %v3042
    %v3135 = vunpack.c.h.b16 %v3042
    %v3136 = vunpack.c.l.b16 %v3043
    %v3137 = vunpack.c.h.b16 %v3043
    %v3138 = vunpack.c.l.b16 %v3044
    %v3139 = vunpack.c.h.b16 %v3044
    %v3140 = vunpack.c.l.b16 %v3045
    %v3141 = vunpack.c.h.b16 %v3045
    %v3142 = vunpack.c.l.b16 %v3046
    %v3143 = vunpack.c.h.b16 %v3046
    %v3144 = vunpack.c.l.b16 %v3047
    %v3145 = vunpack.c.h.b16 %v3047
    %v3146 = vunpack.c.l.b16 %v3048
    %v3147 = vunpack.c.h.b16 %v3048
    %v3148 = vunpack.c.l.b16 %v3049
    %v3149 = vunpack.c.h.b16 %v3049
    %v3150 = vunpack.c.l.b16 %v3050
    %v3151 = vunpack.c.h.b16 %v3050
    %v3152 = vunpack.c.l.b16 %v3051
    %v3153 = vunpack.c.h.b16 %v3051
    %v3154 = vunpack.c.l.b16 %v3052
    %v3155 = vunpack.c.h.b16 %v3052
    %v3156 = vunpack.c.l.b16 %v3053
    %v3157 = vunpack.c.h.b16 %v3053
    %v3158 = vunpack.c.l.b16 %v3054
    %v3159 = vunpack.c.h.b16 %v3054
    %v3160 = vunpack.c.l.b16 %v3055
    %v3161 = vunpack.c.h.b16 %v3055
    %v3162 = vunpack.c.l.b16 %v3056
    %v3163 = vunpack.c.h.b16 %v3056
    %v3164 = vunpack.c.l.b16 %v3057
    %v3165 = vunpack.c.h.b16 %v3057
    %v3166 = vpack.c.b16 %v3104, %v3102
    %v3167 = vpack.c.b16 %v3105, %v3103
    %v3168 = vpack.c.b16 %v3108, %v3106
    %v3169 = vpack.c.b16 %v3109, %v3107
    %v3170 = vpack.c.b16 %v3112, %v3110
    %v3171 = vpack.c.b16 %v3113, %v3111
    %v3172 = vpack.c.b16 %v3116, %v3114
    %v3173 = vpack.c.b16 %v3117, %v3115
    %v3174 = vpack.c.b16 %v3120, %v3118
    %v3175 = vpack.c.b16 %v3121, %v3119
    %v3176 = vpack.c.b16 %v3124, %v3122
    %v3177 = vpack.c.b16 %v3125, %v3123
    %v3178 = vpack.c.b16 %v3128, %v3126
    %v3179 = vpack.c.b16 %v3129, %v3127
    %v3180 = vpack.c.b16 %v3132, %v3130
    %v3181 = vpack.c.b16 %v3133, %v3131
    %v3182 = vpack.c.b16 %v3136, %v3134
    %v3183 = vpack.c.b16 %v3137, %v3135
    %v3184 = vpack.c.b16 %v3140, %v3138
    %v3185 = vpack.c.b16 %v3141, %v3139
    %v3186 = vpack.c.b16 %v3144, %v3142
    %v3187 = vpack.c.b16 %v3145, %v3143
    %v3188 = vpack.c.b16 %v3148, %v3146
    %v3189 = vpack.c.b16 %v3149, %v3147
    %v3190 = vpack.c.b16 %v3152, %v3150
    %v3191 = vpack.c.b16 %v3153, %v3151
    %v3192 = vpack.c.b16 %v3156, %v3154
    %v3193 = vpack.c.b16 %v3157, %v3155
    %v3194 = vpack.c.b16 %v3160, %v3158
    %v3195 = vpack.c.b16 %v3161, %v3159
    %v3196 = vpack.c.b16 %v3164, %v3162
    %v3197 = vpack.c.b16 %v3165, %v3163
    %3230 = vmatprep.subr.bf16.mxu0 %v3167
    %3231 = vmatpush1.bf16.msra.mxu0 %v3166
    %3232 = vmatprep.subr.bf16.mxu0 %v3169
    %3233 = vmatpush1.bf16.msra.mxu0 %v3168
    %3234 = vmatprep.subr.bf16.mxu0 %v3171
    %3235 = vmatpush1.bf16.msra.mxu0 %v3170
    %3236 = vmatprep.subr.bf16.mxu0 %v3173
    %3237 = vmatpush1.bf16.msra.mxu0 %v3172
    %3238 = vmatprep.subr.bf16.mxu0 %v3175
    %3239 = vmatpush1.bf16.msra.mxu0 %v3174
    %3240 = vmatprep.subr.bf16.mxu0 %v3177
    %3241 = vmatpush1.bf16.msra.mxu0 %v3176
    %3242 = vmatprep.subr.bf16.mxu0 %v3179
    %3243 = vmatpush1.bf16.msra.mxu0 %v3178
    %3244 = vmatprep.subr.bf16.mxu0 %v3181
    %3245 = vmatpush1.bf16.msra.mxu0 %v3180
    %3246 = vmatprep.subr.bf16.mxu0 %v3183
    %3247 = vmatpush1.bf16.msra.mxu0 %v3182
    %3248 = vmatprep.subr.bf16.mxu0 %v3185
    %3249 = vmatpush1.bf16.msra.mxu0 %v3184
    %3250 = vmatprep.subr.bf16.mxu0 %v3187
    %3251 = vmatpush1.bf16.msra.mxu0 %v3186
    %3252 = vmatprep.subr.bf16.mxu0 %v3189
    %3253 = vmatpush1.bf16.msra.mxu0 %v3188
    %3254 = vmatprep.subr.bf16.mxu0 %v3191
    %3255 = vmatpush1.bf16.msra.mxu0 %v3190
    %3256 = vmatprep.subr.bf16.mxu0 %v3193
    %3257 = vmatpush1.bf16.msra.mxu0 %v3192
    %3258 = vmatprep.subr.bf16.mxu0 %v3195
    %3259 = vmatpush1.bf16.msra.mxu0 %v3194
    %3260 = vmatprep.subr.bf16.mxu0 %v3197
    %3261 = vmatpush1.bf16.msra.mxu0 %v3196
    %3262 = vmatprep.mubr.bf16.mxu0 %v3023
    %3263 = vmatmul.mubr.bf16.gmra.mrb[0].mxu0 %v3022
    %v3264 = vpop.f32.mrb[0].mxu0
    %v3265 = vadd.f32 %v3063, %v3264
    %v3266 = vpop.f32.mrb[0].mxu0
    %v3267 = vadd.f32 %v3067, %v3266
    %v3268 = vpop.f32.mrb[0].mxu0
    %v3269 = vadd.f32 %v3063, %v3268
    %v3270 = vpop.f32.mrb[0].mxu0
    %v3271 = vadd.f32 %v3067, %v3270
    %3272 = vmatprep.mubr.bf16.mxu0 %v3025
    %3273 = vmatmul.mubr.bf16.gmra.mrb[0].mxu0 %v3024
    %v3274 = vpop.f32.mrb[0].mxu0
    %v3275 = vadd.f32 %v3063, %v3274
    %v3276 = vpop.f32.mrb[0].mxu0
    %v3277 = vadd.f32 %v3067, %v3276
    %v3278 = vpop.f32.mrb[0].mxu0
    %v3279 = vadd.f32 %v3063, %v3278
    %v3280 = vpop.f32.mrb[0].mxu0
    %v3281 = vadd.f32 %v3067, %v3280
    %3282 = vdwg.mxu0
    %v3283 = vadd.f32 %v1793, %v3265
    %v3284 = vadd.f32 %v1794, %v3267
    %v3285 = vadd.f32 %v1795, %v3269
    %v3286 = vadd.f32 %v1796, %v3271
    %v3287 = vadd.f32 %v1797, %v3275
    %v3288 = vadd.f32 %v1798, %v3277
    %v3289 = vadd.f32 %v1799, %v3279
    %v3290 = vadd.f32 %v1800, %v3281
    %v3291 = vld [vmem:[%s14] sm:$0x3]
    %v3292 = vld [vmem:[%s15] sm:$0x3]
    %v3293 = vadd.f32 %v3283, %v3284
    %3294 = vadd.xlane.f32.xlu0 %v3293
    %v3295 = vpop.xlane.xlu0 %3294
    %v3296 = vadd.f32 %v3285, %v3286
    %3297 = vadd.xlane.f32.xlu0 %v3296
    %v3298 = vpop.xlane.xlu0 %3297
    %v3299 = vadd.f32 %v3287, %v3288
    %3300 = vadd.xlane.f32.xlu0 %v3299
    %v3301 = vpop.xlane.xlu0 %3300
    %v3302 = vadd.f32 %v3289, %v3290
    %3303 = vadd.xlane.f32.xlu0 %v3302
    %v3304 = vpop.xlane.xlu0 %3303
    %v3305 = vmul.f32 %v3295, %v1710
    %v3306 = vmul.f32 %v3298, %v1710
    %v3307 = vmul.f32 %v3301, %v1710
    %v3308 = vmul.f32 %v3304, %v1710
    %v3309 = vsub.f32 %v3283, %v3305
    %v3310 = vsub.f32 %v3284, %v3305
    %v3311 = vsub.f32 %v3285, %v3306
    %v3312 = vsub.f32 %v3286, %v3306
    %v3313 = vsub.f32 %v3287, %v3307
    %v3314 = vsub.f32 %v3288, %v3307
    %v3315 = vsub.f32 %v3289, %v3308
    %v3316 = vsub.f32 %v3290, %v3308
    %v3317 = vmul.f32 %v3309, %v3309
    %v3318 = vmul.f32 %v3310, %v3310
    %v3319 = vmul.f32 %v3311, %v3311
    %v3320 = vmul.f32 %v3312, %v3312
    %v3321 = vmul.f32 %v3313, %v3313
    %v3322 = vmul.f32 %v3314, %v3314
    %v3323 = vmul.f32 %v3315, %v3315
    %v3324 = vmul.f32 %v3316, %v3316
    %v3325 = vadd.f32 %v3317, %v3318
    %3326 = vadd.xlane.f32.xlu0 %v3325
    %v3327 = vpop.xlane.xlu0 %3326
    %v3328 = vadd.f32 %v3319, %v3320
    %3329 = vadd.xlane.f32.xlu0 %v3328
    %v3330 = vpop.xlane.xlu0 %3329
    %v3331 = vadd.f32 %v3321, %v3322
    %3332 = vadd.xlane.f32.xlu0 %v3331
    %v3333 = vpop.xlane.xlu0 %3332
    %v3334 = vadd.f32 %v3323, %v3324
    %3335 = vadd.xlane.f32.xlu0 %v3334
    %v3336 = vpop.xlane.xlu0 %3335
    %v3337 = vmul.f32 %v3327, %v1710
    %v3338 = vmul.f32 %v3330, %v1710
    %v3339 = vmul.f32 %v3333, %v1710
    %v3340 = vmul.f32 %v3336, %v1710
    %v3341 = vadd.f32 %v3337, 1e-06
    %v3342 = vadd.f32 %v3338, 1e-06
    %v3343 = vadd.f32 %v3339, 1e-06
    %v3344 = vadd.f32 %v3340, 1e-06
    %v3345 = vrsqrt.pop %v3341
    %v3346 = vrsqrt.pop %v3342
    %v3347 = vrsqrt.pop %v3343
    %v3348 = vrsqrt.pop %v3344
    %v3349 = vmul.f32 %v3309, %v3345
    %v3350 = vmul.f32 %v3310, %v3345
    %v3351 = vmul.f32 %v3311, %v3346
    %v3352 = vmul.f32 %v3312, %v3346
    %v3353 = vmul.f32 %v3313, %v3347
    %v3354 = vmul.f32 %v3314, %v3347
    %v3355 = vmul.f32 %v3315, %v3348
    %v3356 = vmul.f32 %v3316, %v3348
    %v3358 = vlaneseq
    %v3359 = vshrl.u32 %v3358, 7
    %v3360 = vsub.s32 0, %v3359
    %v3361 = vrot.slane %v3291, %v3360
    %v3362 = vlaneseq
    %v3363 = vshrl.u32 %v3362, 7
    %v3364 = vsub.s32 1, %v3363
    %v3365 = vrot.slane %v3291, %v3364
    %v3368 = vmul.f32 %v3349, %v3361
    %v3369 = vmul.f32 %v3350, %v3365
    %v3370 = vmul.f32 %v3351, %v3361
    %v3371 = vmul.f32 %v3352, %v3365
    %v3372 = vmul.f32 %v3353, %v3361
    %v3373 = vmul.f32 %v3354, %v3365
    %v3374 = vmul.f32 %v3355, %v3361
    %v3375 = vmul.f32 %v3356, %v3365
    %v3377 = vlaneseq
    %v3378 = vshrl.u32 %v3377, 7
    %v3379 = vsub.s32 0, %v3378
    %v3380 = vrot.slane %v3292, %v3379
    %v3381 = vlaneseq
    %v3382 = vshrl.u32 %v3381, 7
    %v3383 = vsub.s32 1, %v3382
    %v3384 = vrot.slane %v3292, %v3383
    %v3387 = vadd.f32 %v3368, %v3380
    %v3388 = vadd.f32 %v3369, %v3384
    %v3389 = vadd.f32 %v3370, %v3380
    %v3390 = vadd.f32 %v3371, %v3384
    %v3391 = vadd.f32 %v3372, %v3380
    %v3392 = vadd.f32 %v3373, %v3384
    %v3393 = vadd.f32 %v3374, %v3380
    %v3394 = vadd.f32 %v3375, %v3384
    %v3395 = vpack.c.bf16 %v3389, %v3387
    %v3396 = vpack.c.bf16 %v3390, %v3388
    %v3397 = vpack.c.bf16 %v3393, %v3391
    %v3398 = vpack.c.bf16 %v3394, %v3392
    %v3399 = vld [vmem:[#allocation14] sm:$0xff]
    %v3400 = vld [vmem:[#allocation14 + $0x8] sm:$0xff]
    %v3401 = vld [vmem:[#allocation14 + $0x10] sm:$0xff]
    %v3402 = vld [vmem:[#allocation14 + $0x18] sm:$0xff]
    %v3403 = vld [vmem:[#allocation14 + $0x20] sm:$0xff]
    %v3404 = vld [vmem:[#allocation14 + $0x28] sm:$0xff]
    %v3405 = vld [vmem:[#allocation14 + $0x30] sm:$0xff]
    %v3406 = vld [vmem:[#allocation14 + $0x38] sm:$0xff]
    %v3407 = vld [vmem:[#allocation14 + $0x40] sm:$0xff]
    %v3408 = vld [vmem:[#allocation14 + $0x48] sm:$0xff]
    %v3409 = vld [vmem:[#allocation14 + $0x50] sm:$0xff]
    %v3410 = vld [vmem:[#allocation14 + $0x58] sm:$0xff]
    %v3411 = vld [vmem:[#allocation14 + $0x60] sm:$0xff]
    %v3412 = vld [vmem:[#allocation14 + $0x68] sm:$0xff]
    %v3413 = vld [vmem:[#allocation14 + $0x70] sm:$0xff]
    %v3414 = vld [vmem:[#allocation14 + $0x78] sm:$0xff]
    %v3415 = vld [vmem:[#allocation14 + $0x80] sm:$0xff]
    %v3416 = vld [vmem:[#allocation14 + $0x88] sm:$0xff]
    %v3417 = vld [vmem:[#allocation14 + $0x90] sm:$0xff]
    %v3418 = vld [vmem:[#allocation14 + $0x98] sm:$0xff]
    %v3419 = vld [vmem:[#allocation14 + $0xa0] sm:$0xff]
    %v3420 = vld [vmem:[#allocation14 + $0xa8] sm:$0xff]
    %v3421 = vld [vmem:[#allocation14 + $0xb0] sm:$0xff]
    %v3422 = vld [vmem:[#allocation14 + $0xb8] sm:$0xff]
    %v3423 = vld [vmem:[#allocation14 + $0xc0] sm:$0xff]
    %v3424 = vld [vmem:[#allocation14 + $0xc8] sm:$0xff]
    %v3425 = vld [vmem:[#allocation14 + $0xd0] sm:$0xff]
    %v3426 = vld [vmem:[#allocation14 + $0xd8] sm:$0xff]
    %v3427 = vld [vmem:[#allocation14 + $0xe0] sm:$0xff]
    %v3428 = vld [vmem:[#allocation14 + $0xe8] sm:$0xff]
    %v3429 = vld [vmem:[#allocation14 + $0xf0] sm:$0xff]
    %v3430 = vld [vmem:[#allocation14 + $0xf8] sm:$0xff]
    %v3431 = vld [vmem:[#allocation14 + $0x100] sm:$0xff]
    %v3432 = vld [vmem:[#allocation14 + $0x108] sm:$0xff]
    %v3433 = vld [vmem:[#allocation14 + $0x110] sm:$0xff]
    %v3434 = vld [vmem:[#allocation14 + $0x118] sm:$0xff]
    %v3435 = vld [vmem:[#allocation14 + $0x120] sm:$0xff]
    %v3436 = vld [vmem:[#allocation14 + $0x128] sm:$0xff]
    %v3437 = vld [vmem:[#allocation14 + $0x130] sm:$0xff]
    %v3438 = vld [vmem:[#allocation14 + $0x138] sm:$0xff]
    %v3439 = vld [vmem:[#allocation14 + $0x140] sm:$0xff]
    %v3440 = vld [vmem:[#allocation14 + $0x148] sm:$0xff]
    %v3441 = vld [vmem:[#allocation14 + $0x150] sm:$0xff]
    %v3442 = vld [vmem:[#allocation14 + $0x158] sm:$0xff]
    %v3443 = vld [vmem:[#allocation14 + $0x160] sm:$0xff]
    %v3444 = vld [vmem:[#allocation14 + $0x168] sm:$0xff]
    %v3445 = vld [vmem:[#allocation14 + $0x170] sm:$0xff]
    %v3446 = vld [vmem:[#allocation14 + $0x178] sm:$0xff]
    %v3447 = vld [vmem:[#allocation14 + $0x180] sm:$0xff]
    %v3448 = vld [vmem:[#allocation14 + $0x188] sm:$0xff]
    %v3449 = vld [vmem:[#allocation14 + $0x190] sm:$0xff]
    %v3450 = vld [vmem:[#allocation14 + $0x198] sm:$0xff]
    %v3451 = vld [vmem:[#allocation14 + $0x1a0] sm:$0xff]
    %v3452 = vld [vmem:[#allocation14 + $0x1a8] sm:$0xff]
    %v3453 = vld [vmem:[#allocation14 + $0x1b0] sm:$0xff]
    %v3454 = vld [vmem:[#allocation14 + $0x1b8] sm:$0xff]
    %v3455 = vld [vmem:[#allocation14 + $0x1c0] sm:$0xff]
    %v3456 = vld [vmem:[#allocation14 + $0x1c8] sm:$0xff]
    %v3457 = vld [vmem:[#allocation14 + $0x1d0] sm:$0xff]
    %v3458 = vld [vmem:[#allocation14 + $0x1d8] sm:$0xff]
    %v3459 = vld [vmem:[#allocation14 + $0x1e0] sm:$0xff]
    %v3460 = vld [vmem:[#allocation14 + $0x1e8] sm:$0xff]
    %v3461 = vld [vmem:[#allocation14 + $0x1f0] sm:$0xff]
    %v3462 = vld [vmem:[#allocation14 + $0x1f8] sm:$0xff]
    %v3463 = vld [vmem:[%s17] sm:$0xf]
    %v3465 = vlaneseq
    %v3466 = vshrl.u32 %v3465, 7
    %v3467 = vsub.s32 0, %v3466
    %v3468 = vrot.slane %v3463, %v3467
    %v3469 = vlaneseq
    %v3470 = vshrl.u32 %v3469, 7
    %v3471 = vsub.s32 1, %v3470
    %v3472 = vrot.slane %v3463, %v3471
    %v3473 = vlaneseq
    %v3474 = vshrl.u32 %v3473, 7
    %v3475 = vsub.s32 2, %v3474
    %v3476 = vrot.slane %v3463, %v3475
    %v3477 = vlaneseq
    %v3478 = vshrl.u32 %v3477, 7
    %v3479 = vsub.s32 3, %v3478
    %v3480 = vrot.slane %v3463, %v3479
    %v3549 = vunpack.c.l.b16 %v3399
    %v3550 = vunpack.c.h.b16 %v3399
    %v3551 = vunpack.c.l.b16 %v3400
    %v3552 = vunpack.c.h.b16 %v3400
    %v3553 = vunpack.c.l.b16 %v3401
    %v3554 = vunpack.c.h.b16 %v3401
    %v3555 = vunpack.c.l.b16 %v3402
    %v3556 = vunpack.c.h.b16 %v3402
    %v3557 = vunpack.c.l.b16 %v3403
    %v3558 = vunpack.c.h.b16 %v3403
    %v3559 = vunpack.c.l.b16 %v3404
    %v3560 = vunpack.c.h.b16 %v3404
    %v3561 = vunpack.c.l.b16 %v3405
    %v3562 = vunpack.c.h.b16 %v3405
    %v3563 = vunpack.c.l.b16 %v3406
    %v3564 = vunpack.c.h.b16 %v3406
    %v3565 = vunpack.c.l.b16 %v3407
    %v3566 = vunpack.c.h.b16 %v3407
    %v3567 = vunpack.c.l.b16 %v3408
    %v3568 = vunpack.c.h.b16 %v3408
    %v3569 = vunpack.c.l.b16 %v3409
    %v3570 = vunpack.c.h.b16 %v3409
    %v3571 = vunpack.c.l.b16 %v3410
    %v3572 = vunpack.c.h.b16 %v3410
    %v3573 = vunpack.c.l.b16 %v3411
    %v3574 = vunpack.c.h.b16 %v3411
    %v3575 = vunpack.c.l.b16 %v3412
    %v3576 = vunpack.c.h.b16 %v3412
    %v3577 = vunpack.c.l.b16 %v3413
    %v3578 = vunpack.c.h.b16 %v3413
    %v3579 = vunpack.c.l.b16 %v3414
    %v3580 = vunpack.c.h.b16 %v3414
    %v3581 = vunpack.c.l.b16 %v3415
    %v3582 = vunpack.c.h.b16 %v3415
    %v3583 = vunpack.c.l.b16 %v3416
    %v3584 = vunpack.c.h.b16 %v3416
    %v3585 = vunpack.c.l.b16 %v3417
    %v3586 = vunpack.c.h.b16 %v3417
    %v3587 = vunpack.c.l.b16 %v3418
    %v3588 = vunpack.c.h.b16 %v3418
    %v3589 = vunpack.c.l.b16 %v3419
    %v3590 = vunpack.c.h.b16 %v3419
    %v3591 = vunpack.c.l.b16 %v3420
    %v3592 = vunpack.c.h.b16 %v3420
    %v3593 = vunpack.c.l.b16 %v3421
    %v3594 = vunpack.c.h.b16 %v3421
    %v3595 = vunpack.c.l.b16 %v3422
    %v3596 = vunpack.c.h.b16 %v3422
    %v3597 = vunpack.c.l.b16 %v3423
    %v3598 = vunpack.c.h.b16 %v3423
    %v3599 = vunpack.c.l.b16 %v3424
    %v3600 = vunpack.c.h.b16 %v3424
    %v3601 = vunpack.c.l.b16 %v3425
    %v3602 = vunpack.c.h.b16 %v3425
    %v3603 = vunpack.c.l.b16 %v3426
    %v3604 = vunpack.c.h.b16 %v3426
    %v3605 = vunpack.c.l.b16 %v3427
    %v3606 = vunpack.c.h.b16 %v3427
    %v3607 = vunpack.c.l.b16 %v3428
    %v3608 = vunpack.c.h.b16 %v3428
    %v3609 = vunpack.c.l.b16 %v3429
    %v3610 = vunpack.c.h.b16 %v3429
    %v3611 = vunpack.c.l.b16 %v3430
    %v3612 = vunpack.c.h.b16 %v3430
    %v3613 = vunpack.c.l.b16 %v3431
    %v3614 = vunpack.c.h.b16 %v3431
    %v3615 = vunpack.c.l.b16 %v3432
    %v3616 = vunpack.c.h.b16 %v3432
    %v3617 = vunpack.c.l.b16 %v3433
    %v3618 = vunpack.c.h.b16 %v3433
    %v3619 = vunpack.c.l.b16 %v3434
    %v3620 = vunpack.c.h.b16 %v3434
    %v3621 = vunpack.c.l.b16 %v3435
    %v3622 = vunpack.c.h.b16 %v3435
    %v3623 = vunpack.c.l.b16 %v3436
    %v3624 = vunpack.c.h.b16 %v3436
    %v3625 = vunpack.c.l.b16 %v3437
    %v3626 = vunpack.c.h.b16 %v3437
    %v3627 = vunpack.c.l.b16 %v3438
    %v3628 = vunpack.c.h.b16 %v3438
    %v3629 = vunpack.c.l.b16 %v3439
    %v3630 = vunpack.c.h.b16 %v3439
    %v3631 = vunpack.c.l.b16 %v3440
    %v3632 = vunpack.c.h.b16 %v3440
    %v3633 = vunpack.c.l.b16 %v3441
    %v3634 = vunpack.c.h.b16 %v3441
    %v3635 = vunpack.c.l.b16 %v3442
    %v3636 = vunpack.c.h.b16 %v3442
    %v3637 = vunpack.c.l.b16 %v3443
    %v3638 = vunpack.c.h.b16 %v3443
    %v3639 = vunpack.c.l.b16 %v3444
    %v3640 = vunpack.c.h.b16 %v3444
    %v3641 = vunpack.c.l.b16 %v3445
    %v3642 = vunpack.c.h.b16 %v3445
    %v3643 = vunpack.c.l.b16 %v3446
    %v3644 = vunpack.c.h.b16 %v3446
    %v3645 = vunpack.c.l.b16 %v3447
    %v3646 = vunpack.c.h.b16 %v3447
    %v3647 = vunpack.c.l.b16 %v3448
    %v3648 = vunpack.c.h.b16 %v3448
    %v3649 = vunpack.c.l.b16 %v3449
    %v3650 = vunpack.c.h.b16 %v3449
    %v3651 = vunpack.c.l.b16 %v3450
    %v3652 = vunpack.c.h.b16 %v3450
    %v3653 = vunpack.c.l.b16 %v3451
    %v3654 = vunpack.c.h.b16 %v3451
    %v3655 = vunpack.c.l.b16 %v3452
    %v3656 = vunpack.c.h.b16 %v3452
    %v3657 = vunpack.c.l.b16 %v3453
    %v3658 = vunpack.c.h.b16 %v3453
    %v3659 = vunpack.c.l.b16 %v3454
    %v3660 = vunpack.c.h.b16 %v3454
    %v3661 = vunpack.c.l.b16 %v3455
    %v3662 = vunpack.c.h.b16 %v3455
    %v3663 = vunpack.c.l.b16 %v3456
    %v3664 = vunpack.c.h.b16 %v3456
    %v3665 = vunpack.c.l.b16 %v3457
    %v3666 = vunpack.c.h.b16 %v3457
    %v3667 = vunpack.c.l.b16 %v3458
    %v3668 = vunpack.c.h.b16 %v3458
    %v3669 = vunpack.c.l.b16 %v3459
    %v3670 = vunpack.c.h.b16 %v3459
    %v3671 = vunpack.c.l.b16 %v3460
    %v3672 = vunpack.c.h.b16 %v3460
    %v3673 = vunpack.c.l.b16 %v3461
    %v3674 = vunpack.c.h.b16 %v3461
    %v3675 = vunpack.c.l.b16 %v3462
    %v3676 = vunpack.c.h.b16 %v3462
    %v3677 = vpack.c.b16 %v3553, %v3549
    %v3678 = vpack.c.b16 %v3554, %v3550
    %v3679 = vpack.c.b16 %v3555, %v3551
    %v3680 = vpack.c.b16 %v3556, %v3552
    %v3681 = vpack.c.b16 %v3561, %v3557
    %v3682 = vpack.c.b16 %v3562, %v3558
    %v3683 = vpack.c.b16 %v3563, %v3559
    %v3684 = vpack.c.b16 %v3564, %v3560
    %v3685 = vpack.c.b16 %v3569, %v3565
    %v3686 = vpack.c.b16 %v3570, %v3566
    %v3687 = vpack.c.b16 %v3571, %v3567
    %v3688 = vpack.c.b16 %v3572, %v3568
    %v3689 = vpack.c.b16 %v3577, %v3573
    %v3690 = vpack.c.b16 %v3578, %v3574
    %v3691 = vpack.c.b16 %v3579, %v3575
    %v3692 = vpack.c.b16 %v3580, %v3576
    %v3693 = vpack.c.b16 %v3585, %v3581
    %v3694 = vpack.c.b16 %v3586, %v3582
    %v3695 = vpack.c.b16 %v3587, %v3583
    %v3696 = vpack.c.b16 %v3588, %v3584
    %v3697 = vpack.c.b16 %v3593, %v3589
    %v3698 = vpack.c.b16 %v3594, %v3590
    %v3699 = vpack.c.b16 %v3595, %v3591
    %v3700 = vpack.c.b16 %v3596, %v3592
    %v3701 = vpack.c.b16 %v3601, %v3597
    %v3702 = vpack.c.b16 %v3602, %v3598
    %v3703 = vpack.c.b16 %v3603, %v3599
    %v3704 = vpack.c.b16 %v3604, %v3600
    %v3705 = vpack.c.b16 %v3609, %v3605
    %v3706 = vpack.c.b16 %v3610, %v3606
    %v3707 = vpack.c.b16 %v3611, %v3607
    %v3708 = vpack.c.b16 %v3612, %v3608
    %v3709 = vpack.c.b16 %v3617, %v3613
    %v3710 = vpack.c.b16 %v3618, %v3614
    %v3711 = vpack.c.b16 %v3619, %v3615
    %v3712 = vpack.c.b16 %v3620, %v3616
    %v3713 = vpack.c.b16 %v3625, %v3621
    %v3714 = vpack.c.b16 %v3626, %v3622
    %v3715 = vpack.c.b16 %v3627, %v3623
    %v3716 = vpack.c.b16 %v3628, %v3624
    %v3717 = vpack.c.b16 %v3633, %v3629
    %v3718 = vpack.c.b16 %v3634, %v3630
    %v3719 = vpack.c.b16 %v3635, %v3631
    %v3720 = vpack.c.b16 %v3636, %v3632
    %v3721 = vpack.c.b16 %v3641, %v3637
    %v3722 = vpack.c.b16 %v3642, %v3638
    %v3723 = vpack.c.b16 %v3643, %v3639
    %v3724 = vpack.c.b16 %v3644, %v3640
    %v3725 = vpack.c.b16 %v3649, %v3645
    %v3726 = vpack.c.b16 %v3650, %v3646
    %v3727 = vpack.c.b16 %v3651, %v3647
    %v3728 = vpack.c.b16 %v3652, %v3648
    %v3729 = vpack.c.b16 %v3657, %v3653
    %v3730 = vpack.c.b16 %v3658, %v3654
    %v3731 = vpack.c.b16 %v3659, %v3655
    %v3732 = vpack.c.b16 %v3660, %v3656
    %v3733 = vpack.c.b16 %v3665, %v3661
    %v3734 = vpack.c.b16 %v3666, %v3662
    %v3735 = vpack.c.b16 %v3667, %v3663
    %v3736 = vpack.c.b16 %v3668, %v3664
    %v3737 = vpack.c.b16 %v3673, %v3669
    %v3738 = vpack.c.b16 %v3674, %v3670
    %v3739 = vpack.c.b16 %v3675, %v3671
    %v3740 = vpack.c.b16 %v3676, %v3672
    %3805 = vmatprep.subr.bf16.mxu0 %v3678
    %3806 = vmatpush1.bf16.msra.mxu0 %v3677
    %3807 = vmatprep.subr.bf16.mxu0 %v3682
    %3808 = vmatpush1.bf16.msra.mxu0 %v3681
    %3809 = vmatprep.subr.bf16.mxu0 %v3686
    %3810 = vmatpush1.bf16.msra.mxu0 %v3685
    %3811 = vmatprep.subr.bf16.mxu0 %v3690
    %3812 = vmatpush1.bf16.msra.mxu0 %v3689
    %3813 = vmatprep.subr.bf16.mxu0 %v3694
    %3814 = vmatpush1.bf16.msra.mxu0 %v3693
    %3815 = vmatprep.subr.bf16.mxu0 %v3698
    %3816 = vmatpush1.bf16.msra.mxu0 %v3697
    %3817 = vmatprep.subr.bf16.mxu0 %v3702
    %3818 = vmatpush1.bf16.msra.mxu0 %v3701
    %3819 = vmatprep.subr.bf16.mxu0 %v3706
    %3820 = vmatpush1.bf16.msra.mxu0 %v3705
    %3821 = vmatprep.subr.bf16.mxu0 %v3710
    %3822 = vmatpush1.bf16.msra.mxu0 %v3709
    %3823 = vmatprep.subr.bf16.mxu0 %v3714
    %3824 = vmatpush1.bf16.msra.mxu0 %v3713
    %3825 = vmatprep.subr.bf16.mxu0 %v3718
    %3826 = vmatpush1.bf16.msra.mxu0 %v3717
    %3827 = vmatprep.subr.bf16.mxu0 %v3722
    %3828 = vmatpush1.bf16.msra.mxu0 %v3721
    %3829 = vmatprep.subr.bf16.mxu0 %v3726
    %3830 = vmatpush1.bf16.msra.mxu0 %v3725
    %3831 = vmatprep.subr.bf16.mxu0 %v3730
    %3832 = vmatpush1.bf16.msra.mxu0 %v3729
    %3833 = vmatprep.subr.bf16.mxu0 %v3734
    %3834 = vmatpush1.bf16.msra.mxu0 %v3733
    %3835 = vmatprep.subr.bf16.mxu0 %v3738
    %3836 = vmatpush1.bf16.msra.mxu0 %v3737
    %3837 = vmatprep.mubr.bf16.mxu0 %v3396
    %3838 = vmatmul.mubr.bf16.gmra.mrb[0].mxu0 %v3395
    %v3839 = vpop.f32.mrb[0].mxu0
    %v3840 = vadd.f32 %v3468, %v3839
    %v3841 = vpop.f32.mrb[0].mxu0
    %v3842 = vadd.f32 %v3472, %v3841
    %v3843 = vpop.f32.mrb[0].mxu0
    %v3844 = vadd.f32 %v3468, %v3843
    %v3845 = vpop.f32.mrb[0].mxu0
    %v3846 = vadd.f32 %v3472, %v3845
    %3847 = vmatprep.mubr.bf16.mxu0 %v3398
    %3848 = vmatmul.mubr.bf16.gmra.mrb[0].mxu0 %v3397
    %v3849 = vpop.f32.mrb[0].mxu0
    %v3850 = vadd.f32 %v3468, %v3849
    %v3851 = vpop.f32.mrb[0].mxu0
    %v3852 = vadd.f32 %v3472, %v3851
    %v3853 = vpop.f32.mrb[0].mxu0
    %v3854 = vadd.f32 %v3468, %v3853
    %v3855 = vpop.f32.mrb[0].mxu0
    %v3856 = vadd.f32 %v3472, %v3855
    %3857 = vdwg.mxu0
    %3858 = vmatprep.subr.bf16.mxu0 %v3680
    %3859 = vmatpush1.bf16.msra.mxu0 %v3679
    %3860 = vmatprep.subr.bf16.mxu0 %v3684
    %3861 = vmatpush1.bf16.msra.mxu0 %v3683
    %3862 = vmatprep.subr.bf16.mxu0 %v3688
    %3863 = vmatpush1.bf16.msra.mxu0 %v3687
    %3864 = vmatprep.subr.bf16.mxu0 %v3692
    %3865 = vmatpush1.bf16.msra.mxu0 %v3691
    %3866 = vmatprep.subr.bf16.mxu0 %v3696
    %3867 = vmatpush1.bf16.msra.mxu0 %v3695
    %3868 = vmatprep.subr.bf16.mxu0 %v3700
    %3869 = vmatpush1.bf16.msra.mxu0 %v3699
    %3870 = vmatprep.subr.bf16.mxu0 %v3704
    %3871 = vmatpush1.bf16.msra.mxu0 %v3703
    %3872 = vmatprep.subr.bf16.mxu0 %v3708
    %3873 = vmatpush1.bf16.msra.mxu0 %v3707
    %3874 = vmatprep.subr.bf16.mxu0 %v3712
    %3875 = vmatpush1.bf16.msra.mxu0 %v3711
    %3876 = vmatprep.subr.bf16.mxu0 %v3716
    %3877 = vmatpush1.bf16.msra.mxu0 %v3715
    %3878 = vmatprep.subr.bf16.mxu0 %v3720
    %3879 = vmatpush1.bf16.msra.mxu0 %v3719
    %3880 = vmatprep.subr.bf16.mxu0 %v3724
    %3881 = vmatpush1.bf16.msra.mxu0 %v3723
    %3882 = vmatprep.subr.bf16.mxu0 %v3728
    %3883 = vmatpush1.bf16.msra.mxu0 %v3727
    %3884 = vmatprep.subr.bf16.mxu0 %v3732
    %3885 = vmatpush1.bf16.msra.mxu0 %v3731
    %3886 = vmatprep.subr.bf16.mxu0 %v3736
    %3887 = vmatpush1.bf16.msra.mxu0 %v3735
    %3888 = vmatprep.subr.bf16.mxu0 %v3740
    %3889 = vmatpush1.bf16.msra.mxu0 %v3739
    %3890 = vmatprep.mubr.bf16.mxu0 %v3396
    %3891 = vmatmul.mubr.bf16.gmra.mrb[0].mxu0 %v3395
    %v3892 = vpop.f32.mrb[0].mxu0
    %v3893 = vadd.f32 %v3476, %v3892
    %v3894 = vpop.f32.mrb[0].mxu0
    %v3895 = vadd.f32 %v3480, %v3894
    %v3896 = vpop.f32.mrb[0].mxu0
    %v3897 = vadd.f32 %v3476, %v3896
    %v3898 = vpop.f32.mrb[0].mxu0
    %v3899 = vadd.f32 %v3480, %v3898
    %3900 = vmatprep.mubr.bf16.mxu0 %v3398
    %3901 = vmatmul.mubr.bf16.gmra.mrb[0].mxu0 %v3397
    %v3902 = vpop.f32.mrb[0].mxu0
    %v3903 = vadd.f32 %v3476, %v3902
    %v3904 = vpop.f32.mrb[0].mxu0
    %v3905 = vadd.f32 %v3480, %v3904
    %v3906 = vpop.f32.mrb[0].mxu0
    %v3907 = vadd.f32 %v3476, %v3906
    %v3908 = vpop.f32.mrb[0].mxu0
    %v3909 = vadd.f32 %v3480, %v3908
    %3910 = vdwg.mxu0
    %v3911 = vmax.f32 %v3840, 0.0
    %v3912 = vmax.f32 %v3842, 0.0
    %v3913 = vmax.f32 %v3893, 0.0
    %v3914 = vmax.f32 %v3895, 0.0
    %v3915 = vmax.f32 %v3844, 0.0
    %v3916 = vmax.f32 %v3846, 0.0
    %v3917 = vmax.f32 %v3897, 0.0
    %v3918 = vmax.f32 %v3899, 0.0
    %v3919 = vmax.f32 %v3850, 0.0
    %v3920 = vmax.f32 %v3852, 0.0
    %v3921 = vmax.f32 %v3903, 0.0
    %v3922 = vmax.f32 %v3905, 0.0
    %v3923 = vmax.f32 %v3854, 0.0
    %v3924 = vmax.f32 %v3856, 0.0
    %v3925 = vmax.f32 %v3907, 0.0
    %v3926 = vmax.f32 %v3909, 0.0
    %v3927 = vpack.c.bf16 %v3915, %v3911
    %v3928 = vpack.c.bf16 %v3916, %v3912
    %v3929 = vpack.c.bf16 %v3917, %v3913
    %v3930 = vpack.c.bf16 %v3918, %v3914
    %v3931 = vpack.c.bf16 %v3923, %v3919
    %v3932 = vpack.c.bf16 %v3924, %v3920
    %v3933 = vpack.c.bf16 %v3925, %v3921
    %v3934 = vpack.c.bf16 %v3926, %v3922
    %v3935 = vld [vmem:[#allocation16] sm:$0xff]
    %v3936 = vld [vmem:[#allocation16 + $0x8] sm:$0xff]
    %v3937 = vld [vmem:[#allocation16 + $0x10] sm:$0xff]
    %v3938 = vld [vmem:[#allocation16 + $0x18] sm:$0xff]
    %v3939 = vld [vmem:[#allocation16 + $0x20] sm:$0xff]
    %v3940 = vld [vmem:[#allocation16 + $0x28] sm:$0xff]
    %v3941 = vld [vmem:[#allocation16 + $0x30] sm:$0xff]
    %v3942 = vld [vmem:[#allocation16 + $0x38] sm:$0xff]
    %v3943 = vld [vmem:[#allocation16 + $0x40] sm:$0xff]
    %v3944 = vld [vmem:[#allocation16 + $0x48] sm:$0xff]
    %v3945 = vld [vmem:[#allocation16 + $0x50] sm:$0xff]
    %v3946 = vld [vmem:[#allocation16 + $0x58] sm:$0xff]
    %v3947 = vld [vmem:[#allocation16 + $0x60] sm:$0xff]
    %v3948 = vld [vmem:[#allocation16 + $0x68] sm:$0xff]
    %v3949 = vld [vmem:[#allocation16 + $0x70] sm:$0xff]
    %v3950 = vld [vmem:[#allocation16 + $0x78] sm:$0xff]
    %v3951 = vld [vmem:[#allocation16 + $0x80] sm:$0xff]
    %v3952 = vld [vmem:[#allocation16 + $0x88] sm:$0xff]
    %v3953 = vld [vmem:[#allocation16 + $0x90] sm:$0xff]
    %v3954 = vld [vmem:[#allocation16 + $0x98] sm:$0xff]
    %v3955 = vld [vmem:[#allocation16 + $0xa0] sm:$0xff]
    %v3956 = vld [vmem:[#allocation16 + $0xa8] sm:$0xff]
    %v3957 = vld [vmem:[#allocation16 + $0xb0] sm:$0xff]
    %v3958 = vld [vmem:[#allocation16 + $0xb8] sm:$0xff]
    %v3959 = vld [vmem:[#allocation16 + $0xc0] sm:$0xff]
    %v3960 = vld [vmem:[#allocation16 + $0xc8] sm:$0xff]
    %v3961 = vld [vmem:[#allocation16 + $0xd0] sm:$0xff]
    %v3962 = vld [vmem:[#allocation16 + $0xd8] sm:$0xff]
    %v3963 = vld [vmem:[#allocation16 + $0xe0] sm:$0xff]
    %v3964 = vld [vmem:[#allocation16 + $0xe8] sm:$0xff]
    %v3965 = vld [vmem:[#allocation16 + $0xf0] sm:$0xff]
    %v3966 = vld [vmem:[#allocation16 + $0xf8] sm:$0xff]
    %v3967 = vld [vmem:[#allocation16 + $0x100] sm:$0xff]
    %v3968 = vld [vmem:[#allocation16 + $0x108] sm:$0xff]
    %v3969 = vld [vmem:[#allocation16 + $0x110] sm:$0xff]
    %v3970 = vld [vmem:[#allocation16 + $0x118] sm:$0xff]
    %v3971 = vld [vmem:[#allocation16 + $0x120] sm:$0xff]
    %v3972 = vld [vmem:[#allocation16 + $0x128] sm:$0xff]
    %v3973 = vld [vmem:[#allocation16 + $0x130] sm:$0xff]
    %v3974 = vld [vmem:[#allocation16 + $0x138] sm:$0xff]
    %v3975 = vld [vmem:[#allocation16 + $0x140] sm:$0xff]
    %v3976 = vld [vmem:[#allocation16 + $0x148] sm:$0xff]
    %v3977 = vld [vmem:[#allocation16 + $0x150] sm:$0xff]
    %v3978 = vld [vmem:[#allocation16 + $0x158] sm:$0xff]
    %v3979 = vld [vmem:[#allocation16 + $0x160] sm:$0xff]
    %v3980 = vld [vmem:[#allocation16 + $0x168] sm:$0xff]
    %v3981 = vld [vmem:[#allocation16 + $0x170] sm:$0xff]
    %v3982 = vld [vmem:[#allocation16 + $0x178] sm:$0xff]
    %v3983 = vld [vmem:[#allocation16 + $0x180] sm:$0xff]
    %v3984 = vld [vmem:[#allocation16 + $0x188] sm:$0xff]
    %v3985 = vld [vmem:[#allocation16 + $0x190] sm:$0xff]
    %v3986 = vld [vmem:[#allocation16 + $0x198] sm:$0xff]
    %v3987 = vld [vmem:[#allocation16 + $0x1a0] sm:$0xff]
    %v3988 = vld [vmem:[#allocation16 + $0x1a8] sm:$0xff]
    %v3989 = vld [vmem:[#allocation16 + $0x1b0] sm:$0xff]
    %v3990 = vld [vmem:[#allocation16 + $0x1b8] sm:$0xff]
    %v3991 = vld [vmem:[#allocation16 + $0x1c0] sm:$0xff]
    %v3992 = vld [vmem:[#allocation16 + $0x1c8] sm:$0xff]
    %v3993 = vld [vmem:[#allocation16 + $0x1d0] sm:$0xff]
    %v3994 = vld [vmem:[#allocation16 + $0x1d8] sm:$0xff]
    %v3995 = vld [vmem:[#allocation16 + $0x1e0] sm:$0xff]
    %v3996 = vld [vmem:[#allocation16 + $0x1e8] sm:$0xff]
    %v3997 = vld [vmem:[#allocation16 + $0x1f0] sm:$0xff]
    %v3998 = vld [vmem:[#allocation16 + $0x1f8] sm:$0xff]
    %v3999 = vld [vmem:[%s19] sm:$0x3]
    %v4001 = vlaneseq
    %v4002 = vshrl.u32 %v4001, 7
    %v4003 = vsub.s32 0, %v4002
    %v4004 = vrot.slane %v3999, %v4003
    %v4005 = vlaneseq
    %v4006 = vshrl.u32 %v4005, 7
    %v4007 = vsub.s32 1, %v4006
    %v4008 = vrot.slane %v3999, %v4007
    %v4075 = vunpack.c.l.b16 %v3935
    %v4076 = vunpack.c.h.b16 %v3935
    %v4077 = vunpack.c.l.b16 %v3936
    %v4078 = vunpack.c.h.b16 %v3936
    %v4079 = vunpack.c.l.b16 %v3937
    %v4080 = vunpack.c.h.b16 %v3937
    %v4081 = vunpack.c.l.b16 %v3938
    %v4082 = vunpack.c.h.b16 %v3938
    %v4083 = vunpack.c.l.b16 %v3939
    %v4084 = vunpack.c.h.b16 %v3939
    %v4085 = vunpack.c.l.b16 %v3940
    %v4086 = vunpack.c.h.b16 %v3940
    %v4087 = vunpack.c.l.b16 %v3941
    %v4088 = vunpack.c.h.b16 %v3941
    %v4089 = vunpack.c.l.b16 %v3942
    %v4090 = vunpack.c.h.b16 %v3942
    %v4091 = vunpack.c.l.b16 %v3943
    %v4092 = vunpack.c.h.b16 %v3943
    %v4093 = vunpack.c.l.b16 %v3944
    %v4094 = vunpack.c.h.b16 %v3944
    %v4095 = vunpack.c.l.b16 %v3945
    %v4096 = vunpack.c.h.b16 %v3945
    %v4097 = vunpack.c.l.b16 %v3946
    %v4098 = vunpack.c.h.b16 %v3946
    %v4099 = vunpack.c.l.b16 %v3947
    %v4100 = vunpack.c.h.b16 %v3947
    %v4101 = vunpack.c.l.b16 %v3948
    %v4102 = vunpack.c.h.b16 %v3948
    %v4103 = vunpack.c.l.b16 %v3949
    %v4104 = vunpack.c.h.b16 %v3949
    %v4105 = vunpack.c.l.b16 %v3950
    %v4106 = vunpack.c.h.b16 %v3950
    %v4107 = vunpack.c.l.b16 %v3951
    %v4108 = vunpack.c.h.b16 %v3951
    %v4109 = vunpack.c.l.b16 %v3952
    %v4110 = vunpack.c.h.b16 %v3952
    %v4111 = vunpack.c.l.b16 %v3953
    %v4112 = vunpack.c.h.b16 %v3953
    %v4113 = vunpack.c.l.b16 %v3954
    %v4114 = vunpack.c.h.b16 %v3954
    %v4115 = vunpack.c.l.b16 %v3955
    %v4116 = vunpack.c.h.b16 %v3955
    %v4117 = vunpack.c.l.b16 %v3956
    %v4118 = vunpack.c.h.b16 %v3956
    %v4119 = vunpack.c.l.b16 %v3957
    %v4120 = vunpack.c.h.b16 %v3957
    %v4121 = vunpack.c.l.b16 %v3958
    %v4122 = vunpack.c.h.b16 %v3958
    %v4123 = vunpack.c.l.b16 %v3959
    %v4124 = vunpack.c.h.b16 %v3959
    %v4125 = vunpack.c.l.b16 %v3960
    %v4126 = vunpack.c.h.b16 %v3960
    %v4127 = vunpack.c.l.b16 %v3961
    %v4128 = vunpack.c.h.b16 %v3961
    %v4129 = vunpack.c.l.b16 %v3962
    %v4130 = vunpack.c.h.b16 %v3962
    %v4131 = vunpack.c.l.b16 %v3963
    %v4132 = vunpack.c.h.b16 %v3963
    %v4133 = vunpack.c.l.b16 %v3964
    %v4134 = vunpack.c.h.b16 %v3964
    %v4135 = vunpack.c.l.b16 %v3965
    %v4136 = vunpack.c.h.b16 %v3965
    %v4137 = vunpack.c.l.b16 %v3966
    %v4138 = vunpack.c.h.b16 %v3966
    %v4139 = vunpack.c.l.b16 %v3967
    %v4140 = vunpack.c.h.b16 %v3967
    %v4141 = vunpack.c.l.b16 %v3968
    %v4142 = vunpack.c.h.b16 %v3968
    %v4143 = vunpack.c.l.b16 %v3969
    %v4144 = vunpack.c.h.b16 %v3969
    %v4145 = vunpack.c.l.b16 %v3970
    %v4146 = vunpack.c.h.b16 %v3970
    %v4147 = vunpack.c.l.b16 %v3971
    %v4148 = vunpack.c.h.b16 %v3971
    %v4149 = vunpack.c.l.b16 %v3972
    %v4150 = vunpack.c.h.b16 %v3972
    %v4151 = vunpack.c.l.b16 %v3973
    %v4152 = vunpack.c.h.b16 %v3973
    %v4153 = vunpack.c.l.b16 %v3974
    %v4154 = vunpack.c.h.b16 %v3974
    %v4155 = vunpack.c.l.b16 %v3975
    %v4156 = vunpack.c.h.b16 %v3975
    %v4157 = vunpack.c.l.b16 %v3976
    %v4158 = vunpack.c.h.b16 %v3976
    %v4159 = vunpack.c.l.b16 %v3977
    %v4160 = vunpack.c.h.b16 %v3977
    %v4161 = vunpack.c.l.b16 %v3978
    %v4162 = vunpack.c.h.b16 %v3978
    %v4163 = vunpack.c.l.b16 %v3979
    %v4164 = vunpack.c.h.b16 %v3979
    %v4165 = vunpack.c.l.b16 %v3980
    %v4166 = vunpack.c.h.b16 %v3980
    %v4167 = vunpack.c.l.b16 %v3981
    %v4168 = vunpack.c.h.b16 %v3981
    %v4169 = vunpack.c.l.b16 %v3982
    %v4170 = vunpack.c.h.b16 %v3982
    %v4171 = vunpack.c.l.b16 %v3983
    %v4172 = vunpack.c.h.b16 %v3983
    %v4173 = vunpack.c.l.b16 %v3984
    %v4174 = vunpack.c.h.b16 %v3984
    %v4175 = vunpack.c.l.b16 %v3985
    %v4176 = vunpack.c.h.b16 %v3985
    %v4177 = vunpack.c.l.b16 %v3986
    %v4178 = vunpack.c.h.b16 %v3986
    %v4179 = vunpack.c.l.b16 %v3987
    %v4180 = vunpack.c.h.b16 %v3987
    %v4181 = vunpack.c.l.b16 %v3988
    %v4182 = vunpack.c.h.b16 %v3988
    %v4183 = vunpack.c.l.b16 %v3989
    %v4184 = vunpack.c.h.b16 %v3989
    %v4185 = vunpack.c.l.b16 %v3990
    %v4186 = vunpack.c.h.b16 %v3990
    %v4187 = vunpack.c.l.b16 %v3991
    %v4188 = vunpack.c.h.b16 %v3991
    %v4189 = vunpack.c.l.b16 %v3992
    %v4190 = vunpack.c.h.b16 %v3992
    %v4191 = vunpack.c.l.b16 %v3993
    %v4192 = vunpack.c.h.b16 %v3993
    %v4193 = vunpack.c.l.b16 %v3994
    %v4194 = vunpack.c.h.b16 %v3994
    %v4195 = vunpack.c.l.b16 %v3995
    %v4196 = vunpack.c.h.b16 %v3995
    %v4197 = vunpack.c.l.b16 %v3996
    %v4198 = vunpack.c.h.b16 %v3996
    %v4199 = vunpack.c.l.b16 %v3997
    %v4200 = vunpack.c.h.b16 %v3997
    %v4201 = vunpack.c.l.b16 %v3998
    %v4202 = vunpack.c.h.b16 %v3998
    %v4203 = vpack.c.b16 %v4077, %v4075
    %v4204 = vpack.c.b16 %v4078, %v4076
    %v4205 = vpack.c.b16 %v4081, %v4079
    %v4206 = vpack.c.b16 %v4082, %v4080
    %v4207 = vpack.c.b16 %v4085, %v4083
    %v4208 = vpack.c.b16 %v4086, %v4084
    %v4209 = vpack.c.b16 %v4089, %v4087
    %v4210 = vpack.c.b16 %v4090, %v4088
    %v4211 = vpack.c.b16 %v4093, %v4091
    %v4212 = vpack.c.b16 %v4094, %v4092
    %v4213 = vpack.c.b16 %v4097, %v4095
    %v4214 = vpack.c.b16 %v4098, %v4096
    %v4215 = vpack.c.b16 %v4101, %v4099
    %v4216 = vpack.c.b16 %v4102, %v4100
    %v4217 = vpack.c.b16 %v4105, %v4103
    %v4218 = vpack.c.b16 %v4106, %v4104
    %v4219 = vpack.c.b16 %v4109, %v4107
    %v4220 = vpack.c.b16 %v4110, %v4108
    %v4221 = vpack.c.b16 %v4113, %v4111
    %v4222 = vpack.c.b16 %v4114, %v4112
    %v4223 = vpack.c.b16 %v4117, %v4115
    %v4224 = vpack.c.b16 %v4118, %v4116
    %v4225 = vpack.c.b16 %v4121, %v4119
    %v4226 = vpack.c.b16 %v4122, %v4120
    %v4227 = vpack.c.b16 %v4125, %v4123
    %v4228 = vpack.c.b16 %v4126, %v4124
    %v4229 = vpack.c.b16 %v4129, %v4127
    %v4230 = vpack.c.b16 %v4130, %v4128
    %v4231 = vpack.c.b16 %v4133, %v4131
    %v4232 = vpack.c.b16 %v4134, %v4132
    %v4233 = vpack.c.b16 %v4137, %v4135
    %v4234 = vpack.c.b16 %v4138, %v4136
    %v4235 = vpack.c.b16 %v4141, %v4139
    %v4236 = vpack.c.b16 %v4142, %v4140
    %v4237 = vpack.c.b16 %v4145, %v4143
    %v4238 = vpack.c.b16 %v4146, %v4144
    %v4239 = vpack.c.b16 %v4149, %v4147
    %v4240 = vpack.c.b16 %v4150, %v4148
    %v4241 = vpack.c.b16 %v4153, %v4151
    %v4242 = vpack.c.b16 %v4154, %v4152
    %v4243 = vpack.c.b16 %v4157, %v4155
    %v4244 = vpack.c.b16 %v4158, %v4156
    %v4245 = vpack.c.b16 %v4161, %v4159
    %v4246 = vpack.c.b16 %v4162, %v4160
    %v4247 = vpack.c.b16 %v4165, %v4163
    %v4248 = vpack.c.b16 %v4166, %v4164
    %v4249 = vpack.c.b16 %v4169, %v4167
    %v4250 = vpack.c.b16 %v4170, %v4168
    %v4251 = vpack.c.b16 %v4173, %v4171
    %v4252 = vpack.c.b16 %v4174, %v4172
    %v4253 = vpack.c.b16 %v4177, %v4175
    %v4254 = vpack.c.b16 %v4178, %v4176
    %v4255 = vpack.c.b16 %v4181, %v4179
    %v4256 = vpack.c.b16 %v4182, %v4180
    %v4257 = vpack.c.b16 %v4185, %v4183
    %v4258 = vpack.c.b16 %v4186, %v4184
    %v4259 = vpack.c.b16 %v4189, %v4187
    %v4260 = vpack.c.b16 %v4190, %v4188
    %v4261 = vpack.c.b16 %v4193, %v4191
    %v4262 = vpack.c.b16 %v4194, %v4192
    %v4263 = vpack.c.b16 %v4197, %v4195
    %v4264 = vpack.c.b16 %v4198, %v4196
    %v4265 = vpack.c.b16 %v4201, %v4199
    %v4266 = vpack.c.b16 %v4202, %v4200
    %4331 = vmatprep.subr.bf16.mxu0 %v4204
    %4332 = vmatpush1.bf16.msra.mxu0 %v4203
    %4333 = vmatprep.subr.bf16.mxu0 %v4206
    %4334 = vmatpush1.bf16.msra.mxu0 %v4205
    %4335 = vmatprep.subr.bf16.mxu0 %v4208
    %4336 = vmatpush1.bf16.msra.mxu0 %v4207
    %4337 = vmatprep.subr.bf16.mxu0 %v4210
    %4338 = vmatpush1.bf16.msra.mxu0 %v4209
    %4339 = vmatprep.subr.bf16.mxu0 %v4212
    %4340 = vmatpush1.bf16.msra.mxu0 %v4211
    %4341 = vmatprep.subr.bf16.mxu0 %v4214
    %4342 = vmatpush1.bf16.msra.mxu0 %v4213
    %4343 = vmatprep.subr.bf16.mxu0 %v4216
    %4344 = vmatpush1.bf16.msra.mxu0 %v4215
    %4345 = vmatprep.subr.bf16.mxu0 %v4218
    %4346 = vmatpush1.bf16.msra.mxu0 %v4217
    %4347 = vmatprep.subr.bf16.mxu0 %v4220
    %4348 = vmatpush1.bf16.msra.mxu0 %v4219
    %4349 = vmatprep.subr.bf16.mxu0 %v4222
    %4350 = vmatpush1.bf16.msra.mxu0 %v4221
    %4351 = vmatprep.subr.bf16.mxu0 %v4224
    %4352 = vmatpush1.bf16.msra.mxu0 %v4223
    %4353 = vmatprep.subr.bf16.mxu0 %v4226
    %4354 = vmatpush1.bf16.msra.mxu0 %v4225
    %4355 = vmatprep.subr.bf16.mxu0 %v4228
    %4356 = vmatpush1.bf16.msra.mxu0 %v4227
    %4357 = vmatprep.subr.bf16.mxu0 %v4230
    %4358 = vmatpush1.bf16.msra.mxu0 %v4229
    %4359 = vmatprep.subr.bf16.mxu0 %v4232
    %4360 = vmatpush1.bf16.msra.mxu0 %v4231
    %4361 = vmatprep.subr.bf16.mxu0 %v4234
    %4362 = vmatpush1.bf16.msra.mxu0 %v4233
    %4363 = vmatprep.mubr.bf16.mxu0 %v3928
    %4364 = vmatmul.mubr.bf16.gmra.mrb[0].mxu0 %v3927
    %v4365 = vpop.f32.mrb[0].mxu0
    %v4366 = vadd.f32 %v4004, %v4365
    %v4367 = vpop.f32.mrb[0].mxu0
    %v4368 = vadd.f32 %v4008, %v4367
    %v4369 = vpop.f32.mrb[0].mxu0
    %v4370 = vadd.f32 %v4004, %v4369
    %v4371 = vpop.f32.mrb[0].mxu0
    %v4372 = vadd.f32 %v4008, %v4371
    %4373 = vmatprep.mubr.bf16.mxu0 %v3932
    %4374 = vmatmul.mubr.bf16.gmra.mrb[0].mxu0 %v3931
    %v4375 = vpop.f32.mrb[0].mxu0
    %v4376 = vadd.f32 %v4004, %v4375
    %v4377 = vpop.f32.mrb[0].mxu0
    %v4378 = vadd.f32 %v4008, %v4377
    %v4379 = vpop.f32.mrb[0].mxu0
    %v4380 = vadd.f32 %v4004, %v4379
    %v4381 = vpop.f32.mrb[0].mxu0
    %v4382 = vadd.f32 %v4008, %v4381
    %4383 = vdwg.mxu0
    %4384 = vmatprep.subr.bf16.mxu0 %v4236
    %4385 = vmatpush1.bf16.msra.mxu0 %v4235
    %4386 = vmatprep.subr.bf16.mxu0 %v4238
    %4387 = vmatpush1.bf16.msra.mxu0 %v4237
    %4388 = vmatprep.subr.bf16.mxu0 %v4240
    %4389 = vmatpush1.bf16.msra.mxu0 %v4239
    %4390 = vmatprep.subr.bf16.mxu0 %v4242
    %4391 = vmatpush1.bf16.msra.mxu0 %v4241
    %4392 = vmatprep.subr.bf16.mxu0 %v4244
    %4393 = vmatpush1.bf16.msra.mxu0 %v4243
    %4394 = vmatprep.subr.bf16.mxu0 %v4246
    %4395 = vmatpush1.bf16.msra.mxu0 %v4245
    %4396 = vmatprep.subr.bf16.mxu0 %v4248
    %4397 = vmatpush1.bf16.msra.mxu0 %v4247
    %4398 = vmatprep.subr.bf16.mxu0 %v4250
    %4399 = vmatpush1.bf16.msra.mxu0 %v4249
    %4400 = vmatprep.subr.bf16.mxu0 %v4252
    %4401 = vmatpush1.bf16.msra.mxu0 %v4251
    %4402 = vmatprep.subr.bf16.mxu0 %v4254
    %4403 = vmatpush1.bf16.msra.mxu0 %v4253
    %4404 = vmatprep.subr.bf16.mxu0 %v4256
    %4405 = vmatpush1.bf16.msra.mxu0 %v4255
    %4406 = vmatprep.subr.bf16.mxu0 %v4258
    %4407 = vmatpush1.bf16.msra.mxu0 %v4257
    %4408 = vmatprep.subr.bf16.mxu0 %v4260
    %4409 = vmatpush1.bf16.msra.mxu0 %v4259
    %4410 = vmatprep.subr.bf16.mxu0 %v4262
    %4411 = vmatpush1.bf16.msra.mxu0 %v4261
    %4412 = vmatprep.subr.bf16.mxu0 %v4264
    %4413 = vmatpush1.bf16.msra.mxu0 %v4263
    %4414 = vmatprep.subr.bf16.mxu0 %v4266
    %4415 = vmatpush1.bf16.msra.mxu0 %v4265
    %4416 = vmatprep.mubr.bf16.mxu0 %v3930
    %4417 = vmatmul.mubr.bf16.gmra.mrb[0].mxu0 %v3929
    %v4418 = vpop.f32.mrb[0].mxu0
    %v4419 = vadd.f32 %v4366, %v4418
    %v4420 = vpop.f32.mrb[0].mxu0
    %v4421 = vadd.f32 %v4368, %v4420
    %v4422 = vpop.f32.mrb[0].mxu0
    %v4423 = vadd.f32 %v4370, %v4422
    %v4424 = vpop.f32.mrb[0].mxu0
    %v4425 = vadd.f32 %v4372, %v4424
    %4426 = vmatprep.mubr.bf16.mxu0 %v3934
    %4427 = vmatmul.mubr.bf16.gmra.mrb[0].mxu0 %v3933
    %v4428 = vpop.f32.mrb[0].mxu0
    %v4429 = vadd.f32 %v4376, %v4428
    %v4430 = vpop.f32.mrb[0].mxu0
    %v4431 = vadd.f32 %v4378, %v4430
    %v4432 = vpop.f32.mrb[0].mxu0
    %v4433 = vadd.f32 %v4380, %v4432
    %v4434 = vpop.f32.mrb[0].mxu0
    %v4435 = vadd.f32 %v4382, %v4434
    %4436 = vdwg.mxu0
    %v4437 = vadd.f32 %v3387, %v4419
    %v4438 = vadd.f32 %v3388, %v4421
    %v4439 = vadd.f32 %v3389, %v4423
    %v4440 = vadd.f32 %v3390, %v4425
    %v4441 = vadd.f32 %v3391, %v4429
    %v4442 = vadd.f32 %v3392, %v4431
    %v4443 = vadd.f32 %v3393, %v4433
    %v4444 = vadd.f32 %v3394, %v4435
    %v4445 = vld [vmem:[%s20] sm:$0x3]
    %v4446 = vld [vmem:[%s21] sm:$0x3]
    %v4447 = vadd.f32 %v4437, %v4438
    %4448 = vadd.xlane.f32.xlu0 %v4447
    %v4449 = vpop.xlane.xlu0 %4448
    %v4450 = vadd.f32 %v4439, %v4440
    %4451 = vadd.xlane.f32.xlu0 %v4450
    %v4452 = vpop.xlane.xlu0 %4451
    %v4453 = vadd.f32 %v4441, %v4442
    %4454 = vadd.xlane.f32.xlu0 %v4453
    %v4455 = vpop.xlane.xlu0 %4454
    %v4456 = vadd.f32 %v4443, %v4444
    %4457 = vadd.xlane.f32.xlu0 %v4456
    %v4458 = vpop.xlane.xlu0 %4457
    %v4459 = vmul.f32 %v4449, %v1710
    %v4460 = vmul.f32 %v4452, %v1710
    %v4461 = vmul.f32 %v4455, %v1710
    %v4462 = vmul.f32 %v4458, %v1710
    %v4463 = vsub.f32 %v4437, %v4459
    %v4464 = vsub.f32 %v4438, %v4459
    %v4465 = vsub.f32 %v4439, %v4460
    %v4466 = vsub.f32 %v4440, %v4460
    %v4467 = vsub.f32 %v4441, %v4461
    %v4468 = vsub.f32 %v4442, %v4461
    %v4469 = vsub.f32 %v4443, %v4462
    %v4470 = vsub.f32 %v4444, %v4462
    %v4471 = vmul.f32 %v4463, %v4463
    %v4472 = vmul.f32 %v4464, %v4464
    %v4473 = vmul.f32 %v4465, %v4465
    %v4474 = vmul.f32 %v4466, %v4466
    %v4475 = vmul.f32 %v4467, %v4467
    %v4476 = vmul.f32 %v4468, %v4468
    %v4477 = vmul.f32 %v4469, %v4469
    %v4478 = vmul.f32 %v4470, %v4470
    %v4479 = vadd.f32 %v4471, %v4472
    %4480 = vadd.xlane.f32.xlu0 %v4479
    %v4481 = vpop.xlane.xlu0 %4480
    %v4482 = vadd.f32 %v4473, %v4474
    %4483 = vadd.xlane.f32.xlu0 %v4482
    %v4484 = vpop.xlane.xlu0 %4483
    %v4485 = vadd.f32 %v4475, %v4476
    %4486 = vadd.xlane.f32.xlu0 %v4485
    %v4487 = vpop.xlane.xlu0 %4486
    %v4488 = vadd.f32 %v4477, %v4478
    %4489 = vadd.xlane.f32.xlu0 %v4488
    %v4490 = vpop.xlane.xlu0 %4489
    %v4491 = vmul.f32 %v4481, %v1710
    %v4492 = vmul.f32 %v4484, %v1710
    %v4493 = vmul.f32 %v4487, %v1710
    %v4494 = vmul.f32 %v4490, %v1710
    %v4495 = vadd.f32 %v4491, 1e-06
    %v4496 = vadd.f32 %v4492, 1e-06
    %v4497 = vadd.f32 %v4493, 1e-06
    %v4498 = vadd.f32 %v4494, 1e-06
    %v4499 = vrsqrt.pop %v4495
    %v4500 = vrsqrt.pop %v4496
    %v4501 = vrsqrt.pop %v4497
    %v4502 = vrsqrt.pop %v4498
    %v4503 = vmul.f32 %v4463, %v4499
    %v4504 = vmul.f32 %v4464, %v4499
    %v4505 = vmul.f32 %v4465, %v4500
    %v4506 = vmul.f32 %v4466, %v4500
    %v4507 = vmul.f32 %v4467, %v4501
    %v4508 = vmul.f32 %v4468, %v4501
    %v4509 = vmul.f32 %v4469, %v4502
    %v4510 = vmul.f32 %v4470, %v4502
    %v4512 = vlaneseq
    %v4513 = vshrl.u32 %v4512, 7
    %v4514 = vsub.s32 0, %v4513
    %v4515 = vrot.slane %v4445, %v4514
    %v4516 = vlaneseq
    %v4517 = vshrl.u32 %v4516, 7
    %v4518 = vsub.s32 1, %v4517
    %v4519 = vrot.slane %v4445, %v4518
    %v4522 = vmul.f32 %v4503, %v4515
    %v4523 = vmul.f32 %v4504, %v4519
    %v4524 = vmul.f32 %v4505, %v4515
    %v4525 = vmul.f32 %v4506, %v4519
    %v4526 = vmul.f32 %v4507, %v4515
    %v4527 = vmul.f32 %v4508, %v4519
    %v4528 = vmul.f32 %v4509, %v4515
    %v4529 = vmul.f32 %v4510, %v4519
    %v4531 = vlaneseq
    %v4532 = vshrl.u32 %v4531, 7
    %v4533 = vsub.s32 0, %v4532
    %v4534 = vrot.slane %v4446, %v4533
    %v4535 = vlaneseq
    %v4536 = vshrl.u32 %v4535, 7
    %v4537 = vsub.s32 1, %v4536
    %v4538 = vrot.slane %v4446, %v4537
    %v4541 = vadd.f32 %v4522, %v4534
    %v4542 = vadd.f32 %v4523, %v4538
    %v4543 = vadd.f32 %v4524, %v4534
    %v4544 = vadd.f32 %v4525, %v4538
    %v4545 = vadd.f32 %v4526, %v4534
    %v4546 = vadd.f32 %v4527, %v4538
    %v4547 = vadd.f32 %v4528, %v4534
    %v4548 = vadd.f32 %v4529, %v4538
    %4549 = vst [vmem:[#allocation17] sm:$0xff] %v4541
    %4550 = vst [vmem:[#allocation17 + $0x8] sm:$0xff] %v4542
    %4551 = vst [vmem:[#allocation17 + $0x10] sm:$0xff] %v4543
    %4552 = vst [vmem:[#allocation17 + $0x18] sm:$0xff] %v4544
    %4553 = vst [vmem:[#allocation17 + $0x20] sm:$0xff] %v4545
    %4554 = vst [vmem:[#allocation17 + $0x28] sm:$0xff] %v4546
    %4555 = vst [vmem:[#allocation17 + $0x30] sm:$0xff] %v4547
    %4556 = vst [vmem:[#allocation17 + $0x38] sm:$0xff] %v4548
    // Predicated region
    $region126: #{tpu_custom_call.1} parent=1 // pred_check
      _
    $region127: #{tpu_custom_call.1} parent=1 // pred_check_branch
      %4558 = sbr.rel (0) target = $region129
    $region128: #{tpu_custom_call.1} parent=1 // pred_region
      %s4560 = ssub.s32 1024, 1024
      %4561 = vsyncadd [#allocation4], %s4560
      %s4562 = sshll.u32 [#allocation17], 4
      %s4563 = int_to_ptr.vmem [resolvable:$true] %s4562
      %4568 = dma.vmem_to_hbm [thread:$0]  %s4563, 1024, %s22, [#allocation4], 256, 256, 16
    $region129: #{tpu_custom_call.1} parent=1 // pred_fallthru
      _
    // Predicated region
    $region130: #{tpu_custom_call.1} parent=1 // pred_check
      _
    $region131: #{tpu_custom_call.1} parent=1 // pred_check_branch
      %4570 = sbr.rel (0) target = $region133
    $region132: #{tpu_custom_call.1} parent=1 // pred_region
      %4571 = dma.done [#allocation4], 1024
    $region133: #{tpu_custom_call.1} parent=1 // pred_fallthru
      _
    %4572 = vsyncpa [#allocation3], 1
    %4573 = vsyncpa [#allocation6], 1
    %4574 = vsyncpa [#allocation9], 1
    %4575 = vsyncpa [#allocation12], 1
    %4576 = vsyncpa [#allocation15], 1
    %4577 = vsyncpa [#allocation4], 1

// kernel: tpu_custom_call.1
$region0: #{tpu_custom_call.1}
  #allocation0 [shape = 'u32[]', space=smem, size = 0x4, offset = 0x4, fixed_abs, tag = 'smem constant byte address 0x4 - core index']
  #allocation1 [shape = 'u32[144,128]{1,0:T(1,128)}', space=vmem, size = 0x12000, scoped, tag = 'internal scratch']
  %s0 = inlined_call_operand.hbm [shape: f32[2,16,256], index: 0, kind: input, shape index: {}]
  %s1 = inlined_call_operand.hbm [shape: f32[2,16,256], index: 1, kind: input, shape index: {}]
  %s2 = inlined_call_operand.hbm [shape: bf16[256,768], index: 2, kind: input, shape index: {}]
  %s3 = inlined_call_operand.vmem [shape: f32[1,768], index: 3, kind: input, shape index: {}]
  %s4 = inlined_call_operand.hbm [shape: bf16[256,256], index: 4, kind: input, shape index: {}]
  %s5 = inlined_call_operand.vmem [shape: f32[1,256], index: 5, kind: input, shape index: {}]
  %s6 = inlined_call_operand.vmem [shape: f32[1,256], index: 6, kind: input, shape index: {}]
  %s7 = inlined_call_operand.vmem [shape: f32[1,256], index: 7, kind: input, shape index: {}]
  %s8 = inlined_call_operand.hbm [shape: bf16[256,512], index: 8, kind: input, shape index: {}]
  %s9 = inlined_call_operand.vmem [shape: f32[1,512], index: 9, kind: input, shape index: {}]
  %s10 = inlined_call_operand.hbm [shape: bf16[256,256], index: 10, kind: input, shape index: {}]
  %s11 = inlined_call_operand.vmem [shape: f32[1,256], index: 11, kind: input, shape index: {}]
  %s12 = inlined_call_operand.hbm [shape: bf16[256,256], index: 12, kind: input, shape index: {}]
  %s13 = inlined_call_operand.vmem [shape: f32[1,256], index: 13, kind: input, shape index: {}]
  %s14 = inlined_call_operand.vmem [shape: f32[1,256], index: 14, kind: input, shape index: {}]
  %s15 = inlined_call_operand.vmem [shape: f32[1,256], index: 15, kind: input, shape index: {}]
  %s16 = inlined_call_operand.hbm [shape: bf16[256,512], index: 16, kind: input, shape index: {}]
  %s17 = inlined_call_operand.vmem [shape: f32[1,512], index: 17, kind: input, shape index: {}]
  %s18 = inlined_call_operand.hbm [shape: bf16[512,256], index: 18, kind: input, shape index: {}]
  %s19 = inlined_call_operand.vmem [shape: f32[1,256], index: 19, kind: input, shape index: {}]
  %s20 = inlined_call_operand.vmem [shape: f32[1,256], index: 20, kind: input, shape index: {}]
  %s21 = inlined_call_operand.vmem [shape: f32[1,256], index: 21, kind: input, shape index: {}]
  %s22 = inlined_call_operand.hbm [shape: f32[2,16,256], index: 22, kind: output, shape index: {}]
  %s23 = sld [smem:[#allocation0]]
  $region134: #{tpu_custom_call.1} parent=0
    _
  %s25 = ssub.s32 1, %s23
  %s26 = scalar_select 0, %s25, %s23
  $region1: #{tpu_custom_call.1} parent=0
    #allocation2 [shape = 'u8[32768]{0}', space=vmem, size = 0x8000, scoped, tag = 'input window, operand 0, single buffered']
    #allocation3 [shape = 's32[1]{0}', space=sflag, size = 0x4, scoped, tag = 'scoped memory for tpu_custom_call.1']
    #allocation4 [shape = 's32[1]{0}', space=sflag, size = 0x4, scoped, tag = 'scoped memory for tpu_custom_call.1']
    #allocation5 [shape = 'u8[32768]{0}', space=vmem, size = 0x8000, scoped, tag = 'input window, operand 1, single buffered']
    #allocation6 [shape = 's32[1]{0}', space=sflag, size = 0x4, scoped, tag = 'scoped memory for tpu_custom_call.1']
    #allocation7 [shape = 'u8[393216]{0}', space=vmem, size = 0x60000, scoped, tag = 'input window, operand 2, single buffered']
    #allocation8 [shape = 'u8[131072]{0}', space=vmem, size = 0x20000, scoped, tag = 'input window, operand 4, single buffered']
    #allocation9 [shape = 's32[1]{0}', space=sflag, size = 0x4, scoped, tag = 'scoped memory for tpu_custom_call.1']
    #allocation10 [shape = 'u8[262144]{0}', space=vmem, size = 0x40000, scoped, tag = 'input window, operand 8, single buffered']
    #allocation11 [shape = 'u8[131072]{0}', space=vmem, size = 0x20000, scoped, tag = 'input window, operand 10, single buffered']
    #allocation12 [shape = 's32[1]{0}', space=sflag, size = 0x4, scoped, tag = 'scoped memory for tpu_custom_call.1']
    #allocation13 [shape = 'u8[131072]{0}', space=vmem, size = 0x20000, scoped, tag = 'input window, operand 12, single buffered']
    #allocation14 [shape = 'u8[262144]{0}', space=vmem, size = 0x40000, scoped, tag = 'input window, operand 16, single buffered']
    #allocation15 [shape = 's32[1]{0}', space=sflag, size = 0x4, scoped, tag = 'scoped memory for tpu_custom_call.1']
    #allocation16 [shape = 'u8[262144]{0}', space=vmem, size = 0x40000, scoped, tag = 'input window, operand 18, single buffered']
    #allocation17 [shape = 'u8[32768]{0}', space=vmem, size = 0x8000, scoped, tag = 'output window, operand 0, single buffered']
    %27 = vsyncpa [#allocation3], 0
    %28 = vsyncpa [#allocation6], 0
    %29 = vsyncpa [#allocation9], 0
    %30 = vsyncpa [#allocation12], 0
    %31 = vsyncpa [#allocation15], 0
    %32 = vsyncpa [#allocation4], 0
    // Predicated region
    $region2: #{tpu_custom_call.1} parent=1 // pred_check
      _
    $region3: #{tpu_custom_call.1} parent=1 // pred_check_branch
      %34 = sbr.rel (0) target = $region5
    $region4: #{tpu_custom_call.1} parent=1 // pred_region
      %s36 = ssub.s32 1024, 1024
      %37 = vsyncadd [#allocation3], %s36
      %s38 = sshll.u32 [#allocation2], 4
      %s39 = int_to_ptr.vmem [resolvable:$true] %s38
      %44 = dma.hbm_to_vmem [thread:$0]  %s0, 1024, %s39, [#allocation3], 256, 256, 16
    $region5: #{tpu_custom_call.1} parent=1 // pred_fallthru
      _
    // Predicated region
    $region6: #{tpu_custom_call.1} parent=1 // pred_check
      _
    $region7: #{tpu_custom_call.1} parent=1 // pred_check_branch
      %46 = sbr.rel (0) target = $region9
    $region8: #{tpu_custom_call.1} parent=1 // pred_region
      %s48 = ssub.s32 1024, 1024
      %49 = vsyncadd [#allocation6], %s48
      %s50 = sshll.u32 [#allocation5], 4
      %s51 = int_to_ptr.vmem [resolvable:$true] %s50
      %56 = dma.hbm_to_vmem [thread:$0]  %s1, 1024, %s51, [#allocation6], 256, 256, 16
    $region9: #{tpu_custom_call.1} parent=1 // pred_fallthru
      _
    // Predicated region
    $region10: #{tpu_custom_call.1} parent=1 // pred_check
      _
    $region11: #{tpu_custom_call.1} parent=1 // pred_check_branch
      %58 = sbr.rel (0) target = $region13
    $region12: #{tpu_custom_call.1} parent=1 // pred_region
      %s60 = ssub.s32 12288, 12288
      %61 = vsyncadd [#allocation6], %s60
      %s62 = sshll.u32 [#allocation7], 4
      %s63 = int_to_ptr.vmem [resolvable:$true] %s62
      %68 = dma.hbm_to_vmem [thread:$0]  %s2, 12288, %s63, [#allocation6], 384, 384, 24
    $region13: #{tpu_custom_call.1} parent=1 // pred_fallthru
      _
    // Predicated region
    $region14: #{tpu_custom_call.1} parent=1 // pred_check
      _
    $region15: #{tpu_custom_call.1} parent=1 // pred_check_branch
      %70 = sbr.rel (0) target = $region17
    $region16: #{tpu_custom_call.1} parent=1 // pred_region
      _
    $region17: #{tpu_custom_call.1} parent=1 // pred_fallthru
      _
    // Predicated region
    $region18: #{tpu_custom_call.1} parent=1 // pred_check
      _
    $region19: #{tpu_custom_call.1} parent=1 // pred_check_branch
      %72 = sbr.rel (0) target = $region21
    $region20: #{tpu_custom_call.1} parent=1 // pred_region
      %s74 = ssub.s32 4096, 4096
      %75 = vsyncadd [#allocation9], %s74
      %s76 = sshll.u32 [#allocation8], 4
      %s77 = int_to_ptr.vmem [resolvable:$true] %s76
      %82 = dma.hbm_to_vmem [thread:$0]  %s4, 4096, %s77, [#allocation9], 128, 128, 8
    $region21: #{tpu_custom_call.1} parent=1 // pred_fallthru
      _
    // Predicated region
    $region22: #{tpu_custom_call.1} parent=1 // pred_check
      _
    $region23: #{tpu_custom_call.1} parent=1 // pred_check_branch
      %84 = sbr.rel (0) target = $region25
    $region24: #{tpu_custom_call.1} parent=1 // pred_region
      _
    $region25: #{tpu_custom_call.1} parent=1 // pred_fallthru
      _
    // Predicated region
    $region26: #{tpu_custom_call.1} parent=1 // pred_check
      _
    $region27: #{tpu_custom_call.1} parent=1 // pred_check_branch
      %86 = sbr.rel (0) target = $region29
    $region28: #{tpu_custom_call.1} parent=1 // pred_region
      _
    $region29: #{tpu_custom_call.1} parent=1 // pred_fallthru
      _
    // Predicated region
    $region30: #{tpu_custom_call.1} parent=1 // pred_check
      _
    $region31: #{tpu_custom_call.1} parent=1 // pred_check_branch
      %88 = sbr.rel (0) target = $region33
    $region32: #{tpu_custom_call.1} parent=1 // pred_region
      _
    $region33: #{tpu_custom_call.1} parent=1 // pred_fallthru
      _
    // Predicated region
    $region34: #{tpu_custom_call.1} parent=1 // pred_check
      _
    $region35: #{tpu_custom_call.1} parent=1 // pred_check_branch
      %90 = sbr.rel (0) target = $region37
    $region36: #{tpu_custom_call.1} parent=1 // pred_region
      %s92 = ssub.s32 8192, 8192
      %93 = vsyncadd [#allocation9], %s92
      %s94 = sshll.u32 [#allocation10], 4
      %s95 = int_to_ptr.vmem [resolvable:$true] %s94
      %100 = dma.hbm_to_vmem [thread:$0]  %s8, 8192, %s95, [#allocation9], 256, 256, 16
    $region37: #{tpu_custom_call.1} parent=1 // pred_fallthru
      _
    // Predicated region
    $region38: #{tpu_custom_call.1} parent=1 // pred_check
      _
    $region39: #{tpu_custom_call.1} parent=1 // pred_check_branch
      %102 = sbr.rel (0) target = $region41
    $region40: #{tpu_custom_call.1} parent=1 // pred_region
      _
    $region41: #{tpu_custom_call.1} parent=1 // pred_fallthru
      _
    // Predicated region
    $region42: #{tpu_custom_call.1} parent=1 // pred_check
      _
    $region43: #{tpu_custom_call.1} parent=1 // pred_check_branch
      %104 = sbr.rel (0) target = $region45
    $region44: #{tpu_custom_call.1} parent=1 // pred_region
      %s106 = ssub.s32 4096, 4096
      %107 = vsyncadd [#allocation12], %s106
      %s108 = sshll.u32 [#allocation11], 4
      %s109 = int_to_ptr.vmem [resolvable:$true] %s108
      %114 = dma.hbm_to_vmem [thread:$0]  %s10, 4096, %s109, [#allocation12], 128, 128, 8
    $region45: #{tpu_custom_call.1} parent=1 // pred_fallthru
      _
    // Predicated region
    $region46: #{tpu_custom_call.1} parent=1 // pred_check
      _
    $region47: #{tpu_custom_call.1} parent=1 // pred_check_branch
      %116 = sbr.rel (0) target = $region49
    $region48: #{tpu_custom_call.1} parent=1 // pred_region
      _
    $region49: #{tpu_custom_call.1} parent=1 // pred_fallthru
      _
    // Predicated region
    $region50: #{tpu_custom_call.1} parent=1 // pred_check
      _
    $region51: #{tpu_custom_call.1} parent=1 // pred_check_branch
      %118 = sbr.rel (0) target = $region53
    $region52: #{tpu_custom_call.1} parent=1 // pred_region
      %s120 = ssub.s32 4096, 4096
      %121 = vsyncadd [#allocation12], %s120
      %s122 = sshll.u32 [#allocation13], 4
      %s123 = int_to_ptr.vmem [resolvable:$true] %s122
      %128 = dma.hbm_to_vmem [thread:$0]  %s12, 4096, %s123, [#allocation12], 128, 128, 8
    $region53: #{tpu_custom_call.1} parent=1 // pred_fallthru
      _
    // Predicated region
    $region54: #{tpu_custom_call.1} parent=1 // pred_check
      _
    $region55: #{tpu_custom_call.1} parent=1 // pred_check_branch
      %130 = sbr.rel (0) target = $region57
    $region56: #{tpu_custom_call.1} parent=1 // pred_region
      _
    $region57: #{tpu_custom_call.1} parent=1 // pred_fallthru
      _
    // Predicated region
    $region58: #{tpu_custom_call.1} parent=1 // pred_check
      _
    $region59: #{tpu_custom_call.1} parent=1 // pred_check_branch
      %132 = sbr.rel (0) target = $region61
    $region60: #{tpu_custom_call.1} parent=1 // pred_region
      _
    $region61: #{tpu_custom_call.1} parent=1 // pred_fallthru
      _
    // Predicated region
    $region62: #{tpu_custom_call.1} parent=1 // pred_check
      _
    $region63: #{tpu_custom_call.1} parent=1 // pred_check_branch
      %134 = sbr.rel (0) target = $region65
    $region64: #{tpu_custom_call.1} parent=1 // pred_region
      _
    $region65: #{tpu_custom_call.1} parent=1 // pred_fallthru
      _
    // Predicated region
    $region66: #{tpu_custom_call.1} parent=1 // pred_check
      _
    $region67: #{tpu_custom_call.1} parent=1 // pred_check_branch
      %136 = sbr.rel (0) target = $region69
    $region68: #{tpu_custom_call.1} parent=1 // pred_region
      %s138 = ssub.s32 8192, 8192
      %139 = vsyncadd [#allocation15], %s138
      %s140 = sshll.u32 [#allocation14], 4
      %s141 = int_to_ptr.vmem [resolvable:$true] %s140
      %146 = dma.hbm_to_vmem [thread:$0]  %s16, 8192, %s141, [#allocation15], 256, 256, 16
    $region69: #{tpu_custom_call.1} parent=1 // pred_fallthru
      _
    // Predicated region
    $region70: #{tpu_custom_call.1} parent=1 // pred_check
      _
    $region71: #{tpu_custom_call.1} parent=1 // pred_check_branch
      %148 = sbr.rel (0) target = $region73
    $region72: #{tpu_custom_call.1} parent=1 // pred_region
      _
    $region73: #{tpu_custom_call.1} parent=1 // pred_fallthru
      _
    // Predicated region
    $region74: #{tpu_custom_call.1} parent=1 // pred_check
      _
    $region75: #{tpu_custom_call.1} parent=1 // pred_check_branch
      %150 = sbr.rel (0) target = $region77
    $region76: #{tpu_custom_call.1} parent=1 // pred_region
      %s152 = ssub.s32 8192, 8192
      %153 = vsyncadd [#allocation15], %s152
      %s154 = sshll.u32 [#allocation16], 4
      %s155 = int_to_ptr.vmem [resolvable:$true] %s154
      %160 = dma.hbm_to_vmem [thread:$0]  %s18, 8192, %s155, [#allocation15], 128, 128, 8
    $region77: #{tpu_custom_call.1} parent=1 // pred_fallthru
      _
    // Predicated region
    $region78: #{tpu_custom_call.1} parent=1 // pred_check
      _
    $region79: #{tpu_custom_call.1} parent=1 // pred_check_branch
      %162 = sbr.rel (0) target = $region81
    $region80: #{tpu_custom_call.1} parent=1 // pred_region
      _
    $region81: #{tpu_custom_call.1} parent=1 // pred_fallthru
      _
    // Predicated region
    $region82: #{tpu_custom_call.1} parent=1 // pred_check
      _
    $region83: #{tpu_custom_call.1} parent=1 // pred_check_branch
      %164 = sbr.rel (0) target = $region85
    $region84: #{tpu_custom_call.1} parent=1 // pred_region
      _
    $region85: #{tpu_custom_call.1} parent=1 // pred_fallthru
      _
    // Predicated region
    $region86: #{tpu_custom_call.1} parent=1 // pred_check
      _
    $region87: #{tpu_custom_call.1} parent=1 // pred_check_branch
      %166 = sbr.rel (0) target = $region89
    $region88: #{tpu_custom_call.1} parent=1 // pred_region
      _
    $region89: #{tpu_custom_call.1} parent=1 // pred_fallthru
      _
    // Predicated region
    $region90: #{tpu_custom_call.1} parent=1 // pred_check
      _
    $region91: #{tpu_custom_call.1} parent=1 // pred_check_branch
      %168 = sbr.rel (0) target = $region93
    $region92: #{tpu_custom_call.1} parent=1 // pred_region
      %169 = dma.done [#allocation3], 1024
    $region93: #{tpu_custom_call.1} parent=1 // pred_fallthru
      _
    // Predicated region
    $region94: #{tpu_custom_call.1} parent=1 // pred_check
      _
    $region95: #{tpu_custom_call.1} parent=1 // pred_check_branch
      %171 = sbr.rel (0) target = $region97
    $region96: #{tpu_custom_call.1} parent=1 // pred_region
      %172 = dma.done [#allocation6], 1024
    $region97: #{tpu_custom_call.1} parent=1 // pred_fallthru
      _
    // Predicated region
    $region98: #{tpu_custom_call.1} parent=1 // pred_check
      _
    $region99: #{tpu_custom_call.1} parent=1 // pred_check_branch
      %174 = sbr.rel (0) target = $region101
    $region100: #{tpu_custom_call.1} parent=1 // pred_region
      %175 = dma.done [#allocation6], 12288
    $region101: #{tpu_custom_call.1} parent=1 // pred_fallthru
      _
    // Predicated region
    $region102: #{tpu_custom_call.1} parent=1 // pred_check
      _
    $region103: #{tpu_custom_call.1} parent=1 // pred_check_branch
      %177 = sbr.rel (0) target = $region105
    $region104: #{tpu_custom_call.1} parent=1 // pred_region
      %178 = dma.done [#allocation9], 4096
    $region105: #{tpu_custom_call.1} parent=1 // pred_fallthru
      _
    // Predicated region
    $region106: #{tpu_custom_call.1} parent=1 // pred_check
      _
    $region107: #{tpu_custom_call.1} parent=1 // pred_check_branch
      %180 = sbr.rel (0) target = $region109
    $region108: #{tpu_custom_call.1} parent=1 // pred_region
      %181 = dma.done [#allocation9], 8192
    $region109: #{tpu_custom_call.1} parent=1 // pred_fallthru
      _
    // Predicated region
    $region110: #{tpu_custom_call.1} parent=1 // pred_check
      _
    $region111: #{tpu_custom_call.1} parent=1 // pred_check_branch
      %183 = sbr.rel (0) target = $region113
    $region112: #{tpu_custom_call.1} parent=1 // pred_region
      %184 = dma.done [#allocation12], 4096
    $region113: #{tpu_custom_call.1} parent=1 // pred_fallthru
      _
    // Predicated region
    $region114: #{tpu_custom_call.1} parent=1 // pred_check
      _
    $region115: #{tpu_custom_call.1} parent=1 // pred_check_branch
      %186 = sbr.rel (0) target = $region117
    $region116: #{tpu_custom_call.1} parent=1 // pred_region
      %187 = dma.done [#allocation12], 4096
    $region117: #{tpu_custom_call.1} parent=1 // pred_fallthru
      _
    // Predicated region
    $region118: #{tpu_custom_call.1} parent=1 // pred_check
      _
    $region119: #{tpu_custom_call.1} parent=1 // pred_check_branch
      %189 = sbr.rel (0) target = $region121
    $region120: #{tpu_custom_call.1} parent=1 // pred_region
      %190 = dma.done [#allocation15], 8192
    $region121: #{tpu_custom_call.1} parent=1 // pred_fallthru
      _
    // Predicated region
    $region122: #{tpu_custom_call.1} parent=1 // pred_check
      _
    $region123: #{tpu_custom_call.1} parent=1 // pred_check_branch
      %192 = sbr.rel (0) target = $region125
    $region124: #{tpu_custom_call.1} parent=1 // pred_region
      %193 = dma.done [#allocation15], 8192
    $region125: #{tpu_custom_call.1} parent=1 // pred_fallthru
      _
    %v195 = vld [vmem:[#allocation2] sm:$0xff]
    %v196 = vld [vmem:[#allocation2 + $0x8] sm:$0xff]
    %v197 = vld [vmem:[#allocation2 + $0x10] sm:$0xff]
    %v198 = vld [vmem:[#allocation2 + $0x18] sm:$0xff]
    %v199 = vld [vmem:[#allocation2 + $0x20] sm:$0xff]
    %v200 = vld [vmem:[#allocation2 + $0x28] sm:$0xff]
    %v201 = vld [vmem:[#allocation2 + $0x30] sm:$0xff]
    %v202 = vld [vmem:[#allocation2 + $0x38] sm:$0xff]
    %v203 = vld [vmem:[#allocation5] sm:$0xff]
    %v204 = vld [vmem:[#allocation5 + $0x8] sm:$0xff]
    %v205 = vld [vmem:[#allocation5 + $0x10] sm:$0xff]
    %v206 = vld [vmem:[#allocation5 + $0x18] sm:$0xff]
    %v207 = vld [vmem:[#allocation5 + $0x20] sm:$0xff]
    %v208 = vld [vmem:[#allocation5 + $0x28] sm:$0xff]
    %v209 = vld [vmem:[#allocation5 + $0x30] sm:$0xff]
    %v210 = vld [vmem:[#allocation5 + $0x38] sm:$0xff]
    %v211 = vpack.c.bf16 %v197, %v195
    %v212 = vpack.c.bf16 %v198, %v196
    %v213 = vpack.c.bf16 %v201, %v199
    %v214 = vpack.c.bf16 %v202, %v200
    %v215 = vld [vmem:[#allocation7] sm:$0xff]
    %v216 = vld [vmem:[#allocation7 + $0x8] sm:$0xff]
    %v217 = vld [vmem:[#allocation7 + $0x10] sm:$0xff]
    %v218 = vld [vmem:[#allocation7 + $0x18] sm:$0xff]
    %v219 = vld [vmem:[#allocation7 + $0x20] sm:$0xff]
    %v220 = vld [vmem:[#allocation7 + $0x28] sm:$0xff]
    %v221 = vld [vmem:[#allocation7 + $0x30] sm:$0xff]
    %v222 = vld [vmem:[#allocation7 + $0x38] sm:$0xff]
    %v223 = vld [vmem:[#allocation7 + $0x40] sm:$0xff]
    %v224 = vld [vmem:[#allocation7 + $0x48] sm:$0xff]
    %v225 = vld [vmem:[#allocation7 + $0x50] sm:$0xff]
    %v226 = vld [vmem:[#allocation7 + $0x58] sm:$0xff]
    %v227 = vld [vmem:[#allocation7 + $0x60] sm:$0xff]
    %v228 = vld [vmem:[#allocation7 + $0x68] sm:$0xff]
    %v229 = vld [vmem:[#allocation7 + $0x70] sm:$0xff]
    %v230 = vld [vmem:[#allocation7 + $0x78] sm:$0xff]
    %v231 = vld [vmem:[#allocation7 + $0x80] sm:$0xff]
    %v232 = vld [vmem:[#allocation7 + $0x88] sm:$0xff]
    %v233 = vld [vmem:[#allocation7 + $0x90] sm:$0xff]
    %v234 = vld [vmem:[#allocation7 + $0x98] sm:$0xff]
    %v235 = vld [vmem:[#allocation7 + $0xa0] sm:$0xff]
    %v236 = vld [vmem:[#allocation7 + $0xa8] sm:$0xff]
    %v237 = vld [vmem:[#allocation7 + $0xb0] sm:$0xff]
    %v238 = vld [vmem:[#allocation7 + $0xb8] sm:$0xff]
    %v239 = vld [vmem:[#allocation7 + $0xc0] sm:$0xff]
    %v240 = vld [vmem:[#allocation7 + $0xc8] sm:$0xff]
    %v241 = vld [vmem:[#allocation7 + $0xd0] sm:$0xff]
    %v242 = vld [vmem:[#allocation7 + $0xd8] sm:$0xff]
    %v243 = vld [vmem:[#allocation7 + $0xe0] sm:$0xff]
    %v244 = vld [vmem:[#allocation7 + $0xe8] sm:$0xff]
    %v245 = vld [vmem:[#allocation7 + $0xf0] sm:$0xff]
    %v246 = vld [vmem:[#allocation7 + $0xf8] sm:$0xff]
    %v247 = vld [vmem:[#allocation7 + $0x100] sm:$0xff]
    %v248 = vld [vmem:[#allocation7 + $0x108] sm:$0xff]
    %v249 = vld [vmem:[#allocation7 + $0x110] sm:$0xff]
    %v250 = vld [vmem:[#allocation7 + $0x118] sm:$0xff]
    %v251 = vld [vmem:[#allocation7 + $0x120] sm:$0xff]
    %v252 = vld [vmem:[#allocation7 + $0x128] sm:$0xff]
    %v253 = vld [vmem:[#allocation7 + $0x130] sm:$0xff]
    %v254 = vld [vmem:[#allocation7 + $0x138] sm:$0xff]
    %v255 = vld [vmem:[#allocation7 + $0x140] sm:$0xff]
    %v256 = vld [vmem:[#allocation7 + $0x148] sm:$0xff]
    %v257 = vld [vmem:[#allocation7 + $0x150] sm:$0xff]
    %v258 = vld [vmem:[#allocation7 + $0x158] sm:$0xff]
    %v259 = vld [vmem:[#allocation7 + $0x160] sm:$0xff]
    %v260 = vld [vmem:[#allocation7 + $0x168] sm:$0xff]
    %v261 = vld [vmem:[#allocation7 + $0x170] sm:$0xff]
    %v262 = vld [vmem:[#allocation7 + $0x178] sm:$0xff]
    %v263 = vld [vmem:[#allocation7 + $0x180] sm:$0xff]
    %v264 = vld [vmem:[#allocation7 + $0x188] sm:$0xff]
    %v265 = vld [vmem:[#allocation7 + $0x190] sm:$0xff]
    %v266 = vld [vmem:[#allocation7 + $0x198] sm:$0xff]
    %v267 = vld [vmem:[#allocation7 + $0x1a0] sm:$0xff]
    %v268 = vld [vmem:[#allocation7 + $0x1a8] sm:$0xff]
    %v269 = vld [vmem:[#allocation7 + $0x1b0] sm:$0xff]
    %v270 = vld [vmem:[#allocation7 + $0x1b8] sm:$0xff]
    %v271 = vld [vmem:[#allocation7 + $0x1c0] sm:$0xff]
    %v272 = vld [vmem:[#allocation7 + $0x1c8] sm:$0xff]
    %v273 = vld [vmem:[#allocation7 + $0x1d0] sm:$0xff]
    %v274 = vld [vmem:[#allocation7 + $0x1d8] sm:$0xff]
    %v275 = vld [vmem:[#allocation7 + $0x1e0] sm:$0xff]
    %v276 = vld [vmem:[#allocation7 + $0x1e8] sm:$0xff]
    %v277 = vld [vmem:[#allocation7 + $0x1f0] sm:$0xff]
    %v278 = vld [vmem:[#allocation7 + $0x1f8] sm:$0xff]
    %v279 = vld [vmem:[#allocation7 + $0x200] sm:$0xff]
    %v280 = vld [vmem:[#allocation7 + $0x208] sm:$0xff]
    %v281 = vld [vmem:[#allocation7 + $0x210] sm:$0xff]
    %v282 = vld [vmem:[#allocation7 + $0x218] sm:$0xff]
    %v283 = vld [vmem:[#allocation7 + $0x220] sm:$0xff]
    %v284 = vld [vmem:[#allocation7 + $0x228] sm:$0xff]
    %v285 = vld [vmem:[#allocation7 + $0x230] sm:$0xff]
    %v286 = vld [vmem:[#allocation7 + $0x238] sm:$0xff]
    %v287 = vld [vmem:[#allocation7 + $0x240] sm:$0xff]
    %v288 = vld [vmem:[#allocation7 + $0x248] sm:$0xff]
    %v289 = vld [vmem:[#allocation7 + $0x250] sm:$0xff]
    %v290 = vld [vmem:[#allocation7 + $0x258] sm:$0xff]
    %v291 = vld [vmem:[#allocation7 + $0x260] sm:$0xff]
    %v292 = vld [vmem:[#allocation7 + $0x268] sm:$0xff]
    %v293 = vld [vmem:[#allocation7 + $0x270] sm:$0xff]
    %v294 = vld [vmem:[#allocation7 + $0x278] sm:$0xff]
    %v295 = vld [vmem:[#allocation7 + $0x280] sm:$0xff]
    %v296 = vld [vmem:[#allocation7 + $0x288] sm:$0xff]
    %v297 = vld [vmem:[#allocation7 + $0x290] sm:$0xff]
    %v298 = vld [vmem:[#allocation7 + $0x298] sm:$0xff]
    %v299 = vld [vmem:[#allocation7 + $0x2a0] sm:$0xff]
    %v300 = vld [vmem:[#allocation7 + $0x2a8] sm:$0xff]
    %v301 = vld [vmem:[#allocation7 + $0x2b0] sm:$0xff]
    %v302 = vld [vmem:[#allocation7 + $0x2b8] sm:$0xff]
    %v303 = vld [vmem:[#allocation7 + $0x2c0] sm:$0xff]
    %v304 = vld [vmem:[#allocation7 + $0x2c8] sm:$0xff]
    %v305 = vld [vmem:[#allocation7 + $0x2d0] sm:$0xff]
    %v306 = vld [vmem:[#allocation7 + $0x2d8] sm:$0xff]
    %v307 = vld [vmem:[#allocation7 + $0x2e0] sm:$0xff]
    %v308 = vld [vmem:[#allocation7 + $0x2e8] sm:$0xff]
    %v309 = vld [vmem:[#allocation7 + $0x2f0] sm:$0xff]
    %v310 = vld [vmem:[#allocation7 + $0x2f8] sm:$0xff]
    %v311 = vld [vmem:[%s3] sm:$0x3f]
    %v313 = vlaneseq
    %v314 = vshrl.u32 %v313, 7
    %v315 = vsub.s32 0, %v314
    %v316 = vrot.slane %v311, %v315
    %v317 = vlaneseq
    %v318 = vshrl.u32 %v317, 7
    %v319 = vsub.s32 1, %v318
    %v320 = vrot.slane %v311, %v319
    %v321 = vlaneseq
    %v322 = vshrl.u32 %v321, 7
    %v323 = vsub.s32 2, %v322
    %v324 = vrot.slane %v311, %v323
    %v325 = vlaneseq
    %v326 = vshrl.u32 %v325, 7
    %v327 = vsub.s32 3, %v326
    %v328 = vrot.slane %v311, %v327
    %v329 = vlaneseq
    %v330 = vshrl.u32 %v329, 7
    %v331 = vsub.s32 4, %v330
    %v332 = vrot.slane %v311, %v331
    %v333 = vlaneseq
    %v334 = vshrl.u32 %v333, 7
    %v335 = vsub.s32 5, %v334
    %v336 = vrot.slane %v311, %v335
    %v439 = vunpack.c.l.b16 %v215
    %v440 = vunpack.c.h.b16 %v215
    %v441 = vunpack.c.l.b16 %v216
    %v442 = vunpack.c.h.b16 %v216
    %v443 = vunpack.c.l.b16 %v217
    %v444 = vunpack.c.h.b16 %v217
    %v445 = vunpack.c.l.b16 %v218
    %v446 = vunpack.c.h.b16 %v218
    %v447 = vunpack.c.l.b16 %v219
    %v448 = vunpack.c.h.b16 %v219
    %v449 = vunpack.c.l.b16 %v220
    %v450 = vunpack.c.h.b16 %v220
    %v451 = vunpack.c.l.b16 %v221
    %v452 = vunpack.c.h.b16 %v221
    %v453 = vunpack.c.l.b16 %v222
    %v454 = vunpack.c.h.b16 %v222
    %v455 = vunpack.c.l.b16 %v223
    %v456 = vunpack.c.h.b16 %v223
    %v457 = vunpack.c.l.b16 %v224
    %v458 = vunpack.c.h.b16 %v224
    %v459 = vunpack.c.l.b16 %v225
    %v460 = vunpack.c.h.b16 %v225
    %v461 = vunpack.c.l.b16 %v226
    %v462 = vunpack.c.h.b16 %v226
    %v463 = vunpack.c.l.b16 %v227
    %v464 = vunpack.c.h.b16 %v227
    %v465 = vunpack.c.l.b16 %v228
    %v466 = vunpack.c.h.b16 %v228
    %v467 = vunpack.c.l.b16 %v229
    %v468 = vunpack.c.h.b16 %v229
    %v469 = vunpack.c.l.b16 %v230
    %v470 = vunpack.c.h.b16 %v230
    %v471 = vunpack.c.l.b16 %v231
    %v472 = vunpack.c.h.b16 %v231
    %v473 = vunpack.c.l.b16 %v232
    %v474 = vunpack.c.h.b16 %v232
    %v475 = vunpack.c.l.b16 %v233
    %v476 = vunpack.c.h.b16 %v233
    %v477 = vunpack.c.l.b16 %v234
    %v478 = vunpack.c.h.b16 %v234
    %v479 = vunpack.c.l.b16 %v235
    %v480 = vunpack.c.h.b16 %v235
    %v481 = vunpack.c.l.b16 %v236
    %v482 = vunpack.c.h.b16 %v236
    %v483 = vunpack.c.l.b16 %v237
    %v484 = vunpack.c.h.b16 %v237
    %v485 = vunpack.c.l.b16 %v238
    %v486 = vunpack.c.h.b16 %v238
    %v487 = vunpack.c.l.b16 %v239
    %v488 = vunpack.c.h.b16 %v239
    %v489 = vunpack.c.l.b16 %v240
    %v490 = vunpack.c.h.b16 %v240
    %v491 = vunpack.c.l.b16 %v241
    %v492 = vunpack.c.h.b16 %v241
    %v493 = vunpack.c.l.b16 %v242
    %v494 = vunpack.c.h.b16 %v242
    %v495 = vunpack.c.l.b16 %v243
    %v496 = vunpack.c.h.b16 %v243
    %v497 = vunpack.c.l.b16 %v244
    %v498 = vunpack.c.h.b16 %v244
    %v499 = vunpack.c.l.b16 %v245
    %v500 = vunpack.c.h.b16 %v245
    %v501 = vunpack.c.l.b16 %v246
    %v502 = vunpack.c.h.b16 %v246
    %v503 = vunpack.c.l.b16 %v247
    %v504 = vunpack.c.h.b16 %v247
    %v505 = vunpack.c.l.b16 %v248
    %v506 = vunpack.c.h.b16 %v248
    %v507 = vunpack.c.l.b16 %v249
    %v508 = vunpack.c.h.b16 %v249
    %v509 = vunpack.c.l.b16 %v250
    %v510 = vunpack.c.h.b16 %v250
    %v511 = vunpack.c.l.b16 %v251
    %v512 = vunpack.c.h.b16 %v251
    %v513 = vunpack.c.l.b16 %v252
    %v514 = vunpack.c.h.b16 %v252
    %v515 = vunpack.c.l.b16 %v253
    %v516 = vunpack.c.h.b16 %v253
    %v517 = vunpack.c.l.b16 %v254
    %v518 = vunpack.c.h.b16 %v254
    %v519 = vunpack.c.l.b16 %v255
    %v520 = vunpack.c.h.b16 %v255
    %v521 = vunpack.c.l.b16 %v256
    %v522 = vunpack.c.h.b16 %v256
    %v523 = vunpack.c.l.b16 %v257
    %v524 = vunpack.c.h.b16 %v257
    %v525 = vunpack.c.l.b16 %v258
    %v526 = vunpack.c.h.b16 %v258
    %v527 = vunpack.c.l.b16 %v259
    %v528 = vunpack.c.h.b16 %v259
    %v529 = vunpack.c.l.b16 %v260
    %v530 = vunpack.c.h.b16 %v260
    %v531 = vunpack.c.l.b16 %v261
    %v532 = vunpack.c.h.b16 %v261
    %v533 = vunpack.c.l.b16 %v262
    %v534 = vunpack.c.h.b16 %v262
    %v535 = vunpack.c.l.b16 %v263
    %v536 = vunpack.c.h.b16 %v263
    %v537 = vunpack.c.l.b16 %v264
    %v538 = vunpack.c.h.b16 %v264
    %v539 = vunpack.c.l.b16 %v265
    %v540 = vunpack.c.h.b16 %v265
    %v541 = vunpack.c.l.b16 %v266
    %v542 = vunpack.c.h.b16 %v266
    %v543 = vunpack.c.l.b16 %v267
    %v544 = vunpack.c.h.b16 %v267
    %v545 = vunpack.c.l.b16 %v268
    %v546 = vunpack.c.h.b16 %v268
    %v547 = vunpack.c.l.b16 %v269
    %v548 = vunpack.c.h.b16 %v269
    %v549 = vunpack.c.l.b16 %v270
    %v550 = vunpack.c.h.b16 %v270
    %v551 = vunpack.c.l.b16 %v271
    %v552 = vunpack.c.h.b16 %v271
    %v553 = vunpack.c.l.b16 %v272
    %v554 = vunpack.c.h.b16 %v272
    %v555 = vunpack.c.l.b16 %v273
    %v556 = vunpack.c.h.b16 %v273
    %v557 = vunpack.c.l.b16 %v274
    %v558 = vunpack.c.h.b16 %v274
    %v559 = vunpack.c.l.b16 %v275
    %v560 = vunpack.c.h.b16 %v275
    %v561 = vunpack.c.l.b16 %v276
    %v562 = vunpack.c.h.b16 %v276
    %v563 = vunpack.c.l.b16 %v277
    %v564 = vunpack.c.h.b16 %v277
    %v565 = vunpack.c.l.b16 %v278
    %v566 = vunpack.c.h.b16 %v278
    %v567 = vunpack.c.l.b16 %v279
    %v568 = vunpack.c.h.b16 %v279
    %v569 = vunpack.c.l.b16 %v280
    %v570 = vunpack.c.h.b16 %v280
    %v571 = vunpack.c.l.b16 %v281
    %v572 = vunpack.c.h.b16 %v281
    %v573 = vunpack.c.l.b16 %v282
    %v574 = vunpack.c.h.b16 %v282
    %v575 = vunpack.c.l.b16 %v283
    %v576 = vunpack.c.h.b16 %v283
    %v577 = vunpack.c.l.b16 %v284
    %v578 = vunpack.c.h.b16 %v284
    %v579 = vunpack.c.l.b16 %v285
    %v580 = vunpack.c.h.b16 %v285
    %v581 = vunpack.c.l.b16 %v286
    %v582 = vunpack.c.h.b16 %v286
    %v583 = vunpack.c.l.b16 %v287
    %v584 = vunpack.c.h.b16 %v287
    %v585 = vunpack.c.l.b16 %v288
    %v586 = vunpack.c.h.b16 %v288
    %v587 = vunpack.c.l.b16 %v289
    %v588 = vunpack.c.h.b16 %v289
    %v589 = vunpack.c.l.b16 %v290
    %v590 = vunpack.c.h.b16 %v290
    %v591 = vunpack.c.l.b16 %v291
    %v592 = vunpack.c.h.b16 %v291
    %v593 = vunpack.c.l.b16 %v292
    %v594 = vunpack.c.h.b16 %v292
    %v595 = vunpack.c.l.b16 %v293
    %v596 = vunpack.c.h.b16 %v293
    %v597 = vunpack.c.l.b16 %v294
    %v598 = vunpack.c.h.b16 %v294
    %v599 = vunpack.c.l.b16 %v295
    %v600 = vunpack.c.h.b16 %v295
    %v601 = vunpack.c.l.b16 %v296
    %v602 = vunpack.c.h.b16 %v296
    %v603 = vunpack.c.l.b16 %v297
    %v604 = vunpack.c.h.b16 %v297
    %v605 = vunpack.c.l.b16 %v298
    %v606 = vunpack.c.h.b16 %v298
    %v607 = vunpack.c.l.b16 %v299
    %v608 = vunpack.c.h.b16 %v299
    %v609 = vunpack.c.l.b16 %v300
    %v610 = vunpack.c.h.b16 %v300
    %v611 = vunpack.c.l.b16 %v301
    %v612 = vunpack.c.h.b16 %v301
    %v613 = vunpack.c.l.b16 %v302
    %v614 = vunpack.c.h.b16 %v302
    %v615 = vunpack.c.l.b16 %v303
    %v616 = vunpack.c.h.b16 %v303
    %v617 = vunpack.c.l.b16 %v304
    %v618 = vunpack.c.h.b16 %v304
    %v619 = vunpack.c.l.b16 %v305
    %v620 = vunpack.c.h.b16 %v305
    %v621 = vunpack.c.l.b16 %v306
    %v622 = vunpack.c.h.b16 %v306
    %v623 = vunpack.c.l.b16 %v307
    %v624 = vunpack.c.h.b16 %v307
    %v625 = vunpack.c.l.b16 %v308
    %v626 = vunpack.c.h.b16 %v308
    %v627 = vunpack.c.l.b16 %v309
    %v628 = vunpack.c.h.b16 %v309
    %v629 = vunpack.c.l.b16 %v310
    %v630 = vunpack.c.h.b16 %v310
    %v631 = vpack.c.b16 %v445, %v439
    %v632 = vpack.c.b16 %v446, %v440
    %v633 = vpack.c.b16 %v447, %v441
    %v634 = vpack.c.b16 %v448, %v442
    %v635 = vpack.c.b16 %v449, %v443
    %v636 = vpack.c.b16 %v450, %v444
    %v637 = vpack.c.b16 %v457, %v451
    %v638 = vpack.c.b16 %v458, %v452
    %v639 = vpack.c.b16 %v459, %v453
    %v640 = vpack.c.b16 %v460, %v454
    %v641 = vpack.c.b16 %v461, %v455
    %v642 = vpack.c.b16 %v462, %v456
    %v643 = vpack.c.b16 %v469, %v463
    %v644 = vpack.c.b16 %v470, %v464
    %v645 = vpack.c.b16 %v471, %v465
    %v646 = vpack.c.b16 %v472, %v466
    %v647 = vpack.c.b16 %v473, %v467
    %v648 = vpack.c.b16 %v474, %v468
    %v649 = vpack.c.b16 %v481, %v475
    %v650 = vpack.c.b16 %v482, %v476
    %v651 = vpack.c.b16 %v483, %v477
    %v652 = vpack.c.b16 %v484, %v478
    %v653 = vpack.c.b16 %v485, %v479
    %v654 = vpack.c.b16 %v486, %v480
    %v655 = vpack.c.b16 %v493, %v487
    %v656 = vpack.c.b16 %v494, %v488
    %v657 = vpack.c.b16 %v495, %v489
    %v658 = vpack.c.b16 %v496, %v490
    %v659 = vpack.c.b16 %v497, %v491
    %v660 = vpack.c.b16 %v498, %v492
    %v661 = vpack.c.b16 %v505, %v499
    %v662 = vpack.c.b16 %v506, %v500
    %v663 = vpack.c.b16 %v507, %v501
    %v664 = vpack.c.b16 %v508, %v502
    %v665 = vpack.c.b16 %v509, %v503
    %v666 = vpack.c.b16 %v510, %v504
    %v667 = vpack.c.b16 %v517, %v511
    %v668 = vpack.c.b16 %v518, %v512
    %v669 = vpack.c.b16 %v519, %v513
    %v670 = vpack.c.b16 %v520, %v514
    %v671 = vpack.c.b16 %v521, %v515
    %v672 = vpack.c.b16 %v522, %v516
    %v673 = vpack.c.b16 %v529, %v523
    %v674 = vpack.c.b16 %v530, %v524
    %v675 = vpack.c.b16 %v531, %v525
    %v676 = vpack.c.b16 %v532, %v526
    %v677 = vpack.c.b16 %v533, %v527
    %v678 = vpack.c.b16 %v534, %v528
    %v679 = vpack.c.b16 %v541, %v535
    %v680 = vpack.c.b16 %v542, %v536
    %v681 = vpack.c.b16 %v543, %v537
    %v682 = vpack.c.b16 %v544, %v538
    %v683 = vpack.c.b16 %v545, %v539
    %v684 = vpack.c.b16 %v546, %v540
    %v685 = vpack.c.b16 %v553, %v547
    %v686 = vpack.c.b16 %v554, %v548
    %v687 = vpack.c.b16 %v555, %v549
    %v688 = vpack.c.b16 %v556, %v550
    %v689 = vpack.c.b16 %v557, %v551
    %v690 = vpack.c.b16 %v558, %v552
    %v691 = vpack.c.b16 %v565, %v559
    %v692 = vpack.c.b16 %v566, %v560
    %v693 = vpack.c.b16 %v567, %v561
    %v694 = vpack.c.b16 %v568, %v562
    %v695 = vpack.c.b16 %v569, %v563
    %v696 = vpack.c.b16 %v570, %v564
    %v697 = vpack.c.b16 %v577, %v571
    %v698 = vpack.c.b16 %v578, %v572
    %v699 = vpack.c.b16 %v579, %v573
    %v700 = vpack.c.b16 %v580, %v574
    %v701 = vpack.c.b16 %v581, %v575
    %v702 = vpack.c.b16 %v582, %v576
    %v703 = vpack.c.b16 %v589, %v583
    %v704 = vpack.c.b16 %v590, %v584
    %v705 = vpack.c.b16 %v591, %v585
    %v706 = vpack.c.b16 %v592, %v586
    %v707 = vpack.c.b16 %v593, %v587
    %v708 = vpack.c.b16 %v594, %v588
    %v709 = vpack.c.b16 %v601, %v595
    %v710 = vpack.c.b16 %v602, %v596
    %v711 = vpack.c.b16 %v603, %v597
    %v712 = vpack.c.b16 %v604, %v598
    %v713 = vpack.c.b16 %v605, %v599
    %v714 = vpack.c.b16 %v606, %v600
    %v715 = vpack.c.b16 %v613, %v607
    %v716 = vpack.c.b16 %v614, %v608
    %v717 = vpack.c.b16 %v615, %v609
    %v718 = vpack.c.b16 %v616, %v610
    %v719 = vpack.c.b16 %v617, %v611
    %v720 = vpack.c.b16 %v618, %v612
    %v721 = vpack.c.b16 %v625, %v619
    %v722 = vpack.c.b16 %v626, %v620
    %v723 = vpack.c.b16 %v627, %v621
    %v724 = vpack.c.b16 %v628, %v622
    %v725 = vpack.c.b16 %v629, %v623
    %v726 = vpack.c.b16 %v630, %v624
    %823 = vmatprep.subr.bf16.mxu0 %v632
    %824 = vmatpush1.bf16.msra.mxu0 %v631
    %825 = vmatprep.subr.bf16.mxu0 %v638
    %826 = vmatpush1.bf16.msra.mxu0 %v637
    %827 = vmatprep.subr.bf16.mxu0 %v644
    %828 = vmatpush1.bf16.msra.mxu0 %v643
    %829 = vmatprep.subr.bf16.mxu0 %v650
    %830 = vmatpush1.bf16.msra.mxu0 %v649
    %831 = vmatprep.subr.bf16.mxu0 %v656
    %832 = vmatpush1.bf16.msra.mxu0 %v655
    %833 = vmatprep.subr.bf16.mxu0 %v662
    %834 = vmatpush1.bf16.msra.mxu0 %v661
    %835 = vmatprep.subr.bf16.mxu0 %v668
    %836 = vmatpush1.bf16.msra.mxu0 %v667
    %837 = vmatprep.subr.bf16.mxu0 %v674
    %838 = vmatpush1.bf16.msra.mxu0 %v673
    %839 = vmatprep.subr.bf16.mxu0 %v680
    %840 = vmatpush1.bf16.msra.mxu0 %v679
    %841 = vmatprep.subr.bf16.mxu0 %v686
    %842 = vmatpush1.bf16.msra.mxu0 %v685
    %843 = vmatprep.subr.bf16.mxu0 %v692
    %844 = vmatpush1.bf16.msra.mxu0 %v691
    %845 = vmatprep.subr.bf16.mxu0 %v698
    %846 = vmatpush1.bf16.msra.mxu0 %v697
    %847 = vmatprep.subr.bf16.mxu0 %v704
    %848 = vmatpush1.bf16.msra.mxu0 %v703
    %849 = vmatprep.subr.bf16.mxu0 %v710
    %850 = vmatpush1.bf16.msra.mxu0 %v709
    %851 = vmatprep.subr.bf16.mxu0 %v716
    %852 = vmatpush1.bf16.msra.mxu0 %v715
    %853 = vmatprep.subr.bf16.mxu0 %v722
    %854 = vmatpush1.bf16.msra.mxu0 %v721
    %855 = vmatprep.mubr.bf16.mxu0 %v212
    %856 = vmatmul.mubr.bf16.gmra.mrb[0].mxu0 %v211
    %v857 = vpop.f32.mrb[0].mxu0
    %v858 = vadd.f32 %v316, %v857
    %v859 = vpop.f32.mrb[0].mxu0
    %v860 = vadd.f32 %v320, %v859
    %v861 = vpop.f32.mrb[0].mxu0
    %v862 = vadd.f32 %v316, %v861
    %v863 = vpop.f32.mrb[0].mxu0
    %v864 = vadd.f32 %v320, %v863
    %865 = vmatprep.mubr.bf16.mxu0 %v214
    %866 = vmatmul.mubr.bf16.gmra.mrb[0].mxu0 %v213
    %v867 = vpop.f32.mrb[0].mxu0
    %v868 = vadd.f32 %v316, %v867
    %v869 = vpop.f32.mrb[0].mxu0
    %v870 = vadd.f32 %v320, %v869
    %v871 = vpop.f32.mrb[0].mxu0
    %v872 = vadd.f32 %v316, %v871
    %v873 = vpop.f32.mrb[0].mxu0
    %v874 = vadd.f32 %v320, %v873
    %875 = vdwg.mxu0
    %876 = vmatprep.subr.bf16.mxu0 %v634
    %877 = vmatpush1.bf16.msra.mxu0 %v633
    %878 = vmatprep.subr.bf16.mxu0 %v640
    %879 = vmatpush1.bf16.msra.mxu0 %v639
    %880 = vmatprep.subr.bf16.mxu0 %v646
    %881 = vmatpush1.bf16.msra.mxu0 %v645
    %882 = vmatprep.subr.bf16.mxu0 %v652
    %883 = vmatpush1.bf16.msra.mxu0 %v651
    %884 = vmatprep.subr.bf16.mxu0 %v658
    %885 = vmatpush1.bf16.msra.mxu0 %v657
    %886 = vmatprep.subr.bf16.mxu0 %v664
    %887 = vmatpush1.bf16.msra.mxu0 %v663
    %888 = vmatprep.subr.bf16.mxu0 %v670
    %889 = vmatpush1.bf16.msra.mxu0 %v669
    %890 = vmatprep.subr.bf16.mxu0 %v676
    %891 = vmatpush1.bf16.msra.mxu0 %v675
    %892 = vmatprep.subr.bf16.mxu0 %v682
    %893 = vmatpush1.bf16.msra.mxu0 %v681
    %894 = vmatprep.subr.bf16.mxu0 %v688
    %895 = vmatpush1.bf16.msra.mxu0 %v687
    %896 = vmatprep.subr.bf16.mxu0 %v694
    %897 = vmatpush1.bf16.msra.mxu0 %v693
    %898 = vmatprep.subr.bf16.mxu0 %v700
    %899 = vmatpush1.bf16.msra.mxu0 %v699
    %900 = vmatprep.subr.bf16.mxu0 %v706
    %901 = vmatpush1.bf16.msra.mxu0 %v705
    %902 = vmatprep.subr.bf16.mxu0 %v712
    %903 = vmatpush1.bf16.msra.mxu0 %v711
    %904 = vmatprep.subr.bf16.mxu0 %v718
    %905 = vmatpush1.bf16.msra.mxu0 %v717
    %906 = vmatprep.subr.bf16.mxu0 %v724
    %907 = vmatpush1.bf16.msra.mxu0 %v723
    %908 = vmatprep.mubr.bf16.mxu0 %v212
    %909 = vmatmul.mubr.bf16.gmra.mrb[0].mxu0 %v211
    %v910 = vpop.f32.mrb[0].mxu0
    %v911 = vadd.f32 %v324, %v910
    %v912 = vpop.f32.mrb[0].mxu0
    %v913 = vadd.f32 %v328, %v912
    %v914 = vpop.f32.mrb[0].mxu0
    %v915 = vadd.f32 %v324, %v914
    %v916 = vpop.f32.mrb[0].mxu0
    %v917 = vadd.f32 %v328, %v916
    %918 = vmatprep.mubr.bf16.mxu0 %v214
    %919 = vmatmul.mubr.bf16.gmra.mrb[0].mxu0 %v213
    %v920 = vpop.f32.mrb[0].mxu0
    %v921 = vadd.f32 %v324, %v920
    %v922 = vpop.f32.mrb[0].mxu0
    %v923 = vadd.f32 %v328, %v922
    %v924 = vpop.f32.mrb[0].mxu0
    %v925 = vadd.f32 %v324, %v924
    %v926 = vpop.f32.mrb[0].mxu0
    %v927 = vadd.f32 %v328, %v926
    %928 = vdwg.mxu0
    %929 = vmatprep.subr.bf16.mxu0 %v636
    %930 = vmatpush1.bf16.msra.mxu0 %v635
    %931 = vmatprep.subr.bf16.mxu0 %v642
    %932 = vmatpush1.bf16.msra.mxu0 %v641
    %933 = vmatprep.subr.bf16.mxu0 %v648
    %934 = vmatpush1.bf16.msra.mxu0 %v647
    %935 = vmatprep.subr.bf16.mxu0 %v654
    %936 = vmatpush1.bf16.msra.mxu0 %v653
    %937 = vmatprep.subr.bf16.mxu0 %v660
    %938 = vmatpush1.bf16.msra.mxu0 %v659
    %939 = vmatprep.subr.bf16.mxu0 %v666
    %940 = vmatpush1.bf16.msra.mxu0 %v665
    %941 = vmatprep.subr.bf16.mxu0 %v672
    %942 = vmatpush1.bf16.msra.mxu0 %v671
    %943 = vmatprep.subr.bf16.mxu0 %v678
    %944 = vmatpush1.bf16.msra.mxu0 %v677
    %945 = vmatprep.subr.bf16.mxu0 %v684
    %946 = vmatpush1.bf16.msra.mxu0 %v683
    %947 = vmatprep.subr.bf16.mxu0 %v690
    %948 = vmatpush1.bf16.msra.mxu0 %v689
    %949 = vmatprep.subr.bf16.mxu0 %v696
    %950 = vmatpush1.bf16.msra.mxu0 %v695
    %951 = vmatprep.subr.bf16.mxu0 %v702
    %952 = vmatpush1.bf16.msra.mxu0 %v701
    %953 = vmatprep.subr.bf16.mxu0 %v708
    %954 = vmatpush1.bf16.msra.mxu0 %v707
    %955 = vmatprep.subr.bf16.mxu0 %v714
    %956 = vmatpush1.bf16.msra.mxu0 %v713
    %957 = vmatprep.subr.bf16.mxu0 %v720
    %958 = vmatpush1.bf16.msra.mxu0 %v719
    %959 = vmatprep.subr.bf16.mxu0 %v726
    %960 = vmatpush1.bf16.msra.mxu0 %v725
    %961 = vmatprep.mubr.bf16.mxu0 %v212
    %962 = vmatmul.mubr.bf16.gmra.mrb[0].mxu0 %v211
    %v963 = vpop.f32.mrb[0].mxu0
    %v964 = vadd.f32 %v332, %v963
    %v965 = vpop.f32.mrb[0].mxu0
    %v966 = vadd.f32 %v336, %v965
    %v967 = vpop.f32.mrb[0].mxu0
    %v968 = vadd.f32 %v332, %v967
    %v969 = vpop.f32.mrb[0].mxu0
    %v970 = vadd.f32 %v336, %v969
    %971 = vmatprep.mubr.bf16.mxu0 %v214
    %972 = vmatmul.mubr.bf16.gmra.mrb[0].mxu0 %v213
    %v973 = vpop.f32.mrb[0].mxu0
    %v974 = vadd.f32 %v332, %v973
    %v975 = vpop.f32.mrb[0].mxu0
    %v976 = vadd.f32 %v336, %v975
    %v977 = vpop.f32.mrb[0].mxu0
    %v978 = vadd.f32 %v332, %v977
    %v979 = vpop.f32.mrb[0].mxu0
    %v980 = vadd.f32 %v336, %v979
    %981 = vdwg.mxu0
    %v982 = vpack.c.bf16 %v862, %v858
    %v983 = vpack.c.bf16 %v864, %v860
    %v984 = vpack.c.bf16 %v872, %v868
    %v985 = vpack.c.bf16 %v874, %v870
    %v986 = vpack.c.bf16 %v915, %v911
    %v987 = vpack.c.bf16 %v917, %v913
    %v988 = vpack.c.bf16 %v925, %v921
    %v989 = vpack.c.bf16 %v927, %v923
    %v990 = vpack.c.bf16 %v968, %v964
    %v991 = vpack.c.bf16 %v970, %v966
    %v992 = vpack.c.bf16 %v978, %v974
    %v993 = vpack.c.bf16 %v980, %v976
    %994 = vmatprep.subr.bf16.mxu0 0
    %995 = vmatpush1.bf16.xpose.msra.mxu0 %v986
    %996 = vmatprep.subr.bf16.mxu0 0
    %997 = vmatpush1.bf16.xpose.msra.mxu0 0
    %998 = vmatprep.subr.bf16.mxu0 0
    %999 = vmatpush1.bf16.xpose.msra.mxu0 0
    %1000 = vmatprep.subr.bf16.mxu0 0
    %1001 = vmatpush1.bf16.xpose.msra.mxu0 0
    %1002 = vmatprep.subr.bf16.mxu0 0
    %1003 = vmatpush1.bf16.xpose.msra.mxu0 0
    %1004 = vmatprep.subr.bf16.mxu0 0
    %1005 = vmatpush1.bf16.xpose.msra.mxu0 0
    %1006 = vmatprep.subr.bf16.mxu0 0
    %1007 = vmatpush1.bf16.xpose.msra.mxu0 0
    %1008 = vmatprep.subr.bf16.mxu0 0
    %1009 = vmatpush1.bf16.xpose.msra.mxu0 0
    %1010 = vmatprep.subr.bf16.mxu0 0
    %1011 = vmatpush1.bf16.xpose.msra.mxu0 0
    %1012 = vmatprep.subr.bf16.mxu0 0
    %1013 = vmatpush1.bf16.xpose.msra.mxu0 0
    %1014 = vmatprep.subr.bf16.mxu0 0
    %1015 = vmatpush1.bf16.xpose.msra.mxu0 0
    %1016 = vmatprep.subr.bf16.mxu0 0
    %1017 = vmatpush1.bf16.xpose.msra.mxu0 0
    %1018 = vmatprep.subr.bf16.mxu0 0
    %1019 = vmatpush1.bf16.xpose.msra.mxu0 0
    %1020 = vmatprep.subr.bf16.mxu0 0
    %1021 = vmatpush1.bf16.xpose.msra.mxu0 0
    %1022 = vmatprep.subr.bf16.mxu0 0
    %1023 = vmatpush1.bf16.xpose.msra.mxu0 0
    %1024 = vmatprep.subr.bf16.mxu0 0
    %1025 = vmatpush1.bf16.xpose.msra.mxu0 0
    %1026 = vmatprep.mubr.bf16.mxu0 0
    %1027 = vmatmul.mubr.bf16.gmra.mrb[0].mxu0 %v982
    %v1028 = vpop.f32.mrb[0].mxu0
    %v1029 = vadd.f32 0.0, %v1028
    %v1030 = vpop.f32.mrb[0].mxu0
    %v1031 = vpop.f32.mrb[0].mxu0
    %v1032 = vadd.f32 0.0, %v1031
    %v1033 = vpop.f32.mrb[0].mxu0
    %1034 = vdwg.mxu0
    %1035 = vmatprep.subr.bf16.mxu0 0
    %1036 = vmatpush1.bf16.xpose.msra.mxu0 %v988
    %1037 = vmatprep.subr.bf16.mxu0 0
    %1038 = vmatpush1.bf16.xpose.msra.mxu0 0
    %1039 = vmatprep.subr.bf16.mxu0 0
    %1040 = vmatpush1.bf16.xpose.msra.mxu0 0
    %1041 = vmatprep.subr.bf16.mxu0 0
    %1042 = vmatpush1.bf16.xpose.msra.mxu0 0
    %1043 = vmatprep.subr.bf16.mxu0 0
    %1044 = vmatpush1.bf16.xpose.msra.mxu0 0
    %1045 = vmatprep.subr.bf16.mxu0 0
    %1046 = vmatpush1.bf16.xpose.msra.mxu0 0
    %1047 = vmatprep.subr.bf16.mxu0 0
    %1048 = vmatpush1.bf16.xpose.msra.mxu0 0
    %1049 = vmatprep.subr.bf16.mxu0 0
    %1050 = vmatpush1.bf16.xpose.msra.mxu0 0
    %1051 = vmatprep.subr.bf16.mxu0 0
    %1052 = vmatpush1.bf16.xpose.msra.mxu0 0
    %1053 = vmatprep.subr.bf16.mxu0 0
    %1054 = vmatpush1.bf16.xpose.msra.mxu0 0
    %1055 = vmatprep.subr.bf16.mxu0 0
    %1056 = vmatpush1.bf16.xpose.msra.mxu0 0
    %1057 = vmatprep.subr.bf16.mxu0 0
    %1058 = vmatpush1.bf16.xpose.msra.mxu0 0
    %1059 = vmatprep.subr.bf16.mxu0 0
    %1060 = vmatpush1.bf16.xpose.msra.mxu0 0
    %1061 = vmatprep.subr.bf16.mxu0 0
    %1062 = vmatpush1.bf16.xpose.msra.mxu0 0
    %1063 = vmatprep.subr.bf16.mxu0 0
    %1064 = vmatpush1.bf16.xpose.msra.mxu0 0
    %1065 = vmatprep.subr.bf16.mxu0 0
    %1066 = vmatpush1.bf16.xpose.msra.mxu0 0
    %1067 = vmatprep.mubr.bf16.mxu0 0
    %1068 = vmatmul.mubr.bf16.gmra.mrb[0].mxu0 %v984
    %v1069 = vpop.f32.mrb[0].mxu0
    %v1070 = vadd.f32 0.0, %v1069
    %v1071 = vpop.f32.mrb[0].mxu0
    %v1072 = vpop.f32.mrb[0].mxu0
    %v1073 = vadd.f32 0.0, %v1072
    %v1074 = vpop.f32.mrb[0].mxu0
    %1075 = vdwg.mxu0
    %vm1076 = vcmask 130048
    %v1077 = vsel %vm1076, %v1029, -inf
    %1078 = vmax.xlane.f32.xlu0 %v1077
    %v1079 = vpop.xlane.xlu0 %1078
    %v1080 = vsel %vm1076, %v1032, -inf
    %1081 = vmax.xlane.f32.xlu0 %v1080
    %v1082 = vpop.xlane.xlu0 %1081
    %v1083 = vsel %vm1076, %v1070, -inf
    %1084 = vmax.xlane.f32.xlu0 %v1083
    %v1085 = vpop.xlane.xlu0 %1084
    %v1086 = vsel %vm1076, %v1073, -inf
    %1087 = vmax.xlane.f32.xlu0 %v1086
    %v1088 = vpop.xlane.xlu0 %1087
    %v1089 = vsub.f32 %v1029, %v1079
    %v1090 = vsub.f32 %v1032, %v1082
    %v1091 = vsub.f32 %v1070, %v1085
    %v1092 = vsub.f32 %v1073, %v1088
    %v1093 = vmul.f32 %v1089, 1.442695
    %v1094 = vpow.pop %v1093
    %v1095 = vmul.f32 %v1090, 1.442695
    %v1096 = vpow.pop %v1095
    %v1097 = vmul.f32 %v1091, 1.442695
    %v1098 = vpow.pop %v1097
    %v1099 = vmul.f32 %v1092, 1.442695
    %v1100 = vpow.pop %v1099
    %v1101 = vsel %vm1076, %v1094, 0.0
    %1102 = vadd.xlane.f32.xlu0 %v1101
    %v1103 = vpop.xlane.xlu0 %1102
    %v1104 = vsel %vm1076, %v1096, 0.0
    %1105 = vadd.xlane.f32.xlu0 %v1104
    %v1106 = vpop.xlane.xlu0 %1105
    %v1107 = vsel %vm1076, %v1098, 0.0
    %1108 = vadd.xlane.f32.xlu0 %v1107
    %v1109 = vpop.xlane.xlu0 %1108
    %v1110 = vsel %vm1076, %v1100, 0.0
    %1111 = vadd.xlane.f32.xlu0 %v1110
    %v1112 = vpop.xlane.xlu0 %1111
    %v1113 = vpack.c.bf16 %v1096, %v1094
    %v1114 = vpack.c.bf16 %v1100, %v1098
    %v1116 = vsel %vm1076, %v1113, 0
    %1118 = vmatprep.subr.bf16.mxu0 0
    %1119 = vmatpush1.bf16.msra.mxu0 %v990
    %1120 = vmatprep.subr.bf16.mxu0 0
    %1121 = vmatpush1.bf16.msra.mxu0 0
    %1122 = vmatprep.subr.bf16.mxu0 0
    %1123 = vmatpush1.bf16.msra.mxu0 0
    %1124 = vmatprep.subr.bf16.mxu0 0
    %1125 = vmatpush1.bf16.msra.mxu0 0
    %1126 = vmatprep.subr.bf16.mxu0 0
    %1127 = vmatpush1.bf16.msra.mxu0 0
    %1128 = vmatprep.subr.bf16.mxu0 0
    %1129 = vmatpush1.bf16.msra.mxu0 0
    %1130 = vmatprep.subr.bf16.mxu0 0
    %1131 = vmatpush1.bf16.msra.mxu0 0
    %1132 = vmatprep.subr.bf16.mxu0 0
    %1133 = vmatpush1.bf16.msra.mxu0 0
    %1134 = vmatprep.subr.bf16.mxu0 0
    %1135 = vmatpush1.bf16.msra.mxu0 0
    %1136 = vmatprep.subr.bf16.mxu0 0
    %1137 = vmatpush1.bf16.msra.mxu0 0
    %1138 = vmatprep.subr.bf16.mxu0 0
    %1139 = vmatpush1.bf16.msra.mxu0 0
    %1140 = vmatprep.subr.bf16.mxu0 0
    %1141 = vmatpush1.bf16.msra.mxu0 0
    %1142 = vmatprep.subr.bf16.mxu0 0
    %1143 = vmatpush1.bf16.msra.mxu0 0
    %1144 = vmatprep.subr.bf16.mxu0 0
    %1145 = vmatpush1.bf16.msra.mxu0 0
    %1146 = vmatprep.subr.bf16.mxu0 0
    %1147 = vmatpush1.bf16.msra.mxu0 0
    %1148 = vmatprep.subr.bf16.mxu0 0
    %1149 = vmatpush1.bf16.msra.mxu0 0
    %1150 = vmatprep.mubr.bf16.mxu0 0
    %1151 = vmatmul.mubr.bf16.gmra.mrb[0].mxu0 %v1116
    %v1152 = vpop.f32.mrb[0].mxu0
    %v1153 = vadd.f32 0.0, %v1152
    %v1154 = vpop.f32.mrb[0].mxu0
    %v1155 = vpop.f32.mrb[0].mxu0
    %v1156 = vadd.f32 0.0, %v1155
    %v1157 = vpop.f32.mrb[0].mxu0
    %1158 = vdwg.mxu0
    %v1160 = vsel %vm1076, %v1114, 0
    %1162 = vmatprep.subr.bf16.mxu0 0
    %1163 = vmatpush1.bf16.msra.mxu0 %v992
    %1164 = vmatprep.subr.bf16.mxu0 0
    %1165 = vmatpush1.bf16.msra.mxu0 0
    %1166 = vmatprep.subr.bf16.mxu0 0
    %1167 = vmatpush1.bf16.msra.mxu0 0
    %1168 = vmatprep.subr.bf16.mxu0 0
    %1169 = vmatpush1.bf16.msra.mxu0 0
    %1170 = vmatprep.subr.bf16.mxu0 0
    %1171 = vmatpush1.bf16.msra.mxu0 0
    %1172 = vmatprep.subr.bf16.mxu0 0
    %1173 = vmatpush1.bf16.msra.mxu0 0
    %1174 = vmatprep.subr.bf16.mxu0 0
    %1175 = vmatpush1.bf16.msra.mxu0 0
    %1176 = vmatprep.subr.bf16.mxu0 0
    %1177 = vmatpush1.bf16.msra.mxu0 0
    %1178 = vmatprep.subr.bf16.mxu0 0
    %1179 = vmatpush1.bf16.msra.mxu0 0
    %1180 = vmatprep.subr.bf16.mxu0 0
    %1181 = vmatpush1.bf16.msra.mxu0 0
    %1182 = vmatprep.subr.bf16.mxu0 0
    %1183 = vmatpush1.bf16.msra.mxu0 0
    %1184 = vmatprep.subr.bf16.mxu0 0
    %1185 = vmatpush1.bf16.msra.mxu0 0
    %1186 = vmatprep.subr.bf16.mxu0 0
    %1187 = vmatpush1.bf16.msra.mxu0 0
    %1188 = vmatprep.subr.bf16.mxu0 0
    %1189 = vmatpush1.bf16.msra.mxu0 0
    %1190 = vmatprep.subr.bf16.mxu0 0
    %1191 = vmatpush1.bf16.msra.mxu0 0
    %1192 = vmatprep.subr.bf16.mxu0 0
    %1193 = vmatpush1.bf16.msra.mxu0 0
    %1194 = vmatprep.mubr.bf16.mxu0 0
    %1195 = vmatmul.mubr.bf16.gmra.mrb[0].mxu0 %v1160
    %v1196 = vpop.f32.mrb[0].mxu0
    %v1197 = vadd.f32 0.0, %v1196
    %v1198 = vpop.f32.mrb[0].mxu0
    %v1199 = vpop.f32.mrb[0].mxu0
    %v1200 = vadd.f32 0.0, %v1199
    %v1201 = vpop.f32.mrb[0].mxu0
    %1202 = vdwg.mxu0
    %v1203 = vrcp.pop %v1103
    %v1204 = vrcp.pop %v1106
    %v1205 = vrcp.pop %v1109
    %v1206 = vrcp.pop %v1112
    %v1207 = vmul.f32 %v1153, %v1203
    %v1208 = vmul.f32 %v1156, %v1204
    %v1209 = vmul.f32 %v1197, %v1205
    %v1210 = vmul.f32 %v1200, %v1206
    %1211 = vmatprep.subr.bf16.mxu0 0
    %1212 = vmatpush1.bf16.xpose.msra.mxu0 %v987
    %1213 = vmatprep.subr.bf16.mxu0 0
    %1214 = vmatpush1.bf16.xpose.msra.mxu0 0
    %1215 = vmatprep.subr.bf16.mxu0 0
    %1216 = vmatpush1.bf16.xpose.msra.mxu0 0
    %1217 = vmatprep.subr.bf16.mxu0 0
    %1218 = vmatpush1.bf16.xpose.msra.mxu0 0
    %1219 = vmatprep.subr.bf16.mxu0 0
    %1220 = vmatpush1.bf16.xpose.msra.mxu0 0
    %1221 = vmatprep.subr.bf16.mxu0 0
    %1222 = vmatpush1.bf16.xpose.msra.mxu0 0
    %1223 = vmatprep.subr.bf16.mxu0 0
    %1224 = vmatpush1.bf16.xpose.msra.mxu0 0
    %1225 = vmatprep.subr.bf16.mxu0 0
    %1226 = vmatpush1.bf16.xpose.msra.mxu0 0
    %1227 = vmatprep.subr.bf16.mxu0 0
    %1228 = vmatpush1.bf16.xpose.msra.mxu0 0
    %1229 = vmatprep.subr.bf16.mxu0 0
    %1230 = vmatpush1.bf16.xpose.msra.mxu0 0
    %1231 = vmatprep.subr.bf16.mxu0 0
    %1232 = vmatpush1.bf16.xpose.msra.mxu0 0
    %1233 = vmatprep.subr.bf16.mxu0 0
    %1234 = vmatpush1.bf16.xpose.msra.mxu0 0
    %1235 = vmatprep.subr.bf16.mxu0 0
    %1236 = vmatpush1.bf16.xpose.msra.mxu0 0
    %1237 = vmatprep.subr.bf16.mxu0 0
    %1238 = vmatpush1.bf16.xpose.msra.mxu0 0
    %1239 = vmatprep.subr.bf16.mxu0 0
    %1240 = vmatpush1.bf16.xpose.msra.mxu0 0
    %1241 = vmatprep.subr.bf16.mxu0 0
    %1242 = vmatpush1.bf16.xpose.msra.mxu0 0
    %1243 = vmatprep.mubr.bf16.mxu0 0
    %1244 = vmatmul.mubr.bf16.gmra.mrb[0].mxu0 %v983
    %v1245 = vpop.f32.mrb[0].mxu0
    %v1246 = vadd.f32 0.0, %v1245
    %v1247 = vpop.f32.mrb[0].mxu0
    %v1248 = vpop.f32.mrb[0].mxu0
    %v1249 = vadd.f32 0.0, %v1248
    %v1250 = vpop.f32.mrb[0].mxu0
    %1251 = vdwg.mxu0
    %1252 = vmatprep.subr.bf16.mxu0 0
    %1253 = vmatpush1.bf16.xpose.msra.mxu0 %v989
    %1254 = vmatprep.subr.bf16.mxu0 0
    %1255 = vmatpush1.bf16.xpose.msra.mxu0 0
    %1256 = vmatprep.subr.bf16.mxu0 0
    %1257 = vmatpush1.bf16.xpose.msra.mxu0 0
    %1258 = vmatprep.subr.bf16.mxu0 0
    %1259 = vmatpush1.bf16.xpose.msra.mxu0 0
    %1260 = vmatprep.subr.bf16.mxu0 0
    %1261 = vmatpush1.bf16.xpose.msra.mxu0 0
    %1262 = vmatprep.subr.bf16.mxu0 0
    %1263 = vmatpush1.bf16.xpose.msra.mxu0 0
    %1264 = vmatprep.subr.bf16.mxu0 0
    %1265 = vmatpush1.bf16.xpose.msra.mxu0 0
    %1266 = vmatprep.subr.bf16.mxu0 0
    %1267 = vmatpush1.bf16.xpose.msra.mxu0 0
    %1268 = vmatprep.subr.bf16.mxu0 0
    %1269 = vmatpush1.bf16.xpose.msra.mxu0 0
    %1270 = vmatprep.subr.bf16.mxu0 0
    %1271 = vmatpush1.bf16.xpose.msra.mxu0 0
    %1272 = vmatprep.subr.bf16.mxu0 0
    %1273 = vmatpush1.bf16.xpose.msra.mxu0 0
    %1274 = vmatprep.subr.bf16.mxu0 0
    %1275 = vmatpush1.bf16.xpose.msra.mxu0 0
    %1276 = vmatprep.subr.bf16.mxu0 0
    %1277 = vmatpush1.bf16.xpose.msra.mxu0 0
    %1278 = vmatprep.subr.bf16.mxu0 0
    %1279 = vmatpush1.bf16.xpose.msra.mxu0 0
    %1280 = vmatprep.subr.bf16.mxu0 0
    %1281 = vmatpush1.bf16.xpose.msra.mxu0 0
    %1282 = vmatprep.subr.bf16.mxu0 0
    %1283 = vmatpush1.bf16.xpose.msra.mxu0 0
    %1284 = vmatprep.mubr.bf16.mxu0 0
    %1285 = vmatmul.mubr.bf16.gmra.mrb[0].mxu0 %v985
    %v1286 = vpop.f32.mrb[0].mxu0
    %v1287 = vadd.f32 0.0, %v1286
    %v1288 = vpop.f32.mrb[0].mxu0
    %v1289 = vpop.f32.mrb[0].mxu0
    %v1290 = vadd.f32 0.0, %v1289
    %v1291 = vpop.f32.mrb[0].mxu0
    %1292 = vdwg.mxu0
    %v1293 = vsel %vm1076, %v1246, -inf
    %1294 = vmax.xlane.f32.xlu0 %v1293
    %v1295 = vpop.xlane.xlu0 %1294
    %v1296 = vsel %vm1076, %v1249, -inf
    %1297 = vmax.xlane.f32.xlu0 %v1296
    %v1298 = vpop.xlane.xlu0 %1297
    %v1299 = vsel %vm1076, %v1287, -inf
    %1300 = vmax.xlane.f32.xlu0 %v1299
    %v1301 = vpop.xlane.xlu0 %1300
    %v1302 = vsel %vm1076, %v1290, -inf
    %1303 = vmax.xlane.f32.xlu0 %v1302
    %v1304 = vpop.xlane.xlu0 %1303
    %v1305 = vsub.f32 %v1246, %v1295
    %v1306 = vsub.f32 %v1249, %v1298
    %v1307 = vsub.f32 %v1287, %v1301
    %v1308 = vsub.f32 %v1290, %v1304
    %v1309 = vmul.f32 %v1305, 1.442695
    %v1310 = vpow.pop %v1309
    %v1311 = vmul.f32 %v1306, 1.442695
    %v1312 = vpow.pop %v1311
    %v1313 = vmul.f32 %v1307, 1.442695
    %v1314 = vpow.pop %v1313
    %v1315 = vmul.f32 %v1308, 1.442695
    %v1316 = vpow.pop %v1315
    %v1317 = vsel %vm1076, %v1310, 0.0
    %1318 = vadd.xlane.f32.xlu0 %v1317
    %v1319 = vpop.xlane.xlu0 %1318
    %v1320 = vsel %vm1076, %v1312, 0.0
    %1321 = vadd.xlane.f32.xlu0 %v1320
    %v1322 = vpop.xlane.xlu0 %1321
    %v1323 = vsel %vm1076, %v1314, 0.0
    %1324 = vadd.xlane.f32.xlu0 %v1323
    %v1325 = vpop.xlane.xlu0 %1324
    %v1326 = vsel %vm1076, %v1316, 0.0
    %1327 = vadd.xlane.f32.xlu0 %v1326
    %v1328 = vpop.xlane.xlu0 %1327
    %v1329 = vpack.c.bf16 %v1312, %v1310
    %v1330 = vpack.c.bf16 %v1316, %v1314
    %v1332 = vsel %vm1076, %v1329, 0
    %1334 = vmatprep.subr.bf16.mxu0 0
    %1335 = vmatpush1.bf16.msra.mxu0 %v991
    %1336 = vmatprep.subr.bf16.mxu0 0
    %1337 = vmatpush1.bf16.msra.mxu0 0
    %1338 = vmatprep.subr.bf16.mxu0 0
    %1339 = vmatpush1.bf16.msra.mxu0 0
    %1340 = vmatprep.subr.bf16.mxu0 0
    %1341 = vmatpush1.bf16.msra.mxu0 0
    %1342 = vmatprep.subr.bf16.mxu0 0
    %1343 = vmatpush1.bf16.msra.mxu0 0
    %1344 = vmatprep.subr.bf16.mxu0 0
    %1345 = vmatpush1.bf16.msra.mxu0 0
    %1346 = vmatprep.subr.bf16.mxu0 0
    %1347 = vmatpush1.bf16.msra.mxu0 0
    %1348 = vmatprep.subr.bf16.mxu0 0
    %1349 = vmatpush1.bf16.msra.mxu0 0
    %1350 = vmatprep.subr.bf16.mxu0 0
    %1351 = vmatpush1.bf16.msra.mxu0 0
    %1352 = vmatprep.subr.bf16.mxu0 0
    %1353 = vmatpush1.bf16.msra.mxu0 0
    %1354 = vmatprep.subr.bf16.mxu0 0
    %1355 = vmatpush1.bf16.msra.mxu0 0
    %1356 = vmatprep.subr.bf16.mxu0 0
    %1357 = vmatpush1.bf16.msra.mxu0 0
    %1358 = vmatprep.subr.bf16.mxu0 0
    %1359 = vmatpush1.bf16.msra.mxu0 0
    %1360 = vmatprep.subr.bf16.mxu0 0
    %1361 = vmatpush1.bf16.msra.mxu0 0
    %1362 = vmatprep.subr.bf16.mxu0 0
    %1363 = vmatpush1.bf16.msra.mxu0 0
    %1364 = vmatprep.subr.bf16.mxu0 0
    %1365 = vmatpush1.bf16.msra.mxu0 0
    %1366 = vmatprep.mubr.bf16.mxu0 0
    %1367 = vmatmul.mubr.bf16.gmra.mrb[0].mxu0 %v1332
    %v1368 = vpop.f32.mrb[0].mxu0
    %v1369 = vadd.f32 0.0, %v1368
    %v1370 = vpop.f32.mrb[0].mxu0
    %v1371 = vpop.f32.mrb[0].mxu0
    %v1372 = vadd.f32 0.0, %v1371
    %v1373 = vpop.f32.mrb[0].mxu0
    %1374 = vdwg.mxu0
    %v1376 = vsel %vm1076, %v1330, 0
    %1378 = vmatprep.subr.bf16.mxu0 0
    %1379 = vmatpush1.bf16.msra.mxu0 %v993
    %1380 = vmatprep.subr.bf16.mxu0 0
    %1381 = vmatpush1.bf16.msra.mxu0 0
    %1382 = vmatprep.subr.bf16.mxu0 0
    %1383 = vmatpush1.bf16.msra.mxu0 0
    %1384 = vmatprep.subr.bf16.mxu0 0
    %1385 = vmatpush1.bf16.msra.mxu0 0
    %1386 = vmatprep.subr.bf16.mxu0 0
    %1387 = vmatpush1.bf16.msra.mxu0 0
    %1388 = vmatprep.subr.bf16.mxu0 0
    %1389 = vmatpush1.bf16.msra.mxu0 0
    %1390 = vmatprep.subr.bf16.mxu0 0
    %1391 = vmatpush1.bf16.msra.mxu0 0
    %1392 = vmatprep.subr.bf16.mxu0 0
    %1393 = vmatpush1.bf16.msra.mxu0 0
    %1394 = vmatprep.subr.bf16.mxu0 0
    %1395 = vmatpush1.bf16.msra.mxu0 0
    %1396 = vmatprep.subr.bf16.mxu0 0
    %1397 = vmatpush1.bf16.msra.mxu0 0
    %1398 = vmatprep.subr.bf16.mxu0 0
    %1399 = vmatpush1.bf16.msra.mxu0 0
    %1400 = vmatprep.subr.bf16.mxu0 0
    %1401 = vmatpush1.bf16.msra.mxu0 0
    %1402 = vmatprep.subr.bf16.mxu0 0
    %1403 = vmatpush1.bf16.msra.mxu0 0
    %1404 = vmatprep.subr.bf16.mxu0 0
    %1405 = vmatpush1.bf16.msra.mxu0 0
    %1406 = vmatprep.subr.bf16.mxu0 0
    %1407 = vmatpush1.bf16.msra.mxu0 0
    %1408 = vmatprep.subr.bf16.mxu0 0
    %1409 = vmatpush1.bf16.msra.mxu0 0
    %1410 = vmatprep.mubr.bf16.mxu0 0
    %1411 = vmatmul.mubr.bf16.gmra.mrb[0].mxu0 %v1376
    %v1412 = vpop.f32.mrb[0].mxu0
    %v1413 = vadd.f32 0.0, %v1412
    %v1414 = vpop.f32.mrb[0].mxu0
    %v1415 = vpop.f32.mrb[0].mxu0
    %v1416 = vadd.f32 0.0, %v1415
    %v1417 = vpop.f32.mrb[0].mxu0
    %1418 = vdwg.mxu0
    %v1419 = vrcp.pop %v1319
    %v1420 = vrcp.pop %v1322
    %v1421 = vrcp.pop %v1325
    %v1422 = vrcp.pop %v1328
    %v1423 = vmul.f32 %v1369, %v1419
    %v1424 = vmul.f32 %v1372, %v1420
    %v1425 = vmul.f32 %v1413, %v1421
    %v1426 = vmul.f32 %v1416, %v1422
    %v1427 = vpack.c.bf16 %v1208, %v1207
    %v1428 = vpack.c.bf16 %v1424, %v1423
    %v1429 = vpack.c.bf16 %v1210, %v1209
    %v1430 = vpack.c.bf16 %v1426, %v1425
    %v1431 = vld [vmem:[#allocation8] sm:$0xff]
    %v1432 = vld [vmem:[#allocation8 + $0x8] sm:$0xff]
    %v1433 = vld [vmem:[#allocation8 + $0x10] sm:$0xff]
    %v1434 = vld [vmem:[#allocation8 + $0x18] sm:$0xff]
    %v1435 = vld [vmem:[#allocation8 + $0x20] sm:$0xff]
    %v1436 = vld [vmem:[#allocation8 + $0x28] sm:$0xff]
    %v1437 = vld [vmem:[#allocation8 + $0x30] sm:$0xff]
    %v1438 = vld [vmem:[#allocation8 + $0x38] sm:$0xff]
    %v1439 = vld [vmem:[#allocation8 + $0x40] sm:$0xff]
    %v1440 = vld [vmem:[#allocation8 + $0x48] sm:$0xff]
    %v1441 = vld [vmem:[#allocation8 + $0x50] sm:$0xff]
    %v1442 = vld [vmem:[#allocation8 + $0x58] sm:$0xff]
    %v1443 = vld [vmem:[#allocation8 + $0x60] sm:$0xff]
    %v1444 = vld [vmem:[#allocation8 + $0x68] sm:$0xff]
    %v1445 = vld [vmem:[#allocation8 + $0x70] sm:$0xff]
    %v1446 = vld [vmem:[#allocation8 + $0x78] sm:$0xff]
    %v1447 = vld [vmem:[#allocation8 + $0x80] sm:$0xff]
    %v1448 = vld [vmem:[#allocation8 + $0x88] sm:$0xff]
    %v1449 = vld [vmem:[#allocation8 + $0x90] sm:$0xff]
    %v1450 = vld [vmem:[#allocation8 + $0x98] sm:$0xff]
    %v1451 = vld [vmem:[#allocation8 + $0xa0] sm:$0xff]
    %v1452 = vld [vmem:[#allocation8 + $0xa8] sm:$0xff]
    %v1453 = vld [vmem:[#allocation8 + $0xb0] sm:$0xff]
    %v1454 = vld [vmem:[#allocation8 + $0xb8] sm:$0xff]
    %v1455 = vld [vmem:[#allocation8 + $0xc0] sm:$0xff]
    %v1456 = vld [vmem:[#allocation8 + $0xc8] sm:$0xff]
    %v1457 = vld [vmem:[#allocation8 + $0xd0] sm:$0xff]
    %v1458 = vld [vmem:[#allocation8 + $0xd8] sm:$0xff]
    %v1459 = vld [vmem:[#allocation8 + $0xe0] sm:$0xff]
    %v1460 = vld [vmem:[#allocation8 + $0xe8] sm:$0xff]
    %v1461 = vld [vmem:[#allocation8 + $0xf0] sm:$0xff]
    %v1462 = vld [vmem:[#allocation8 + $0xf8] sm:$0xff]
    %v1463 = vld [vmem:[%s5] sm:$0x3]
    %v1465 = vlaneseq
    %v1466 = vshrl.u32 %v1465, 7
    %v1467 = vsub.s32 0, %v1466
    %v1468 = vrot.slane %v1463, %v1467
    %v1469 = vlaneseq
    %v1470 = vshrl.u32 %v1469, 7
    %v1471 = vsub.s32 1, %v1470
    %v1472 = vrot.slane %v1463, %v1471
    %v1507 = vunpack.c.l.b16 %v1431
    %v1508 = vunpack.c.h.b16 %v1431
    %v1509 = vunpack.c.l.b16 %v1432
    %v1510 = vunpack.c.h.b16 %v1432
    %v1511 = vunpack.c.l.b16 %v1433
    %v1512 = vunpack.c.h.b16 %v1433
    %v1513 = vunpack.c.l.b16 %v1434
    %v1514 = vunpack.c.h.b16 %v1434
    %v1515 = vunpack.c.l.b16 %v1435
    %v1516 = vunpack.c.h.b16 %v1435
    %v1517 = vunpack.c.l.b16 %v1436
    %v1518 = vunpack.c.h.b16 %v1436
    %v1519 = vunpack.c.l.b16 %v1437
    %v1520 = vunpack.c.h.b16 %v1437
    %v1521 = vunpack.c.l.b16 %v1438
    %v1522 = vunpack.c.h.b16 %v1438
    %v1523 = vunpack.c.l.b16 %v1439
    %v1524 = vunpack.c.h.b16 %v1439
    %v1525 = vunpack.c.l.b16 %v1440
    %v1526 = vunpack.c.h.b16 %v1440
    %v1527 = vunpack.c.l.b16 %v1441
    %v1528 = vunpack.c.h.b16 %v1441
    %v1529 = vunpack.c.l.b16 %v1442
    %v1530 = vunpack.c.h.b16 %v1442
    %v1531 = vunpack.c.l.b16 %v1443
    %v1532 = vunpack.c.h.b16 %v1443
    %v1533 = vunpack.c.l.b16 %v1444
    %v1534 = vunpack.c.h.b16 %v1444
    %v1535 = vunpack.c.l.b16 %v1445
    %v1536 = vunpack.c.h.b16 %v1445
    %v1537 = vunpack.c.l.b16 %v1446
    %v1538 = vunpack.c.h.b16 %v1446
    %v1539 = vunpack.c.l.b16 %v1447
    %v1540 = vunpack.c.h.b16 %v1447
    %v1541 = vunpack.c.l.b16 %v1448
    %v1542 = vunpack.c.h.b16 %v1448
    %v1543 = vunpack.c.l.b16 %v1449
    %v1544 = vunpack.c.h.b16 %v1449
    %v1545 = vunpack.c.l.b16 %v1450
    %v1546 = vunpack.c.h.b16 %v1450
    %v1547 = vunpack.c.l.b16 %v1451
    %v1548 = vunpack.c.h.b16 %v1451
    %v1549 = vunpack.c.l.b16 %v1452
    %v1550 = vunpack.c.h.b16 %v1452
    %v1551 = vunpack.c.l.b16 %v1453
    %v1552 = vunpack.c.h.b16 %v1453
    %v1553 = vunpack.c.l.b16 %v1454
    %v1554 = vunpack.c.h.b16 %v1454
    %v1555 = vunpack.c.l.b16 %v1455
    %v1556 = vunpack.c.h.b16 %v1455
    %v1557 = vunpack.c.l.b16 %v1456
    %v1558 = vunpack.c.h.b16 %v1456
    %v1559 = vunpack.c.l.b16 %v1457
    %v1560 = vunpack.c.h.b16 %v1457
    %v1561 = vunpack.c.l.b16 %v1458
    %v1562 = vunpack.c.h.b16 %v1458
    %v1563 = vunpack.c.l.b16 %v1459
    %v1564 = vunpack.c.h.b16 %v1459
    %v1565 = vunpack.c.l.b16 %v1460
    %v1566 = vunpack.c.h.b16 %v1460
    %v1567 = vunpack.c.l.b16 %v1461
    %v1568 = vunpack.c.h.b16 %v1461
    %v1569 = vunpack.c.l.b16 %v1462
    %v1570 = vunpack.c.h.b16 %v1462
    %v1571 = vpack.c.b16 %v1509, %v1507
    %v1572 = vpack.c.b16 %v1510, %v1508
    %v1573 = vpack.c.b16 %v1513, %v1511
    %v1574 = vpack.c.b16 %v1514, %v1512
    %v1575 = vpack.c.b16 %v1517, %v1515
    %v1576 = vpack.c.b16 %v1518, %v1516
    %v1577 = vpack.c.b16 %v1521, %v1519
    %v1578 = vpack.c.b16 %v1522, %v1520
    %v1579 = vpack.c.b16 %v1525, %v1523
    %v1580 = vpack.c.b16 %v1526, %v1524
    %v1581 = vpack.c.b16 %v1529, %v1527
    %v1582 = vpack.c.b16 %v1530, %v1528
    %v1583 = vpack.c.b16 %v1533, %v1531
    %v1584 = vpack.c.b16 %v1534, %v1532
    %v1585 = vpack.c.b16 %v1537, %v1535
    %v1586 = vpack.c.b16 %v1538, %v1536
    %v1587 = vpack.c.b16 %v1541, %v1539
    %v1588 = vpack.c.b16 %v1542, %v1540
    %v1589 = vpack.c.b16 %v1545, %v1543
    %v1590 = vpack.c.b16 %v1546, %v1544
    %v1591 = vpack.c.b16 %v1549, %v1547
    %v1592 = vpack.c.b16 %v1550, %v1548
    %v1593 = vpack.c.b16 %v1553, %v1551
    %v1594 = vpack.c.b16 %v1554, %v1552
    %v1595 = vpack.c.b16 %v1557, %v1555
    %v1596 = vpack.c.b16 %v1558, %v1556
    %v1597 = vpack.c.b16 %v1561, %v1559
    %v1598 = vpack.c.b16 %v1562, %v1560
    %v1599 = vpack.c.b16 %v1565, %v1563
    %v1600 = vpack.c.b16 %v1566, %v1564
    %v1601 = vpack.c.b16 %v1569, %v1567
    %v1602 = vpack.c.b16 %v1570, %v1568
    %1635 = vmatprep.subr.bf16.mxu0 %v1572
    %1636 = vmatpush1.bf16.msra.mxu0 %v1571
    %1637 = vmatprep.subr.bf16.mxu0 %v1574
    %1638 = vmatpush1.bf16.msra.mxu0 %v1573
    %1639 = vmatprep.subr.bf16.mxu0 %v1576
    %1640 = vmatpush1.bf16.msra.mxu0 %v1575
    %1641 = vmatprep.subr.bf16.mxu0 %v1578
    %1642 = vmatpush1.bf16.msra.mxu0 %v1577
    %1643 = vmatprep.subr.bf16.mxu0 %v1580
    %1644 = vmatpush1.bf16.msra.mxu0 %v1579
    %1645 = vmatprep.subr.bf16.mxu0 %v1582
    %1646 = vmatpush1.bf16.msra.mxu0 %v1581
    %1647 = vmatprep.subr.bf16.mxu0 %v1584
    %1648 = vmatpush1.bf16.msra.mxu0 %v1583
    %1649 = vmatprep.subr.bf16.mxu0 %v1586
    %1650 = vmatpush1.bf16.msra.mxu0 %v1585
    %1651 = vmatprep.subr.bf16.mxu0 %v1588
    %1652 = vmatpush1.bf16.msra.mxu0 %v1587
    %1653 = vmatprep.subr.bf16.mxu0 %v1590
    %1654 = vmatpush1.bf16.msra.mxu0 %v1589
    %1655 = vmatprep.subr.bf16.mxu0 %v1592
    %1656 = vmatpush1.bf16.msra.mxu0 %v1591
    %1657 = vmatprep.subr.bf16.mxu0 %v1594
    %1658 = vmatpush1.bf16.msra.mxu0 %v1593
    %1659 = vmatprep.subr.bf16.mxu0 %v1596
    %1660 = vmatpush1.bf16.msra.mxu0 %v1595
    %1661 = vmatprep.subr.bf16.mxu0 %v1598
    %1662 = vmatpush1.bf16.msra.mxu0 %v1597
    %1663 = vmatprep.subr.bf16.mxu0 %v1600
    %1664 = vmatpush1.bf16.msra.mxu0 %v1599
    %1665 = vmatprep.subr.bf16.mxu0 %v1602
    %1666 = vmatpush1.bf16.msra.mxu0 %v1601
    %1667 = vmatprep.mubr.bf16.mxu0 %v1428
    %1668 = vmatmul.mubr.bf16.gmra.mrb[0].mxu0 %v1427
    %v1669 = vpop.f32.mrb[0].mxu0
    %v1670 = vadd.f32 %v1468, %v1669
    %v1671 = vpop.f32.mrb[0].mxu0
    %v1672 = vadd.f32 %v1472, %v1671
    %v1673 = vpop.f32.mrb[0].mxu0
    %v1674 = vadd.f32 %v1468, %v1673
    %v1675 = vpop.f32.mrb[0].mxu0
    %v1676 = vadd.f32 %v1472, %v1675
    %1677 = vmatprep.mubr.bf16.mxu0 %v1430
    %1678 = vmatmul.mubr.bf16.gmra.mrb[0].mxu0 %v1429
    %v1679 = vpop.f32.mrb[0].mxu0
    %v1680 = vadd.f32 %v1468, %v1679
    %v1681 = vpop.f32.mrb[0].mxu0
    %v1682 = vadd.f32 %v1472, %v1681
    %v1683 = vpop.f32.mrb[0].mxu0
    %v1684 = vadd.f32 %v1468, %v1683
    %v1685 = vpop.f32.mrb[0].mxu0
    %v1686 = vadd.f32 %v1472, %v1685
    %1687 = vdwg.mxu0
    %v1688 = vadd.f32 %v195, %v1670
    %v1689 = vadd.f32 %v196, %v1672
    %v1690 = vadd.f32 %v197, %v1674
    %v1691 = vadd.f32 %v198, %v1676
    %v1692 = vadd.f32 %v199, %v1680
    %v1693 = vadd.f32 %v200, %v1682
    %v1694 = vadd.f32 %v201, %v1684
    %v1695 = vadd.f32 %v202, %v1686
    %v1696 = vld [vmem:[%s6] sm:$0x3]
    %v1697 = vld [vmem:[%s7] sm:$0x3]
    %v1698 = vadd.f32 %v1688, %v1689
    %1699 = vadd.xlane.f32.xlu0 %v1698
    %v1700 = vpop.xlane.xlu0 %1699
    %v1701 = vadd.f32 %v1690, %v1691
    %1702 = vadd.xlane.f32.xlu0 %v1701
    %v1703 = vpop.xlane.xlu0 %1702
    %v1704 = vadd.f32 %v1692, %v1693
    %1705 = vadd.xlane.f32.xlu0 %v1704
    %v1706 = vpop.xlane.xlu0 %1705
    %v1707 = vadd.f32 %v1694, %v1695
    %1708 = vadd.xlane.f32.xlu0 %v1707
    %v1709 = vpop.xlane.xlu0 %1708
    %v1710 = vrcp.pop 256.0
    %v1711 = vmul.f32 %v1700, %v1710
    %v1712 = vmul.f32 %v1703, %v1710
    %v1713 = vmul.f32 %v1706, %v1710
    %v1714 = vmul.f32 %v1709, %v1710
    %v1715 = vsub.f32 %v1688, %v1711
    %v1716 = vsub.f32 %v1689, %v1711
    %v1717 = vsub.f32 %v1690, %v1712
    %v1718 = vsub.f32 %v1691, %v1712
    %v1719 = vsub.f32 %v1692, %v1713
    %v1720 = vsub.f32 %v1693, %v1713
    %v1721 = vsub.f32 %v1694, %v1714
    %v1722 = vsub.f32 %v1695, %v1714
    %v1723 = vmul.f32 %v1715, %v1715
    %v1724 = vmul.f32 %v1716, %v1716
    %v1725 = vmul.f32 %v1717, %v1717
    %v1726 = vmul.f32 %v1718, %v1718
    %v1727 = vmul.f32 %v1719, %v1719
    %v1728 = vmul.f32 %v1720, %v1720
    %v1729 = vmul.f32 %v1721, %v1721
    %v1730 = vmul.f32 %v1722, %v1722
    %v1731 = vadd.f32 %v1723, %v1724
    %1732 = vadd.xlane.f32.xlu0 %v1731
    %v1733 = vpop.xlane.xlu0 %1732
    %v1734 = vadd.f32 %v1725, %v1726
    %1735 = vadd.xlane.f32.xlu0 %v1734
    %v1736 = vpop.xlane.xlu0 %1735
    %v1737 = vadd.f32 %v1727, %v1728
    %1738 = vadd.xlane.f32.xlu0 %v1737
    %v1739 = vpop.xlane.xlu0 %1738
    %v1740 = vadd.f32 %v1729, %v1730
    %1741 = vadd.xlane.f32.xlu0 %v1740
    %v1742 = vpop.xlane.xlu0 %1741
    %v1743 = vmul.f32 %v1733, %v1710
    %v1744 = vmul.f32 %v1736, %v1710
    %v1745 = vmul.f32 %v1739, %v1710
    %v1746 = vmul.f32 %v1742, %v1710
    %v1747 = vadd.f32 %v1743, 1e-06
    %v1748 = vadd.f32 %v1744, 1e-06
    %v1749 = vadd.f32 %v1745, 1e-06
    %v1750 = vadd.f32 %v1746, 1e-06
    %v1751 = vrsqrt.pop %v1747
    %v1752 = vrsqrt.pop %v1748
    %v1753 = vrsqrt.pop %v1749
    %v1754 = vrsqrt.pop %v1750
    %v1755 = vmul.f32 %v1715, %v1751
    %v1756 = vmul.f32 %v1716, %v1751
    %v1757 = vmul.f32 %v1717, %v1752
    %v1758 = vmul.f32 %v1718, %v1752
    %v1759 = vmul.f32 %v1719, %v1753
    %v1760 = vmul.f32 %v1720, %v1753
    %v1761 = vmul.f32 %v1721, %v1754
    %v1762 = vmul.f32 %v1722, %v1754
    %v1764 = vlaneseq
    %v1765 = vshrl.u32 %v1764, 7
    %v1766 = vsub.s32 0, %v1765
    %v1767 = vrot.slane %v1696, %v1766
    %v1768 = vlaneseq
    %v1769 = vshrl.u32 %v1768, 7
    %v1770 = vsub.s32 1, %v1769
    %v1771 = vrot.slane %v1696, %v1770
    %v1774 = vmul.f32 %v1755, %v1767
    %v1775 = vmul.f32 %v1756, %v1771
    %v1776 = vmul.f32 %v1757, %v1767
    %v1777 = vmul.f32 %v1758, %v1771
    %v1778 = vmul.f32 %v1759, %v1767
    %v1779 = vmul.f32 %v1760, %v1771
    %v1780 = vmul.f32 %v1761, %v1767
    %v1781 = vmul.f32 %v1762, %v1771
    %v1783 = vlaneseq
    %v1784 = vshrl.u32 %v1783, 7
    %v1785 = vsub.s32 0, %v1784
    %v1786 = vrot.slane %v1697, %v1785
    %v1787 = vlaneseq
    %v1788 = vshrl.u32 %v1787, 7
    %v1789 = vsub.s32 1, %v1788
    %v1790 = vrot.slane %v1697, %v1789
    %v1793 = vadd.f32 %v1774, %v1786
    %v1794 = vadd.f32 %v1775, %v1790
    %v1795 = vadd.f32 %v1776, %v1786
    %v1796 = vadd.f32 %v1777, %v1790
    %v1797 = vadd.f32 %v1778, %v1786
    %v1798 = vadd.f32 %v1779, %v1790
    %v1799 = vadd.f32 %v1780, %v1786
    %v1800 = vadd.f32 %v1781, %v1790
    %v1801 = vpack.c.bf16 %v205, %v203
    %v1802 = vpack.c.bf16 %v206, %v204
    %v1803 = vpack.c.bf16 %v209, %v207
    %v1804 = vpack.c.bf16 %v210, %v208
    %v1805 = vld [vmem:[#allocation10] sm:$0xff]
    %v1806 = vld [vmem:[#allocation10 + $0x8] sm:$0xff]
    %v1807 = vld [vmem:[#allocation10 + $0x10] sm:$0xff]
    %v1808 = vld [vmem:[#allocation10 + $0x18] sm:$0xff]
    %v1809 = vld [vmem:[#allocation10 + $0x20] sm:$0xff]
    %v1810 = vld [vmem:[#allocation10 + $0x28] sm:$0xff]
    %v1811 = vld [vmem:[#allocation10 + $0x30] sm:$0xff]
    %v1812 = vld [vmem:[#allocation10 + $0x38] sm:$0xff]
    %v1813 = vld [vmem:[#allocation10 + $0x40] sm:$0xff]
    %v1814 = vld [vmem:[#allocation10 + $0x48] sm:$0xff]
    %v1815 = vld [vmem:[#allocation10 + $0x50] sm:$0xff]
    %v1816 = vld [vmem:[#allocation10 + $0x58] sm:$0xff]
    %v1817 = vld [vmem:[#allocation10 + $0x60] sm:$0xff]
    %v1818 = vld [vmem:[#allocation10 + $0x68] sm:$0xff]
    %v1819 = vld [vmem:[#allocation10 + $0x70] sm:$0xff]
    %v1820 = vld [vmem:[#allocation10 + $0x78] sm:$0xff]
    %v1821 = vld [vmem:[#allocation10 + $0x80] sm:$0xff]
    %v1822 = vld [vmem:[#allocation10 + $0x88] sm:$0xff]
    %v1823 = vld [vmem:[#allocation10 + $0x90] sm:$0xff]
    %v1824 = vld [vmem:[#allocation10 + $0x98] sm:$0xff]
    %v1825 = vld [vmem:[#allocation10 + $0xa0] sm:$0xff]
    %v1826 = vld [vmem:[#allocation10 + $0xa8] sm:$0xff]
    %v1827 = vld [vmem:[#allocation10 + $0xb0] sm:$0xff]
    %v1828 = vld [vmem:[#allocation10 + $0xb8] sm:$0xff]
    %v1829 = vld [vmem:[#allocation10 + $0xc0] sm:$0xff]
    %v1830 = vld [vmem:[#allocation10 + $0xc8] sm:$0xff]
    %v1831 = vld [vmem:[#allocation10 + $0xd0] sm:$0xff]
    %v1832 = vld [vmem:[#allocation10 + $0xd8] sm:$0xff]
    %v1833 = vld [vmem:[#allocation10 + $0xe0] sm:$0xff]
    %v1834 = vld [vmem:[#allocation10 + $0xe8] sm:$0xff]
    %v1835 = vld [vmem:[#allocation10 + $0xf0] sm:$0xff]
    %v1836 = vld [vmem:[#allocation10 + $0xf8] sm:$0xff]
    %v1837 = vld [vmem:[#allocation10 + $0x100] sm:$0xff]
    %v1838 = vld [vmem:[#allocation10 + $0x108] sm:$0xff]
    %v1839 = vld [vmem:[#allocation10 + $0x110] sm:$0xff]
    %v1840 = vld [vmem:[#allocation10 + $0x118] sm:$0xff]
    %v1841 = vld [vmem:[#allocation10 + $0x120] sm:$0xff]
    %v1842 = vld [vmem:[#allocation10 + $0x128] sm:$0xff]
    %v1843 = vld [vmem:[#allocation10 + $0x130] sm:$0xff]
    %v1844 = vld [vmem:[#allocation10 + $0x138] sm:$0xff]
    %v1845 = vld [vmem:[#allocation10 + $0x140] sm:$0xff]
    %v1846 = vld [vmem:[#allocation10 + $0x148] sm:$0xff]
    %v1847 = vld [vmem:[#allocation10 + $0x150] sm:$0xff]
    %v1848 = vld [vmem:[#allocation10 + $0x158] sm:$0xff]
    %v1849 = vld [vmem:[#allocation10 + $0x160] sm:$0xff]
    %v1850 = vld [vmem:[#allocation10 + $0x168] sm:$0xff]
    %v1851 = vld [vmem:[#allocation10 + $0x170] sm:$0xff]
    %v1852 = vld [vmem:[#allocation10 + $0x178] sm:$0xff]
    %v1853 = vld [vmem:[#allocation10 + $0x180] sm:$0xff]
    %v1854 = vld [vmem:[#allocation10 + $0x188] sm:$0xff]
    %v1855 = vld [vmem:[#allocation10 + $0x190] sm:$0xff]
    %v1856 = vld [vmem:[#allocation10 + $0x198] sm:$0xff]
    %v1857 = vld [vmem:[#allocation10 + $0x1a0] sm:$0xff]
    %v1858 = vld [vmem:[#allocation10 + $0x1a8] sm:$0xff]
    %v1859 = vld [vmem:[#allocation10 + $0x1b0] sm:$0xff]
    %v1860 = vld [vmem:[#allocation10 + $0x1b8] sm:$0xff]
    %v1861 = vld [vmem:[#allocation10 + $0x1c0] sm:$0xff]
    %v1862 = vld [vmem:[#allocation10 + $0x1c8] sm:$0xff]
    %v1863 = vld [vmem:[#allocation10 + $0x1d0] sm:$0xff]
    %v1864 = vld [vmem:[#allocation10 + $0x1d8] sm:$0xff]
    %v1865 = vld [vmem:[#allocation10 + $0x1e0] sm:$0xff]
    %v1866 = vld [vmem:[#allocation10 + $0x1e8] sm:$0xff]
    %v1867 = vld [vmem:[#allocation10 + $0x1f0] sm:$0xff]
    %v1868 = vld [vmem:[#allocation10 + $0x1f8] sm:$0xff]
    %v1869 = vld [vmem:[%s9] sm:$0xf]
    %v1871 = vlaneseq
    %v1872 = vshrl.u32 %v1871, 7
    %v1873 = vsub.s32 0, %v1872
    %v1874 = vrot.slane %v1869, %v1873
    %v1875 = vlaneseq
    %v1876 = vshrl.u32 %v1875, 7
    %v1877 = vsub.s32 1, %v1876
    %v1878 = vrot.slane %v1869, %v1877
    %v1879 = vlaneseq
    %v1880 = vshrl.u32 %v1879, 7
    %v1881 = vsub.s32 2, %v1880
    %v1882 = vrot.slane %v1869, %v1881
    %v1883 = vlaneseq
    %v1884 = vshrl.u32 %v1883, 7
    %v1885 = vsub.s32 3, %v1884
    %v1886 = vrot.slane %v1869, %v1885
    %v1955 = vunpack.c.l.b16 %v1805
    %v1956 = vunpack.c.h.b16 %v1805
    %v1957 = vunpack.c.l.b16 %v1806
    %v1958 = vunpack.c.h.b16 %v1806
    %v1959 = vunpack.c.l.b16 %v1807
    %v1960 = vunpack.c.h.b16 %v1807
    %v1961 = vunpack.c.l.b16 %v1808
    %v1962 = vunpack.c.h.b16 %v1808
    %v1963 = vunpack.c.l.b16 %v1809
    %v1964 = vunpack.c.h.b16 %v1809
    %v1965 = vunpack.c.l.b16 %v1810
    %v1966 = vunpack.c.h.b16 %v1810
    %v1967 = vunpack.c.l.b16 %v1811
    %v1968 = vunpack.c.h.b16 %v1811
    %v1969 = vunpack.c.l.b16 %v1812
    %v1970 = vunpack.c.h.b16 %v1812
    %v1971 = vunpack.c.l.b16 %v1813
    %v1972 = vunpack.c.h.b16 %v1813
    %v1973 = vunpack.c.l.b16 %v1814
    %v1974 = vunpack.c.h.b16 %v1814
    %v1975 = vunpack.c.l.b16 %v1815
    %v1976 = vunpack.c.h.b16 %v1815
    %v1977 = vunpack.c.l.b16 %v1816
    %v1978 = vunpack.c.h.b16 %v1816
    %v1979 = vunpack.c.l.b16 %v1817
    %v1980 = vunpack.c.h.b16 %v1817
    %v1981 = vunpack.c.l.b16 %v1818
    %v1982 = vunpack.c.h.b16 %v1818
    %v1983 = vunpack.c.l.b16 %v1819
    %v1984 = vunpack.c.h.b16 %v1819
    %v1985 = vunpack.c.l.b16 %v1820
    %v1986 = vunpack.c.h.b16 %v1820
    %v1987 = vunpack.c.l.b16 %v1821
    %v1988 = vunpack.c.h.b16 %v1821
    %v1989 = vunpack.c.l.b16 %v1822
    %v1990 = vunpack.c.h.b16 %v1822
    %v1991 = vunpack.c.l.b16 %v1823
    %v1992 = vunpack.c.h.b16 %v1823
    %v1993 = vunpack.c.l.b16 %v1824
    %v1994 = vunpack.c.h.b16 %v1824
    %v1995 = vunpack.c.l.b16 %v1825
    %v1996 = vunpack.c.h.b16 %v1825
    %v1997 = vunpack.c.l.b16 %v1826
    %v1998 = vunpack.c.h.b16 %v1826
    %v1999 = vunpack.c.l.b16 %v1827
    %v2000 = vunpack.c.h.b16 %v1827
    %v2001 = vunpack.c.l.b16 %v1828
    %v2002 = vunpack.c.h.b16 %v1828
    %v2003 = vunpack.c.l.b16 %v1829
    %v2004 = vunpack.c.h.b16 %v1829
    %v2005 = vunpack.c.l.b16 %v1830
    %v2006 = vunpack.c.h.b16 %v1830
    %v2007 = vunpack.c.l.b16 %v1831
    %v2008 = vunpack.c.h.b16 %v1831
    %v2009 = vunpack.c.l.b16 %v1832
    %v2010 = vunpack.c.h.b16 %v1832
    %v2011 = vunpack.c.l.b16 %v1833
    %v2012 = vunpack.c.h.b16 %v1833
    %v2013 = vunpack.c.l.b16 %v1834
    %v2014 = vunpack.c.h.b16 %v1834
    %v2015 = vunpack.c.l.b16 %v1835
    %v2016 = vunpack.c.h.b16 %v1835
    %v2017 = vunpack.c.l.b16 %v1836
    %v2018 = vunpack.c.h.b16 %v1836
    %v2019 = vunpack.c.l.b16 %v1837
    %v2020 = vunpack.c.h.b16 %v1837
    %v2021 = vunpack.c.l.b16 %v1838
    %v2022 = vunpack.c.h.b16 %v1838
    %v2023 = vunpack.c.l.b16 %v1839
    %v2024 = vunpack.c.h.b16 %v1839
    %v2025 = vunpack.c.l.b16 %v1840
    %v2026 = vunpack.c.h.b16 %v1840
    %v2027 = vunpack.c.l.b16 %v1841
    %v2028 = vunpack.c.h.b16 %v1841
    %v2029 = vunpack.c.l.b16 %v1842
    %v2030 = vunpack.c.h.b16 %v1842
    %v2031 = vunpack.c.l.b16 %v1843
    %v2032 = vunpack.c.h.b16 %v1843
    %v2033 = vunpack.c.l.b16 %v1844
    %v2034 = vunpack.c.h.b16 %v1844
    %v2035 = vunpack.c.l.b16 %v1845
    %v2036 = vunpack.c.h.b16 %v1845
    %v2037 = vunpack.c.l.b16 %v1846
    %v2038 = vunpack.c.h.b16 %v1846
    %v2039 = vunpack.c.l.b16 %v1847
    %v2040 = vunpack.c.h.b16 %v1847
    %v2041 = vunpack.c.l.b16 %v1848
    %v2042 = vunpack.c.h.b16 %v1848
    %v2043 = vunpack.c.l.b16 %v1849
    %v2044 = vunpack.c.h.b16 %v1849
    %v2045 = vunpack.c.l.b16 %v1850
    %v2046 = vunpack.c.h.b16 %v1850
    %v2047 = vunpack.c.l.b16 %v1851
    %v2048 = vunpack.c.h.b16 %v1851
    %v2049 = vunpack.c.l.b16 %v1852
    %v2050 = vunpack.c.h.b16 %v1852
    %v2051 = vunpack.c.l.b16 %v1853
    %v2052 = vunpack.c.h.b16 %v1853
    %v2053 = vunpack.c.l.b16 %v1854
    %v2054 = vunpack.c.h.b16 %v1854
    %v2055 = vunpack.c.l.b16 %v1855
    %v2056 = vunpack.c.h.b16 %v1855
    %v2057 = vunpack.c.l.b16 %v1856
    %v2058 = vunpack.c.h.b16 %v1856
    %v2059 = vunpack.c.l.b16 %v1857
    %v2060 = vunpack.c.h.b16 %v1857
    %v2061 = vunpack.c.l.b16 %v1858
    %v2062 = vunpack.c.h.b16 %v1858
    %v2063 = vunpack.c.l.b16 %v1859
    %v2064 = vunpack.c.h.b16 %v1859
    %v2065 = vunpack.c.l.b16 %v1860
    %v2066 = vunpack.c.h.b16 %v1860
    %v2067 = vunpack.c.l.b16 %v1861
    %v2068 = vunpack.c.h.b16 %v1861
    %v2069 = vunpack.c.l.b16 %v1862
    %v2070 = vunpack.c.h.b16 %v1862
    %v2071 = vunpack.c.l.b16 %v1863
    %v2072 = vunpack.c.h.b16 %v1863
    %v2073 = vunpack.c.l.b16 %v1864
    %v2074 = vunpack.c.h.b16 %v1864
    %v2075 = vunpack.c.l.b16 %v1865
    %v2076 = vunpack.c.h.b16 %v1865
    %v2077 = vunpack.c.l.b16 %v1866
    %v2078 = vunpack.c.h.b16 %v1866
    %v2079 = vunpack.c.l.b16 %v1867
    %v2080 = vunpack.c.h.b16 %v1867
    %v2081 = vunpack.c.l.b16 %v1868
    %v2082 = vunpack.c.h.b16 %v1868
    %v2083 = vpack.c.b16 %v1959, %v1955
    %v2084 = vpack.c.b16 %v1960, %v1956
    %v2085 = vpack.c.b16 %v1961, %v1957
    %v2086 = vpack.c.b16 %v1962, %v1958
    %v2087 = vpack.c.b16 %v1967, %v1963
    %v2088 = vpack.c.b16 %v1968, %v1964
    %v2089 = vpack.c.b16 %v1969, %v1965
    %v2090 = vpack.c.b16 %v1970, %v1966
    %v2091 = vpack.c.b16 %v1975, %v1971
    %v2092 = vpack.c.b16 %v1976, %v1972
    %v2093 = vpack.c.b16 %v1977, %v1973
    %v2094 = vpack.c.b16 %v1978, %v1974
    %v2095 = vpack.c.b16 %v1983, %v1979
    %v2096 = vpack.c.b16 %v1984, %v1980
    %v2097 = vpack.c.b16 %v1985, %v1981
    %v2098 = vpack.c.b16 %v1986, %v1982
    %v2099 = vpack.c.b16 %v1991, %v1987
    %v2100 = vpack.c.b16 %v1992, %v1988
    %v2101 = vpack.c.b16 %v1993, %v1989
    %v2102 = vpack.c.b16 %v1994, %v1990
    %v2103 = vpack.c.b16 %v1999, %v1995
    %v2104 = vpack.c.b16 %v2000, %v1996
    %v2105 = vpack.c.b16 %v2001, %v1997
    %v2106 = vpack.c.b16 %v2002, %v1998
    %v2107 = vpack.c.b16 %v2007, %v2003
    %v2108 = vpack.c.b16 %v2008, %v2004
    %v2109 = vpack.c.b16 %v2009, %v2005
    %v2110 = vpack.c.b16 %v2010, %v2006
    %v2111 = vpack.c.b16 %v2015, %v2011
    %v2112 = vpack.c.b16 %v2016, %v2012
    %v2113 = vpack.c.b16 %v2017, %v2013
    %v2114 = vpack.c.b16 %v2018, %v2014
    %v2115 = vpack.c.b16 %v2023, %v2019
    %v2116 = vpack.c.b16 %v2024, %v2020
    %v2117 = vpack.c.b16 %v2025, %v2021
    %v2118 = vpack.c.b16 %v2026, %v2022
    %v2119 = vpack.c.b16 %v2031, %v2027
    %v2120 = vpack.c.b16 %v2032, %v2028
    %v2121 = vpack.c.b16 %v2033, %v2029
    %v2122 = vpack.c.b16 %v2034, %v2030
    %v2123 = vpack.c.b16 %v2039, %v2035
    %v2124 = vpack.c.b16 %v2040, %v2036
    %v2125 = vpack.c.b16 %v2041, %v2037
    %v2126 = vpack.c.b16 %v2042, %v2038
    %v2127 = vpack.c.b16 %v2047, %v2043
    %v2128 = vpack.c.b16 %v2048, %v2044
    %v2129 = vpack.c.b16 %v2049, %v2045
    %v2130 = vpack.c.b16 %v2050, %v2046
    %v2131 = vpack.c.b16 %v2055, %v2051
    %v2132 = vpack.c.b16 %v2056, %v2052
    %v2133 = vpack.c.b16 %v2057, %v2053
    %v2134 = vpack.c.b16 %v2058, %v2054
    %v2135 = vpack.c.b16 %v2063, %v2059
    %v2136 = vpack.c.b16 %v2064, %v2060
    %v2137 = vpack.c.b16 %v2065, %v2061
    %v2138 = vpack.c.b16 %v2066, %v2062
    %v2139 = vpack.c.b16 %v2071, %v2067
    %v2140 = vpack.c.b16 %v2072, %v2068
    %v2141 = vpack.c.b16 %v2073, %v2069
    %v2142 = vpack.c.b16 %v2074, %v2070
    %v2143 = vpack.c.b16 %v2079, %v2075
    %v2144 = vpack.c.b16 %v2080, %v2076
    %v2145 = vpack.c.b16 %v2081, %v2077
    %v2146 = vpack.c.b16 %v2082, %v2078
    %2211 = vmatprep.subr.bf16.mxu0 %v2084
    %2212 = vmatpush1.bf16.msra.mxu0 %v2083
    %2213 = vmatprep.subr.bf16.mxu0 %v2088
    %2214 = vmatpush1.bf16.msra.mxu0 %v2087
    %2215 = vmatprep.subr.bf16.mxu0 %v2092
    %2216 = vmatpush1.bf16.msra.mxu0 %v2091
    %2217 = vmatprep.subr.bf16.mxu0 %v2096
    %2218 = vmatpush1.bf16.msra.mxu0 %v2095
    %2219 = vmatprep.subr.bf16.mxu0 %v2100
    %2220 = vmatpush1.bf16.msra.mxu0 %v2099
    %2221 = vmatprep.subr.bf16.mxu0 %v2104
    %2222 = vmatpush1.bf16.msra.mxu0 %v2103
    %2223 = vmatprep.subr.bf16.mxu0 %v2108
    %2224 = vmatpush1.bf16.msra.mxu0 %v2107
    %2225 = vmatprep.subr.bf16.mxu0 %v2112
    %2226 = vmatpush1.bf16.msra.mxu0 %v2111
    %2227 = vmatprep.subr.bf16.mxu0 %v2116
    %2228 = vmatpush1.bf16.msra.mxu0 %v2115
    %2229 = vmatprep.subr.bf16.mxu0 %v2120
    %2230 = vmatpush1.bf16.msra.mxu0 %v2119
    %2231 = vmatprep.subr.bf16.mxu0 %v2124
    %2232 = vmatpush1.bf16.msra.mxu0 %v2123
    %2233 = vmatprep.subr.bf16.mxu0 %v2128
    %2234 = vmatpush1.bf16.msra.mxu0 %v2127
    %2235 = vmatprep.subr.bf16.mxu0 %v2132
    %2236 = vmatpush1.bf16.msra.mxu0 %v2131
    %2237 = vmatprep.subr.bf16.mxu0 %v2136
    %2238 = vmatpush1.bf16.msra.mxu0 %v2135
    %2239 = vmatprep.subr.bf16.mxu0 %v2140
    %2240 = vmatpush1.bf16.msra.mxu0 %v2139
    %2241 = vmatprep.subr.bf16.mxu0 %v2144
    %2242 = vmatpush1.bf16.msra.mxu0 %v2143
    %2243 = vmatprep.mubr.bf16.mxu0 %v1802
    %2244 = vmatmul.mubr.bf16.gmra.mrb[0].mxu0 %v1801
    %v2245 = vpop.f32.mrb[0].mxu0
    %v2246 = vadd.f32 %v1874, %v2245
    %v2247 = vpop.f32.mrb[0].mxu0
    %v2248 = vadd.f32 %v1878, %v2247
    %v2249 = vpop.f32.mrb[0].mxu0
    %v2250 = vadd.f32 %v1874, %v2249
    %v2251 = vpop.f32.mrb[0].mxu0
    %v2252 = vadd.f32 %v1878, %v2251
    %2253 = vmatprep.mubr.bf16.mxu0 %v1804
    %2254 = vmatmul.mubr.bf16.gmra.mrb[0].mxu0 %v1803
    %v2255 = vpop.f32.mrb[0].mxu0
    %v2256 = vadd.f32 %v1874, %v2255
    %v2257 = vpop.f32.mrb[0].mxu0
    %v2258 = vadd.f32 %v1878, %v2257
    %v2259 = vpop.f32.mrb[0].mxu0
    %v2260 = vadd.f32 %v1874, %v2259
    %v2261 = vpop.f32.mrb[0].mxu0
    %v2262 = vadd.f32 %v1878, %v2261
    %2263 = vdwg.mxu0
    %2264 = vmatprep.subr.bf16.mxu0 %v2086
    %2265 = vmatpush1.bf16.msra.mxu0 %v2085
    %2266 = vmatprep.subr.bf16.mxu0 %v2090
    %2267 = vmatpush1.bf16.msra.mxu0 %v2089
    %2268 = vmatprep.subr.bf16.mxu0 %v2094
    %2269 = vmatpush1.bf16.msra.mxu0 %v2093
    %2270 = vmatprep.subr.bf16.mxu0 %v2098
    %2271 = vmatpush1.bf16.msra.mxu0 %v2097
    %2272 = vmatprep.subr.bf16.mxu0 %v2102
    %2273 = vmatpush1.bf16.msra.mxu0 %v2101
    %2274 = vmatprep.subr.bf16.mxu0 %v2106
    %2275 = vmatpush1.bf16.msra.mxu0 %v2105
    %2276 = vmatprep.subr.bf16.mxu0 %v2110
    %2277 = vmatpush1.bf16.msra.mxu0 %v2109
    %2278 = vmatprep.subr.bf16.mxu0 %v2114
    %2279 = vmatpush1.bf16.msra.mxu0 %v2113
    %2280 = vmatprep.subr.bf16.mxu0 %v2118
    %2281 = vmatpush1.bf16.msra.mxu0 %v2117
    %2282 = vmatprep.subr.bf16.mxu0 %v2122
    %2283 = vmatpush1.bf16.msra.mxu0 %v2121
    %2284 = vmatprep.subr.bf16.mxu0 %v2126
    %2285 = vmatpush1.bf16.msra.mxu0 %v2125
    %2286 = vmatprep.subr.bf16.mxu0 %v2130
    %2287 = vmatpush1.bf16.msra.mxu0 %v2129
    %2288 = vmatprep.subr.bf16.mxu0 %v2134
    %2289 = vmatpush1.bf16.msra.mxu0 %v2133
    %2290 = vmatprep.subr.bf16.mxu0 %v2138
    %2291 = vmatpush1.bf16.msra.mxu0 %v2137
    %2292 = vmatprep.subr.bf16.mxu0 %v2142
    %2293 = vmatpush1.bf16.msra.mxu0 %v2141
    %2294 = vmatprep.subr.bf16.mxu0 %v2146
    %2295 = vmatpush1.bf16.msra.mxu0 %v2145
    %2296 = vmatprep.mubr.bf16.mxu0 %v1802
    %2297 = vmatmul.mubr.bf16.gmra.mrb[0].mxu0 %v1801
    %v2298 = vpop.f32.mrb[0].mxu0
    %v2299 = vadd.f32 %v1882, %v2298
    %v2300 = vpop.f32.mrb[0].mxu0
    %v2301 = vadd.f32 %v1886, %v2300
    %v2302 = vpop.f32.mrb[0].mxu0
    %v2303 = vadd.f32 %v1882, %v2302
    %v2304 = vpop.f32.mrb[0].mxu0
    %v2305 = vadd.f32 %v1886, %v2304
    %2306 = vmatprep.mubr.bf16.mxu0 %v1804
    %2307 = vmatmul.mubr.bf16.gmra.mrb[0].mxu0 %v1803
    %v2308 = vpop.f32.mrb[0].mxu0
    %v2309 = vadd.f32 %v1882, %v2308
    %v2310 = vpop.f32.mrb[0].mxu0
    %v2311 = vadd.f32 %v1886, %v2310
    %v2312 = vpop.f32.mrb[0].mxu0
    %v2313 = vadd.f32 %v1882, %v2312
    %v2314 = vpop.f32.mrb[0].mxu0
    %v2315 = vadd.f32 %v1886, %v2314
    %2316 = vdwg.mxu0
    %v2317 = vpack.c.bf16 %v1795, %v1793
    %v2318 = vpack.c.bf16 %v1796, %v1794
    %v2319 = vpack.c.bf16 %v1799, %v1797
    %v2320 = vpack.c.bf16 %v1800, %v1798
    %v2321 = vld [vmem:[#allocation11] sm:$0xff]
    %v2322 = vld [vmem:[#allocation11 + $0x8] sm:$0xff]
    %v2323 = vld [vmem:[#allocation11 + $0x10] sm:$0xff]
    %v2324 = vld [vmem:[#allocation11 + $0x18] sm:$0xff]
    %v2325 = vld [vmem:[#allocation11 + $0x20] sm:$0xff]
    %v2326 = vld [vmem:[#allocation11 + $0x28] sm:$0xff]
    %v2327 = vld [vmem:[#allocation11 + $0x30] sm:$0xff]
    %v2328 = vld [vmem:[#allocation11 + $0x38] sm:$0xff]
    %v2329 = vld [vmem:[#allocation11 + $0x40] sm:$0xff]
    %v2330 = vld [vmem:[#allocation11 + $0x48] sm:$0xff]
    %v2331 = vld [vmem:[#allocation11 + $0x50] sm:$0xff]
    %v2332 = vld [vmem:[#allocation11 + $0x58] sm:$0xff]
    %v2333 = vld [vmem:[#allocation11 + $0x60] sm:$0xff]
    %v2334 = vld [vmem:[#allocation11 + $0x68] sm:$0xff]
    %v2335 = vld [vmem:[#allocation11 + $0x70] sm:$0xff]
    %v2336 = vld [vmem:[#allocation11 + $0x78] sm:$0xff]
    %v2337 = vld [vmem:[#allocation11 + $0x80] sm:$0xff]
    %v2338 = vld [vmem:[#allocation11 + $0x88] sm:$0xff]
    %v2339 = vld [vmem:[#allocation11 + $0x90] sm:$0xff]
    %v2340 = vld [vmem:[#allocation11 + $0x98] sm:$0xff]
    %v2341 = vld [vmem:[#allocation11 + $0xa0] sm:$0xff]
    %v2342 = vld [vmem:[#allocation11 + $0xa8] sm:$0xff]
    %v2343 = vld [vmem:[#allocation11 + $0xb0] sm:$0xff]
    %v2344 = vld [vmem:[#allocation11 + $0xb8] sm:$0xff]
    %v2345 = vld [vmem:[#allocation11 + $0xc0] sm:$0xff]
    %v2346 = vld [vmem:[#allocation11 + $0xc8] sm:$0xff]
    %v2347 = vld [vmem:[#allocation11 + $0xd0] sm:$0xff]
    %v2348 = vld [vmem:[#allocation11 + $0xd8] sm:$0xff]
    %v2349 = vld [vmem:[#allocation11 + $0xe0] sm:$0xff]
    %v2350 = vld [vmem:[#allocation11 + $0xe8] sm:$0xff]
    %v2351 = vld [vmem:[#allocation11 + $0xf0] sm:$0xff]
    %v2352 = vld [vmem:[#allocation11 + $0xf8] sm:$0xff]
    %v2353 = vld [vmem:[%s11] sm:$0x3]
    %v2355 = vlaneseq
    %v2356 = vshrl.u32 %v2355, 7
    %v2357 = vsub.s32 0, %v2356
    %v2358 = vrot.slane %v2353, %v2357
    %v2359 = vlaneseq
    %v2360 = vshrl.u32 %v2359, 7
    %v2361 = vsub.s32 1, %v2360
    %v2362 = vrot.slane %v2353, %v2361
    %v2397 = vunpack.c.l.b16 %v2321
    %v2398 = vunpack.c.h.b16 %v2321
    %v2399 = vunpack.c.l.b16 %v2322
    %v2400 = vunpack.c.h.b16 %v2322
    %v2401 = vunpack.c.l.b16 %v2323
    %v2402 = vunpack.c.h.b16 %v2323
    %v2403 = vunpack.c.l.b16 %v2324
    %v2404 = vunpack.c.h.b16 %v2324
    %v2405 = vunpack.c.l.b16 %v2325
    %v2406 = vunpack.c.h.b16 %v2325
    %v2407 = vunpack.c.l.b16 %v2326
    %v2408 = vunpack.c.h.b16 %v2326
    %v2409 = vunpack.c.l.b16 %v2327
    %v2410 = vunpack.c.h.b16 %v2327
    %v2411 = vunpack.c.l.b16 %v2328
    %v2412 = vunpack.c.h.b16 %v2328
    %v2413 = vunpack.c.l.b16 %v2329
    %v2414 = vunpack.c.h.b16 %v2329
    %v2415 = vunpack.c.l.b16 %v2330
    %v2416 = vunpack.c.h.b16 %v2330
    %v2417 = vunpack.c.l.b16 %v2331
    %v2418 = vunpack.c.h.b16 %v2331
    %v2419 = vunpack.c.l.b16 %v2332
    %v2420 = vunpack.c.h.b16 %v2332
    %v2421 = vunpack.c.l.b16 %v2333
    %v2422 = vunpack.c.h.b16 %v2333
    %v2423 = vunpack.c.l.b16 %v2334
    %v2424 = vunpack.c.h.b16 %v2334
    %v2425 = vunpack.c.l.b16 %v2335
    %v2426 = vunpack.c.h.b16 %v2335
    %v2427 = vunpack.c.l.b16 %v2336
    %v2428 = vunpack.c.h.b16 %v2336
    %v2429 = vunpack.c.l.b16 %v2337
    %v2430 = vunpack.c.h.b16 %v2337
    %v2431 = vunpack.c.l.b16 %v2338
    %v2432 = vunpack.c.h.b16 %v2338
    %v2433 = vunpack.c.l.b16 %v2339
    %v2434 = vunpack.c.h.b16 %v2339
    %v2435 = vunpack.c.l.b16 %v2340
    %v2436 = vunpack.c.h.b16 %v2340
    %v2437 = vunpack.c.l.b16 %v2341
    %v2438 = vunpack.c.h.b16 %v2341
    %v2439 = vunpack.c.l.b16 %v2342
    %v2440 = vunpack.c.h.b16 %v2342
    %v2441 = vunpack.c.l.b16 %v2343
    %v2442 = vunpack.c.h.b16 %v2343
    %v2443 = vunpack.c.l.b16 %v2344
    %v2444 = vunpack.c.h.b16 %v2344
    %v2445 = vunpack.c.l.b16 %v2345
    %v2446 = vunpack.c.h.b16 %v2345
    %v2447 = vunpack.c.l.b16 %v2346
    %v2448 = vunpack.c.h.b16 %v2346
    %v2449 = vunpack.c.l.b16 %v2347
    %v2450 = vunpack.c.h.b16 %v2347
    %v2451 = vunpack.c.l.b16 %v2348
    %v2452 = vunpack.c.h.b16 %v2348
    %v2453 = vunpack.c.l.b16 %v2349
    %v2454 = vunpack.c.h.b16 %v2349
    %v2455 = vunpack.c.l.b16 %v2350
    %v2456 = vunpack.c.h.b16 %v2350
    %v2457 = vunpack.c.l.b16 %v2351
    %v2458 = vunpack.c.h.b16 %v2351
    %v2459 = vunpack.c.l.b16 %v2352
    %v2460 = vunpack.c.h.b16 %v2352
    %v2461 = vpack.c.b16 %v2399, %v2397
    %v2462 = vpack.c.b16 %v2400, %v2398
    %v2463 = vpack.c.b16 %v2403, %v2401
    %v2464 = vpack.c.b16 %v2404, %v2402
    %v2465 = vpack.c.b16 %v2407, %v2405
    %v2466 = vpack.c.b16 %v2408, %v2406
    %v2467 = vpack.c.b16 %v2411, %v2409
    %v2468 = vpack.c.b16 %v2412, %v2410
    %v2469 = vpack.c.b16 %v2415, %v2413
    %v2470 = vpack.c.b16 %v2416, %v2414
    %v2471 = vpack.c.b16 %v2419, %v2417
    %v2472 = vpack.c.b16 %v2420, %v2418
    %v2473 = vpack.c.b16 %v2423, %v2421
    %v2474 = vpack.c.b16 %v2424, %v2422
    %v2475 = vpack.c.b16 %v2427, %v2425
    %v2476 = vpack.c.b16 %v2428, %v2426
    %v2477 = vpack.c.b16 %v2431, %v2429
    %v2478 = vpack.c.b16 %v2432, %v2430
    %v2479 = vpack.c.b16 %v2435, %v2433
    %v2480 = vpack.c.b16 %v2436, %v2434
    %v2481 = vpack.c.b16 %v2439, %v2437
    %v2482 = vpack.c.b16 %v2440, %v2438
    %v2483 = vpack.c.b16 %v2443, %v2441
    %v2484 = vpack.c.b16 %v2444, %v2442
    %v2485 = vpack.c.b16 %v2447, %v2445
    %v2486 = vpack.c.b16 %v2448, %v2446
    %v2487 = vpack.c.b16 %v2451, %v2449
    %v2488 = vpack.c.b16 %v2452, %v2450
    %v2489 = vpack.c.b16 %v2455, %v2453
    %v2490 = vpack.c.b16 %v2456, %v2454
    %v2491 = vpack.c.b16 %v2459, %v2457
    %v2492 = vpack.c.b16 %v2460, %v2458
    %2525 = vmatprep.subr.bf16.mxu0 %v2462
    %2526 = vmatpush1.bf16.msra.mxu0 %v2461
    %2527 = vmatprep.subr.bf16.mxu0 %v2464
    %2528 = vmatpush1.bf16.msra.mxu0 %v2463
    %2529 = vmatprep.subr.bf16.mxu0 %v2466
    %2530 = vmatpush1.bf16.msra.mxu0 %v2465
    %2531 = vmatprep.subr.bf16.mxu0 %v2468
    %2532 = vmatpush1.bf16.msra.mxu0 %v2467
    %2533 = vmatprep.subr.bf16.mxu0 %v2470
    %2534 = vmatpush1.bf16.msra.mxu0 %v2469
    %2535 = vmatprep.subr.bf16.mxu0 %v2472
    %2536 = vmatpush1.bf16.msra.mxu0 %v2471
    %2537 = vmatprep.subr.bf16.mxu0 %v2474
    %2538 = vmatpush1.bf16.msra.mxu0 %v2473
    %2539 = vmatprep.subr.bf16.mxu0 %v2476
    %2540 = vmatpush1.bf16.msra.mxu0 %v2475
    %2541 = vmatprep.subr.bf16.mxu0 %v2478
    %2542 = vmatpush1.bf16.msra.mxu0 %v2477
    %2543 = vmatprep.subr.bf16.mxu0 %v2480
    %2544 = vmatpush1.bf16.msra.mxu0 %v2479
    %2545 = vmatprep.subr.bf16.mxu0 %v2482
    %2546 = vmatpush1.bf16.msra.mxu0 %v2481
    %2547 = vmatprep.subr.bf16.mxu0 %v2484
    %2548 = vmatpush1.bf16.msra.mxu0 %v2483
    %2549 = vmatprep.subr.bf16.mxu0 %v2486
    %2550 = vmatpush1.bf16.msra.mxu0 %v2485
    %2551 = vmatprep.subr.bf16.mxu0 %v2488
    %2552 = vmatpush1.bf16.msra.mxu0 %v2487
    %2553 = vmatprep.subr.bf16.mxu0 %v2490
    %2554 = vmatpush1.bf16.msra.mxu0 %v2489
    %2555 = vmatprep.subr.bf16.mxu0 %v2492
    %2556 = vmatpush1.bf16.msra.mxu0 %v2491
    %2557 = vmatprep.mubr.bf16.mxu0 %v2318
    %2558 = vmatmul.mubr.bf16.gmra.mrb[0].mxu0 %v2317
    %v2559 = vpop.f32.mrb[0].mxu0
    %v2560 = vadd.f32 %v2358, %v2559
    %v2561 = vpop.f32.mrb[0].mxu0
    %v2562 = vadd.f32 %v2362, %v2561
    %v2563 = vpop.f32.mrb[0].mxu0
    %v2564 = vadd.f32 %v2358, %v2563
    %v2565 = vpop.f32.mrb[0].mxu0
    %v2566 = vadd.f32 %v2362, %v2565
    %2567 = vmatprep.mubr.bf16.mxu0 %v2320
    %2568 = vmatmul.mubr.bf16.gmra.mrb[0].mxu0 %v2319
    %v2569 = vpop.f32.mrb[0].mxu0
    %v2570 = vadd.f32 %v2358, %v2569
    %v2571 = vpop.f32.mrb[0].mxu0
    %v2572 = vadd.f32 %v2362, %v2571
    %v2573 = vpop.f32.mrb[0].mxu0
    %v2574 = vadd.f32 %v2358, %v2573
    %v2575 = vpop.f32.mrb[0].mxu0
    %v2576 = vadd.f32 %v2362, %v2575
    %2577 = vdwg.mxu0
    %v2578 = vpack.c.bf16 %v2250, %v2246
    %v2579 = vpack.c.bf16 %v2252, %v2248
    %v2580 = vpack.c.bf16 %v2260, %v2256
    %v2581 = vpack.c.bf16 %v2262, %v2258
    %v2582 = vpack.c.bf16 %v2303, %v2299
    %v2583 = vpack.c.bf16 %v2305, %v2301
    %v2584 = vpack.c.bf16 %v2313, %v2309
    %v2585 = vpack.c.bf16 %v2315, %v2311
    %v2586 = vpack.c.bf16 %v2564, %v2560
    %v2587 = vpack.c.bf16 %v2566, %v2562
    %v2588 = vpack.c.bf16 %v2574, %v2570
    %v2589 = vpack.c.bf16 %v2576, %v2572
    %2590 = vmatprep.subr.bf16.mxu0 0
    %2591 = vmatpush1.bf16.xpose.msra.mxu0 %v2582
    %2592 = vmatprep.subr.bf16.mxu0 0
    %2593 = vmatpush1.bf16.xpose.msra.mxu0 0
    %2594 = vmatprep.subr.bf16.mxu0 0
    %2595 = vmatpush1.bf16.xpose.msra.mxu0 0
    %2596 = vmatprep.subr.bf16.mxu0 0
    %2597 = vmatpush1.bf16.xpose.msra.mxu0 0
    %2598 = vmatprep.subr.bf16.mxu0 0
    %2599 = vmatpush1.bf16.xpose.msra.mxu0 0
    %2600 = vmatprep.subr.bf16.mxu0 0
    %2601 = vmatpush1.bf16.xpose.msra.mxu0 0
    %2602 = vmatprep.subr.bf16.mxu0 0
    %2603 = vmatpush1.bf16.xpose.msra.mxu0 0
    %2604 = vmatprep.subr.bf16.mxu0 0
    %2605 = vmatpush1.bf16.xpose.msra.mxu0 0
    %2606 = vmatprep.subr.bf16.mxu0 0
    %2607 = vmatpush1.bf16.xpose.msra.mxu0 0
    %2608 = vmatprep.subr.bf16.mxu0 0
    %2609 = vmatpush1.bf16.xpose.msra.mxu0 0
    %2610 = vmatprep.subr.bf16.mxu0 0
    %2611 = vmatpush1.bf16.xpose.msra.mxu0 0
    %2612 = vmatprep.subr.bf16.mxu0 0
    %2613 = vmatpush1.bf16.xpose.msra.mxu0 0
    %2614 = vmatprep.subr.bf16.mxu0 0
    %2615 = vmatpush1.bf16.xpose.msra.mxu0 0
    %2616 = vmatprep.subr.bf16.mxu0 0
    %2617 = vmatpush1.bf16.xpose.msra.mxu0 0
    %2618 = vmatprep.subr.bf16.mxu0 0
    %2619 = vmatpush1.bf16.xpose.msra.mxu0 0
    %2620 = vmatprep.subr.bf16.mxu0 0
    %2621 = vmatpush1.bf16.xpose.msra.mxu0 0
    %2622 = vmatprep.mubr.bf16.mxu0 0
    %2623 = vmatmul.mubr.bf16.gmra.mrb[0].mxu0 %v2578
    %v2624 = vpop.f32.mrb[0].mxu0
    %v2625 = vadd.f32 0.0, %v2624
    %v2626 = vpop.f32.mrb[0].mxu0
    %v2627 = vpop.f32.mrb[0].mxu0
    %v2628 = vadd.f32 0.0, %v2627
    %v2629 = vpop.f32.mrb[0].mxu0
    %2630 = vdwg.mxu0
    %2631 = vmatprep.subr.bf16.mxu0 0
    %2632 = vmatpush1.bf16.xpose.msra.mxu0 %v2584
    %2633 = vmatprep.subr.bf16.mxu0 0
    %2634 = vmatpush1.bf16.xpose.msra.mxu0 0
    %2635 = vmatprep.subr.bf16.mxu0 0
    %2636 = vmatpush1.bf16.xpose.msra.mxu0 0
    %2637 = vmatprep.subr.bf16.mxu0 0
    %2638 = vmatpush1.bf16.xpose.msra.mxu0 0
    %2639 = vmatprep.subr.bf16.mxu0 0
    %2640 = vmatpush1.bf16.xpose.msra.mxu0 0
    %2641 = vmatprep.subr.bf16.mxu0 0
    %2642 = vmatpush1.bf16.xpose.msra.mxu0 0
    %2643 = vmatprep.subr.bf16.mxu0 0
    %2644 = vmatpush1.bf16.xpose.msra.mxu0 0
    %2645 = vmatprep.subr.bf16.mxu0 0
    %2646 = vmatpush1.bf16.xpose.msra.mxu0 0
    %2647 = vmatprep.subr.bf16.mxu0 0
    %2648 = vmatpush1.bf16.xpose.msra.mxu0 0
    %2649 = vmatprep.subr.bf16.mxu0 0
    %2650 = vmatpush1.bf16.xpose.msra.mxu0 0
    %2651 = vmatprep.subr.bf16.mxu0 0
    %2652 = vmatpush1.bf16.xpose.msra.mxu0 0
    %2653 = vmatprep.subr.bf16.mxu0 0
    %2654 = vmatpush1.bf16.xpose.msra.mxu0 0
    %2655 = vmatprep.subr.bf16.mxu0 0
    %2656 = vmatpush1.bf16.xpose.msra.mxu0 0
    %2657 = vmatprep.subr.bf16.mxu0 0
    %2658 = vmatpush1.bf16.xpose.msra.mxu0 0
    %2659 = vmatprep.subr.bf16.mxu0 0
    %2660 = vmatpush1.bf16.xpose.msra.mxu0 0
    %2661 = vmatprep.subr.bf16.mxu0 0
    %2662 = vmatpush1.bf16.xpose.msra.mxu0 0
    %2663 = vmatprep.mubr.bf16.mxu0 0
    %2664 = vmatmul.mubr.bf16.gmra.mrb[0].mxu0 %v2580
    %v2665 = vpop.f32.mrb[0].mxu0
    %v2666 = vadd.f32 0.0, %v2665
    %v2667 = vpop.f32.mrb[0].mxu0
    %v2668 = vpop.f32.mrb[0].mxu0
    %v2669 = vadd.f32 0.0, %v2668
    %v2670 = vpop.f32.mrb[0].mxu0
    %2671 = vdwg.mxu0
    %v2672 = vsel %vm1076, %v2625, -inf
    %2673 = vmax.xlane.f32.xlu0 %v2672
    %v2674 = vpop.xlane.xlu0 %2673
    %v2675 = vsel %vm1076, %v2628, -inf
    %2676 = vmax.xlane.f32.xlu0 %v2675
    %v2677 = vpop.xlane.xlu0 %2676
    %v2678 = vsel %vm1076, %v2666, -inf
    %2679 = vmax.xlane.f32.xlu0 %v2678
    %v2680 = vpop.xlane.xlu0 %2679
    %v2681 = vsel %vm1076, %v2669, -inf
    %2682 = vmax.xlane.f32.xlu0 %v2681
    %v2683 = vpop.xlane.xlu0 %2682
    %v2684 = vsub.f32 %v2625, %v2674
    %v2685 = vsub.f32 %v2628, %v2677
    %v2686 = vsub.f32 %v2666, %v2680
    %v2687 = vsub.f32 %v2669, %v2683
    %v2688 = vmul.f32 %v2684, 1.442695
    %v2689 = vpow.pop %v2688
    %v2690 = vmul.f32 %v2685, 1.442695
    %v2691 = vpow.pop %v2690
    %v2692 = vmul.f32 %v2686, 1.442695
    %v2693 = vpow.pop %v2692
    %v2694 = vmul.f32 %v2687, 1.442695
    %v2695 = vpow.pop %v2694
    %v2696 = vsel %vm1076, %v2689, 0.0
    %2697 = vadd.xlane.f32.xlu0 %v2696
    %v2698 = vpop.xlane.xlu0 %2697
    %v2699 = vsel %vm1076, %v2691, 0.0
    %2700 = vadd.xlane.f32.xlu0 %v2699
    %v2701 = vpop.xlane.xlu0 %2700
    %v2702 = vsel %vm1076, %v2693, 0.0
    %2703 = vadd.xlane.f32.xlu0 %v2702
    %v2704 = vpop.xlane.xlu0 %2703
    %v2705 = vsel %vm1076, %v2695, 0.0
    %2706 = vadd.xlane.f32.xlu0 %v2705
    %v2707 = vpop.xlane.xlu0 %2706
    %v2708 = vpack.c.bf16 %v2691, %v2689
    %v2709 = vpack.c.bf16 %v2695, %v2693
    %v2711 = vsel %vm1076, %v2708, 0
    %2713 = vmatprep.subr.bf16.mxu0 0
    %2714 = vmatpush1.bf16.msra.mxu0 %v2586
    %2715 = vmatprep.subr.bf16.mxu0 0
    %2716 = vmatpush1.bf16.msra.mxu0 0
    %2717 = vmatprep.subr.bf16.mxu0 0
    %2718 = vmatpush1.bf16.msra.mxu0 0
    %2719 = vmatprep.subr.bf16.mxu0 0
    %2720 = vmatpush1.bf16.msra.mxu0 0
    %2721 = vmatprep.subr.bf16.mxu0 0
    %2722 = vmatpush1.bf16.msra.mxu0 0
    %2723 = vmatprep.subr.bf16.mxu0 0
    %2724 = vmatpush1.bf16.msra.mxu0 0
    %2725 = vmatprep.subr.bf16.mxu0 0
    %2726 = vmatpush1.bf16.msra.mxu0 0
    %2727 = vmatprep.subr.bf16.mxu0 0
    %2728 = vmatpush1.bf16.msra.mxu0 0
    %2729 = vmatprep.subr.bf16.mxu0 0
    %2730 = vmatpush1.bf16.msra.mxu0 0
    %2731 = vmatprep.subr.bf16.mxu0 0
    %2732 = vmatpush1.bf16.msra.mxu0 0
    %2733 = vmatprep.subr.bf16.mxu0 0
    %2734 = vmatpush1.bf16.msra.mxu0 0
    %2735 = vmatprep.subr.bf16.mxu0 0
    %2736 = vmatpush1.bf16.msra.mxu0 0
    %2737 = vmatprep.subr.bf16.mxu0 0
    %2738 = vmatpush1.bf16.msra.mxu0 0
    %2739 = vmatprep.subr.bf16.mxu0 0
    %2740 = vmatpush1.bf16.msra.mxu0 0
    %2741 = vmatprep.subr.bf16.mxu0 0
    %2742 = vmatpush1.bf16.msra.mxu0 0
    %2743 = vmatprep.subr.bf16.mxu0 0
    %2744 = vmatpush1.bf16.msra.mxu0 0
    %2745 = vmatprep.mubr.bf16.mxu0 0
    %2746 = vmatmul.mubr.bf16.gmra.mrb[0].mxu0 %v2711
    %v2747 = vpop.f32.mrb[0].mxu0
    %v2748 = vadd.f32 0.0, %v2747
    %v2749 = vpop.f32.mrb[0].mxu0
    %v2750 = vpop.f32.mrb[0].mxu0
    %v2751 = vadd.f32 0.0, %v2750
    %v2752 = vpop.f32.mrb[0].mxu0
    %2753 = vdwg.mxu0
    %v2755 = vsel %vm1076, %v2709, 0
    %2757 = vmatprep.subr.bf16.mxu0 0
    %2758 = vmatpush1.bf16.msra.mxu0 %v2588
    %2759 = vmatprep.subr.bf16.mxu0 0
    %2760 = vmatpush1.bf16.msra.mxu0 0
    %2761 = vmatprep.subr.bf16.mxu0 0
    %2762 = vmatpush1.bf16.msra.mxu0 0
    %2763 = vmatprep.subr.bf16.mxu0 0
    %2764 = vmatpush1.bf16.msra.mxu0 0
    %2765 = vmatprep.subr.bf16.mxu0 0
    %2766 = vmatpush1.bf16.msra.mxu0 0
    %2767 = vmatprep.subr.bf16.mxu0 0
    %2768 = vmatpush1.bf16.msra.mxu0 0
    %2769 = vmatprep.subr.bf16.mxu0 0
    %2770 = vmatpush1.bf16.msra.mxu0 0
    %2771 = vmatprep.subr.bf16.mxu0 0
    %2772 = vmatpush1.bf16.msra.mxu0 0
    %2773 = vmatprep.subr.bf16.mxu0 0
    %2774 = vmatpush1.bf16.msra.mxu0 0
    %2775 = vmatprep.subr.bf16.mxu0 0
    %2776 = vmatpush1.bf16.msra.mxu0 0
    %2777 = vmatprep.subr.bf16.mxu0 0
    %2778 = vmatpush1.bf16.msra.mxu0 0
    %2779 = vmatprep.subr.bf16.mxu0 0
    %2780 = vmatpush1.bf16.msra.mxu0 0
    %2781 = vmatprep.subr.bf16.mxu0 0
    %2782 = vmatpush1.bf16.msra.mxu0 0
    %2783 = vmatprep.subr.bf16.mxu0 0
    %2784 = vmatpush1.bf16.msra.mxu0 0
    %2785 = vmatprep.subr.bf16.mxu0 0
    %2786 = vmatpush1.bf16.msra.mxu0 0
    %2787 = vmatprep.subr.bf16.mxu0 0
    %2788 = vmatpush1.bf16.msra.mxu0 0
    %2789 = vmatprep.mubr.bf16.mxu0 0
    %2790 = vmatmul.mubr.bf16.gmra.mrb[0].mxu0 %v2755
    %v2791 = vpop.f32.mrb[0].mxu0
    %v2792 = vadd.f32 0.0, %v2791
    %v2793 = vpop.f32.mrb[0].mxu0
    %v2794 = vpop.f32.mrb[0].mxu0
    %v2795 = vadd.f32 0.0, %v2794
    %v2796 = vpop.f32.mrb[0].mxu0
    %2797 = vdwg.mxu0
    %v2798 = vrcp.pop %v2698
    %v2799 = vrcp.pop %v2701
    %v2800 = vrcp.pop %v2704
    %v2801 = vrcp.pop %v2707
    %v2802 = vmul.f32 %v2748, %v2798
    %v2803 = vmul.f32 %v2751, %v2799
    %v2804 = vmul.f32 %v2792, %v2800
    %v2805 = vmul.f32 %v2795, %v2801
    %2806 = vmatprep.subr.bf16.mxu0 0
    %2807 = vmatpush1.bf16.xpose.msra.mxu0 %v2583
    %2808 = vmatprep.subr.bf16.mxu0 0
    %2809 = vmatpush1.bf16.xpose.msra.mxu0 0
    %2810 = vmatprep.subr.bf16.mxu0 0
    %2811 = vmatpush1.bf16.xpose.msra.mxu0 0
    %2812 = vmatprep.subr.bf16.mxu0 0
    %2813 = vmatpush1.bf16.xpose.msra.mxu0 0
    %2814 = vmatprep.subr.bf16.mxu0 0
    %2815 = vmatpush1.bf16.xpose.msra.mxu0 0
    %2816 = vmatprep.subr.bf16.mxu0 0
    %2817 = vmatpush1.bf16.xpose.msra.mxu0 0
    %2818 = vmatprep.subr.bf16.mxu0 0
    %2819 = vmatpush1.bf16.xpose.msra.mxu0 0
    %2820 = vmatprep.subr.bf16.mxu0 0
    %2821 = vmatpush1.bf16.xpose.msra.mxu0 0
    %2822 = vmatprep.subr.bf16.mxu0 0
    %2823 = vmatpush1.bf16.xpose.msra.mxu0 0
    %2824 = vmatprep.subr.bf16.mxu0 0
    %2825 = vmatpush1.bf16.xpose.msra.mxu0 0
    %2826 = vmatprep.subr.bf16.mxu0 0
    %2827 = vmatpush1.bf16.xpose.msra.mxu0 0
    %2828 = vmatprep.subr.bf16.mxu0 0
    %2829 = vmatpush1.bf16.xpose.msra.mxu0 0
    %2830 = vmatprep.subr.bf16.mxu0 0
    %2831 = vmatpush1.bf16.xpose.msra.mxu0 0
    %2832 = vmatprep.subr.bf16.mxu0 0
    %2833 = vmatpush1.bf16.xpose.msra.mxu0 0
    %2834 = vmatprep.subr.bf16.mxu0 0
    %2835 = vmatpush1.bf16.xpose.msra.mxu0 0
    %2836 = vmatprep.subr.bf16.mxu0 0
    %2837 = vmatpush1.bf16.xpose.msra.mxu0 0
    %2838 = vmatprep.mubr.bf16.mxu0 0
    %2839 = vmatmul.mubr.bf16.gmra.mrb[0].mxu0 %v2579
    %v2840 = vpop.f32.mrb[0].mxu0
    %v2841 = vadd.f32 0.0, %v2840
    %v2842 = vpop.f32.mrb[0].mxu0
    %v2843 = vpop.f32.mrb[0].mxu0
    %v2844 = vadd.f32 0.0, %v2843
    %v2845 = vpop.f32.mrb[0].mxu0
    %2846 = vdwg.mxu0
    %2847 = vmatprep.subr.bf16.mxu0 0
    %2848 = vmatpush1.bf16.xpose.msra.mxu0 %v2585
    %2849 = vmatprep.subr.bf16.mxu0 0
    %2850 = vmatpush1.bf16.xpose.msra.mxu0 0
    %2851 = vmatprep.subr.bf16.mxu0 0
    %2852 = vmatpush1.bf16.xpose.msra.mxu0 0
    %2853 = vmatprep.subr.bf16.mxu0 0
    %2854 = vmatpush1.bf16.xpose.msra.mxu0 0
    %2855 = vmatprep.subr.bf16.mxu0 0
    %2856 = vmatpush1.bf16.xpose.msra.mxu0 0
    %2857 = vmatprep.subr.bf16.mxu0 0
    %2858 = vmatpush1.bf16.xpose.msra.mxu0 0
    %2859 = vmatprep.subr.bf16.mxu0 0
    %2860 = vmatpush1.bf16.xpose.msra.mxu0 0
    %2861 = vmatprep.subr.bf16.mxu0 0
    %2862 = vmatpush1.bf16.xpose.msra.mxu0 0
    %2863 = vmatprep.subr.bf16.mxu0 0
    %2864 = vmatpush1.bf16.xpose.msra.mxu0 0
    %2865 = vmatprep.subr.bf16.mxu0 0
    %2866 = vmatpush1.bf16.xpose.msra.mxu0 0
    %2867 = vmatprep.subr.bf16.mxu0 0
    %2868 = vmatpush1.bf16.xpose.msra.mxu0 0
    %2869 = vmatprep.subr.bf16.mxu0 0
    %2870 = vmatpush1.bf16.xpose.msra.mxu0 0
    %2871 = vmatprep.subr.bf16.mxu0 0
    %2872 = vmatpush1.bf16.xpose.msra.mxu0 0
    %2873 = vmatprep.subr.bf16.mxu0 0
    %2874 = vmatpush1.bf16.xpose.msra.mxu0 0
    %2875 = vmatprep.subr.bf16.mxu0 0
    %2876 = vmatpush1.bf16.xpose.msra.mxu0 0
    %2877 = vmatprep.subr.bf16.mxu0 0
    %2878 = vmatpush1.bf16.xpose.msra.mxu0 0
    %2879 = vmatprep.mubr.bf16.mxu0 0
    %2880 = vmatmul.mubr.bf16.gmra.mrb[0].mxu0 %v2581
    %v2881 = vpop.f32.mrb[0].mxu0
    %v2882 = vadd.f32 0.0, %v2881
    %v2883 = vpop.f32.mrb[0].mxu0
    %v2884 = vpop.f32.mrb[0].mxu0
    %v2885 = vadd.f32 0.0, %v2884
    %v2886 = vpop.f32.mrb[0].mxu0
    %2887 = vdwg.mxu0
    %v2888 = vsel %vm1076, %v2841, -inf
    %2889 = vmax.xlane.f32.xlu0 %v2888
    %v2890 = vpop.xlane.xlu0 %2889
    %v2891 = vsel %vm1076, %v2844, -inf
    %2892 = vmax.xlane.f32.xlu0 %v2891
    %v2893 = vpop.xlane.xlu0 %2892
    %v2894 = vsel %vm1076, %v2882, -inf
    %2895 = vmax.xlane.f32.xlu0 %v2894
    %v2896 = vpop.xlane.xlu0 %2895
    %v2897 = vsel %vm1076, %v2885, -inf
    %2898 = vmax.xlane.f32.xlu0 %v2897
    %v2899 = vpop.xlane.xlu0 %2898
    %v2900 = vsub.f32 %v2841, %v2890
    %v2901 = vsub.f32 %v2844, %v2893
    %v2902 = vsub.f32 %v2882, %v2896
    %v2903 = vsub.f32 %v2885, %v2899
    %v2904 = vmul.f32 %v2900, 1.442695
    %v2905 = vpow.pop %v2904
    %v2906 = vmul.f32 %v2901, 1.442695
    %v2907 = vpow.pop %v2906
    %v2908 = vmul.f32 %v2902, 1.442695
    %v2909 = vpow.pop %v2908
    %v2910 = vmul.f32 %v2903, 1.442695
    %v2911 = vpow.pop %v2910
    %v2912 = vsel %vm1076, %v2905, 0.0
    %2913 = vadd.xlane.f32.xlu0 %v2912
    %v2914 = vpop.xlane.xlu0 %2913
    %v2915 = vsel %vm1076, %v2907, 0.0
    %2916 = vadd.xlane.f32.xlu0 %v2915
    %v2917 = vpop.xlane.xlu0 %2916
    %v2918 = vsel %vm1076, %v2909, 0.0
    %2919 = vadd.xlane.f32.xlu0 %v2918
    %v2920 = vpop.xlane.xlu0 %2919
    %v2921 = vsel %vm1076, %v2911, 0.0
    %2922 = vadd.xlane.f32.xlu0 %v2921
    %v2923 = vpop.xlane.xlu0 %2922
    %v2924 = vpack.c.bf16 %v2907, %v2905
    %v2925 = vpack.c.bf16 %v2911, %v2909
    %v2927 = vsel %vm1076, %v2924, 0
    %2929 = vmatprep.subr.bf16.mxu0 0
    %2930 = vmatpush1.bf16.msra.mxu0 %v2587
    %2931 = vmatprep.subr.bf16.mxu0 0
    %2932 = vmatpush1.bf16.msra.mxu0 0
    %2933 = vmatprep.subr.bf16.mxu0 0
    %2934 = vmatpush1.bf16.msra.mxu0 0
    %2935 = vmatprep.subr.bf16.mxu0 0
    %2936 = vmatpush1.bf16.msra.mxu0 0
    %2937 = vmatprep.subr.bf16.mxu0 0
    %2938 = vmatpush1.bf16.msra.mxu0 0
    %2939 = vmatprep.subr.bf16.mxu0 0
    %2940 = vmatpush1.bf16.msra.mxu0 0
    %2941 = vmatprep.subr.bf16.mxu0 0
    %2942 = vmatpush1.bf16.msra.mxu0 0
    %2943 = vmatprep.subr.bf16.mxu0 0
    %2944 = vmatpush1.bf16.msra.mxu0 0
    %2945 = vmatprep.subr.bf16.mxu0 0
    %2946 = vmatpush1.bf16.msra.mxu0 0
    %2947 = vmatprep.subr.bf16.mxu0 0
    %2948 = vmatpush1.bf16.msra.mxu0 0
    %2949 = vmatprep.subr.bf16.mxu0 0
    %2950 = vmatpush1.bf16.msra.mxu0 0
    %2951 = vmatprep.subr.bf16.mxu0 0
    %2952 = vmatpush1.bf16.msra.mxu0 0
    %2953 = vmatprep.subr.bf16.mxu0 0
    %2954 = vmatpush1.bf16.msra.mxu0 0
    %2955 = vmatprep.subr.bf16.mxu0 0
    %2956 = vmatpush1.bf16.msra.mxu0 0
    %2957 = vmatprep.subr.bf16.mxu0 0
    %2958 = vmatpush1.bf16.msra.mxu0 0
    %2959 = vmatprep.subr.bf16.mxu0 0
    %2960 = vmatpush1.bf16.msra.mxu0 0
    %2961 = vmatprep.mubr.bf16.mxu0 0
    %2962 = vmatmul.mubr.bf16.gmra.mrb[0].mxu0 %v2927
    %v2963 = vpop.f32.mrb[0].mxu0
    %v2964 = vadd.f32 0.0, %v2963
    %v2965 = vpop.f32.mrb[0].mxu0
    %v2966 = vpop.f32.mrb[0].mxu0
    %v2967 = vadd.f32 0.0, %v2966
    %v2968 = vpop.f32.mrb[0].mxu0
    %2969 = vdwg.mxu0
    %v2971 = vsel %vm1076, %v2925, 0
    %2973 = vmatprep.subr.bf16.mxu0 0
    %2974 = vmatpush1.bf16.msra.mxu0 %v2589
    %2975 = vmatprep.subr.bf16.mxu0 0
    %2976 = vmatpush1.bf16.msra.mxu0 0
    %2977 = vmatprep.subr.bf16.mxu0 0
    %2978 = vmatpush1.bf16.msra.mxu0 0
    %2979 = vmatprep.subr.bf16.mxu0 0
    %2980 = vmatpush1.bf16.msra.mxu0 0
    %2981 = vmatprep.subr.bf16.mxu0 0
    %2982 = vmatpush1.bf16.msra.mxu0 0
    %2983 = vmatprep.subr.bf16.mxu0 0
    %2984 = vmatpush1.bf16.msra.mxu0 0
    %2985 = vmatprep.subr.bf16.mxu0 0
    %2986 = vmatpush1.bf16.msra.mxu0 0
    %2987 = vmatprep.subr.bf16.mxu0 0
    %2988 = vmatpush1.bf16.msra.mxu0 0
    %2989 = vmatprep.subr.bf16.mxu0 0
    %2990 = vmatpush1.bf16.msra.mxu0 0
    %2991 = vmatprep.subr.bf16.mxu0 0
    %2992 = vmatpush1.bf16.msra.mxu0 0
    %2993 = vmatprep.subr.bf16.mxu0 0
    %2994 = vmatpush1.bf16.msra.mxu0 0
    %2995 = vmatprep.subr.bf16.mxu0 0
    %2996 = vmatpush1.bf16.msra.mxu0 0
    %2997 = vmatprep.subr.bf16.mxu0 0
    %2998 = vmatpush1.bf16.msra.mxu0 0
    %2999 = vmatprep.subr.bf16.mxu0 0
    %3000 = vmatpush1.bf16.msra.mxu0 0
    %3001 = vmatprep.subr.bf16.mxu0 0
    %3002 = vmatpush1.bf16.msra.mxu0 0
    %3003 = vmatprep.subr.bf16.mxu0 0
    %3004 = vmatpush1.bf16.msra.mxu0 0
    %3005 = vmatprep.mubr.bf16.mxu0 0
    %3006 = vmatmul.mubr.bf16.gmra.mrb[0].mxu0 %v2971
    %v3007 = vpop.f32.mrb[0].mxu0
    %v3008 = vadd.f32 0.0, %v3007
    %v3009 = vpop.f32.mrb[0].mxu0
    %v3010 = vpop.f32.mrb[0].mxu0
    %v3011 = vadd.f32 0.0, %v3010
    %v3012 = vpop.f32.mrb[0].mxu0
    %3013 = vdwg.mxu0
    %v3014 = vrcp.pop %v2914
    %v3015 = vrcp.pop %v2917
    %v3016 = vrcp.pop %v2920
    %v3017 = vrcp.pop %v2923
    %v3018 = vmul.f32 %v2964, %v3014
    %v3019 = vmul.f32 %v2967, %v3015
    %v3020 = vmul.f32 %v3008, %v3016
    %v3021 = vmul.f32 %v3011, %v3017
    %v3022 = vpack.c.bf16 %v2803, %v2802
    %v3023 = vpack.c.bf16 %v3019, %v3018
    %v3024 = vpack.c.bf16 %v2805, %v2804
    %v3025 = vpack.c.bf16 %v3021, %v3020
    %v3026 = vld [vmem:[#allocation13] sm:$0xff]
    %v3027 = vld [vmem:[#allocation13 + $0x8] sm:$0xff]
    %v3028 = vld [vmem:[#allocation13 + $0x10] sm:$0xff]
    %v3029 = vld [vmem:[#allocation13 + $0x18] sm:$0xff]
    %v3030 = vld [vmem:[#allocation13 + $0x20] sm:$0xff]
    %v3031 = vld [vmem:[#allocation13 + $0x28] sm:$0xff]
    %v3032 = vld [vmem:[#allocation13 + $0x30] sm:$0xff]
    %v3033 = vld [vmem:[#allocation13 + $0x38] sm:$0xff]
    %v3034 = vld [vmem:[#allocation13 + $0x40] sm:$0xff]
    %v3035 = vld [vmem:[#allocation13 + $0x48] sm:$0xff]
    %v3036 = vld [vmem:[#allocation13 + $0x50] sm:$0xff]
    %v3037 = vld [vmem:[#allocation13 + $0x58] sm:$0xff]
    %v3038 = vld [vmem:[#allocation13 + $0x60] sm:$0xff]
    %v3039 = vld [vmem:[#allocation13 + $0x68] sm:$0xff]
    %v3040 = vld [vmem:[#allocation13 + $0x70] sm:$0xff]
    %v3041 = vld [vmem:[#allocation13 + $0x78] sm:$0xff]
    %v3042 = vld [vmem:[#allocation13 + $0x80] sm:$0xff]
    %v3043 = vld [vmem:[#allocation13 + $0x88] sm:$0xff]
    %v3044 = vld [vmem:[#allocation13 + $0x90] sm:$0xff]
    %v3045 = vld [vmem:[#allocation13 + $0x98] sm:$0xff]
    %v3046 = vld [vmem:[#allocation13 + $0xa0] sm:$0xff]
    %v3047 = vld [vmem:[#allocation13 + $0xa8] sm:$0xff]
    %v3048 = vld [vmem:[#allocation13 + $0xb0] sm:$0xff]
    %v3049 = vld [vmem:[#allocation13 + $0xb8] sm:$0xff]
    %v3050 = vld [vmem:[#allocation13 + $0xc0] sm:$0xff]
    %v3051 = vld [vmem:[#allocation13 + $0xc8] sm:$0xff]
    %v3052 = vld [vmem:[#allocation13 + $0xd0] sm:$0xff]
    %v3053 = vld [vmem:[#allocation13 + $0xd8] sm:$0xff]
    %v3054 = vld [vmem:[#allocation13 + $0xe0] sm:$0xff]
    %v3055 = vld [vmem:[#allocation13 + $0xe8] sm:$0xff]
    %v3056 = vld [vmem:[#allocation13 + $0xf0] sm:$0xff]
    %v3057 = vld [vmem:[#allocation13 + $0xf8] sm:$0xff]
    %v3058 = vld [vmem:[%s13] sm:$0x3]
    %v3060 = vlaneseq
    %v3061 = vshrl.u32 %v3060, 7
    %v3062 = vsub.s32 0, %v3061
    %v3063 = vrot.slane %v3058, %v3062
    %v3064 = vlaneseq
    %v3065 = vshrl.u32 %v3064, 7
    %v3066 = vsub.s32 1, %v3065
    %v3067 = vrot.slane %v3058, %v3066
    %v3102 = vunpack.c.l.b16 %v3026
    %v3103 = vunpack.c.h.b16 %v3026
    %v3104 = vunpack.c.l.b16 %v3027
    %v3105 = vunpack.c.h.b16 %v3027
    %v3106 = vunpack.c.l.b16 %v3028
    %v3107 = vunpack.c.h.b16 %v3028
    %v3108 = vunpack.c.l.b16 %v3029
    %v3109 = vunpack.c.h.b16 %v3029
    %v3110 = vunpack.c.l.b16 %v3030
    %v3111 = vunpack.c.h.b16 %v3030
    %v3112 = vunpack.c.l.b16 %v3031
    %v3113 = vunpack.c.h.b16 %v3031
    %v3114 = vunpack.c.l.b16 %v3032
    %v3115 = vunpack.c.h.b16 %v3032
    %v3116 = vunpack.c.l.b16 %v3033
    %v3117 = vunpack.c.h.b16 %v3033
    %v3118 = vunpack.c.l.b16 %v3034
    %v3119 = vunpack.c.h.b16 %v3034
    %v3120 = vunpack.c.l.b16 %v3035
    %v3121 = vunpack.c.h.b16 %v3035
    %v3122 = vunpack.c.l.b16 %v3036
    %v3123 = vunpack.c.h.b16 %v3036
    %v3124 = vunpack.c.l.b16 %v3037
    %v3125 = vunpack.c.h.b16 %v3037
    %v3126 = vunpack.c.l.b16 %v3038
    %v3127 = vunpack.c.h.b16 %v3038
    %v3128 = vunpack.c.l.b16 %v3039
    %v3129 = vunpack.c.h.b16 %v3039
    %v3130 = vunpack.c.l.b16 %v3040
    %v3131 = vunpack.c.h.b16 %v3040
    %v3132 = vunpack.c.l.b16 %v3041
    %v3133 = vunpack.c.h.b16 %v3041
    %v3134 = vunpack.c.l.b16 %v3042
    %v3135 = vunpack.c.h.b16 %v3042
    %v3136 = vunpack.c.l.b16 %v3043
    %v3137 = vunpack.c.h.b16 %v3043
    %v3138 = vunpack.c.l.b16 %v3044
    %v3139 = vunpack.c.h.b16 %v3044
    %v3140 = vunpack.c.l.b16 %v3045
    %v3141 = vunpack.c.h.b16 %v3045
    %v3142 = vunpack.c.l.b16 %v3046
    %v3143 = vunpack.c.h.b16 %v3046
    %v3144 = vunpack.c.l.b16 %v3047
    %v3145 = vunpack.c.h.b16 %v3047
    %v3146 = vunpack.c.l.b16 %v3048
    %v3147 = vunpack.c.h.b16 %v3048
    %v3148 = vunpack.c.l.b16 %v3049
    %v3149 = vunpack.c.h.b16 %v3049
    %v3150 = vunpack.c.l.b16 %v3050
    %v3151 = vunpack.c.h.b16 %v3050
    %v3152 = vunpack.c.l.b16 %v3051
    %v3153 = vunpack.c.h.b16 %v3051
    %v3154 = vunpack.c.l.b16 %v3052
    %v3155 = vunpack.c.h.b16 %v3052
    %v3156 = vunpack.c.l.b16 %v3053
    %v3157 = vunpack.c.h.b16 %v3053
    %v3158 = vunpack.c.l.b16 %v3054
    %v3159 = vunpack.c.h.b16 %v3054
    %v3160 = vunpack.c.l.b16 %v3055
    %v3161 = vunpack.c.h.b16 %v3055
    %v3162 = vunpack.c.l.b16 %v3056
    %v3163 = vunpack.c.h.b16 %v3056
    %v3164 = vunpack.c.l.b16 %v3057
    %v3165 = vunpack.c.h.b16 %v3057
    %v3166 = vpack.c.b16 %v3104, %v3102
    %v3167 = vpack.c.b16 %v3105, %v3103
    %v3168 = vpack.c.b16 %v3108, %v3106
    %v3169 = vpack.c.b16 %v3109, %v3107
    %v3170 = vpack.c.b16 %v3112, %v3110
    %v3171 = vpack.c.b16 %v3113, %v3111
    %v3172 = vpack.c.b16 %v3116, %v3114
    %v3173 = vpack.c.b16 %v3117, %v3115
    %v3174 = vpack.c.b16 %v3120, %v3118
    %v3175 = vpack.c.b16 %v3121, %v3119
    %v3176 = vpack.c.b16 %v3124, %v3122
    %v3177 = vpack.c.b16 %v3125, %v3123
    %v3178 = vpack.c.b16 %v3128, %v3126
    %v3179 = vpack.c.b16 %v3129, %v3127
    %v3180 = vpack.c.b16 %v3132, %v3130
    %v3181 = vpack.c.b16 %v3133, %v3131
    %v3182 = vpack.c.b16 %v3136, %v3134
    %v3183 = vpack.c.b16 %v3137, %v3135
    %v3184 = vpack.c.b16 %v3140, %v3138
    %v3185 = vpack.c.b16 %v3141, %v3139
    %v3186 = vpack.c.b16 %v3144, %v3142
    %v3187 = vpack.c.b16 %v3145, %v3143
    %v3188 = vpack.c.b16 %v3148, %v3146
    %v3189 = vpack.c.b16 %v3149, %v3147
    %v3190 = vpack.c.b16 %v3152, %v3150
    %v3191 = vpack.c.b16 %v3153, %v3151
    %v3192 = vpack.c.b16 %v3156, %v3154
    %v3193 = vpack.c.b16 %v3157, %v3155
    %v3194 = vpack.c.b16 %v3160, %v3158
    %v3195 = vpack.c.b16 %v3161, %v3159
    %v3196 = vpack.c.b16 %v3164, %v3162
    %v3197 = vpack.c.b16 %v3165, %v3163
    %3230 = vmatprep.subr.bf16.mxu0 %v3167
    %3231 = vmatpush1.bf16.msra.mxu0 %v3166
    %3232 = vmatprep.subr.bf16.mxu0 %v3169
    %3233 = vmatpush1.bf16.msra.mxu0 %v3168
    %3234 = vmatprep.subr.bf16.mxu0 %v3171
    %3235 = vmatpush1.bf16.msra.mxu0 %v3170
    %3236 = vmatprep.subr.bf16.mxu0 %v3173
    %3237 = vmatpush1.bf16.msra.mxu0 %v3172
    %3238 = vmatprep.subr.bf16.mxu0 %v3175
    %3239 = vmatpush1.bf16.msra.mxu0 %v3174
    %3240 = vmatprep.subr.bf16.mxu0 %v3177
    %3241 = vmatpush1.bf16.msra.mxu0 %v3176
    %3242 = vmatprep.subr.bf16.mxu0 %v3179
    %3243 = vmatpush1.bf16.msra.mxu0 %v3178
    %3244 = vmatprep.subr.bf16.mxu0 %v3181
    %3245 = vmatpush1.bf16.msra.mxu0 %v3180
    %3246 = vmatprep.subr.bf16.mxu0 %v3183
    %3247 = vmatpush1.bf16.msra.mxu0 %v3182
    %3248 = vmatprep.subr.bf16.mxu0 %v3185
    %3249 = vmatpush1.bf16.msra.mxu0 %v3184
    %3250 = vmatprep.subr.bf16.mxu0 %v3187
    %3251 = vmatpush1.bf16.msra.mxu0 %v3186
    %3252 = vmatprep.subr.bf16.mxu0 %v3189
    %3253 = vmatpush1.bf16.msra.mxu0 %v3188
    %3254 = vmatprep.subr.bf16.mxu0 %v3191
    %3255 = vmatpush1.bf16.msra.mxu0 %v3190
    %3256 = vmatprep.subr.bf16.mxu0 %v3193
    %3257 = vmatpush1.bf16.msra.mxu0 %v3192
    %3258 = vmatprep.subr.bf16.mxu0 %v3195
    %3259 = vmatpush1.bf16.msra.mxu0 %v3194
    %3260 = vmatprep.subr.bf16.mxu0 %v3197
    %3261 = vmatpush1.bf16.msra.mxu0 %v3196
    %3262 = vmatprep.mubr.bf16.mxu0 %v3023
    %3263 = vmatmul.mubr.bf16.gmra.mrb[0].mxu0 %v3022
    %v3264 = vpop.f32.mrb[0].mxu0
    %v3265 = vadd.f32 %v3063, %v3264
    %v3266 = vpop.f32.mrb[0].mxu0
    %v3267 = vadd.f32 %v3067, %v3266
    %v3268 = vpop.f32.mrb[0].mxu0
    %v3269 = vadd.f32 %v3063, %v3268
    %v3270 = vpop.f32.mrb[0].mxu0
    %v3271 = vadd.f32 %v3067, %v3270
    %3272 = vmatprep.mubr.bf16.mxu0 %v3025
    %3273 = vmatmul.mubr.bf16.gmra.mrb[0].mxu0 %v3024
    %v3274 = vpop.f32.mrb[0].mxu0
    %v3275 = vadd.f32 %v3063, %v3274
    %v3276 = vpop.f32.mrb[0].mxu0
    %v3277 = vadd.f32 %v3067, %v3276
    %v3278 = vpop.f32.mrb[0].mxu0
    %v3279 = vadd.f32 %v3063, %v3278
    %v3280 = vpop.f32.mrb[0].mxu0
    %v3281 = vadd.f32 %v3067, %v3280
    %3282 = vdwg.mxu0
    %v3283 = vadd.f32 %v1793, %v3265
    %v3284 = vadd.f32 %v1794, %v3267
    %v3285 = vadd.f32 %v1795, %v3269
    %v3286 = vadd.f32 %v1796, %v3271
    %v3287 = vadd.f32 %v1797, %v3275
    %v3288 = vadd.f32 %v1798, %v3277
    %v3289 = vadd.f32 %v1799, %v3279
    %v3290 = vadd.f32 %v1800, %v3281
    %v3291 = vld [vmem:[%s14] sm:$0x3]
    %v3292 = vld [vmem:[%s15] sm:$0x3]
    %v3293 = vadd.f32 %v3283, %v3284
    %3294 = vadd.xlane.f32.xlu0 %v3293
    %v3295 = vpop.xlane.xlu0 %3294
    %v3296 = vadd.f32 %v3285, %v3286
    %3297 = vadd.xlane.f32.xlu0 %v3296
    %v3298 = vpop.xlane.xlu0 %3297
    %v3299 = vadd.f32 %v3287, %v3288
    %3300 = vadd.xlane.f32.xlu0 %v3299
    %v3301 = vpop.xlane.xlu0 %3300
    %v3302 = vadd.f32 %v3289, %v3290
    %3303 = vadd.xlane.f32.xlu0 %v3302
    %v3304 = vpop.xlane.xlu0 %3303
    %v3305 = vmul.f32 %v3295, %v1710
    %v3306 = vmul.f32 %v3298, %v1710
    %v3307 = vmul.f32 %v3301, %v1710
    %v3308 = vmul.f32 %v3304, %v1710
    %v3309 = vsub.f32 %v3283, %v3305
    %v3310 = vsub.f32 %v3284, %v3305
    %v3311 = vsub.f32 %v3285, %v3306
    %v3312 = vsub.f32 %v3286, %v3306
    %v3313 = vsub.f32 %v3287, %v3307
    %v3314 = vsub.f32 %v3288, %v3307
    %v3315 = vsub.f32 %v3289, %v3308
    %v3316 = vsub.f32 %v3290, %v3308
    %v3317 = vmul.f32 %v3309, %v3309
    %v3318 = vmul.f32 %v3310, %v3310
    %v3319 = vmul.f32 %v3311, %v3311
    %v3320 = vmul.f32 %v3312, %v3312
    %v3321 = vmul.f32 %v3313, %v3313
    %v3322 = vmul.f32 %v3314, %v3314
    %v3323 = vmul.f32 %v3315, %v3315
    %v3324 = vmul.f32 %v3316, %v3316
    %v3325 = vadd.f32 %v3317, %v3318
    %3326 = vadd.xlane.f32.xlu0 %v3325
    %v3327 = vpop.xlane.xlu0 %3326
    %v3328 = vadd.f32 %v3319, %v3320
    %3329 = vadd.xlane.f32.xlu0 %v3328
    %v3330 = vpop.xlane.xlu0 %3329
    %v3331 = vadd.f32 %v3321, %v3322
    %3332 = vadd.xlane.f32.xlu0 %v3331
    %v3333 = vpop.xlane.xlu0 %3332
    %v3334 = vadd.f32 %v3323, %v3324
    %3335 = vadd.xlane.f32.xlu0 %v3334
    %v3336 = vpop.xlane.xlu0 %3335
    %v3337 = vmul.f32 %v3327, %v1710
    %v3338 = vmul.f32 %v3330, %v1710
    %v3339 = vmul.f32 %v3333, %v1710
    %v3340 = vmul.f32 %v3336, %v1710
    %v3341 = vadd.f32 %v3337, 1e-06
    %v3342 = vadd.f32 %v3338, 1e-06
    %v3343 = vadd.f32 %v3339, 1e-06
    %v3344 = vadd.f32 %v3340, 1e-06
    %v3345 = vrsqrt.pop %v3341
    %v3346 = vrsqrt.pop %v3342
    %v3347 = vrsqrt.pop %v3343
    %v3348 = vrsqrt.pop %v3344
    %v3349 = vmul.f32 %v3309, %v3345
    %v3350 = vmul.f32 %v3310, %v3345
    %v3351 = vmul.f32 %v3311, %v3346
    %v3352 = vmul.f32 %v3312, %v3346
    %v3353 = vmul.f32 %v3313, %v3347
    %v3354 = vmul.f32 %v3314, %v3347
    %v3355 = vmul.f32 %v3315, %v3348
    %v3356 = vmul.f32 %v3316, %v3348
    %v3358 = vlaneseq
    %v3359 = vshrl.u32 %v3358, 7
    %v3360 = vsub.s32 0, %v3359
    %v3361 = vrot.slane %v3291, %v3360
    %v3362 = vlaneseq
    %v3363 = vshrl.u32 %v3362, 7
    %v3364 = vsub.s32 1, %v3363
    %v3365 = vrot.slane %v3291, %v3364
    %v3368 = vmul.f32 %v3349, %v3361
    %v3369 = vmul.f32 %v3350, %v3365
    %v3370 = vmul.f32 %v3351, %v3361
    %v3371 = vmul.f32 %v3352, %v3365
    %v3372 = vmul.f32 %v3353, %v3361
    %v3373 = vmul.f32 %v3354, %v3365
    %v3374 = vmul.f32 %v3355, %v3361
    %v3375 = vmul.f32 %v3356, %v3365
    %v3377 = vlaneseq
    %v3378 = vshrl.u32 %v3377, 7
    %v3379 = vsub.s32 0, %v3378
    %v3380 = vrot.slane %v3292, %v3379
    %v3381 = vlaneseq
    %v3382 = vshrl.u32 %v3381, 7
    %v3383 = vsub.s32 1, %v3382
    %v3384 = vrot.slane %v3292, %v3383
    %v3387 = vadd.f32 %v3368, %v3380
    %v3388 = vadd.f32 %v3369, %v3384
    %v3389 = vadd.f32 %v3370, %v3380
    %v3390 = vadd.f32 %v3371, %v3384
    %v3391 = vadd.f32 %v3372, %v3380
    %v3392 = vadd.f32 %v3373, %v3384
    %v3393 = vadd.f32 %v3374, %v3380
    %v3394 = vadd.f32 %v3375, %v3384
    %v3395 = vpack.c.bf16 %v3389, %v3387
    %v3396 = vpack.c.bf16 %v3390, %v3388
    %v3397 = vpack.c.bf16 %v3393, %v3391
    %v3398 = vpack.c.bf16 %v3394, %v3392
    %v3399 = vld [vmem:[#allocation14] sm:$0xff]
    %v3400 = vld [vmem:[#allocation14 + $0x8] sm:$0xff]
    %v3401 = vld [vmem:[#allocation14 + $0x10] sm:$0xff]
    %v3402 = vld [vmem:[#allocation14 + $0x18] sm:$0xff]
    %v3403 = vld [vmem:[#allocation14 + $0x20] sm:$0xff]
    %v3404 = vld [vmem:[#allocation14 + $0x28] sm:$0xff]
    %v3405 = vld [vmem:[#allocation14 + $0x30] sm:$0xff]
    %v3406 = vld [vmem:[#allocation14 + $0x38] sm:$0xff]
    %v3407 = vld [vmem:[#allocation14 + $0x40] sm:$0xff]
    %v3408 = vld [vmem:[#allocation14 + $0x48] sm:$0xff]
    %v3409 = vld [vmem:[#allocation14 + $0x50] sm:$0xff]
    %v3410 = vld [vmem:[#allocation14 + $0x58] sm:$0xff]
    %v3411 = vld [vmem:[#allocation14 + $0x60] sm:$0xff]
    %v3412 = vld [vmem:[#allocation14 + $0x68] sm:$0xff]
    %v3413 = vld [vmem:[#allocation14 + $0x70] sm:$0xff]
    %v3414 = vld [vmem:[#allocation14 + $0x78] sm:$0xff]
    %v3415 = vld [vmem:[#allocation14 + $0x80] sm:$0xff]
    %v3416 = vld [vmem:[#allocation14 + $0x88] sm:$0xff]
    %v3417 = vld [vmem:[#allocation14 + $0x90] sm:$0xff]
    %v3418 = vld [vmem:[#allocation14 + $0x98] sm:$0xff]
    %v3419 = vld [vmem:[#allocation14 + $0xa0] sm:$0xff]
    %v3420 = vld [vmem:[#allocation14 + $0xa8] sm:$0xff]
    %v3421 = vld [vmem:[#allocation14 + $0xb0] sm:$0xff]
    %v3422 = vld [vmem:[#allocation14 + $0xb8] sm:$0xff]
    %v3423 = vld [vmem:[#allocation14 + $0xc0] sm:$0xff]
    %v3424 = vld [vmem:[#allocation14 + $0xc8] sm:$0xff]
    %v3425 = vld [vmem:[#allocation14 + $0xd0] sm:$0xff]
    %v3426 = vld [vmem:[#allocation14 + $0xd8] sm:$0xff]
    %v3427 = vld [vmem:[#allocation14 + $0xe0] sm:$0xff]
    %v3428 = vld [vmem:[#allocation14 + $0xe8] sm:$0xff]
    %v3429 = vld [vmem:[#allocation14 + $0xf0] sm:$0xff]
    %v3430 = vld [vmem:[#allocation14 + $0xf8] sm:$0xff]
    %v3431 = vld [vmem:[#allocation14 + $0x100] sm:$0xff]
    %v3432 = vld [vmem:[#allocation14 + $0x108] sm:$0xff]
    %v3433 = vld [vmem:[#allocation14 + $0x110] sm:$0xff]
    %v3434 = vld [vmem:[#allocation14 + $0x118] sm:$0xff]
    %v3435 = vld [vmem:[#allocation14 + $0x120] sm:$0xff]
    %v3436 = vld [vmem:[#allocation14 + $0x128] sm:$0xff]
    %v3437 = vld [vmem:[#allocation14 + $0x130] sm:$0xff]
    %v3438 = vld [vmem:[#allocation14 + $0x138] sm:$0xff]
    %v3439 = vld [vmem:[#allocation14 + $0x140] sm:$0xff]
    %v3440 = vld [vmem:[#allocation14 + $0x148] sm:$0xff]
    %v3441 = vld [vmem:[#allocation14 + $0x150] sm:$0xff]
    %v3442 = vld [vmem:[#allocation14 + $0x158] sm:$0xff]
    %v3443 = vld [vmem:[#allocation14 + $0x160] sm:$0xff]
    %v3444 = vld [vmem:[#allocation14 + $0x168] sm:$0xff]
    %v3445 = vld [vmem:[#allocation14 + $0x170] sm:$0xff]
    %v3446 = vld [vmem:[#allocation14 + $0x178] sm:$0xff]
    %v3447 = vld [vmem:[#allocation14 + $0x180] sm:$0xff]
    %v3448 = vld [vmem:[#allocation14 + $0x188] sm:$0xff]
    %v3449 = vld [vmem:[#allocation14 + $0x190] sm:$0xff]
    %v3450 = vld [vmem:[#allocation14 + $0x198] sm:$0xff]
    %v3451 = vld [vmem:[#allocation14 + $0x1a0] sm:$0xff]
    %v3452 = vld [vmem:[#allocation14 + $0x1a8] sm:$0xff]
    %v3453 = vld [vmem:[#allocation14 + $0x1b0] sm:$0xff]
    %v3454 = vld [vmem:[#allocation14 + $0x1b8] sm:$0xff]
    %v3455 = vld [vmem:[#allocation14 + $0x1c0] sm:$0xff]
    %v3456 = vld [vmem:[#allocation14 + $0x1c8] sm:$0xff]
    %v3457 = vld [vmem:[#allocation14 + $0x1d0] sm:$0xff]
    %v3458 = vld [vmem:[#allocation14 + $0x1d8] sm:$0xff]
    %v3459 = vld [vmem:[#allocation14 + $0x1e0] sm:$0xff]
    %v3460 = vld [vmem:[#allocation14 + $0x1e8] sm:$0xff]
    %v3461 = vld [vmem:[#allocation14 + $0x1f0] sm:$0xff]
    %v3462 = vld [vmem:[#allocation14 + $0x1f8] sm:$0xff]
    %v3463 = vld [vmem:[%s17] sm:$0xf]
    %v3465 = vlaneseq
    %v3466 = vshrl.u32 %v3465, 7
    %v3467 = vsub.s32 0, %v3466
    %v3468 = vrot.slane %v3463, %v3467
    %v3469 = vlaneseq
    %v3470 = vshrl.u32 %v3469, 7
    %v3471 = vsub.s32 1, %v3470
    %v3472 = vrot.slane %v3463, %v3471
    %v3473 = vlaneseq
    %v3474 = vshrl.u32 %v3473, 7
    %v3475 = vsub.s32 2, %v3474
    %v3476 = vrot.slane %v3463, %v3475
    %v3477 = vlaneseq
    %v3478 = vshrl.u32 %v3477, 7
    %v3479 = vsub.s32 3, %v3478
    %v3480 = vrot.slane %v3463, %v3479
    %v3549 = vunpack.c.l.b16 %v3399
    %v3550 = vunpack.c.h.b16 %v3399
    %v3551 = vunpack.c.l.b16 %v3400
    %v3552 = vunpack.c.h.b16 %v3400
    %v3553 = vunpack.c.l.b16 %v3401
    %v3554 = vunpack.c.h.b16 %v3401
    %v3555 = vunpack.c.l.b16 %v3402
    %v3556 = vunpack.c.h.b16 %v3402
    %v3557 = vunpack.c.l.b16 %v3403
    %v3558 = vunpack.c.h.b16 %v3403
    %v3559 = vunpack.c.l.b16 %v3404
    %v3560 = vunpack.c.h.b16 %v3404
    %v3561 = vunpack.c.l.b16 %v3405
    %v3562 = vunpack.c.h.b16 %v3405
    %v3563 = vunpack.c.l.b16 %v3406
    %v3564 = vunpack.c.h.b16 %v3406
    %v3565 = vunpack.c.l.b16 %v3407
    %v3566 = vunpack.c.h.b16 %v3407
    %v3567 = vunpack.c.l.b16 %v3408
    %v3568 = vunpack.c.h.b16 %v3408
    %v3569 = vunpack.c.l.b16 %v3409
    %v3570 = vunpack.c.h.b16 %v3409
    %v3571 = vunpack.c.l.b16 %v3410
    %v3572 = vunpack.c.h.b16 %v3410
    %v3573 = vunpack.c.l.b16 %v3411
    %v3574 = vunpack.c.h.b16 %v3411
    %v3575 = vunpack.c.l.b16 %v3412
    %v3576 = vunpack.c.h.b16 %v3412
    %v3577 = vunpack.c.l.b16 %v3413
    %v3578 = vunpack.c.h.b16 %v3413
    %v3579 = vunpack.c.l.b16 %v3414
    %v3580 = vunpack.c.h.b16 %v3414
    %v3581 = vunpack.c.l.b16 %v3415
    %v3582 = vunpack.c.h.b16 %v3415
    %v3583 = vunpack.c.l.b16 %v3416
    %v3584 = vunpack.c.h.b16 %v3416
    %v3585 = vunpack.c.l.b16 %v3417
    %v3586 = vunpack.c.h.b16 %v3417
    %v3587 = vunpack.c.l.b16 %v3418
    %v3588 = vunpack.c.h.b16 %v3418
    %v3589 = vunpack.c.l.b16 %v3419
    %v3590 = vunpack.c.h.b16 %v3419
    %v3591 = vunpack.c.l.b16 %v3420
    %v3592 = vunpack.c.h.b16 %v3420
    %v3593 = vunpack.c.l.b16 %v3421
    %v3594 = vunpack.c.h.b16 %v3421
    %v3595 = vunpack.c.l.b16 %v3422
    %v3596 = vunpack.c.h.b16 %v3422
    %v3597 = vunpack.c.l.b16 %v3423
    %v3598 = vunpack.c.h.b16 %v3423
    %v3599 = vunpack.c.l.b16 %v3424
    %v3600 = vunpack.c.h.b16 %v3424
    %v3601 = vunpack.c.l.b16 %v3425
    %v3602 = vunpack.c.h.b16 %v3425
    %v3603 = vunpack.c.l.b16 %v3426
    %v3604 = vunpack.c.h.b16 %v3426
    %v3605 = vunpack.c.l.b16 %v3427
    %v3606 = vunpack.c.h.b16 %v3427
    %v3607 = vunpack.c.l.b16 %v3428
    %v3608 = vunpack.c.h.b16 %v3428
    %v3609 = vunpack.c.l.b16 %v3429
    %v3610 = vunpack.c.h.b16 %v3429
    %v3611 = vunpack.c.l.b16 %v3430
    %v3612 = vunpack.c.h.b16 %v3430
    %v3613 = vunpack.c.l.b16 %v3431
    %v3614 = vunpack.c.h.b16 %v3431
    %v3615 = vunpack.c.l.b16 %v3432
    %v3616 = vunpack.c.h.b16 %v3432
    %v3617 = vunpack.c.l.b16 %v3433
    %v3618 = vunpack.c.h.b16 %v3433
    %v3619 = vunpack.c.l.b16 %v3434
    %v3620 = vunpack.c.h.b16 %v3434
    %v3621 = vunpack.c.l.b16 %v3435
    %v3622 = vunpack.c.h.b16 %v3435
    %v3623 = vunpack.c.l.b16 %v3436
    %v3624 = vunpack.c.h.b16 %v3436
    %v3625 = vunpack.c.l.b16 %v3437
    %v3626 = vunpack.c.h.b16 %v3437
    %v3627 = vunpack.c.l.b16 %v3438
    %v3628 = vunpack.c.h.b16 %v3438
    %v3629 = vunpack.c.l.b16 %v3439
    %v3630 = vunpack.c.h.b16 %v3439
    %v3631 = vunpack.c.l.b16 %v3440
    %v3632 = vunpack.c.h.b16 %v3440
    %v3633 = vunpack.c.l.b16 %v3441
    %v3634 = vunpack.c.h.b16 %v3441
    %v3635 = vunpack.c.l.b16 %v3442
    %v3636 = vunpack.c.h.b16 %v3442
    %v3637 = vunpack.c.l.b16 %v3443
    %v3638 = vunpack.c.h.b16 %v3443
    %v3639 = vunpack.c.l.b16 %v3444
    %v3640 = vunpack.c.h.b16 %v3444
    %v3641 = vunpack.c.l.b16 %v3445
    %v3642 = vunpack.c.h.b16 %v3445
    %v3643 = vunpack.c.l.b16 %v3446
    %v3644 = vunpack.c.h.b16 %v3446
    %v3645 = vunpack.c.l.b16 %v3447
    %v3646 = vunpack.c.h.b16 %v3447
    %v3647 = vunpack.c.l.b16 %v3448
    %v3648 = vunpack.c.h.b16 %v3448
    %v3649 = vunpack.c.l.b16 %v3449
    %v3650 = vunpack.c.h.b16 %v3449
    %v3651 = vunpack.c.l.b16 %v3450
    %v3652 = vunpack.c.h.b16 %v3450
    %v3653 = vunpack.c.l.b16 %v3451
    %v3654 = vunpack.c.h.b16 %v3451
    %v3655 = vunpack.c.l.b16 %v3452
    %v3656 = vunpack.c.h.b16 %v3452
    %v3657 = vunpack.c.l.b16 %v3453
    %v3658 = vunpack.c.h.b16 %v3453
    %v3659 = vunpack.c.l.b16 %v3454
    %v3660 = vunpack.c.h.b16 %v3454
    %v3661 = vunpack.c.l.b16 %v3455
    %v3662 = vunpack.c.h.b16 %v3455
    %v3663 = vunpack.c.l.b16 %v3456
    %v3664 = vunpack.c.h.b16 %v3456
    %v3665 = vunpack.c.l.b16 %v3457
    %v3666 = vunpack.c.h.b16 %v3457
    %v3667 = vunpack.c.l.b16 %v3458
    %v3668 = vunpack.c.h.b16 %v3458
    %v3669 = vunpack.c.l.b16 %v3459
    %v3670 = vunpack.c.h.b16 %v3459
    %v3671 = vunpack.c.l.b16 %v3460
    %v3672 = vunpack.c.h.b16 %v3460
    %v3673 = vunpack.c.l.b16 %v3461
    %v3674 = vunpack.c.h.b16 %v3461
    %v3675 = vunpack.c.l.b16 %v3462
    %v3676 = vunpack.c.h.b16 %v3462
    %v3677 = vpack.c.b16 %v3553, %v3549
    %v3678 = vpack.c.b16 %v3554, %v3550
    %v3679 = vpack.c.b16 %v3555, %v3551
    %v3680 = vpack.c.b16 %v3556, %v3552
    %v3681 = vpack.c.b16 %v3561, %v3557
    %v3682 = vpack.c.b16 %v3562, %v3558
    %v3683 = vpack.c.b16 %v3563, %v3559
    %v3684 = vpack.c.b16 %v3564, %v3560
    %v3685 = vpack.c.b16 %v3569, %v3565
    %v3686 = vpack.c.b16 %v3570, %v3566
    %v3687 = vpack.c.b16 %v3571, %v3567
    %v3688 = vpack.c.b16 %v3572, %v3568
    %v3689 = vpack.c.b16 %v3577, %v3573
    %v3690 = vpack.c.b16 %v3578, %v3574
    %v3691 = vpack.c.b16 %v3579, %v3575
    %v3692 = vpack.c.b16 %v3580, %v3576
    %v3693 = vpack.c.b16 %v3585, %v3581
    %v3694 = vpack.c.b16 %v3586, %v3582
    %v3695 = vpack.c.b16 %v3587, %v3583
    %v3696 = vpack.c.b16 %v3588, %v3584
    %v3697 = vpack.c.b16 %v3593, %v3589
    %v3698 = vpack.c.b16 %v3594, %v3590
    %v3699 = vpack.c.b16 %v3595, %v3591
    %v3700 = vpack.c.b16 %v3596, %v3592
    %v3701 = vpack.c.b16 %v3601, %v3597
    %v3702 = vpack.c.b16 %v3602, %v3598
    %v3703 = vpack.c.b16 %v3603, %v3599
    %v3704 = vpack.c.b16 %v3604, %v3600
    %v3705 = vpack.c.b16 %v3609, %v3605
    %v3706 = vpack.c.b16 %v3610, %v3606
    %v3707 = vpack.c.b16 %v3611, %v3607
    %v3708 = vpack.c.b16 %v3612, %v3608
    %v3709 = vpack.c.b16 %v3617, %v3613
    %v3710 = vpack.c.b16 %v3618, %v3614
    %v3711 = vpack.c.b16 %v3619, %v3615
    %v3712 = vpack.c.b16 %v3620, %v3616
    %v3713 = vpack.c.b16 %v3625, %v3621
    %v3714 = vpack.c.b16 %v3626, %v3622
    %v3715 = vpack.c.b16 %v3627, %v3623
    %v3716 = vpack.c.b16 %v3628, %v3624
    %v3717 = vpack.c.b16 %v3633, %v3629
    %v3718 = vpack.c.b16 %v3634, %v3630
    %v3719 = vpack.c.b16 %v3635, %v3631
    %v3720 = vpack.c.b16 %v3636, %v3632
    %v3721 = vpack.c.b16 %v3641, %v3637
    %v3722 = vpack.c.b16 %v3642, %v3638
    %v3723 = vpack.c.b16 %v3643, %v3639
    %v3724 = vpack.c.b16 %v3644, %v3640
    %v3725 = vpack.c.b16 %v3649, %v3645
    %v3726 = vpack.c.b16 %v3650, %v3646
    %v3727 = vpack.c.b16 %v3651, %v3647
    %v3728 = vpack.c.b16 %v3652, %v3648
    %v3729 = vpack.c.b16 %v3657, %v3653
    %v3730 = vpack.c.b16 %v3658, %v3654
    %v3731 = vpack.c.b16 %v3659, %v3655
    %v3732 = vpack.c.b16 %v3660, %v3656
    %v3733 = vpack.c.b16 %v3665, %v3661
    %v3734 = vpack.c.b16 %v3666, %v3662
    %v3735 = vpack.c.b16 %v3667, %v3663
    %v3736 = vpack.c.b16 %v3668, %v3664
    %v3737 = vpack.c.b16 %v3673, %v3669
    %v3738 = vpack.c.b16 %v3674, %v3670
    %v3739 = vpack.c.b16 %v3675, %v3671
    %v3740 = vpack.c.b16 %v3676, %v3672
    %3805 = vmatprep.subr.bf16.mxu0 %v3678
    %3806 = vmatpush1.bf16.msra.mxu0 %v3677
    %3807 = vmatprep.subr.bf16.mxu0 %v3682
    %3808 = vmatpush1.bf16.msra.mxu0 %v3681
    %3809 = vmatprep.subr.bf16.mxu0 %v3686
    %3810 = vmatpush1.bf16.msra.mxu0 %v3685
    %3811 = vmatprep.subr.bf16.mxu0 %v3690
    %3812 = vmatpush1.bf16.msra.mxu0 %v3689
    %3813 = vmatprep.subr.bf16.mxu0 %v3694
    %3814 = vmatpush1.bf16.msra.mxu0 %v3693
    %3815 = vmatprep.subr.bf16.mxu0 %v3698
    %3816 = vmatpush1.bf16.msra.mxu0 %v3697
    %3817 = vmatprep.subr.bf16.mxu0 %v3702
    %3818 = vmatpush1.bf16.msra.mxu0 %v3701
    %3819 = vmatprep.subr.bf16.mxu0 %v3706
    %3820 = vmatpush1.bf16.msra.mxu0 %v3705
    %3821 = vmatprep.subr.bf16.mxu0 %v3710
    %3822 = vmatpush1.bf16.msra.mxu0 %v3709
    %3823 = vmatprep.subr.bf16.mxu0 %v3714
    %3824 = vmatpush1.bf16.msra.mxu0 %v3713
    %3825 = vmatprep.subr.bf16.mxu0 %v3718
    %3826 = vmatpush1.bf16.msra.mxu0 %v3717
    %3827 = vmatprep.subr.bf16.mxu0 %v3722
    %3828 = vmatpush1.bf16.msra.mxu0 %v3721
    %3829 = vmatprep.subr.bf16.mxu0 %v3726
    %3830 = vmatpush1.bf16.msra.mxu0 %v3725
    %3831 = vmatprep.subr.bf16.mxu0 %v3730
    %3832 = vmatpush1.bf16.msra.mxu0 %v3729
    %3833 = vmatprep.subr.bf16.mxu0 %v3734
    %3834 = vmatpush1.bf16.msra.mxu0 %v3733
    %3835 = vmatprep.subr.bf16.mxu0 %v3738
    %3836 = vmatpush1.bf16.msra.mxu0 %v3737
    %3837 = vmatprep.mubr.bf16.mxu0 %v3396
    %3838 = vmatmul.mubr.bf16.gmra.mrb[0].mxu0 %v3395
    %v3839 = vpop.f32.mrb[0].mxu0
    %v3840 = vadd.f32 %v3468, %v3839
    %v3841 = vpop.f32.mrb[0].mxu0
    %v3842 = vadd.f32 %v3472, %v3841
    %v3843 = vpop.f32.mrb[0].mxu0
    %v3844 = vadd.f32 %v3468, %v3843
    %v3845 = vpop.f32.mrb[0].mxu0
    %v3846 = vadd.f32 %v3472, %v3845
    %3847 = vmatprep.mubr.bf16.mxu0 %v3398
    %3848 = vmatmul.mubr.bf16.gmra.mrb[0].mxu0 %v3397
    %v3849 = vpop.f32.mrb[0].mxu0
    %v3850 = vadd.f32 %v3468, %v3849
    %v3851 = vpop.f32.mrb[0].mxu0
    %v3852 = vadd.f32 %v3472, %v3851
    %v3853 = vpop.f32.mrb[0].mxu0
    %v3854 = vadd.f32 %v3468, %v3853
    %v3855 = vpop.f32.mrb[0].mxu0
    %v3856 = vadd.f32 %v3472, %v3855
    %3857 = vdwg.mxu0
    %3858 = vmatprep.subr.bf16.mxu0 %v3680
    %3859 = vmatpush1.bf16.msra.mxu0 %v3679
    %3860 = vmatprep.subr.bf16.mxu0 %v3684
    %3861 = vmatpush1.bf16.msra.mxu0 %v3683
    %3862 = vmatprep.subr.bf16.mxu0 %v3688
    %3863 = vmatpush1.bf16.msra.mxu0 %v3687
    %3864 = vmatprep.subr.bf16.mxu0 %v3692
    %3865 = vmatpush1.bf16.msra.mxu0 %v3691
    %3866 = vmatprep.subr.bf16.mxu0 %v3696
    %3867 = vmatpush1.bf16.msra.mxu0 %v3695
    %3868 = vmatprep.subr.bf16.mxu0 %v3700
    %3869 = vmatpush1.bf16.msra.mxu0 %v3699
    %3870 = vmatprep.subr.bf16.mxu0 %v3704
    %3871 = vmatpush1.bf16.msra.mxu0 %v3703
    %3872 = vmatprep.subr.bf16.mxu0 %v3708
    %3873 = vmatpush1.bf16.msra.mxu0 %v3707
    %3874 = vmatprep.subr.bf16.mxu0 %v3712
    %3875 = vmatpush1.bf16.msra.mxu0 %v3711
    %3876 = vmatprep.subr.bf16.mxu0 %v3716
    %3877 = vmatpush1.bf16.msra.mxu0 %v3715
    %3878 = vmatprep.subr.bf16.mxu0 %v3720
    %3879 = vmatpush1.bf16.msra.mxu0 %v3719
    %3880 = vmatprep.subr.bf16.mxu0 %v3724
    %3881 = vmatpush1.bf16.msra.mxu0 %v3723
    %3882 = vmatprep.subr.bf16.mxu0 %v3728
    %3883 = vmatpush1.bf16.msra.mxu0 %v3727
    %3884 = vmatprep.subr.bf16.mxu0 %v3732
    %3885 = vmatpush1.bf16.msra.mxu0 %v3731
    %3886 = vmatprep.subr.bf16.mxu0 %v3736
    %3887 = vmatpush1.bf16.msra.mxu0 %v3735
    %3888 = vmatprep.subr.bf16.mxu0 %v3740
    %3889 = vmatpush1.bf16.msra.mxu0 %v3739
    %3890 = vmatprep.mubr.bf16.mxu0 %v3396
    %3891 = vmatmul.mubr.bf16.gmra.mrb[0].mxu0 %v3395
    %v3892 = vpop.f32.mrb[0].mxu0
    %v3893 = vadd.f32 %v3476, %v3892
    %v3894 = vpop.f32.mrb[0].mxu0
    %v3895 = vadd.f32 %v3480, %v3894
    %v3896 = vpop.f32.mrb[0].mxu0
    %v3897 = vadd.f32 %v3476, %v3896
    %v3898 = vpop.f32.mrb[0].mxu0
    %v3899 = vadd.f32 %v3480, %v3898
    %3900 = vmatprep.mubr.bf16.mxu0 %v3398
    %3901 = vmatmul.mubr.bf16.gmra.mrb[0].mxu0 %v3397
    %v3902 = vpop.f32.mrb[0].mxu0
    %v3903 = vadd.f32 %v3476, %v3902
    %v3904 = vpop.f32.mrb[0].mxu0
    %v3905 = vadd.f32 %v3480, %v3904
    %v3906 = vpop.f32.mrb[0].mxu0
    %v3907 = vadd.f32 %v3476, %v3906
    %v3908 = vpop.f32.mrb[0].mxu0
    %v3909 = vadd.f32 %v3480, %v3908
    %3910 = vdwg.mxu0
    %v3911 = vmax.f32 %v3840, 0.0
    %v3912 = vmax.f32 %v3842, 0.0
    %v3913 = vmax.f32 %v3893, 0.0
    %v3914 = vmax.f32 %v3895, 0.0
    %v3915 = vmax.f32 %v3844, 0.0
    %v3916 = vmax.f32 %v3846, 0.0
    %v3917 = vmax.f32 %v3897, 0.0
    %v3918 = vmax.f32 %v3899, 0.0
    %v3919 = vmax.f32 %v3850, 0.0
    %v3920 = vmax.f32 %v3852, 0.0
    %v3921 = vmax.f32 %v3903, 0.0
    %v3922 = vmax.f32 %v3905, 0.0
    %v3923 = vmax.f32 %v3854, 0.0
    %v3924 = vmax.f32 %v3856, 0.0
    %v3925 = vmax.f32 %v3907, 0.0
    %v3926 = vmax.f32 %v3909, 0.0
    %v3927 = vpack.c.bf16 %v3915, %v3911
    %v3928 = vpack.c.bf16 %v3916, %v3912
    %v3929 = vpack.c.bf16 %v3917, %v3913
    %v3930 = vpack.c.bf16 %v3918, %v3914
    %v3931 = vpack.c.bf16 %v3923, %v3919
    %v3932 = vpack.c.bf16 %v3924, %v3920
    %v3933 = vpack.c.bf16 %v3925, %v3921
    %v3934 = vpack.c.bf16 %v3926, %v3922
    %v3935 = vld [vmem:[#allocation16] sm:$0xff]
    %v3936 = vld [vmem:[#allocation16 + $0x8] sm:$0xff]
    %v3937 = vld [vmem:[#allocation16 + $0x10] sm:$0xff]
    %v3938 = vld [vmem:[#allocation16 + $0x18] sm:$0xff]
    %v3939 = vld [vmem:[#allocation16 + $0x20] sm:$0xff]
    %v3940 = vld [vmem:[#allocation16 + $0x28] sm:$0xff]
    %v3941 = vld [vmem:[#allocation16 + $0x30] sm:$0xff]
    %v3942 = vld [vmem:[#allocation16 + $0x38] sm:$0xff]
    %v3943 = vld [vmem:[#allocation16 + $0x40] sm:$0xff]
    %v3944 = vld [vmem:[#allocation16 + $0x48] sm:$0xff]
    %v3945 = vld [vmem:[#allocation16 + $0x50] sm:$0xff]
    %v3946 = vld [vmem:[#allocation16 + $0x58] sm:$0xff]
    %v3947 = vld [vmem:[#allocation16 + $0x60] sm:$0xff]
    %v3948 = vld [vmem:[#allocation16 + $0x68] sm:$0xff]
    %v3949 = vld [vmem:[#allocation16 + $0x70] sm:$0xff]
    %v3950 = vld [vmem:[#allocation16 + $0x78] sm:$0xff]
    %v3951 = vld [vmem:[#allocation16 + $0x80] sm:$0xff]
    %v3952 = vld [vmem:[#allocation16 + $0x88] sm:$0xff]
    %v3953 = vld [vmem:[#allocation16 + $0x90] sm:$0xff]
    %v3954 = vld [vmem:[#allocation16 + $0x98] sm:$0xff]
    %v3955 = vld [vmem:[#allocation16 + $0xa0] sm:$0xff]
    %v3956 = vld [vmem:[#allocation16 + $0xa8] sm:$0xff]
    %v3957 = vld [vmem:[#allocation16 + $0xb0] sm:$0xff]
    %v3958 = vld [vmem:[#allocation16 + $0xb8] sm:$0xff]
    %v3959 = vld [vmem:[#allocation16 + $0xc0] sm:$0xff]
    %v3960 = vld [vmem:[#allocation16 + $0xc8] sm:$0xff]
    %v3961 = vld [vmem:[#allocation16 + $0xd0] sm:$0xff]
    %v3962 = vld [vmem:[#allocation16 + $0xd8] sm:$0xff]
    %v3963 = vld [vmem:[#allocation16 + $0xe0] sm:$0xff]
    %v3964 = vld [vmem:[#allocation16 + $0xe8] sm:$0xff]
    %v3965 = vld [vmem:[#allocation16 + $0xf0] sm:$0xff]
    %v3966 = vld [vmem:[#allocation16 + $0xf8] sm:$0xff]
    %v3967 = vld [vmem:[#allocation16 + $0x100] sm:$0xff]
    %v3968 = vld [vmem:[#allocation16 + $0x108] sm:$0xff]
    %v3969 = vld [vmem:[#allocation16 + $0x110] sm:$0xff]
    %v3970 = vld [vmem:[#allocation16 + $0x118] sm:$0xff]
    %v3971 = vld [vmem:[#allocation16 + $0x120] sm:$0xff]
    %v3972 = vld [vmem:[#allocation16 + $0x128] sm:$0xff]
    %v3973 = vld [vmem:[#allocation16 + $0x130] sm:$0xff]
    %v3974 = vld [vmem:[#allocation16 + $0x138] sm:$0xff]
    %v3975 = vld [vmem:[#allocation16 + $0x140] sm:$0xff]
    %v3976 = vld [vmem:[#allocation16 + $0x148] sm:$0xff]
    %v3977 = vld [vmem:[#allocation16 + $0x150] sm:$0xff]
    %v3978 = vld [vmem:[#allocation16 + $0x158] sm:$0xff]
    %v3979 = vld [vmem:[#allocation16 + $0x160] sm:$0xff]
    %v3980 = vld [vmem:[#allocation16 + $0x168] sm:$0xff]
    %v3981 = vld [vmem:[#allocation16 + $0x170] sm:$0xff]
    %v3982 = vld [vmem:[#allocation16 + $0x178] sm:$0xff]
    %v3983 = vld [vmem:[#allocation16 + $0x180] sm:$0xff]
    %v3984 = vld [vmem:[#allocation16 + $0x188] sm:$0xff]
    %v3985 = vld [vmem:[#allocation16 + $0x190] sm:$0xff]
    %v3986 = vld [vmem:[#allocation16 + $0x198] sm:$0xff]
    %v3987 = vld [vmem:[#allocation16 + $0x1a0] sm:$0xff]
    %v3988 = vld [vmem:[#allocation16 + $0x1a8] sm:$0xff]
    %v3989 = vld [vmem:[#allocation16 + $0x1b0] sm:$0xff]
    %v3990 = vld [vmem:[#allocation16 + $0x1b8] sm:$0xff]
    %v3991 = vld [vmem:[#allocation16 + $0x1c0] sm:$0xff]
    %v3992 = vld [vmem:[#allocation16 + $0x1c8] sm:$0xff]
    %v3993 = vld [vmem:[#allocation16 + $0x1d0] sm:$0xff]
    %v3994 = vld [vmem:[#allocation16 + $0x1d8] sm:$0xff]
    %v3995 = vld [vmem:[#allocation16 + $0x1e0] sm:$0xff]
    %v3996 = vld [vmem:[#allocation16 + $0x1e8] sm:$0xff]
    %v3997 = vld [vmem:[#allocation16 + $0x1f0] sm:$0xff]
    %v3998 = vld [vmem:[#allocation16 + $0x1f8] sm:$0xff]
    %v3999 = vld [vmem:[%s19] sm:$0x3]
    %v4001 = vlaneseq
    %v4002 = vshrl.u32 %v4001, 7
    %v4003 = vsub.s32 0, %v4002
    %v4004 = vrot.slane %v3999, %v4003
    %v4005 = vlaneseq
    %v4006 = vshrl.u32 %v4005, 7
    %v4007 = vsub.s32 1, %v4006
    %v4008 = vrot.slane %v3999, %v4007
    %v4075 = vunpack.c.l.b16 %v3935
    %v4076 = vunpack.c.h.b16 %v3935
    %v4077 = vunpack.c.l.b16 %v3936
    %v4078 = vunpack.c.h.b16 %v3936
    %v4079 = vunpack.c.l.b16 %v3937
    %v4080 = vunpack.c.h.b16 %v3937
    %v4081 = vunpack.c.l.b16 %v3938
    %v4082 = vunpack.c.h.b16 %v3938
    %v4083 = vunpack.c.l.b16 %v3939
    %v4084 = vunpack.c.h.b16 %v3939
    %v4085 = vunpack.c.l.b16 %v3940
    %v4086 = vunpack.c.h.b16 %v3940
    %v4087 = vunpack.c.l.b16 %v3941
    %v4088 = vunpack.c.h.b16 %v3941
    %v4089 = vunpack.c.l.b16 %v3942
    %v4090 = vunpack.c.h.b16 %v3942
    %v4091 = vunpack.c.l.b16 %v3943
    %v4092 = vunpack.c.h.b16 %v3943
    %v4093 = vunpack.c.l.b16 %v3944
    %v4094 = vunpack.c.h.b16 %v3944
    %v4095 = vunpack.c.l.b16 %v3945
    %v4096 = vunpack.c.h.b16 %v3945
    %v4097 = vunpack.c.l.b16 %v3946
    %v4098 = vunpack.c.h.b16 %v3946
    %v4099 = vunpack.c.l.b16 %v3947
    %v4100 = vunpack.c.h.b16 %v3947
    %v4101 = vunpack.c.l.b16 %v3948
    %v4102 = vunpack.c.h.b16 %v3948
    %v4103 = vunpack.c.l.b16 %v3949
    %v4104 = vunpack.c.h.b16 %v3949
    %v4105 = vunpack.c.l.b16 %v3950
    %v4106 = vunpack.c.h.b16 %v3950
    %v4107 = vunpack.c.l.b16 %v3951
    %v4108 = vunpack.c.h.b16 %v3951
    %v4109 = vunpack.c.l.b16 %v3952
    %v4110 = vunpack.c.h.b16 %v3952
    %v4111 = vunpack.c.l.b16 %v3953
    %v4112 = vunpack.c.h.b16 %v3953
    %v4113 = vunpack.c.l.b16 %v3954
    %v4114 = vunpack.c.h.b16 %v3954
    %v4115 = vunpack.c.l.b16 %v3955
    %v4116 = vunpack.c.h.b16 %v3955
    %v4117 = vunpack.c.l.b16 %v3956
    %v4118 = vunpack.c.h.b16 %v3956
    %v4119 = vunpack.c.l.b16 %v3957
    %v4120 = vunpack.c.h.b16 %v3957
    %v4121 = vunpack.c.l.b16 %v3958
    %v4122 = vunpack.c.h.b16 %v3958
    %v4123 = vunpack.c.l.b16 %v3959
    %v4124 = vunpack.c.h.b16 %v3959
    %v4125 = vunpack.c.l.b16 %v3960
    %v4126 = vunpack.c.h.b16 %v3960
    %v4127 = vunpack.c.l.b16 %v3961
    %v4128 = vunpack.c.h.b16 %v3961
    %v4129 = vunpack.c.l.b16 %v3962
    %v4130 = vunpack.c.h.b16 %v3962
    %v4131 = vunpack.c.l.b16 %v3963
    %v4132 = vunpack.c.h.b16 %v3963
    %v4133 = vunpack.c.l.b16 %v3964
    %v4134 = vunpack.c.h.b16 %v3964
    %v4135 = vunpack.c.l.b16 %v3965
    %v4136 = vunpack.c.h.b16 %v3965
    %v4137 = vunpack.c.l.b16 %v3966
    %v4138 = vunpack.c.h.b16 %v3966
    %v4139 = vunpack.c.l.b16 %v3967
    %v4140 = vunpack.c.h.b16 %v3967
    %v4141 = vunpack.c.l.b16 %v3968
    %v4142 = vunpack.c.h.b16 %v3968
    %v4143 = vunpack.c.l.b16 %v3969
    %v4144 = vunpack.c.h.b16 %v3969
    %v4145 = vunpack.c.l.b16 %v3970
    %v4146 = vunpack.c.h.b16 %v3970
    %v4147 = vunpack.c.l.b16 %v3971
    %v4148 = vunpack.c.h.b16 %v3971
    %v4149 = vunpack.c.l.b16 %v3972
    %v4150 = vunpack.c.h.b16 %v3972
    %v4151 = vunpack.c.l.b16 %v3973
    %v4152 = vunpack.c.h.b16 %v3973
    %v4153 = vunpack.c.l.b16 %v3974
    %v4154 = vunpack.c.h.b16 %v3974
    %v4155 = vunpack.c.l.b16 %v3975
    %v4156 = vunpack.c.h.b16 %v3975
    %v4157 = vunpack.c.l.b16 %v3976
    %v4158 = vunpack.c.h.b16 %v3976
    %v4159 = vunpack.c.l.b16 %v3977
    %v4160 = vunpack.c.h.b16 %v3977
    %v4161 = vunpack.c.l.b16 %v3978
    %v4162 = vunpack.c.h.b16 %v3978
    %v4163 = vunpack.c.l.b16 %v3979
    %v4164 = vunpack.c.h.b16 %v3979
    %v4165 = vunpack.c.l.b16 %v3980
    %v4166 = vunpack.c.h.b16 %v3980
    %v4167 = vunpack.c.l.b16 %v3981
    %v4168 = vunpack.c.h.b16 %v3981
    %v4169 = vunpack.c.l.b16 %v3982
    %v4170 = vunpack.c.h.b16 %v3982
    %v4171 = vunpack.c.l.b16 %v3983
    %v4172 = vunpack.c.h.b16 %v3983
    %v4173 = vunpack.c.l.b16 %v3984
    %v4174 = vunpack.c.h.b16 %v3984
    %v4175 = vunpack.c.l.b16 %v3985
    %v4176 = vunpack.c.h.b16 %v3985
    %v4177 = vunpack.c.l.b16 %v3986
    %v4178 = vunpack.c.h.b16 %v3986
    %v4179 = vunpack.c.l.b16 %v3987
    %v4180 = vunpack.c.h.b16 %v3987
    %v4181 = vunpack.c.l.b16 %v3988
    %v4182 = vunpack.c.h.b16 %v3988
    %v4183 = vunpack.c.l.b16 %v3989
    %v4184 = vunpack.c.h.b16 %v3989
    %v4185 = vunpack.c.l.b16 %v3990
    %v4186 = vunpack.c.h.b16 %v3990
    %v4187 = vunpack.c.l.b16 %v3991
    %v4188 = vunpack.c.h.b16 %v3991
    %v4189 = vunpack.c.l.b16 %v3992
    %v4190 = vunpack.c.h.b16 %v3992
    %v4191 = vunpack.c.l.b16 %v3993
    %v4192 = vunpack.c.h.b16 %v3993
    %v4193 = vunpack.c.l.b16 %v3994
    %v4194 = vunpack.c.h.b16 %v3994
    %v4195 = vunpack.c.l.b16 %v3995
    %v4196 = vunpack.c.h.b16 %v3995
    %v4197 = vunpack.c.l.b16 %v3996
    %v4198 = vunpack.c.h.b16 %v3996
    %v4199 = vunpack.c.l.b16 %v3997
    %v4200 = vunpack.c.h.b16 %v3997
    %v4201 = vunpack.c.l.b16 %v3998
    %v4202 = vunpack.c.h.b16 %v3998
    %v4203 = vpack.c.b16 %v4077, %v4075
    %v4204 = vpack.c.b16 %v4078, %v4076
    %v4205 = vpack.c.b16 %v4081, %v4079
    %v4206 = vpack.c.b16 %v4082, %v4080
    %v4207 = vpack.c.b16 %v4085, %v4083
    %v4208 = vpack.c.b16 %v4086, %v4084
    %v4209 = vpack.c.b16 %v4089, %v4087
    %v4210 = vpack.c.b16 %v4090, %v4088
    %v4211 = vpack.c.b16 %v4093, %v4091
    %v4212 = vpack.c.b16 %v4094, %v4092
    %v4213 = vpack.c.b16 %v4097, %v4095
    %v4214 = vpack.c.b16 %v4098, %v4096
    %v4215 = vpack.c.b16 %v4101, %v4099
    %v4216 = vpack.c.b16 %v4102, %v4100
    %v4217 = vpack.c.b16 %v4105, %v4103
    %v4218 = vpack.c.b16 %v4106, %v4104
    %v4219 = vpack.c.b16 %v4109, %v4107
    %v4220 = vpack.c.b16 %v4110, %v4108
    %v4221 = vpack.c.b16 %v4113, %v4111
    %v4222 = vpack.c.b16 %v4114, %v4112
    %v4223 = vpack.c.b16 %v4117, %v4115
    %v4224 = vpack.c.b16 %v4118, %v4116
    %v4225 = vpack.c.b16 %v4121, %v4119
    %v4226 = vpack.c.b16 %v4122, %v4120
    %v4227 = vpack.c.b16 %v4125, %v4123
    %v4228 = vpack.c.b16 %v4126, %v4124
    %v4229 = vpack.c.b16 %v4129, %v4127
    %v4230 = vpack.c.b16 %v4130, %v4128
    %v4231 = vpack.c.b16 %v4133, %v4131
    %v4232 = vpack.c.b16 %v4134, %v4132
    %v4233 = vpack.c.b16 %v4137, %v4135
    %v4234 = vpack.c.b16 %v4138, %v4136
    %v4235 = vpack.c.b16 %v4141, %v4139
    %v4236 = vpack.c.b16 %v4142, %v4140
    %v4237 = vpack.c.b16 %v4145, %v4143
    %v4238 = vpack.c.b16 %v4146, %v4144
    %v4239 = vpack.c.b16 %v4149, %v4147
    %v4240 = vpack.c.b16 %v4150, %v4148
    %v4241 = vpack.c.b16 %v4153, %v4151
    %v4242 = vpack.c.b16 %v4154, %v4152
    %v4243 = vpack.c.b16 %v4157, %v4155
    %v4244 = vpack.c.b16 %v4158, %v4156
    %v4245 = vpack.c.b16 %v4161, %v4159
    %v4246 = vpack.c.b16 %v4162, %v4160
    %v4247 = vpack.c.b16 %v4165, %v4163
    %v4248 = vpack.c.b16 %v4166, %v4164
    %v4249 = vpack.c.b16 %v4169, %v4167
    %v4250 = vpack.c.b16 %v4170, %v4168
    %v4251 = vpack.c.b16 %v4173, %v4171
    %v4252 = vpack.c.b16 %v4174, %v4172
    %v4253 = vpack.c.b16 %v4177, %v4175
    %v4254 = vpack.c.b16 %v4178, %v4176
    %v4255 = vpack.c.b16 %v4181, %v4179
    %v4256 = vpack.c.b16 %v4182, %v4180
    %v4257 = vpack.c.b16 %v4185, %v4183
    %v4258 = vpack.c.b16 %v4186, %v4184
    %v4259 = vpack.c.b16 %v4189, %v4187
    %v4260 = vpack.c.b16 %v4190, %v4188
    %v4261 = vpack.c.b16 %v4193, %v4191
    %v4262 = vpack.c.b16 %v4194, %v4192
    %v4263 = vpack.c.b16 %v4197, %v4195
    %v4264 = vpack.c.b16 %v4198, %v4196
    %v4265 = vpack.c.b16 %v4201, %v4199
    %v4266 = vpack.c.b16 %v4202, %v4200
    %4331 = vmatprep.subr.bf16.mxu0 %v4204
    %4332 = vmatpush1.bf16.msra.mxu0 %v4203
    %4333 = vmatprep.subr.bf16.mxu0 %v4206
    %4334 = vmatpush1.bf16.msra.mxu0 %v4205
    %4335 = vmatprep.subr.bf16.mxu0 %v4208
    %4336 = vmatpush1.bf16.msra.mxu0 %v4207
    %4337 = vmatprep.subr.bf16.mxu0 %v4210
    %4338 = vmatpush1.bf16.msra.mxu0 %v4209
    %4339 = vmatprep.subr.bf16.mxu0 %v4212
    %4340 = vmatpush1.bf16.msra.mxu0 %v4211
    %4341 = vmatprep.subr.bf16.mxu0 %v4214
    %4342 = vmatpush1.bf16.msra.mxu0 %v4213
    %4343 = vmatprep.subr.bf16.mxu0 %v4216
    %4344 = vmatpush1.bf16.msra.mxu0 %v4215
    %4345 = vmatprep.subr.bf16.mxu0 %v4218
    %4346 = vmatpush1.bf16.msra.mxu0 %v4217
    %4347 = vmatprep.subr.bf16.mxu0 %v4220
    %4348 = vmatpush1.bf16.msra.mxu0 %v4219
    %4349 = vmatprep.subr.bf16.mxu0 %v4222
    %4350 = vmatpush1.bf16.msra.mxu0 %v4221
    %4351 = vmatprep.subr.bf16.mxu0 %v4224
    %4352 = vmatpush1.bf16.msra.mxu0 %v4223
    %4353 = vmatprep.subr.bf16.mxu0 %v4226
    %4354 = vmatpush1.bf16.msra.mxu0 %v4225
    %4355 = vmatprep.subr.bf16.mxu0 %v4228
    %4356 = vmatpush1.bf16.msra.mxu0 %v4227
    %4357 = vmatprep.subr.bf16.mxu0 %v4230
    %4358 = vmatpush1.bf16.msra.mxu0 %v4229
    %4359 = vmatprep.subr.bf16.mxu0 %v4232
    %4360 = vmatpush1.bf16.msra.mxu0 %v4231
    %4361 = vmatprep.subr.bf16.mxu0 %v4234
    %4362 = vmatpush1.bf16.msra.mxu0 %v4233
    %4363 = vmatprep.mubr.bf16.mxu0 %v3928
    %4364 = vmatmul.mubr.bf16.gmra.mrb[0].mxu0 %v3927
    %v4365 = vpop.f32.mrb[0].mxu0
    %v4366 = vadd.f32 %v4004, %v4365
    %v4367 = vpop.f32.mrb[0].mxu0
    %v4368 = vadd.f32 %v4008, %v4367
    %v4369 = vpop.f32.mrb[0].mxu0
    %v4370 = vadd.f32 %v4004, %v4369
    %v4371 = vpop.f32.mrb[0].mxu0
    %v4372 = vadd.f32 %v4008, %v4371
    %4373 = vmatprep.mubr.bf16.mxu0 %v3932
    %4374 = vmatmul.mubr.bf16.gmra.mrb[0].mxu0 %v3931
    %v4375 = vpop.f32.mrb[0].mxu0
    %v4376 = vadd.f32 %v4004, %v4375
    %v4377 = vpop.f32.mrb[0].mxu0
    %v4378 = vadd.f32 %v4008, %v4377
    %v4379 = vpop.f32.mrb[0].mxu0
    %v4380 = vadd.f32 %v4004, %v4379
    %v4381 = vpop.f32.mrb[0].mxu0
    %v4382 = vadd.f32 %v4008, %v4381
    %4383 = vdwg.mxu0
    %4384 = vmatprep.subr.bf16.mxu0 %v4236
    %4385 = vmatpush1.bf16.msra.mxu0 %v4235
    %4386 = vmatprep.subr.bf16.mxu0 %v4238
    %4387 = vmatpush1.bf16.msra.mxu0 %v4237
    %4388 = vmatprep.subr.bf16.mxu0 %v4240
    %4389 = vmatpush1.bf16.msra.mxu0 %v4239
    %4390 = vmatprep.subr.bf16.mxu0 %v4242
    %4391 = vmatpush1.bf16.msra.mxu0 %v4241
    %4392 = vmatprep.subr.bf16.mxu0 %v4244
    %4393 = vmatpush1.bf16.msra.mxu0 %v4243
    %4394 = vmatprep.subr.bf16.mxu0 %v4246
    %4395 = vmatpush1.bf16.msra.mxu0 %v4245
    %4396 = vmatprep.subr.bf16.mxu0 %v4248
    %4397 = vmatpush1.bf16.msra.mxu0 %v4247
    %4398 = vmatprep.subr.bf16.mxu0 %v4250
    %4399 = vmatpush1.bf16.msra.mxu0 %v4249
    %4400 = vmatprep.subr.bf16.mxu0 %v4252
    %4401 = vmatpush1.bf16.msra.mxu0 %v4251
    %4402 = vmatprep.subr.bf16.mxu0 %v4254
    %4403 = vmatpush1.bf16.msra.mxu0 %v4253
    %4404 = vmatprep.subr.bf16.mxu0 %v4256
    %4405 = vmatpush1.bf16.msra.mxu0 %v4255
    %4406 = vmatprep.subr.bf16.mxu0 %v4258
    %4407 = vmatpush1.bf16.msra.mxu0 %v4257
    %4408 = vmatprep.subr.bf16.mxu0 %v4260
    %4409 = vmatpush1.bf16.msra.mxu0 %v4259
    %4410 = vmatprep.subr.bf16.mxu0 %v4262
    %4411 = vmatpush1.bf16.msra.mxu0 %v4261
    %4412 = vmatprep.subr.bf16.mxu0 %v4264
    %4413 = vmatpush1.bf16.msra.mxu0 %v4263
    %4414 = vmatprep.subr.bf16.mxu0 %v4266
    %4415 = vmatpush1.bf16.msra.mxu0 %v4265
    %4416 = vmatprep.mubr.bf16.mxu0 %v3930
    %4417 = vmatmul.mubr.bf16.gmra.mrb[0].mxu0 %v3929
    %v4418 = vpop.f32.mrb[0].mxu0
    %v4419 = vadd.f32 %v4366, %v4418
    %v4420 = vpop.f32.mrb[0].mxu0
    %v4421 = vadd.f32 %v4368, %v4420
    %v4422 = vpop.f32.mrb[0].mxu0
    %v4423 = vadd.f32 %v4370, %v4422
    %v4424 = vpop.f32.mrb[0].mxu0
    %v4425 = vadd.f32 %v4372, %v4424
    %4426 = vmatprep.mubr.bf16.mxu0 %v3934
    %4427 = vmatmul.mubr.bf16.gmra.mrb[0].mxu0 %v3933
    %v4428 = vpop.f32.mrb[0].mxu0
    %v4429 = vadd.f32 %v4376, %v4428
    %v4430 = vpop.f32.mrb[0].mxu0
    %v4431 = vadd.f32 %v4378, %v4430
    %v4432 = vpop.f32.mrb[0].mxu0
    %v4433 = vadd.f32 %v4380, %v4432
    %v4434 = vpop.f32.mrb[0].mxu0
    %v4435 = vadd.f32 %v4382, %v4434
    %4436 = vdwg.mxu0
    %v4437 = vadd.f32 %v3387, %v4419
    %v4438 = vadd.f32 %v3388, %v4421
    %v4439 = vadd.f32 %v3389, %v4423
    %v4440 = vadd.f32 %v3390, %v4425
    %v4441 = vadd.f32 %v3391, %v4429
    %v4442 = vadd.f32 %v3392, %v4431
    %v4443 = vadd.f32 %v3393, %v4433
    %v4444 = vadd.f32 %v3394, %v4435
    %v4445 = vld [vmem:[%s20] sm:$0x3]
    %v4446 = vld [vmem:[%s21] sm:$0x3]
    %v4447 = vadd.f32 %v4437, %v4438
    %4448 = vadd.xlane.f32.xlu0 %v4447
    %v4449 = vpop.xlane.xlu0 %4448
    %v4450 = vadd.f32 %v4439, %v4440
    %4451 = vadd.xlane.f32.xlu0 %v4450
    %v4452 = vpop.xlane.xlu0 %4451
    %v4453 = vadd.f32 %v4441, %v4442
    %4454 = vadd.xlane.f32.xlu0 %v4453
    %v4455 = vpop.xlane.xlu0 %4454
    %v4456 = vadd.f32 %v4443, %v4444
    %4457 = vadd.xlane.f32.xlu0 %v4456
    %v4458 = vpop.xlane.xlu0 %4457
    %v4459 = vmul.f32 %v4449, %v1710
    %v4460 = vmul.f32 %v4452, %v1710
    %v4461 = vmul.f32 %v4455, %v1710
    %v4462 = vmul.f32 %v4458, %v1710
    %v4463 = vsub.f32 %v4437, %v4459
    %v4464 = vsub.f32 %v4438, %v4459
    %v4465 = vsub.f32 %v4439, %v4460
    %v4466 = vsub.f32 %v4440, %v4460
    %v4467 = vsub.f32 %v4441, %v4461
    %v4468 = vsub.f32 %v4442, %v4461
    %v4469 = vsub.f32 %v4443, %v4462
    %v4470 = vsub.f32 %v4444, %v4462
    %v4471 = vmul.f32 %v4463, %v4463
    %v4472 = vmul.f32 %v4464, %v4464
    %v4473 = vmul.f32 %v4465, %v4465
    %v4474 = vmul.f32 %v4466, %v4466
    %v4475 = vmul.f32 %v4467, %v4467
    %v4476 = vmul.f32 %v4468, %v4468
    %v4477 = vmul.f32 %v4469, %v4469
    %v4478 = vmul.f32 %v4470, %v4470
    %v4479 = vadd.f32 %v4471, %v4472
    %4480 = vadd.xlane.f32.xlu0 %v4479
    %v4481 = vpop.xlane.xlu0 %4480
    %v4482 = vadd.f32 %v4473, %v4474
    %4483 = vadd.xlane.f32.xlu0 %v4482
    %v4484 = vpop.xlane.xlu0 %4483
    %v4485 = vadd.f32 %v4475, %v4476
    %4486 = vadd.xlane.f32.xlu0 %v4485
    %v4487 = vpop.xlane.xlu0 %4486
    %v4488 = vadd.f32 %v4477, %v4478
    %4489 = vadd.xlane.f32.xlu0 %v4488
    %v4490 = vpop.xlane.xlu0 %4489
    %v4491 = vmul.f32 %v4481, %v1710
    %v4492 = vmul.f32 %v4484, %v1710
    %v4493 = vmul.f32 %v4487, %v1710
    %v4494 = vmul.f32 %v4490, %v1710
    %v4495 = vadd.f32 %v4491, 1e-06
    %v4496 = vadd.f32 %v4492, 1e-06
    %v4497 = vadd.f32 %v4493, 1e-06
    %v4498 = vadd.f32 %v4494, 1e-06
    %v4499 = vrsqrt.pop %v4495
    %v4500 = vrsqrt.pop %v4496
    %v4501 = vrsqrt.pop %v4497
    %v4502 = vrsqrt.pop %v4498
    %v4503 = vmul.f32 %v4463, %v4499
    %v4504 = vmul.f32 %v4464, %v4499
    %v4505 = vmul.f32 %v4465, %v4500
    %v4506 = vmul.f32 %v4466, %v4500
    %v4507 = vmul.f32 %v4467, %v4501
    %v4508 = vmul.f32 %v4468, %v4501
    %v4509 = vmul.f32 %v4469, %v4502
    %v4510 = vmul.f32 %v4470, %v4502
    %v4512 = vlaneseq
    %v4513 = vshrl.u32 %v4512, 7
    %v4514 = vsub.s32 0, %v4513
    %v4515 = vrot.slane %v4445, %v4514
    %v4516 = vlaneseq
    %v4517 = vshrl.u32 %v4516, 7
    %v4518 = vsub.s32 1, %v4517
    %v4519 = vrot.slane %v4445, %v4518
    %v4522 = vmul.f32 %v4503, %v4515
    %v4523 = vmul.f32 %v4504, %v4519
    %v4524 = vmul.f32 %v4505, %v4515
    %v4525 = vmul.f32 %v4506, %v4519
    %v4526 = vmul.f32 %v4507, %v4515
    %v4527 = vmul.f32 %v4508, %v4519
    %v4528 = vmul.f32 %v4509, %v4515
    %v4529 = vmul.f32 %v4510, %v4519
    %v4531 = vlaneseq
    %v4532 = vshrl.u32 %v4531, 7
    %v4533 = vsub.s32 0, %v4532
    %v4534 = vrot.slane %v4446, %v4533
    %v4535 = vlaneseq
    %v4536 = vshrl.u32 %v4535, 7
    %v4537 = vsub.s32 1, %v4536
    %v4538 = vrot.slane %v4446, %v4537
    %v4541 = vadd.f32 %v4522, %v4534
    %v4542 = vadd.f32 %v4523, %v4538
    %v4543 = vadd.f32 %v4524, %v4534
    %v4544 = vadd.f32 %v4525, %v4538
    %v4545 = vadd.f32 %v4526, %v4534
    %v4546 = vadd.f32 %v4527, %v4538
    %v4547 = vadd.f32 %v4528, %v4534
    %v4548 = vadd.f32 %v4529, %v4538
    %4549 = vst [vmem:[#allocation17] sm:$0xff] %v4541
    %4550 = vst [vmem:[#allocation17 + $0x8] sm:$0xff] %v4542
    %4551 = vst [vmem:[#allocation17 + $0x10] sm:$0xff] %v4543
    %4552 = vst [vmem:[#allocation17 + $0x18] sm:$0xff] %v4544
    %4553 = vst [vmem:[#allocation17 + $0x20] sm:$0xff] %v4545
    %4554 = vst [vmem:[#allocation17 + $0x28] sm:$0xff] %v4546
    %4555 = vst [vmem:[#allocation17 + $0x30] sm:$0xff] %v4547
    %4556 = vst [vmem:[#allocation17 + $0x38] sm:$0xff] %v4548
    // Predicated region
    $region126: #{tpu_custom_call.1} parent=1 // pred_check
      _
    $region127: #{tpu_custom_call.1} parent=1 // pred_check_branch
      %4558 = sbr.rel (0) target = $region129
    $region128: #{tpu_custom_call.1} parent=1 // pred_region
      %s4560 = ssub.s32 1024, 1024
      %4561 = vsyncadd [#allocation4], %s4560
      %s4562 = sshll.u32 [#allocation17], 4
      %s4563 = int_to_ptr.vmem [resolvable:$true] %s4562
      %4568 = dma.vmem_to_hbm [thread:$0]  %s4563, 1024, %s22, [#allocation4], 256, 256, 16
    $region129: #{tpu_custom_call.1} parent=1 // pred_fallthru
      _
    // Predicated region
    $region130: #{tpu_custom_call.1} parent=1 // pred_check
      _
    $region131: #{tpu_custom_call.1} parent=1 // pred_check_branch
      %4570 = sbr.rel (0) target = $region133
    $region132: #{tpu_custom_call.1} parent=1 // pred_region
      %4571 = dma.done [#allocation4], 1024
    $region133: #{tpu_custom_call.1} parent=1 // pred_fallthru
      _
    %4572 = vsyncpa [#allocation3], 1
    %4573 = vsyncpa [#allocation6], 1
    %4574 = vsyncpa [#allocation9], 1
    %4575 = vsyncpa [#allocation12], 1
    %4576 = vsyncpa [#allocation15], 1
    %4577 = vsyncpa [#allocation4], 1

</llo_original>
